<compile_context>
chip_gen: v7x
topology: tpu7x:2x2x1
jax: 0.10.0
libtpu: 0.0.40
codegen_flags: <defaults>
</compile_context>

<pallas_src>
import math
import functools

import jax
import jax.numpy as jnp
from jax.experimental import pallas as pl
from jax.experimental.pallas import tpu as pltpu


# --------------------------- in-kernel helpers (values) ---------------------------

def _layernorm(z, g, b):
    # PyTorch LayerNorm, eps=1e-5 (f32)
    mu = jnp.mean(z, axis=-1, keepdims=True)
    var = jnp.mean(jnp.square(z - mu), axis=-1, keepdims=True)
    return (z - mu) * jax.lax.rsqrt(var + 1e-5) * g + b


def _mha(x_q, x_kv, bias, w_in_ref, b_in_ref, wo_ref, bo_ref, *, nhead, scale):
    """Batched multi-head attention for one batch element, emitted as (Sq, D).

    x_q: (Sq, D) f32, x_kv: (Sk, D) f32,
    w_in_ref: (3*H, D, dh) bf16  (q|k|v per-head projections, leading-axis split),
    b_in_ref: (3*H, 1, dh) f32, wo_ref: (H, dh, D) bf16, bo_ref: (1, D) f32,
    bias: additive mask broadcastable to (H, Sq, Sk), or None.
    Every contraction is a single leading-batch einsum (no per-head loop, no
    lane slicing); out-proj is a batched matmul + cheap leading-axis sum.
    """
    H = nhead
    Sq, D = x_q.shape
    Sk = x_kv.shape[0]

    xq = jnp.broadcast_to(x_q.astype(jnp.bfloat16)[None], (H, Sq, D))
    xk = jnp.broadcast_to(x_kv.astype(jnp.bfloat16)[None], (H, Sk, D))

    wq = w_in_ref[0:H]                       # (H, D, dh) bf16
    wk = w_in_ref[H:2 * H]
    wv = w_in_ref[2 * H:3 * H]
    bq = b_in_ref[0:H]                       # (H, 1, dh) f32
    bk = b_in_ref[H:2 * H]
    bv = b_in_ref[2 * H:3 * H]

    q = jnp.einsum('hsd,hde->hse', xq, wq, preferred_element_type=jnp.float32) + bq
    k = jnp.einsum('hsd,hde->hse', xk, wk, preferred_element_type=jnp.float32) + bk
    v = jnp.einsum('hsd,hde->hse', xk, wv, preferred_element_type=jnp.float32) + bv

    s = jnp.einsum('hqe,hke->hqk', q.astype(jnp.bfloat16), k.astype(jnp.bfloat16),
                   preferred_element_type=jnp.float32) * scale
    if bias is not None:
        s = s + bias                          # broadcast over heads (and queries)
    m = jnp.max(s, axis=-1, keepdims=True)
    p = jnp.exp(s - m)
    # approx reciprocal (EUP slot); ~2^-12 rel. error vs exact division.
    p = p * pl.reciprocal(jnp.sum(p, axis=-1, keepdims=True), approx=True)

    ctx = jnp.einsum('hqk,hke->hqe', p.astype(jnp.bfloat16), v.astype(jnp.bfloat16),
                     preferred_element_type=jnp.float32)                  # (H, Sq, dh)
    proj = jnp.einsum('hqe,hed->hqd', ctx.astype(jnp.bfloat16), wo_ref[...],
                      preferred_element_type=jnp.float32)                 # (H, Sq, D)
    return jnp.sum(proj, axis=0) + bo_ref[...]                            # (Sq, D)


def _ffn(x, w1_ref, b1_ref, w2_ref, b2_ref):
    h = jnp.dot(x.astype(jnp.bfloat16), w1_ref[...],
                preferred_element_type=jnp.float32) + b1_ref[...]
    h = jnp.maximum(h, 0.0)
    return jnp.dot(h.astype(jnp.bfloat16), w2_ref[...],
                   preferred_element_type=jnp.float32) + b2_ref[...]


def _key_padding_bias(tok_row):
    # tokens == 2 -> large finite negative (instead of -inf; no NaN on fully-padded rows)
    return jnp.where(tok_row == 2, jnp.float32(-1e30), jnp.float32(0.0))


# ------------------------------ stacked-layer kernels ------------------------------

def _encoder_stack_kernel(tok_ref, x_ref,
                          w_in_ref, b_in_ref, wo_ref, bo_ref,
                          w1_ref, b1_ref, w2_ref, b2_ref,
                          lng_ref, lnb_ref, fing_ref, finb_ref,
                          o_ref, act_ref, *, nhead):
    l = pl.program_id(1)

    @pl.when(l == 0)
    def _():
        act_ref[...] = x_ref[...]            # activation enters VMEM once per batch elem

    x = act_ref[...]                          # (S, D) f32
    S, D = x.shape
    scale = 1.0 / math.sqrt(D // nhead)

    bias = _key_padding_bias(tok_ref[...])    # (1, S) -> broadcast over (H, S, S)

    a = _mha(x, x, bias, w_in_ref, b_in_ref, wo_ref, bo_ref, nhead=nhead, scale=scale)
    x2 = _layernorm(x + a, lng_ref[0], lnb_ref[0])

    f = _ffn(x2, w1_ref, b1_ref, w2_ref, b2_ref)
    y = _layernorm(x2 + f, lng_ref[1], lnb_ref[1])

    act_ref[...] = y                          # carry to next layer (same batch elem)

    @pl.when(l == pl.num_programs(1) - 1)
    def _():
        # final encoder LayerNorm folded into the last layer iteration
        o_ref[...] = _layernorm(y, fing_ref[...], finb_ref[...])


def _decoder_stack_kernel(tok_ref, x_ref, mem_ref,
                          sa_w_in_ref, sa_b_in_ref, sa_wo_ref, sa_bo_ref,
                          ca_w_in_ref, ca_b_in_ref, ca_wo_ref, ca_bo_ref,
                          w1_ref, b1_ref, w2_ref, b2_ref,
                          lng_ref, lnb_ref, fing_ref, finb_ref,
                          o_ref, act_ref, *, nhead):
    l = pl.program_id(1)

    @pl.when(l == 0)
    def _():
        act_ref[...] = x_ref[...]

    x = act_ref[...]                          # (St, D) f32
    mem = mem_ref[...]                        # (Ss, D) f32
    St, D = x.shape
    scale = 1.0 / math.sqrt(D // nhead)

    # masked self-attention: causal + tgt key padding, built in-kernel
    row = jax.lax.broadcasted_iota(jnp.int32, (St, St), 0)
    col = jax.lax.broadcasted_iota(jnp.int32, (St, St), 1)
    causal = jnp.where(col > row, jnp.float32(-1e30), jnp.float32(0.0))
    bias_sa = causal + _key_padding_bias(tok_ref[...])            # (St, St)

    a = _mha(x, x, bias_sa, sa_w_in_ref, sa_b_in_ref, sa_wo_ref, sa_bo_ref,
             nhead=nhead, scale=scale)
    x2 = _layernorm(x + a, lng_ref[0], lnb_ref[0])

    # cross-attention: memory_key_padding_mask=None -> no bias at all
    c = _mha(x2, mem, None, ca_w_in_ref, ca_b_in_ref, ca_wo_ref, ca_bo_ref,
             nhead=nhead, scale=scale)
    x3 = _layernorm(x2 + c, lng_ref[1], lnb_ref[1])

    f = _ffn(x3, w1_ref, b1_ref, w2_ref, b2_ref)
    y = _layernorm(x3 + f, lng_ref[2], lnb_ref[2])

    act_ref[...] = y

    @pl.when(l == pl.num_programs(1) - 1)
    def _():
        o_ref[...] = _layernorm(y, fing_ref[...], finb_ref[...])


# ------------------------------ pallas_call wrappers ------------------------------

def _layer_spec(arr):
    # per-layer stacked weight: select layer l, squeeze the layer axis
    nz = arr.ndim - 1
    return pl.BlockSpec((None,) + arr.shape[1:],
                        lambda b, l, _n=nz: (l,) + (0,) * _n)


def _shared_spec(arr):
    # whole-array weight shared by all grid steps (final norm params)
    nd = arr.ndim
    return pl.BlockSpec(arr.shape, lambda b, l, _n=nd: (0,) * _n)


def run_encoder_stack(tok3, x, ep, fin_g, fin_b, *, nhead, B, S, D):
    n_layers = ep["w_in"].shape[0]
    layer_ws = [ep["w_in"], ep["b_in"], ep["wo"], ep["bo"],
                ep["w1"], ep["b1"], ep["w2"], ep["b2"],
                ep["ln_g"], ep["ln_b"]]
    act_spec = pl.BlockSpec((S, D), lambda b, l: (b, 0))
    tok_spec = pl.BlockSpec((None, 1, S), lambda b, l: (b, 0, 0))
    in_specs = ([tok_spec, act_spec]
                + [_layer_spec(a) for a in layer_ws]
                + [_shared_spec(fin_g), _shared_spec(fin_b)])
    return pl.pallas_call(
        functools.partial(_encoder_stack_kernel, nhead=nhead),
        grid=(B, n_layers),
        in_specs=in_specs,
        out_specs=act_spec,
        out_shape=jax.ShapeDtypeStruct((B * S, D), jnp.float32),
        scratch_shapes=[pltpu.VMEM((S, D), jnp.float32)],
        compiler_params=pltpu.CompilerParams(
            dimension_semantics=("parallel", "arbitrary"),
            vmem_limit_bytes=32 * 1024 * 1024),
    )(tok3, x, *layer_ws, fin_g, fin_b)


def run_decoder_stack(tok3, x, mem, dp, fin_g, fin_b, *, nhead, B, St, Ss, D):
    n_layers = dp["sa_w_in"].shape[0]
    layer_ws = [dp["sa_w_in"], dp["sa_b_in"], dp["sa_wo"], dp["sa_bo"],
                dp["ca_w_in"], dp["ca_b_in"], dp["ca_wo"], dp["ca_bo"],
                dp["w1"], dp["b1"], dp["w2"], dp["b2"],
                dp["ln_g"], dp["ln_b"]]
    x_spec = pl.BlockSpec((St, D), lambda b, l: (b, 0))
    mem_spec = pl.BlockSpec((Ss, D), lambda b, l: (b, 0))
    tok_spec = pl.BlockSpec((None, 1, St), lambda b, l: (b, 0, 0))
    in_specs = ([tok_spec, x_spec, mem_spec]
                + [_layer_spec(a) for a in layer_ws]
                + [_shared_spec(fin_g), _shared_spec(fin_b)])
    return pl.pallas_call(
        functools.partial(_decoder_stack_kernel, nhead=nhead),
        grid=(B, n_layers),
        in_specs=in_specs,
        out_specs=x_spec,
        out_shape=jax.ShapeDtypeStruct((B * St, D), jnp.float32),
        scratch_shapes=[pltpu.VMEM((St, D), jnp.float32)],
        compiler_params=pltpu.CompilerParams(
            dimension_semantics=("parallel", "arbitrary"),
            vmem_limit_bytes=32 * 1024 * 1024),
    )(tok3, x, mem, *layer_ws, fin_g, fin_b)


# ------------------------------ model forward ------------------------------

def positional_encoding(S, D):
    pos = jnp.arange(S, dtype=jnp.float32)[:, None]
    div = jnp.exp(jnp.arange(0, D, 2, dtype=jnp.float32) * (-math.log(10000.0) / D))
    pe = jnp.zeros((S, D), jnp.float32)
    pe = pe.at[:, 0::2].set(jnp.sin(pos * div))
    pe = pe.at[:, 1::2].set(jnp.cos(pos * div))
    return pe


def generate_task_model_forward(params, src_tokens, tgt_tokens, *, d_model, nhead):
    B, Ss = src_tokens.shape
    _, St = tgt_tokens.shape
    D = d_model
    assert D % nhead == 0

    # embedding lookup + positional encoding in plain JAX (tiny gather, not worth a kernel)
    emb = params["embedding"]
    src = jnp.take(emb, src_tokens, axis=0) + positional_encoding(Ss, D)[None]
    tgt = jnp.take(emb, tgt_tokens, axis=0) + positional_encoding(St, D)[None]
    src = src.reshape(B * Ss, D)              # lane-dense (rows, D) slab
    tgt = tgt.reshape(B * St, D)
    # TODO(synk): dropout(p=0.1) in PositionalEncoding / Transformer layers is treated
    # as identity (eval/inference semantics); training-mode stochastic dropout not emitted.

    src_tok = src_tokens.astype(jnp.int32).reshape(B, 1, Ss)   # raw ids; mask built in-kernel
    tgt_tok = tgt_tokens.astype(jnp.int32).reshape(B, 1, St)

    mem = run_encoder_stack(src_tok, src, params["enc"],
                            params["enc_fin_g"], params["enc_fin_b"],
                            nhead=nhead, B=B, S=Ss, D=D)
    out = run_decoder_stack(tgt_tok, tgt, mem, params["dec"],
                            params["dec_fin_g"], params["dec_fin_b"],
                            nhead=nhead, B=B, St=St, Ss=Ss, D=D)
    return out.reshape(B, St, D)              # matches PyTorch `out`


# ------------------------------ parameter init ------------------------------

def init_params(key, *, d_model, nhead, vocab_size, dim_ff, n_enc, n_dec):
    D, H, F = d_model, nhead, dim_ff
    dh = D // H
    keys = iter(jax.random.split(key, 64))

    def w(shape, scale=0.05):
        # matmul weights stored in bf16 (MXU-native); biases / LN params stay f32
        return (jax.random.normal(next(keys), shape, jnp.float32) * scale).astype(jnp.bfloat16)

    def attn(L):
        return dict(
            w_in=w((L, 3 * H, D, dh)),                    # per-head q|k|v projections
            b_in=jnp.zeros((L, 3 * H, 1, dh), jnp.float32),
            wo=w((L, H, dh, D)),                          # per-head rows of the (D,D) out-proj
            bo=jnp.zeros((L, 1, D), jnp.float32),
        )

    def ffn(L):
        return dict(
            w1=w((L, D, F)), b1=jnp.zeros((L, 1, F), jnp.float32),
            w2=w((L, F, D)), b2=jnp.zeros((L, 1, D), jnp.float32),
        )

    enc = dict(**attn(n_enc), **ffn(n_enc),
               ln_g=jnp.ones((n_enc, 2, 1, D), jnp.float32),
               ln_b=jnp.zeros((n_enc, 2, 1, D), jnp.float32))

    sa = attn(n_dec)
    ca = attn(n_dec)
    dec = dict(
        sa_w_in=sa["w_in"], sa_b_in=sa["b_in"], sa_wo=sa["wo"], sa_bo=sa["bo"],
        ca_w_in=ca["w_in"], ca_b_in=ca["b_in"], ca_wo=ca["wo"], ca_bo=ca["bo"],
        **ffn(n_dec),
        ln_g=jnp.ones((n_dec, 3, 1, D), jnp.float32),
        ln_b=jnp.zeros((n_dec, 3, 1, D), jnp.float32))

    return dict(
        embedding=jax.random.normal(next(keys), (vocab_size, D), jnp.float32),
        enc=enc, dec=dec,
        enc_fin_g=jnp.ones((1, D), jnp.float32), enc_fin_b=jnp.zeros((1, D), jnp.float32),
        dec_fin_g=jnp.ones((1, D), jnp.float32), dec_fin_b=jnp.zeros((1, D), jnp.float32),
    )


# ----------------------------------- main -----------------------------------

if __name__ == "__main__":
    # Small shapes consistent with the module: d_model=32 (instead of 512),
    # nhead=4 (head_dim=8), dim_feedforward=32, vocab=10, 2 enc + 2 dec layers.
    D_MODEL, NHEAD, DIM_FF, VOCAB = 32, 4, 32, 10
    B, S_SRC, S_TGT = 2, 8, 8

    key = jax.random.PRNGKey(0)
    pkey, skey, tkey = jax.random.split(key, 3)
    params = init_params(pkey, d_model=D_MODEL, nhead=NHEAD, vocab_size=VOCAB,
                         dim_ff=DIM_FF, n_enc=2, n_dec=2)

    # tokens in [3, 10) so token 2 (the pad id in get_key_padding_mask) only
    # appears where we explicitly place it.
    src = jax.random.randint(skey, (B, S_SRC), 3, VOCAB, dtype=jnp.int32)
    tgt = jax.random.randint(tkey, (B, S_TGT), 3, VOCAB, dtype=jnp.int32)
    src = src.at[:, -2:].set(2)   # padded tail on src
    tgt = tgt.at[:, -1:].set(2)   # padded tail on tgt

    fwd = jax.jit(functools.partial(generate_task_model_forward,
                                    d_model=D_MODEL, nhead=NHEAD))
    out = fwd(params, src, tgt)
    jax.block_until_ready(out)
    assert out.shape == (B, S_TGT, D_MODEL)
    print("KERNEL_OK")
</pallas_src>

<mosaic_0001>
module attributes {stable_mosaic.version = 11 : i64} {
  func.func @_decoder_stack_kernel(%arg0: i32, %arg1: i32, %arg2: memref<1x1x8xi32, #tpu.memory_space<vmem>>, %arg3: memref<8x32xf32, #tpu.memory_space<vmem>>, %arg4: memref<8x32xf32, #tpu.memory_space<vmem>>, %arg5: memref<1x12x32x8xbf16, #tpu.memory_space<vmem>>, %arg6: memref<1x12x1x8xf32, #tpu.memory_space<vmem>>, %arg7: memref<1x4x8x32xbf16, #tpu.memory_space<vmem>>, %arg8: memref<1x1x32xf32, #tpu.memory_space<vmem>>, %arg9: memref<1x12x32x8xbf16, #tpu.memory_space<vmem>>, %arg10: memref<1x12x1x8xf32, #tpu.memory_space<vmem>>, %arg11: memref<1x4x8x32xbf16, #tpu.memory_space<vmem>>, %arg12: memref<1x1x32xf32, #tpu.memory_space<vmem>>, %arg13: memref<1x32x32xbf16, #tpu.memory_space<vmem>>, %arg14: memref<1x1x32xf32, #tpu.memory_space<vmem>>, %arg15: memref<1x32x32xbf16, #tpu.memory_space<vmem>>, %arg16: memref<1x1x32xf32, #tpu.memory_space<vmem>>, %arg17: memref<1x3x1x32xf32, #tpu.memory_space<vmem>>, %arg18: memref<1x3x1x32xf32, #tpu.memory_space<vmem>>, %arg19: memref<1x32xf32, #tpu.memory_space<vmem>>, %arg20: memref<1x32xf32, #tpu.memory_space<vmem>>, %arg21: memref<8x32xf32, #tpu.memory_space<vmem>>, %arg22: memref<8x32xf32, #tpu.memory_space<vmem>>) attributes {dimension_semantics = [#tpu.dimension_semantics<parallel>, #tpu.dimension_semantics<arbitrary>], iteration_bounds = array<i64: 2, 2>, scalar_prefetch = 0 : i64, scratch_operands = 1 : i64, tpu.core_type = #tpu.core_type<tc>, window_params = [{transform_indices = @transform_0, window_bounds = array<i64: 1, 1, 8>}, {transform_indices = @transform_1, window_bounds = array<i64: 8, 32>}, {transform_indices = @transform_2, window_bounds = array<i64: 8, 32>}, {transform_indices = @transform_3, window_bounds = array<i64: 1, 12, 32, 8>}, {transform_indices = @transform_4, window_bounds = array<i64: 1, 12, 1, 8>}, {transform_indices = @transform_5, window_bounds = array<i64: 1, 4, 8, 32>}, {transform_indices = @transform_6, window_bounds = array<i64: 1, 1, 32>}, {transform_indices = @transform_7, window_bounds = array<i64: 1, 12, 32, 8>}, {transform_indices = @transform_8, window_bounds = array<i64: 1, 12, 1, 8>}, {transform_indices = @transform_9, window_bounds = array<i64: 1, 4, 8, 32>}, {transform_indices = @transform_10, window_bounds = array<i64: 1, 1, 32>}, {transform_indices = @transform_11, window_bounds = array<i64: 1, 32, 32>}, {transform_indices = @transform_12, window_bounds = array<i64: 1, 1, 32>}, {transform_indices = @transform_13, window_bounds = array<i64: 1, 32, 32>}, {transform_indices = @transform_14, window_bounds = array<i64: 1, 1, 32>}, {transform_indices = @transform_15, window_bounds = array<i64: 1, 3, 1, 32>}, {transform_indices = @transform_16, window_bounds = array<i64: 1, 3, 1, 32>}, {pipeline_mode = #tpu.pipeline_mode<synchronous>, transform_indices = @transform_17, window_bounds = array<i64: 1, 32>}, {pipeline_mode = #tpu.pipeline_mode<synchronous>, transform_indices = @transform_18, window_bounds = array<i64: 1, 32>}, {transform_indices = @transform_19, window_bounds = array<i64: 8, 32>}]} {
    %c0_i32 = arith.constant 0 : i32
    %0 = arith.cmpi eq, %arg1, %c0_i32 : i32
    %1 = arith.extui %0 : i1 to i32
    %c0_i32_0 = arith.constant 0 : i32
    %2 = arith.cmpi ne, %1, %c0_i32_0 : i32
    scf.if %2 {
      %c0_145 = arith.constant 0 : index
      %c0_146 = arith.constant 0 : index
      %238 = vector.load %arg3[%c0_145, %c0_146] : memref<8x32xf32, #tpu.memory_space<vmem>>, vector<8x32xf32>
      %c0_147 = arith.constant 0 : index
      %c0_148 = arith.constant 0 : index
      %239 = vector.load %arg22[%c0_147, %c0_148] : memref<8x32xf32, #tpu.memory_space<vmem>>, vector<8x32xf32>
      tpu.vector_store %arg22[%c0_147, %c0_148], %238 {strides = array<i32>} : memref<8x32xf32, #tpu.memory_space<vmem>>, vector<8x32xf32>,
    } else {
    }
    %c0 = arith.constant 0 : index
    %c0_1 = arith.constant 0 : index
    %3 = vector.load %arg22[%c0, %c0_1] : memref<8x32xf32, #tpu.memory_space<vmem>>, vector<8x32xf32>
    %c0_2 = arith.constant 0 : index
    %c0_3 = arith.constant 0 : index
    %4 = vector.load %arg4[%c0_2, %c0_3] : memref<8x32xf32, #tpu.memory_space<vmem>>, vector<8x32xf32>
    %5 = tpu.iota {dimensions = array<i32: 0>} : vector<8x8xi32>
    %6 = tpu.iota {dimensions = array<i32: 1>} : vector<8x8xi32>
    %7 = arith.cmpi sgt, %6, %5 : vector<8x8xi32>
    %cst = arith.constant -1.000000e+30 : f32
    %cst_4 = arith.constant 0.000000e+00 : f32
    %8 = vector.broadcast %cst : f32 to vector<8x8xf32>
    %9 = vector.broadcast %cst_4 : f32 to vector<8x8xf32>
    %10 = arith.select %7, %8, %9 : vector<8x8xi1>, vector<8x8xf32>
    %c0_5 = arith.constant 0 : index
    %c0_6 = arith.constant 0 : index
    %c0_7 = arith.constant 0 : index
    %11 = vector.load %arg2[%c0_5, %c0_6, %c0_7] : memref<1x1x8xi32, #tpu.memory_space<vmem>>, vector<1x1x8xi32>
    %12 = vector.shape_cast %11 : vector<1x1x8xi32> to vector<1x8xi32>
    %c2_i32 = arith.constant 2 : i32
    %13 = vector.broadcast %c2_i32 : i32 to vector<1x8xi32>
    %14 = arith.cmpi eq, %12, %13 : vector<1x8xi32>
    %cst_8 = arith.constant -1.000000e+30 : f32
    %cst_9 = arith.constant 0.000000e+00 : f32
    %15 = vector.broadcast %cst_8 : f32 to vector<1x8xf32>
    %16 = vector.broadcast %cst_9 : f32 to vector<1x8xf32>
    %17 = arith.select %14, %15, %16 : vector<1x8xi1>, vector<1x8xf32>
    %18 = vector.broadcast %17 : vector<1x8xf32> to vector<8x8xf32>
    %19 = arith.addf %10, %18 : vector<8x8xf32>
    %20 = arith.truncf %3 : vector<8x32xf32> to vector<8x32xbf16>
    %21 = vector.shape_cast %20 : vector<8x32xbf16> to vector<1x8x32xbf16>
    %22 = vector.shape_cast %21 : vector<1x8x32xbf16> to vector<1x8x32xbf16>
    %23 = vector.broadcast %22 : vector<1x8x32xbf16> to vector<4x8x32xbf16>
    %24 = arith.truncf %3 : vector<8x32xf32> to vector<8x32xbf16>
    %25 = vector.shape_cast %24 : vector<8x32xbf16> to vector<1x8x32xbf16>
    %26 = vector.shape_cast %25 : vector<1x8x32xbf16> to vector<1x8x32xbf16>
    %27 = vector.broadcast %26 : vector<1x8x32xbf16> to vector<4x8x32xbf16>
    %c0_10 = arith.constant 0 : index
    %c0_11 = arith.constant 0 : index
    %c0_12 = arith.constant 0 : index
    %c0_13 = arith.constant 0 : index
    %28 = vector.load %arg5[%c0_10, %c0_11, %c0_12, %c0_13] : memref<1x12x32x8xbf16, #tpu.memory_space<vmem>>, vector<1x4x32x8xbf16>
    %29 = vector.shape_cast %28 : vector<1x4x32x8xbf16> to vector<4x32x8xbf16>
    %c0_14 = arith.constant 0 : index
    %c4 = arith.constant 4 : index
    %c0_15 = arith.constant 0 : index
    %c0_16 = arith.constant 0 : index
    %30 = vector.load %arg5[%c0_14, %c4, %c0_15, %c0_16] : memref<1x12x32x8xbf16, #tpu.memory_space<vmem>>, vector<1x4x32x8xbf16>
    %31 = vector.shape_cast %30 : vector<1x4x32x8xbf16> to vector<4x32x8xbf16>
    %c0_17 = arith.constant 0 : index
    %c8 = arith.constant 8 : index
    %c0_18 = arith.constant 0 : index
    %c0_19 = arith.constant 0 : index
    %32 = vector.load %arg5[%c0_17, %c8, %c0_18, %c0_19] : memref<1x12x32x8xbf16, #tpu.memory_space<vmem>>, vector<1x4x32x8xbf16>
    %33 = vector.shape_cast %32 : vector<1x4x32x8xbf16> to vector<4x32x8xbf16>
    %c0_20 = arith.constant 0 : index
    %c0_21 = arith.constant 0 : index
    %c0_22 = arith.constant 0 : index
    %c0_23 = arith.constant 0 : index
    %34 = vector.load %arg6[%c0_20, %c0_21, %c0_22, %c0_23] : memref<1x12x1x8xf32, #tpu.memory_space<vmem>>, vector<1x4x1x8xf32>
    %35 = vector.shape_cast %34 : vector<1x4x1x8xf32> to vector<4x1x8xf32>
    %c0_24 = arith.constant 0 : index
    %c4_25 = arith.constant 4 : index
    %c0_26 = arith.constant 0 : index
    %c0_27 = arith.constant 0 : index
    %36 = vector.load %arg6[%c0_24, %c4_25, %c0_26, %c0_27] : memref<1x12x1x8xf32, #tpu.memory_space<vmem>>, vector<1x4x1x8xf32>
    %37 = vector.shape_cast %36 : vector<1x4x1x8xf32> to vector<4x1x8xf32>
    %c0_28 = arith.constant 0 : index
    %c8_29 = arith.constant 8 : index
    %c0_30 = arith.constant 0 : index
    %c0_31 = arith.constant 0 : index
    %38 = vector.load %arg6[%c0_28, %c8_29, %c0_30, %c0_31] : memref<1x12x1x8xf32, #tpu.memory_space<vmem>>, vector<1x4x1x8xf32>
    %39 = vector.shape_cast %38 : vector<1x4x1x8xf32> to vector<4x1x8xf32>
    "tpu.trace_start"() <{level = 10 : i32, message = "hsd,hde->hse"}> : () -> ()
    %cst_32 = arith.constant dense<0.000000e+00> : vector<4x8x8xf32>
    %40 = tpu.matmul %23, %29, %cst_32 {dimension_numbers = #tpu.dot_dimension_numbers<[2], [1], [1], [2], [0, 0, 0, 1, 1, 2], [0], [0]>} : vector<4x8x32xbf16>, vector<4x32x8xbf16>, vector<4x8x8xf32> -> vector<4x8x8xf32>
    "tpu.trace_stop"() : () -> ()
    %41 = vector.broadcast %35 : vector<4x1x8xf32> to vector<4x8x8xf32>
    %42 = arith.addf %40, %41 : vector<4x8x8xf32>
    "tpu.trace_start"() <{level = 10 : i32, message = "hsd,hde->hse"}> : () -> ()
    %cst_33 = arith.constant dense<0.000000e+00> : vector<4x8x8xf32>
    %43 = tpu.matmul %27, %31, %cst_33 {dimension_numbers = #tpu.dot_dimension_numbers<[2], [1], [1], [2], [0, 0, 0, 1, 1, 2], [0], [0]>} : vector<4x8x32xbf16>, vector<4x32x8xbf16>, vector<4x8x8xf32> -> vector<4x8x8xf32>
    "tpu.trace_stop"() : () -> ()
    %44 = vector.broadcast %37 : vector<4x1x8xf32> to vector<4x8x8xf32>
    %45 = arith.addf %43, %44 : vector<4x8x8xf32>
    "tpu.trace_start"() <{level = 10 : i32, message = "hsd,hde->hse"}> : () -> ()
    %cst_34 = arith.constant dense<0.000000e+00> : vector<4x8x8xf32>
    %46 = tpu.matmul %27, %33, %cst_34 {dimension_numbers = #tpu.dot_dimension_numbers<[2], [1], [1], [2], [0, 0, 0, 1, 1, 2], [0], [0]>} : vector<4x8x32xbf16>, vector<4x32x8xbf16>, vector<4x8x8xf32> -> vector<4x8x8xf32>
    "tpu.trace_stop"() : () -> ()
    %47 = vector.broadcast %39 : vector<4x1x8xf32> to vector<4x8x8xf32>
    %48 = arith.addf %46, %47 : vector<4x8x8xf32>
    %49 = arith.truncf %42 : vector<4x8x8xf32> to vector<4x8x8xbf16>
    %50 = arith.truncf %45 : vector<4x8x8xf32> to vector<4x8x8xbf16>
    "tpu.trace_start"() <{level = 10 : i32, message = "hqe,hke->hqk"}> : () -> ()
    %cst_35 = arith.constant dense<0.000000e+00> : vector<4x8x8xf32>
    %51 = tpu.matmul %49, %50, %cst_35 {dimension_numbers = #tpu.dot_dimension_numbers<[2], [2], [1], [1], [0, 0, 0, 1, 1, 1], [0], [0]>} : vector<4x8x8xbf16>, vector<4x8x8xbf16>, vector<4x8x8xf32> -> vector<4x8x8xf32>
    "tpu.trace_stop"() : () -> ()
    %cst_36 = arith.constant 0.353553385 : f32
    %52 = vector.broadcast %cst_36 : f32 to vector<4x8x8xf32>
    %53 = arith.mulf %51, %52 : vector<4x8x8xf32>
    %54 = vector.shape_cast %19 : vector<8x8xf32> to vector<1x8x8xf32>
    %55 = vector.broadcast %54 : vector<1x8x8xf32> to vector<4x8x8xf32>
    %56 = arith.addf %53, %55 : vector<4x8x8xf32>
    %cst_37 = arith.constant dense<0xFF800000> : vector<4x8xf32>
    %57 = vector.multi_reduction <maximumf>, %56, %cst_37 [2] : vector<4x8x8xf32> to vector<4x8xf32>
    %58 = vector.shape_cast %57 : vector<4x8xf32> to vector<4x8x1xf32>
    %59 = vector.broadcast %58 : vector<4x8x1xf32> to vector<4x8x8xf32>
    %60 = arith.subf %56, %59 : vector<4x8x8xf32>
    %61 = math.exp %60 : vector<4x8x8xf32>
    %cst_38 = arith.constant dense<0.000000e+00> : vector<4x8xf32>
    %62 = vector.multi_reduction <add>, %61, %cst_38 [2] : vector<4x8x8xf32> to vector<4x8xf32>
    %63 = vector.shape_cast %62 : vector<4x8xf32> to vector<4x8x1xf32>
    %64 = tpu.reciprocal %63 {approx = true} : vector<4x8x1xf32> -> vector<4x8x1xf32>
    %65 = vector.broadcast %64 : vector<4x8x1xf32> to vector<4x8x8xf32>
    %66 = arith.mulf %61, %65 : vector<4x8x8xf32>
    %67 = arith.truncf %66 : vector<4x8x8xf32> to vector<4x8x8xbf16>
    %68 = arith.truncf %48 : vector<4x8x8xf32> to vector<4x8x8xbf16>
    "tpu.trace_start"() <{level = 10 : i32, message = "hqk,hke->hqe"}> : () -> ()
    %cst_39 = arith.constant dense<0.000000e+00> : vector<4x8x8xf32>
    %69 = tpu.matmul %67, %68, %cst_39 {dimension_numbers = #tpu.dot_dimension_numbers<[2], [1], [1], [2], [0, 0, 0, 1, 1, 2], [0], [0]>} : vector<4x8x8xbf16>, vector<4x8x8xbf16>, vector<4x8x8xf32> -> vector<4x8x8xf32>
    "tpu.trace_stop"() : () -> ()
    %70 = arith.truncf %69 : vector<4x8x8xf32> to vector<4x8x8xbf16>
    %c0_40 = arith.constant 0 : index
    %c0_41 = arith.constant 0 : index
    %c0_42 = arith.constant 0 : index
    %c0_43 = arith.constant 0 : index
    %71 = vector.load %arg7[%c0_40, %c0_41, %c0_42, %c0_43] : memref<1x4x8x32xbf16, #tpu.memory_space<vmem>>, vector<1x4x8x32xbf16>
    %72 = vector.shape_cast %71 : vector<1x4x8x32xbf16> to vector<4x8x32xbf16>
    "tpu.trace_start"() <{level = 10 : i32, message = "hqe,hed->hqd"}> : () -> ()
    %cst_44 = arith.constant dense<0.000000e+00> : vector<4x8x32xf32>
    %73 = tpu.matmul %70, %72, %cst_44 {dimension_numbers = #tpu.dot_dimension_numbers<[2], [1], [1], [2], [0, 0, 0, 1, 1, 2], [0], [0]>} : vector<4x8x8xbf16>, vector<4x8x32xbf16>, vector<4x8x32xf32> -> vector<4x8x32xf32>
    "tpu.trace_stop"() : () -> ()
    %cst_45 = arith.constant dense<0.000000e+00> : vector<8x32xf32>
    %74 = vector.multi_reduction <add>, %73, %cst_45 [0] : vector<4x8x32xf32> to vector<8x32xf32>
    %c0_46 = arith.constant 0 : index
    %c0_47 = arith.constant 0 : index
    %c0_48 = arith.constant 0 : index
    %75 = vector.load %arg8[%c0_46, %c0_47, %c0_48] : memref<1x1x32xf32, #tpu.memory_space<vmem>>, vector<1x1x32xf32>
    %76 = vector.shape_cast %75 : vector<1x1x32xf32> to vector<1x32xf32>
    %77 = vector.broadcast %76 : vector<1x32xf32> to vector<8x32xf32>
    %78 = arith.addf %74, %77 : vector<8x32xf32>
    %79 = arith.addf %3, %78 : vector<8x32xf32>
    %c0_49 = arith.constant 0 : index
    %c0_50 = arith.constant 0 : index
    %c0_51 = arith.constant 0 : index
    %c0_52 = arith.constant 0 : index
    %80 = vector.load %arg17[%c0_49, %c0_50, %c0_51, %c0_52] : memref<1x3x1x32xf32, #tpu.memory_space<vmem>>, vector<1x1x1x32xf32>
    %81 = vector.shape_cast %80 : vector<1x1x1x32xf32> to vector<1x32xf32>
    %c0_53 = arith.constant 0 : index
    %c0_54 = arith.constant 0 : index
    %c0_55 = arith.constant 0 : index
    %c0_56 = arith.constant 0 : index
    %82 = vector.load %arg18[%c0_53, %c0_54, %c0_55, %c0_56] : memref<1x3x1x32xf32, #tpu.memory_space<vmem>>, vector<1x1x1x32xf32>
    %83 = vector.shape_cast %82 : vector<1x1x1x32xf32> to vector<1x32xf32>
    %cst_57 = arith.constant dense<0.000000e+00> : vector<8xf32>
    %84 = vector.multi_reduction <add>, %79, %cst_57 [1] : vector<8x32xf32> to vector<8xf32>
    %85 = vector.shape_cast %84 : vector<8xf32> to vector<8x1xf32>
    %cst_58 = arith.constant 3.200000e+01 : f32
    %86 = vector.broadcast %cst_58 : f32 to vector<8x1xf32>
    %87 = arith.divf %85, %86 : vector<8x1xf32>
    %88 = vector.broadcast %87 : vector<8x1xf32> to vector<8x32xf32>
    %89 = arith.subf %79, %88 : vector<8x32xf32>
    %90 = arith.mulf %89, %89 : vector<8x32xf32>
    %cst_59 = arith.constant dense<0.000000e+00> : vector<8xf32>
    %91 = vector.multi_reduction <add>, %90, %cst_59 [1] : vector<8x32xf32> to vector<8xf32>
    %92 = vector.shape_cast %91 : vector<8xf32> to vector<8x1xf32>
    %cst_60 = arith.constant 3.200000e+01 : f32
    %93 = vector.broadcast %cst_60 : f32 to vector<8x1xf32>
    %94 = arith.divf %92, %93 : vector<8x1xf32>
    %95 = vector.broadcast %87 : vector<8x1xf32> to vector<8x32xf32>
    %96 = arith.subf %79, %95 : vector<8x32xf32>
    %cst_61 = arith.constant 9.99999974E-6 : f32
    %97 = vector.broadcast %cst_61 : f32 to vector<8x1xf32>
    %98 = arith.addf %94, %97 : vector<8x1xf32>
    %99 = math.rsqrt %98 : vector<8x1xf32>
    %100 = vector.broadcast %99 : vector<8x1xf32> to vector<8x32xf32>
    %101 = arith.mulf %96, %100 : vector<8x32xf32>
    %102 = vector.broadcast %81 : vector<1x32xf32> to vector<8x32xf32>
    %103 = arith.mulf %101, %102 : vector<8x32xf32>
    %104 = vector.broadcast %83 : vector<1x32xf32> to vector<8x32xf32>
    %105 = arith.addf %103, %104 : vector<8x32xf32>
    %106 = arith.truncf %105 : vector<8x32xf32> to vector<8x32xbf16>
    %107 = vector.shape_cast %106 : vector<8x32xbf16> to vector<1x8x32xbf16>
    %108 = vector.shape_cast %107 : vector<1x8x32xbf16> to vector<1x8x32xbf16>
    %109 = vector.broadcast %108 : vector<1x8x32xbf16> to vector<4x8x32xbf16>
    %110 = arith.truncf %4 : vector<8x32xf32> to vector<8x32xbf16>
    %111 = vector.shape_cast %110 : vector<8x32xbf16> to vector<1x8x32xbf16>
    %112 = vector.shape_cast %111 : vector<1x8x32xbf16> to vector<1x8x32xbf16>
    %113 = vector.broadcast %112 : vector<1x8x32xbf16> to vector<4x8x32xbf16>
    %c0_62 = arith.constant 0 : index
    %c0_63 = arith.constant 0 : index
    %c0_64 = arith.constant 0 : index
    %c0_65 = arith.constant 0 : index
    %114 = vector.load %arg9[%c0_62, %c0_63, %c0_64, %c0_65] : memref<1x12x32x8xbf16, #tpu.memory_space<vmem>>, vector<1x4x32x8xbf16>
    %115 = vector.shape_cast %114 : vector<1x4x32x8xbf16> to vector<4x32x8xbf16>
    %c0_66 = arith.constant 0 : index
    %c4_67 = arith.constant 4 : index
    %c0_68 = arith.constant 0 : index
    %c0_69 = arith.constant 0 : index
    %116 = vector.load %arg9[%c0_66, %c4_67, %c0_68, %c0_69] : memref<1x12x32x8xbf16, #tpu.memory_space<vmem>>, vector<1x4x32x8xbf16>
    %117 = vector.shape_cast %116 : vector<1x4x32x8xbf16> to vector<4x32x8xbf16>
    %c0_70 = arith.constant 0 : index
    %c8_71 = arith.constant 8 : index
    %c0_72 = arith.constant 0 : index
    %c0_73 = arith.constant 0 : index
    %118 = vector.load %arg9[%c0_70, %c8_71, %c0_72, %c0_73] : memref<1x12x32x8xbf16, #tpu.memory_space<vmem>>, vector<1x4x32x8xbf16>
    %119 = vector.shape_cast %118 : vector<1x4x32x8xbf16> to vector<4x32x8xbf16>
    %c0_74 = arith.constant 0 : index
    %c0_75 = arith.constant 0 : index
    %c0_76 = arith.constant 0 : index
    %c0_77 = arith.constant 0 : index
    %120 = vector.load %arg10[%c0_74, %c0_75, %c0_76, %c0_77] : memref<1x12x1x8xf32, #tpu.memory_space<vmem>>, vector<1x4x1x8xf32>
    %121 = vector.shape_cast %120 : vector<1x4x1x8xf32> to vector<4x1x8xf32>
    %c0_78 = arith.constant 0 : index
    %c4_79 = arith.constant 4 : index
    %c0_80 = arith.constant 0 : index
    %c0_81 = arith.constant 0 : index
    %122 = vector.load %arg10[%c0_78, %c4_79, %c0_80, %c0_81] : memref<1x12x1x8xf32, #tpu.memory_space<vmem>>, vector<1x4x1x8xf32>
    %123 = vector.shape_cast %122 : vector<1x4x1x8xf32> to vector<4x1x8xf32>
    %c0_82 = arith.constant 0 : index
    %c8_83 = arith.constant 8 : index
    %c0_84 = arith.constant 0 : index
    %c0_85 = arith.constant 0 : index
    %124 = vector.load %arg10[%c0_82, %c8_83, %c0_84, %c0_85] : memref<1x12x1x8xf32, #tpu.memory_space<vmem>>, vector<1x4x1x8xf32>
    %125 = vector.shape_cast %124 : vector<1x4x1x8xf32> to vector<4x1x8xf32>
    "tpu.trace_start"() <{level = 10 : i32, message = "hsd,hde->hse"}> : () -> ()
    %cst_86 = arith.constant dense<0.000000e+00> : vector<4x8x8xf32>
    %126 = tpu.matmul %109, %115, %cst_86 {dimension_numbers = #tpu.dot_dimension_numbers<[2], [1], [1], [2], [0, 0, 0, 1, 1, 2], [0], [0]>} : vector<4x8x32xbf16>, vector<4x32x8xbf16>, vector<4x8x8xf32> -> vector<4x8x8xf32>
    "tpu.trace_stop"() : () -> ()
    %127 = vector.broadcast %121 : vector<4x1x8xf32> to vector<4x8x8xf32>
    %128 = arith.addf %126, %127 : vector<4x8x8xf32>
    "tpu.trace_start"() <{level = 10 : i32, message = "hsd,hde->hse"}> : () -> ()
    %cst_87 = arith.constant dense<0.000000e+00> : vector<4x8x8xf32>
    %129 = tpu.matmul %113, %117, %cst_87 {dimension_numbers = #tpu.dot_dimension_numbers<[2], [1], [1], [2], [0, 0, 0, 1, 1, 2], [0], [0]>} : vector<4x8x32xbf16>, vector<4x32x8xbf16>, vector<4x8x8xf32> -> vector<4x8x8xf32>
    "tpu.trace_stop"() : () -> ()
    %130 = vector.broadcast %123 : vector<4x1x8xf32> to vector<4x8x8xf32>
    %131 = arith.addf %129, %130 : vector<4x8x8xf32>
    "tpu.trace_start"() <{level = 10 : i32, message = "hsd,hde->hse"}> : () -> ()
    %cst_88 = arith.constant dense<0.000000e+00> : vector<4x8x8xf32>
    %132 = tpu.matmul %113, %119, %cst_88 {dimension_numbers = #tpu.dot_dimension_numbers<[2], [1], [1], [2], [0, 0, 0, 1, 1, 2], [0], [0]>} : vector<4x8x32xbf16>, vector<4x32x8xbf16>, vector<4x8x8xf32> -> vector<4x8x8xf32>
    "tpu.trace_stop"() : () -> ()
    %133 = vector.broadcast %125 : vector<4x1x8xf32> to vector<4x8x8xf32>
    %134 = arith.addf %132, %133 : vector<4x8x8xf32>
    %135 = arith.truncf %128 : vector<4x8x8xf32> to vector<4x8x8xbf16>
    %136 = arith.truncf %131 : vector<4x8x8xf32> to vector<4x8x8xbf16>
    "tpu.trace_start"() <{level = 10 : i32, message = "hqe,hke->hqk"}> : () -> ()
    %cst_89 = arith.constant dense<0.000000e+00> : vector<4x8x8xf32>
    %137 = tpu.matmul %135, %136, %cst_89 {dimension_numbers = #tpu.dot_dimension_numbers<[2], [2], [1], [1], [0, 0, 0, 1, 1, 1], [0], [0]>} : vector<4x8x8xbf16>, vector<4x8x8xbf16>, vector<4x8x8xf32> -> vector<4x8x8xf32>
    "tpu.trace_stop"() : () -> ()
    %cst_90 = arith.constant 0.353553385 : f32
    %138 = vector.broadcast %cst_90 : f32 to vector<4x8x8xf32>
    %139 = arith.mulf %137, %138 : vector<4x8x8xf32>
    %cst_91 = arith.constant dense<0xFF800000> : vector<4x8xf32>
    %140 = vector.multi_reduction <maximumf>, %139, %cst_91 [2] : vector<4x8x8xf32> to vector<4x8xf32>
    %141 = vector.shape_cast %140 : vector<4x8xf32> to vector<4x8x1xf32>
    %142 = vector.broadcast %141 : vector<4x8x1xf32> to vector<4x8x8xf32>
    %143 = arith.subf %139, %142 : vector<4x8x8xf32>
    %144 = math.exp %143 : vector<4x8x8xf32>
    %cst_92 = arith.constant dense<0.000000e+00> : vector<4x8xf32>
    %145 = vector.multi_reduction <add>, %144, %cst_92 [2] : vector<4x8x8xf32> to vector<4x8xf32>
    %146 = vector.shape_cast %145 : vector<4x8xf32> to vector<4x8x1xf32>
    %147 = tpu.reciprocal %146 {approx = true} : vector<4x8x1xf32> -> vector<4x8x1xf32>
    %148 = vector.broadcast %147 : vector<4x8x1xf32> to vector<4x8x8xf32>
    %149 = arith.mulf %144, %148 : vector<4x8x8xf32>
    %150 = arith.truncf %149 : vector<4x8x8xf32> to vector<4x8x8xbf16>
    %151 = arith.truncf %134 : vector<4x8x8xf32> to vector<4x8x8xbf16>
    "tpu.trace_start"() <{level = 10 : i32, message = "hqk,hke->hqe"}> : () -> ()
    %cst_93 = arith.constant dense<0.000000e+00> : vector<4x8x8xf32>
    %152 = tpu.matmul %150, %151, %cst_93 {dimension_numbers = #tpu.dot_dimension_numbers<[2], [1], [1], [2], [0, 0, 0, 1, 1, 2], [0], [0]>} : vector<4x8x8xbf16>, vector<4x8x8xbf16>, vector<4x8x8xf32> -> vector<4x8x8xf32>
    "tpu.trace_stop"() : () -> ()
    %153 = arith.truncf %152 : vector<4x8x8xf32> to vector<4x8x8xbf16>
    %c0_94 = arith.constant 0 : index
    %c0_95 = arith.constant 0 : index
    %c0_96 = arith.constant 0 : index
    %c0_97 = arith.constant 0 : index
    %154 = vector.load %arg11[%c0_94, %c0_95, %c0_96, %c0_97] : memref<1x4x8x32xbf16, #tpu.memory_space<vmem>>, vector<1x4x8x32xbf16>
    %155 = vector.shape_cast %154 : vector<1x4x8x32xbf16> to vector<4x8x32xbf16>
    "tpu.trace_start"() <{level = 10 : i32, message = "hqe,hed->hqd"}> : () -> ()
    %cst_98 = arith.constant dense<0.000000e+00> : vector<4x8x32xf32>
    %156 = tpu.matmul %153, %155, %cst_98 {dimension_numbers = #tpu.dot_dimension_numbers<[2], [1], [1], [2], [0, 0, 0, 1, 1, 2], [0], [0]>} : vector<4x8x8xbf16>, vector<4x8x32xbf16>, vector<4x8x32xf32> -> vector<4x8x32xf32>
    "tpu.trace_stop"() : () -> ()
    %cst_99 = arith.constant dense<0.000000e+00> : vector<8x32xf32>
    %157 = vector.multi_reduction <add>, %156, %cst_99 [0] : vector<4x8x32xf32> to vector<8x32xf32>
    %c0_100 = arith.constant 0 : index
    %c0_101 = arith.constant 0 : index
    %c0_102 = arith.constant 0 : index
    %158 = vector.load %arg12[%c0_100, %c0_101, %c0_102] : memref<1x1x32xf32, #tpu.memory_space<vmem>>, vector<1x1x32xf32>
    %159 = vector.shape_cast %158 : vector<1x1x32xf32> to vector<1x32xf32>
    %160 = vector.broadcast %159 : vector<1x32xf32> to vector<8x32xf32>
    %161 = arith.addf %157, %160 : vector<8x32xf32>
    %162 = arith.addf %105, %161 : vector<8x32xf32>
    %c0_103 = arith.constant 0 : index
    %c1 = arith.constant 1 : index
    %c0_104 = arith.constant 0 : index
    %c0_105 = arith.constant 0 : index
    %163 = vector.load %arg17[%c0_103, %c1, %c0_104, %c0_105] : memref<1x3x1x32xf32, #tpu.memory_space<vmem>>, vector<1x1x1x32xf32>
    %164 = vector.shape_cast %163 : vector<1x1x1x32xf32> to vector<1x32xf32>
    %c0_106 = arith.constant 0 : index
    %c1_107 = arith.constant 1 : index
    %c0_108 = arith.constant 0 : index
    %c0_109 = arith.constant 0 : index
    %165 = vector.load %arg18[%c0_106, %c1_107, %c0_108, %c0_109] : memref<1x3x1x32xf32, #tpu.memory_space<vmem>>, vector<1x1x1x32xf32>
    %166 = vector.shape_cast %165 : vector<1x1x1x32xf32> to vector<1x32xf32>
    %cst_110 = arith.constant dense<0.000000e+00> : vector<8xf32>
    %167 = vector.multi_reduction <add>, %162, %cst_110 [1] : vector<8x32xf32> to vector<8xf32>
    %168 = vector.shape_cast %167 : vector<8xf32> to vector<8x1xf32>
    %cst_111 = arith.constant 3.200000e+01 : f32
    %169 = vector.broadcast %cst_111 : f32 to vector<8x1xf32>
    %170 = arith.divf %168, %169 : vector<8x1xf32>
    %171 = vector.broadcast %170 : vector<8x1xf32> to vector<8x32xf32>
    %172 = arith.subf %162, %171 : vector<8x32xf32>
    %173 = arith.mulf %172, %172 : vector<8x32xf32>
    %cst_112 = arith.constant dense<0.000000e+00> : vector<8xf32>
    %174 = vector.multi_reduction <add>, %173, %cst_112 [1] : vector<8x32xf32> to vector<8xf32>
    %175 = vector.shape_cast %174 : vector<8xf32> to vector<8x1xf32>
    %cst_113 = arith.constant 3.200000e+01 : f32
    %176 = vector.broadcast %cst_113 : f32 to vector<8x1xf32>
    %177 = arith.divf %175, %176 : vector<8x1xf32>
    %178 = vector.broadcast %170 : vector<8x1xf32> to vector<8x32xf32>
    %179 = arith.subf %162, %178 : vector<8x32xf32>
    %cst_114 = arith.constant 9.99999974E-6 : f32
    %180 = vector.broadcast %cst_114 : f32 to vector<8x1xf32>
    %181 = arith.addf %177, %180 : vector<8x1xf32>
    %182 = math.rsqrt %181 : vector<8x1xf32>
    %183 = vector.broadcast %182 : vector<8x1xf32> to vector<8x32xf32>
    %184 = arith.mulf %179, %183 : vector<8x32xf32>
    %185 = vector.broadcast %164 : vector<1x32xf32> to vector<8x32xf32>
    %186 = arith.mulf %184, %185 : vector<8x32xf32>
    %187 = vector.broadcast %166 : vector<1x32xf32> to vector<8x32xf32>
    %188 = arith.addf %186, %187 : vector<8x32xf32>
    %189 = arith.truncf %188 : vector<8x32xf32> to vector<8x32xbf16>
    %c0_115 = arith.constant 0 : index
    %c0_116 = arith.constant 0 : index
    %c0_117 = arith.constant 0 : index
    %190 = vector.load %arg13[%c0_115, %c0_116, %c0_117] : memref<1x32x32xbf16, #tpu.memory_space<vmem>>, vector<1x32x32xbf16>
    %191 = vector.shape_cast %190 : vector<1x32x32xbf16> to vector<32x32xbf16>
    %cst_118 = arith.constant dense<0.000000e+00> : vector<8x32xf32>
    %192 = tpu.matmul %189, %191, %cst_118 {dimension_numbers = #tpu.dot_dimension_numbers<[1], [0], [0], [1], [0, 0, 1, 1], [], []>} : vector<8x32xbf16>, vector<32x32xbf16>, vector<8x32xf32> -> vector<8x32xf32>
    %c0_119 = arith.constant 0 : index
    %c0_120 = arith.constant 0 : index
    %c0_121 = arith.constant 0 : index
    %193 = vector.load %arg14[%c0_119, %c0_120, %c0_121] : memref<1x1x32xf32, #tpu.memory_space<vmem>>, vector<1x1x32xf32>
    %194 = vector.shape_cast %193 : vector<1x1x32xf32> to vector<1x32xf32>
    %195 = vector.broadcast %194 : vector<1x32xf32> to vector<8x32xf32>
    %196 = arith.addf %192, %195 : vector<8x32xf32>
    %cst_122 = arith.constant 0.000000e+00 : f32
    %197 = vector.broadcast %cst_122 : f32 to vector<8x32xf32>
    %198 = arith.maximumf %196, %197 : vector<8x32xf32>
    %199 = arith.truncf %198 : vector<8x32xf32> to vector<8x32xbf16>
    %c0_123 = arith.constant 0 : index
    %c0_124 = arith.constant 0 : index
    %c0_125 = arith.constant 0 : index
    %200 = vector.load %arg15[%c0_123, %c0_124, %c0_125] : memref<1x32x32xbf16, #tpu.memory_space<vmem>>, vector<1x32x32xbf16>
    %201 = vector.shape_cast %200 : vector<1x32x32xbf16> to vector<32x32xbf16>
    %cst_126 = arith.constant dense<0.000000e+00> : vector<8x32xf32>
    %202 = tpu.matmul %199, %201, %cst_126 {dimension_numbers = #tpu.dot_dimension_numbers<[1], [0], [0], [1], [0, 0, 1, 1], [], []>} : vector<8x32xbf16>, vector<32x32xbf16>, vector<8x32xf32> -> vector<8x32xf32>
    %c0_127 = arith.constant 0 : index
    %c0_128 = arith.constant 0 : index
    %c0_129 = arith.constant 0 : index
    %203 = vector.load %arg16[%c0_127, %c0_128, %c0_129] : memref<1x1x32xf32, #tpu.memory_space<vmem>>, vector<1x1x32xf32>
    %204 = vector.shape_cast %203 : vector<1x1x32xf32> to vector<1x32xf32>
    %205 = vector.broadcast %204 : vector<1x32xf32> to vector<8x32xf32>
    %206 = arith.addf %202, %205 : vector<8x32xf32>
    %207 = arith.addf %188, %206 : vector<8x32xf32>
    %c0_130 = arith.constant 0 : index
    %c2 = arith.constant 2 : index
    %c0_131 = arith.constant 0 : index
    %c0_132 = arith.constant 0 : index
    %208 = vector.load %arg17[%c0_130, %c2, %c0_131, %c0_132] : memref<1x3x1x32xf32, #tpu.memory_space<vmem>>, vector<1x1x1x32xf32>
    %209 = vector.shape_cast %208 : vector<1x1x1x32xf32> to vector<1x32xf32>
    %c0_133 = arith.constant 0 : index
    %c2_134 = arith.constant 2 : index
    %c0_135 = arith.constant 0 : index
    %c0_136 = arith.constant 0 : index
    %210 = vector.load %arg18[%c0_133, %c2_134, %c0_135, %c0_136] : memref<1x3x1x32xf32, #tpu.memory_space<vmem>>, vector<1x1x1x32xf32>
    %211 = vector.shape_cast %210 : vector<1x1x1x32xf32> to vector<1x32xf32>
    %cst_137 = arith.constant dense<0.000000e+00> : vector<8xf32>
    %212 = vector.multi_reduction <add>, %207, %cst_137 [1] : vector<8x32xf32> to vector<8xf32>
    %213 = vector.shape_cast %212 : vector<8xf32> to vector<8x1xf32>
    %cst_138 = arith.constant 3.200000e+01 : f32
    %214 = vector.broadcast %cst_138 : f32 to vector<8x1xf32>
    %215 = arith.divf %213, %214 : vector<8x1xf32>
    %216 = vector.broadcast %215 : vector<8x1xf32> to vector<8x32xf32>
    %217 = arith.subf %207, %216 : vector<8x32xf32>
    %218 = arith.mulf %217, %217 : vector<8x32xf32>
    %cst_139 = arith.constant dense<0.000000e+00> : vector<8xf32>
    %219 = vector.multi_reduction <add>, %218, %cst_139 [1] : vector<8x32xf32> to vector<8xf32>
    %220 = vector.shape_cast %219 : vector<8xf32> to vector<8x1xf32>
    %cst_140 = arith.constant 3.200000e+01 : f32
    %221 = vector.broadcast %cst_140 : f32 to vector<8x1xf32>
    %222 = arith.divf %220, %221 : vector<8x1xf32>
    %223 = vector.broadcast %215 : vector<8x1xf32> to vector<8x32xf32>
    %224 = arith.subf %207, %223 : vector<8x32xf32>
    %cst_141 = arith.constant 9.99999974E-6 : f32
    %225 = vector.broadcast %cst_141 : f32 to vector<8x1xf32>
    %226 = arith.addf %222, %225 : vector<8x1xf32>
    %227 = math.rsqrt %226 : vector<8x1xf32>
    %228 = vector.broadcast %227 : vector<8x1xf32> to vector<8x32xf32>
    %229 = arith.mulf %224, %228 : vector<8x32xf32>
    %230 = vector.broadcast %209 : vector<1x32xf32> to vector<8x32xf32>
    %231 = arith.mulf %229, %230 : vector<8x32xf32>
    %232 = vector.broadcast %211 : vector<1x32xf32> to vector<8x32xf32>
    %233 = arith.addf %231, %232 : vector<8x32xf32>
    %c0_142 = arith.constant 0 : index
    %c0_143 = arith.constant 0 : index
    %234 = vector.load %arg22[%c0_142, %c0_143] : memref<8x32xf32, #tpu.memory_space<vmem>>, vector<8x32xf32>
    tpu.vector_store %arg22[%c0_142, %c0_143], %233 {strides = array<i32>} : memref<8x32xf32, #tpu.memory_space<vmem>>, vector<8x32xf32>,
    %c1_i32 = arith.constant 1 : i32
    %235 = arith.cmpi eq, %arg1, %c1_i32 : i32
    %236 = arith.extui %235 : i1 to i32
    %c0_i32_144 = arith.constant 0 : i32
    %237 = arith.cmpi ne, %236, %c0_i32_144 : i32
    scf.if %237 {
      %c0_145 = arith.constant 0 : index
      %c0_146 = arith.constant 0 : index
      %238 = vector.load %arg19[%c0_145, %c0_146] : memref<1x32xf32, #tpu.memory_space<vmem>>, vector<1x32xf32>
      %c0_147 = arith.constant 0 : index
      %c0_148 = arith.constant 0 : index
      %239 = vector.load %arg20[%c0_147, %c0_148] : memref<1x32xf32, #tpu.memory_space<vmem>>, vector<1x32xf32>
      %cst_149 = arith.constant dense<0.000000e+00> : vector<8xf32>
      %240 = vector.multi_reduction <add>, %233, %cst_149 [1] : vector<8x32xf32> to vector<8xf32>
      %241 = vector.shape_cast %240 : vector<8xf32> to vector<8x1xf32>
      %cst_150 = arith.constant 3.200000e+01 : f32
      %242 = vector.broadcast %cst_150 : f32 to vector<8x1xf32>
      %243 = arith.divf %241, %242 : vector<8x1xf32>
      %244 = vector.broadcast %243 : vector<8x1xf32> to vector<8x32xf32>
      %245 = arith.subf %233, %244 : vector<8x32xf32>
      %246 = arith.mulf %245, %245 : vector<8x32xf32>
      %cst_151 = arith.constant dense<0.000000e+00> : vector<8xf32>
      %247 = vector.multi_reduction <add>, %246, %cst_151 [1] : vector<8x32xf32> to vector<8xf32>
      %248 = vector.shape_cast %247 : vector<8xf32> to vector<8x1xf32>
      %cst_152 = arith.constant 3.200000e+01 : f32
      %249 = vector.broadcast %cst_152 : f32 to vector<8x1xf32>
      %250 = arith.divf %248, %249 : vector<8x1xf32>
      %251 = vector.broadcast %243 : vector<8x1xf32> to vector<8x32xf32>
      %252 = arith.subf %233, %251 : vector<8x32xf32>
      %cst_153 = arith.constant 9.99999974E-6 : f32
      %253 = vector.broadcast %cst_153 : f32 to vector<8x1xf32>
      %254 = arith.addf %250, %253 : vector<8x1xf32>
      %255 = math.rsqrt %254 : vector<8x1xf32>
      %256 = vector.broadcast %255 : vector<8x1xf32> to vector<8x32xf32>
      %257 = arith.mulf %252, %256 : vector<8x32xf32>
      %258 = vector.broadcast %238 : vector<1x32xf32> to vector<8x32xf32>
      %259 = arith.mulf %257, %258 : vector<8x32xf32>
      %260 = vector.broadcast %239 : vector<1x32xf32> to vector<8x32xf32>
      %261 = arith.addf %259, %260 : vector<8x32xf32>
      %c0_154 = arith.constant 0 : index
      %c0_155 = arith.constant 0 : index
      %262 = vector.load %arg21[%c0_154, %c0_155] : memref<8x32xf32, #tpu.memory_space<vmem>>, vector<8x32xf32>
      tpu.vector_store %arg21[%c0_154, %c0_155], %261 {strides = array<i32>} : memref<8x32xf32, #tpu.memory_space<vmem>>, vector<8x32xf32>,
    } else {
    }
    return
  }
  func.func @transform_0(%arg0: i32, %arg1: i32) -> (i32, i32, i32) {
    %c0_i32 = arith.constant 0 : i32
    %c0_i32_0 = arith.constant 0 : i32
    %c0_i32_1 = arith.constant 0 : i32
    return %arg0, %c0_i32, %c0_i32_0 : i32, i32, i32
  }
  func.func @transform_1(%arg0: i32, %arg1: i32) -> (i32, i32) {
    %c0_i32 = arith.constant 0 : i32
    %c0_i32_0 = arith.constant 0 : i32
    return %arg0, %c0_i32 : i32, i32
  }
  func.func @transform_2(%arg0: i32, %arg1: i32) -> (i32, i32) {
    %c0_i32 = arith.constant 0 : i32
    %c0_i32_0 = arith.constant 0 : i32
    return %arg0, %c0_i32 : i32, i32
  }
  func.func @transform_3(%arg0: i32, %arg1: i32) -> (i32, i32, i32, i32) {
    %c0_i32 = arith.constant 0 : i32
    %c0_i32_0 = arith.constant 0 : i32
    %c0_i32_1 = arith.constant 0 : i32
    %c0_i32_2 = arith.constant 0 : i32
    return %arg1, %c0_i32, %c0_i32_0, %c0_i32_1 : i32, i32, i32, i32
  }
  func.func @transform_4(%arg0: i32, %arg1: i32) -> (i32, i32, i32, i32) {
    %c0_i32 = arith.constant 0 : i32
    %c0_i32_0 = arith.constant 0 : i32
    %c0_i32_1 = arith.constant 0 : i32
    %c0_i32_2 = arith.constant 0 : i32
    return %arg1, %c0_i32, %c0_i32_0, %c0_i32_1 : i32, i32, i32, i32
  }
  func.func @transform_5(%arg0: i32, %arg1: i32) -> (i32, i32, i32, i32) {
    %c0_i32 = arith.constant 0 : i32
    %c0_i32_0 = arith.constant 0 : i32
    %c0_i32_1 = arith.constant 0 : i32
    %c0_i32_2 = arith.constant 0 : i32
    return %arg1, %c0_i32, %c0_i32_0, %c0_i32_1 : i32, i32, i32, i32
  }
  func.func @transform_6(%arg0: i32, %arg1: i32) -> (i32, i32, i32) {
    %c0_i32 = arith.constant 0 : i32
    %c0_i32_0 = arith.constant 0 : i32
    %c0_i32_1 = arith.constant 0 : i32
    return %arg1, %c0_i32, %c0_i32_0 : i32, i32, i32
  }
  func.func @transform_7(%arg0: i32, %arg1: i32) -> (i32, i32, i32, i32) {
    %c0_i32 = arith.constant 0 : i32
    %c0_i32_0 = arith.constant 0 : i32
    %c0_i32_1 = arith.constant 0 : i32
    %c0_i32_2 = arith.constant 0 : i32
    return %arg1, %c0_i32, %c0_i32_0, %c0_i32_1 : i32, i32, i32, i32
  }
  func.func @transform_8(%arg0: i32, %arg1: i32) -> (i32, i32, i32, i32) {
    %c0_i32 = arith.constant 0 : i32
    %c0_i32_0 = arith.constant 0 : i32
    %c0_i32_1 = arith.constant 0 : i32
    %c0_i32_2 = arith.constant 0 : i32
    return %arg1, %c0_i32, %c0_i32_0, %c0_i32_1 : i32, i32, i32, i32
  }
  func.func @transform_9(%arg0: i32, %arg1: i32) -> (i32, i32, i32, i32) {
    %c0_i32 = arith.constant 0 : i32
    %c0_i32_0 = arith.constant 0 : i32
    %c0_i32_1 = arith.constant 0 : i32
    %c0_i32_2 = arith.constant 0 : i32
    return %arg1, %c0_i32, %c0_i32_0, %c0_i32_1 : i32, i32, i32, i32
  }
  func.func @transform_10(%arg0: i32, %arg1: i32) -> (i32, i32, i32) {
    %c0_i32 = arith.constant 0 : i32
    %c0_i32_0 = arith.constant 0 : i32
    %c0_i32_1 = arith.constant 0 : i32
    return %arg1, %c0_i32, %c0_i32_0 : i32, i32, i32
  }
  func.func @transform_11(%arg0: i32, %arg1: i32) -> (i32, i32, i32) {
    %c0_i32 = arith.constant 0 : i32
    %c0_i32_0 = arith.constant 0 : i32
    %c0_i32_1 = arith.constant 0 : i32
    return %arg1, %c0_i32, %c0_i32_0 : i32, i32, i32
  }
  func.func @transform_12(%arg0: i32, %arg1: i32) -> (i32, i32, i32) {
    %c0_i32 = arith.constant 0 : i32
    %c0_i32_0 = arith.constant 0 : i32
    %c0_i32_1 = arith.constant 0 : i32
    return %arg1, %c0_i32, %c0_i32_0 : i32, i32, i32
  }
  func.func @transform_13(%arg0: i32, %arg1: i32) -> (i32, i32, i32) {
    %c0_i32 = arith.constant 0 : i32
    %c0_i32_0 = arith.constant 0 : i32
    %c0_i32_1 = arith.constant 0 : i32
    return %arg1, %c0_i32, %c0_i32_0 : i32, i32, i32
  }
  func.func @transform_14(%arg0: i32, %arg1: i32) -> (i32, i32, i32) {
    %c0_i32 = arith.constant 0 : i32
    %c0_i32_0 = arith.constant 0 : i32
    %c0_i32_1 = arith.constant 0 : i32
    return %arg1, %c0_i32, %c0_i32_0 : i32, i32, i32
  }
  func.func @transform_15(%arg0: i32, %arg1: i32) -> (i32, i32, i32, i32) {
    %c0_i32 = arith.constant 0 : i32
    %c0_i32_0 = arith.constant 0 : i32
    %c0_i32_1 = arith.constant 0 : i32
    %c0_i32_2 = arith.constant 0 : i32
    return %arg1, %c0_i32, %c0_i32_0, %c0_i32_1 : i32, i32, i32, i32
  }
  func.func @transform_16(%arg0: i32, %arg1: i32) -> (i32, i32, i32, i32) {
    %c0_i32 = arith.constant 0 : i32
    %c0_i32_0 = arith.constant 0 : i32
    %c0_i32_1 = arith.constant 0 : i32
    %c0_i32_2 = arith.constant 0 : i32
    return %arg1, %c0_i32, %c0_i32_0, %c0_i32_1 : i32, i32, i32, i32
  }
  func.func @transform_17(%arg0: i32, %arg1: i32) -> (i32, i32) {
    %c0_i32 = arith.constant 0 : i32
    %c0_i32_0 = arith.constant 0 : i32
    %c0_i32_1 = arith.constant 0 : i32
    return %c0_i32, %c0_i32_0 : i32, i32
  }
  func.func @transform_18(%arg0: i32, %arg1: i32) -> (i32, i32) {
    %c0_i32 = arith.constant 0 : i32
    %c0_i32_0 = arith.constant 0 : i32
    %c0_i32_1 = arith.constant 0 : i32
    return %c0_i32, %c0_i32_0 : i32, i32
  }
  func.func @transform_19(%arg0: i32, %arg1: i32) -> (i32, i32) {
    %c0_i32 = arith.constant 0 : i32
    %c0_i32_0 = arith.constant 0 : i32
    return %arg0, %c0_i32 : i32, i32
  }
}

module attributes {stable_mosaic.version = 11 : i64} {
  func.func @_encoder_stack_kernel(%arg0: i32, %arg1: i32, %arg2: memref<1x1x8xi32, #tpu.memory_space<vmem>>, %arg3: memref<8x32xf32, #tpu.memory_space<vmem>>, %arg4: memref<1x12x32x8xbf16, #tpu.memory_space<vmem>>, %arg5: memref<1x12x1x8xf32, #tpu.memory_space<vmem>>, %arg6: memref<1x4x8x32xbf16, #tpu.memory_space<vmem>>, %arg7: memref<1x1x32xf32, #tpu.memory_space<vmem>>, %arg8: memref<1x32x32xbf16, #tpu.memory_space<vmem>>, %arg9: memref<1x1x32xf32, #tpu.memory_space<vmem>>, %arg10: memref<1x32x32xbf16, #tpu.memory_space<vmem>>, %arg11: memref<1x1x32xf32, #tpu.memory_space<vmem>>, %arg12: memref<1x2x1x32xf32, #tpu.memory_space<vmem>>, %arg13: memref<1x2x1x32xf32, #tpu.memory_space<vmem>>, %arg14: memref<1x32xf32, #tpu.memory_space<vmem>>, %arg15: memref<1x32xf32, #tpu.memory_space<vmem>>, %arg16: memref<8x32xf32, #tpu.memory_space<vmem>>, %arg17: memref<8x32xf32, #tpu.memory_space<vmem>>) attributes {dimension_semantics = [#tpu.dimension_semantics<parallel>, #tpu.dimension_semantics<arbitrary>], iteration_bounds = array<i64: 2, 2>, scalar_prefetch = 0 : i64, scratch_operands = 1 : i64, tpu.core_type = #tpu.core_type<tc>, window_params = [{transform_indices = @transform_0, window_bounds = array<i64: 1, 1, 8>}, {transform_indices = @transform_1, window_bounds = array<i64: 8, 32>}, {transform_indices = @transform_2, window_bounds = array<i64: 1, 12, 32, 8>}, {transform_indices = @transform_3, window_bounds = array<i64: 1, 12, 1, 8>}, {transform_indices = @transform_4, window_bounds = array<i64: 1, 4, 8, 32>}, {transform_indices = @transform_5, window_bounds = array<i64: 1, 1, 32>}, {transform_indices = @transform_6, window_bounds = array<i64: 1, 32, 32>}, {transform_indices = @transform_7, window_bounds = array<i64: 1, 1, 32>}, {transform_indices = @transform_8, window_bounds = array<i64: 1, 32, 32>}, {transform_indices = @transform_9, window_bounds = array<i64: 1, 1, 32>}, {transform_indices = @transform_10, window_bounds = array<i64: 1, 2, 1, 32>}, {transform_indices = @transform_11, window_bounds = array<i64: 1, 2, 1, 32>}, {pipeline_mode = #tpu.pipeline_mode<synchronous>, transform_indices = @transform_12, window_bounds = array<i64: 1, 32>}, {pipeline_mode = #tpu.pipeline_mode<synchronous>, transform_indices = @transform_13, window_bounds = array<i64: 1, 32>}, {transform_indices = @transform_14, window_bounds = array<i64: 8, 32>}]} {
    %c0_i32 = arith.constant 0 : i32
    %0 = arith.cmpi eq, %arg1, %c0_i32 : i32
    %1 = arith.extui %0 : i1 to i32
    %c0_i32_0 = arith.constant 0 : i32
    %2 = arith.cmpi ne, %1, %c0_i32_0 : i32
    scf.if %2 {
      %c0_88 = arith.constant 0 : index
      %c0_89 = arith.constant 0 : index
      %146 = vector.load %arg3[%c0_88, %c0_89] : memref<8x32xf32, #tpu.memory_space<vmem>>, vector<8x32xf32>
      %c0_90 = arith.constant 0 : index
      %c0_91 = arith.constant 0 : index
      %147 = vector.load %arg17[%c0_90, %c0_91] : memref<8x32xf32, #tpu.memory_space<vmem>>, vector<8x32xf32>
      tpu.vector_store %arg17[%c0_90, %c0_91], %146 {strides = array<i32>} : memref<8x32xf32, #tpu.memory_space<vmem>>, vector<8x32xf32>,
    } else {
    }
    %c0 = arith.constant 0 : index
    %c0_1 = arith.constant 0 : index
    %3 = vector.load %arg17[%c0, %c0_1] : memref<8x32xf32, #tpu.memory_space<vmem>>, vector<8x32xf32>
    %c0_2 = arith.constant 0 : index
    %c0_3 = arith.constant 0 : index
    %c0_4 = arith.constant 0 : index
    %4 = vector.load %arg2[%c0_2, %c0_3, %c0_4] : memref<1x1x8xi32, #tpu.memory_space<vmem>>, vector<1x1x8xi32>
    %5 = vector.shape_cast %4 : vector<1x1x8xi32> to vector<1x8xi32>
    %c2_i32 = arith.constant 2 : i32
    %6 = vector.broadcast %c2_i32 : i32 to vector<1x8xi32>
    %7 = arith.cmpi eq, %5, %6 : vector<1x8xi32>
    %cst = arith.constant -1.000000e+30 : f32
    %cst_5 = arith.constant 0.000000e+00 : f32
    %8 = vector.broadcast %cst : f32 to vector<1x8xf32>
    %9 = vector.broadcast %cst_5 : f32 to vector<1x8xf32>
    %10 = arith.select %7, %8, %9 : vector<1x8xi1>, vector<1x8xf32>
    %11 = arith.truncf %3 : vector<8x32xf32> to vector<8x32xbf16>
    %12 = vector.shape_cast %11 : vector<8x32xbf16> to vector<1x8x32xbf16>
    %13 = vector.shape_cast %12 : vector<1x8x32xbf16> to vector<1x8x32xbf16>
    %14 = vector.broadcast %13 : vector<1x8x32xbf16> to vector<4x8x32xbf16>
    %15 = arith.truncf %3 : vector<8x32xf32> to vector<8x32xbf16>
    %16 = vector.shape_cast %15 : vector<8x32xbf16> to vector<1x8x32xbf16>
    %17 = vector.shape_cast %16 : vector<1x8x32xbf16> to vector<1x8x32xbf16>
    %18 = vector.broadcast %17 : vector<1x8x32xbf16> to vector<4x8x32xbf16>
    %c0_6 = arith.constant 0 : index
    %c0_7 = arith.constant 0 : index
    %c0_8 = arith.constant 0 : index
    %c0_9 = arith.constant 0 : index
    %19 = vector.load %arg4[%c0_6, %c0_7, %c0_8, %c0_9] : memref<1x12x32x8xbf16, #tpu.memory_space<vmem>>, vector<1x4x32x8xbf16>
    %20 = vector.shape_cast %19 : vector<1x4x32x8xbf16> to vector<4x32x8xbf16>
    %c0_10 = arith.constant 0 : index
    %c4 = arith.constant 4 : index
    %c0_11 = arith.constant 0 : index
    %c0_12 = arith.constant 0 : index
    %21 = vector.load %arg4[%c0_10, %c4, %c0_11, %c0_12] : memref<1x12x32x8xbf16, #tpu.memory_space<vmem>>, vector<1x4x32x8xbf16>
    %22 = vector.shape_cast %21 : vector<1x4x32x8xbf16> to vector<4x32x8xbf16>
    %c0_13 = arith.constant 0 : index
    %c8 = arith.constant 8 : index
    %c0_14 = arith.constant 0 : index
    %c0_15 = arith.constant 0 : index
    %23 = vector.load %arg4[%c0_13, %c8, %c0_14, %c0_15] : memref<1x12x32x8xbf16, #tpu.memory_space<vmem>>, vector<1x4x32x8xbf16>
    %24 = vector.shape_cast %23 : vector<1x4x32x8xbf16> to vector<4x32x8xbf16>
    %c0_16 = arith.constant 0 : index
    %c0_17 = arith.constant 0 : index
    %c0_18 = arith.constant 0 : index
    %c0_19 = arith.constant 0 : index
    %25 = vector.load %arg5[%c0_16, %c0_17, %c0_18, %c0_19] : memref<1x12x1x8xf32, #tpu.memory_space<vmem>>, vector<1x4x1x8xf32>
    %26 = vector.shape_cast %25 : vector<1x4x1x8xf32> to vector<4x1x8xf32>
    %c0_20 = arith.constant 0 : index
    %c4_21 = arith.constant 4 : index
    %c0_22 = arith.constant 0 : index
    %c0_23 = arith.constant 0 : index
    %27 = vector.load %arg5[%c0_20, %c4_21, %c0_22, %c0_23] : memref<1x12x1x8xf32, #tpu.memory_space<vmem>>, vector<1x4x1x8xf32>
    %28 = vector.shape_cast %27 : vector<1x4x1x8xf32> to vector<4x1x8xf32>
    %c0_24 = arith.constant 0 : index
    %c8_25 = arith.constant 8 : index
    %c0_26 = arith.constant 0 : index
    %c0_27 = arith.constant 0 : index
    %29 = vector.load %arg5[%c0_24, %c8_25, %c0_26, %c0_27] : memref<1x12x1x8xf32, #tpu.memory_space<vmem>>, vector<1x4x1x8xf32>
    %30 = vector.shape_cast %29 : vector<1x4x1x8xf32> to vector<4x1x8xf32>
    "tpu.trace_start"() <{level = 10 : i32, message = "hsd,hde->hse"}> : () -> ()
    %cst_28 = arith.constant dense<0.000000e+00> : vector<4x8x8xf32>
    %31 = tpu.matmul %14, %20, %cst_28 {dimension_numbers = #tpu.dot_dimension_numbers<[2], [1], [1], [2], [0, 0, 0, 1, 1, 2], [0], [0]>} : vector<4x8x32xbf16>, vector<4x32x8xbf16>, vector<4x8x8xf32> -> vector<4x8x8xf32>
    "tpu.trace_stop"() : () -> ()
    %32 = vector.broadcast %26 : vector<4x1x8xf32> to vector<4x8x8xf32>
    %33 = arith.addf %31, %32 : vector<4x8x8xf32>
    "tpu.trace_start"() <{level = 10 : i32, message = "hsd,hde->hse"}> : () -> ()
    %cst_29 = arith.constant dense<0.000000e+00> : vector<4x8x8xf32>
    %34 = tpu.matmul %18, %22, %cst_29 {dimension_numbers = #tpu.dot_dimension_numbers<[2], [1], [1], [2], [0, 0, 0, 1, 1, 2], [0], [0]>} : vector<4x8x32xbf16>, vector<4x32x8xbf16>, vector<4x8x8xf32> -> vector<4x8x8xf32>
    "tpu.trace_stop"() : () -> ()
    %35 = vector.broadcast %28 : vector<4x1x8xf32> to vector<4x8x8xf32>
    %36 = arith.addf %34, %35 : vector<4x8x8xf32>
    "tpu.trace_start"() <{level = 10 : i32, message = "hsd,hde->hse"}> : () -> ()
    %cst_30 = arith.constant dense<0.000000e+00> : vector<4x8x8xf32>
    %37 = tpu.matmul %18, %24, %cst_30 {dimension_numbers = #tpu.dot_dimension_numbers<[2], [1], [1], [2], [0, 0, 0, 1, 1, 2], [0], [0]>} : vector<4x8x32xbf16>, vector<4x32x8xbf16>, vector<4x8x8xf32> -> vector<4x8x8xf32>
    "tpu.trace_stop"() : () -> ()
    %38 = vector.broadcast %30 : vector<4x1x8xf32> to vector<4x8x8xf32>
    %39 = arith.addf %37, %38 : vector<4x8x8xf32>
    %40 = arith.truncf %33 : vector<4x8x8xf32> to vector<4x8x8xbf16>
    %41 = arith.truncf %36 : vector<4x8x8xf32> to vector<4x8x8xbf16>
    "tpu.trace_start"() <{level = 10 : i32, message = "hqe,hke->hqk"}> : () -> ()
    %cst_31 = arith.constant dense<0.000000e+00> : vector<4x8x8xf32>
    %42 = tpu.matmul %40, %41, %cst_31 {dimension_numbers = #tpu.dot_dimension_numbers<[2], [2], [1], [1], [0, 0, 0, 1, 1, 1], [0], [0]>} : vector<4x8x8xbf16>, vector<4x8x8xbf16>, vector<4x8x8xf32> -> vector<4x8x8xf32>
    "tpu.trace_stop"() : () -> ()
    %cst_32 = arith.constant 0.353553385 : f32
    %43 = vector.broadcast %cst_32 : f32 to vector<4x8x8xf32>
    %44 = arith.mulf %42, %43 : vector<4x8x8xf32>
    %45 = vector.shape_cast %10 : vector<1x8xf32> to vector<1x1x8xf32>
    %46 = vector.broadcast %45 : vector<1x1x8xf32> to vector<4x8x8xf32>
    %47 = arith.addf %44, %46 : vector<4x8x8xf32>
    %cst_33 = arith.constant dense<0xFF800000> : vector<4x8xf32>
    %48 = vector.multi_reduction <maximumf>, %47, %cst_33 [2] : vector<4x8x8xf32> to vector<4x8xf32>
    %49 = vector.shape_cast %48 : vector<4x8xf32> to vector<4x8x1xf32>
    %50 = vector.broadcast %49 : vector<4x8x1xf32> to vector<4x8x8xf32>
    %51 = arith.subf %47, %50 : vector<4x8x8xf32>
    %52 = math.exp %51 : vector<4x8x8xf32>
    %cst_34 = arith.constant dense<0.000000e+00> : vector<4x8xf32>
    %53 = vector.multi_reduction <add>, %52, %cst_34 [2] : vector<4x8x8xf32> to vector<4x8xf32>
    %54 = vector.shape_cast %53 : vector<4x8xf32> to vector<4x8x1xf32>
    %55 = tpu.reciprocal %54 {approx = true} : vector<4x8x1xf32> -> vector<4x8x1xf32>
    %56 = vector.broadcast %55 : vector<4x8x1xf32> to vector<4x8x8xf32>
    %57 = arith.mulf %52, %56 : vector<4x8x8xf32>
    %58 = arith.truncf %57 : vector<4x8x8xf32> to vector<4x8x8xbf16>
    %59 = arith.truncf %39 : vector<4x8x8xf32> to vector<4x8x8xbf16>
    "tpu.trace_start"() <{level = 10 : i32, message = "hqk,hke->hqe"}> : () -> ()
    %cst_35 = arith.constant dense<0.000000e+00> : vector<4x8x8xf32>
    %60 = tpu.matmul %58, %59, %cst_35 {dimension_numbers = #tpu.dot_dimension_numbers<[2], [1], [1], [2], [0, 0, 0, 1, 1, 2], [0], [0]>} : vector<4x8x8xbf16>, vector<4x8x8xbf16>, vector<4x8x8xf32> -> vector<4x8x8xf32>
    "tpu.trace_stop"() : () -> ()
    %61 = arith.truncf %60 : vector<4x8x8xf32> to vector<4x8x8xbf16>
    %c0_36 = arith.constant 0 : index
    %c0_37 = arith.constant 0 : index
    %c0_38 = arith.constant 0 : index
    %c0_39 = arith.constant 0 : index
    %62 = vector.load %arg6[%c0_36, %c0_37, %c0_38, %c0_39] : memref<1x4x8x32xbf16, #tpu.memory_space<vmem>>, vector<1x4x8x32xbf16>
    %63 = vector.shape_cast %62 : vector<1x4x8x32xbf16> to vector<4x8x32xbf16>
    "tpu.trace_start"() <{level = 10 : i32, message = "hqe,hed->hqd"}> : () -> ()
    %cst_40 = arith.constant dense<0.000000e+00> : vector<4x8x32xf32>
    %64 = tpu.matmul %61, %63, %cst_40 {dimension_numbers = #tpu.dot_dimension_numbers<[2], [1], [1], [2], [0, 0, 0, 1, 1, 2], [0], [0]>} : vector<4x8x8xbf16>, vector<4x8x32xbf16>, vector<4x8x32xf32> -> vector<4x8x32xf32>
    "tpu.trace_stop"() : () -> ()
    %cst_41 = arith.constant dense<0.000000e+00> : vector<8x32xf32>
    %65 = vector.multi_reduction <add>, %64, %cst_41 [0] : vector<4x8x32xf32> to vector<8x32xf32>
    %c0_42 = arith.constant 0 : index
    %c0_43 = arith.constant 0 : index
    %c0_44 = arith.constant 0 : index
    %66 = vector.load %arg7[%c0_42, %c0_43, %c0_44] : memref<1x1x32xf32, #tpu.memory_space<vmem>>, vector<1x1x32xf32>
    %67 = vector.shape_cast %66 : vector<1x1x32xf32> to vector<1x32xf32>
    %68 = vector.broadcast %67 : vector<1x32xf32> to vector<8x32xf32>
    %69 = arith.addf %65, %68 : vector<8x32xf32>
    %70 = arith.addf %3, %69 : vector<8x32xf32>
    %c0_45 = arith.constant 0 : index
    %c0_46 = arith.constant 0 : index
    %c0_47 = arith.constant 0 : index
    %c0_48 = arith.constant 0 : index
    %71 = vector.load %arg12[%c0_45, %c0_46, %c0_47, %c0_48] : memref<1x2x1x32xf32, #tpu.memory_space<vmem>>, vector<1x1x1x32xf32>
    %72 = vector.shape_cast %71 : vector<1x1x1x32xf32> to vector<1x32xf32>
    %c0_49 = arith.constant 0 : index
    %c0_50 = arith.constant 0 : index
    %c0_51 = arith.constant 0 : index
    %c0_52 = arith.constant 0 : index
    %73 = vector.load %arg13[%c0_49, %c0_50, %c0_51, %c0_52] : memref<1x2x1x32xf32, #tpu.memory_space<vmem>>, vector<1x1x1x32xf32>
    %74 = vector.shape_cast %73 : vector<1x1x1x32xf32> to vector<1x32xf32>
    %cst_53 = arith.constant dense<0.000000e+00> : vector<8xf32>
    %75 = vector.multi_reduction <add>, %70, %cst_53 [1] : vector<8x32xf32> to vector<8xf32>
    %76 = vector.shape_cast %75 : vector<8xf32> to vector<8x1xf32>
    %cst_54 = arith.constant 3.200000e+01 : f32
    %77 = vector.broadcast %cst_54 : f32 to vector<8x1xf32>
    %78 = arith.divf %76, %77 : vector<8x1xf32>
    %79 = vector.broadcast %78 : vector<8x1xf32> to vector<8x32xf32>
    %80 = arith.subf %70, %79 : vector<8x32xf32>
    %81 = arith.mulf %80, %80 : vector<8x32xf32>
    %cst_55 = arith.constant dense<0.000000e+00> : vector<8xf32>
    %82 = vector.multi_reduction <add>, %81, %cst_55 [1] : vector<8x32xf32> to vector<8xf32>
    %83 = vector.shape_cast %82 : vector<8xf32> to vector<8x1xf32>
    %cst_56 = arith.constant 3.200000e+01 : f32
    %84 = vector.broadcast %cst_56 : f32 to vector<8x1xf32>
    %85 = arith.divf %83, %84 : vector<8x1xf32>
    %86 = vector.broadcast %78 : vector<8x1xf32> to vector<8x32xf32>
    %87 = arith.subf %70, %86 : vector<8x32xf32>
    %cst_57 = arith.constant 9.99999974E-6 : f32
    %88 = vector.broadcast %cst_57 : f32 to vector<8x1xf32>
    %89 = arith.addf %85, %88 : vector<8x1xf32>
    %90 = math.rsqrt %89 : vector<8x1xf32>
    %91 = vector.broadcast %90 : vector<8x1xf32> to vector<8x32xf32>
    %92 = arith.mulf %87, %91 : vector<8x32xf32>
    %93 = vector.broadcast %72 : vector<1x32xf32> to vector<8x32xf32>
    %94 = arith.mulf %92, %93 : vector<8x32xf32>
    %95 = vector.broadcast %74 : vector<1x32xf32> to vector<8x32xf32>
    %96 = arith.addf %94, %95 : vector<8x32xf32>
    %97 = arith.truncf %96 : vector<8x32xf32> to vector<8x32xbf16>
    %c0_58 = arith.constant 0 : index
    %c0_59 = arith.constant 0 : index
    %c0_60 = arith.constant 0 : index
    %98 = vector.load %arg8[%c0_58, %c0_59, %c0_60] : memref<1x32x32xbf16, #tpu.memory_space<vmem>>, vector<1x32x32xbf16>
    %99 = vector.shape_cast %98 : vector<1x32x32xbf16> to vector<32x32xbf16>
    %cst_61 = arith.constant dense<0.000000e+00> : vector<8x32xf32>
    %100 = tpu.matmul %97, %99, %cst_61 {dimension_numbers = #tpu.dot_dimension_numbers<[1], [0], [0], [1], [0, 0, 1, 1], [], []>} : vector<8x32xbf16>, vector<32x32xbf16>, vector<8x32xf32> -> vector<8x32xf32>
    %c0_62 = arith.constant 0 : index
    %c0_63 = arith.constant 0 : index
    %c0_64 = arith.constant 0 : index
    %101 = vector.load %arg9[%c0_62, %c0_63, %c0_64] : memref<1x1x32xf32, #tpu.memory_space<vmem>>, vector<1x1x32xf32>
    %102 = vector.shape_cast %101 : vector<1x1x32xf32> to vector<1x32xf32>
    %103 = vector.broadcast %102 : vector<1x32xf32> to vector<8x32xf32>
    %104 = arith.addf %100, %103 : vector<8x32xf32>
    %cst_65 = arith.constant 0.000000e+00 : f32
    %105 = vector.broadcast %cst_65 : f32 to vector<8x32xf32>
    %106 = arith.maximumf %104, %105 : vector<8x32xf32>
    %107 = arith.truncf %106 : vector<8x32xf32> to vector<8x32xbf16>
    %c0_66 = arith.constant 0 : index
    %c0_67 = arith.constant 0 : index
    %c0_68 = arith.constant 0 : index
    %108 = vector.load %arg10[%c0_66, %c0_67, %c0_68] : memref<1x32x32xbf16, #tpu.memory_space<vmem>>, vector<1x32x32xbf16>
    %109 = vector.shape_cast %108 : vector<1x32x32xbf16> to vector<32x32xbf16>
    %cst_69 = arith.constant dense<0.000000e+00> : vector<8x32xf32>
    %110 = tpu.matmul %107, %109, %cst_69 {dimension_numbers = #tpu.dot_dimension_numbers<[1], [0], [0], [1], [0, 0, 1, 1], [], []>} : vector<8x32xbf16>, vector<32x32xbf16>, vector<8x32xf32> -> vector<8x32xf32>
    %c0_70 = arith.constant 0 : index
    %c0_71 = arith.constant 0 : index
    %c0_72 = arith.constant 0 : index
    %111 = vector.load %arg11[%c0_70, %c0_71, %c0_72] : memref<1x1x32xf32, #tpu.memory_space<vmem>>, vector<1x1x32xf32>
    %112 = vector.shape_cast %111 : vector<1x1x32xf32> to vector<1x32xf32>
    %113 = vector.broadcast %112 : vector<1x32xf32> to vector<8x32xf32>
    %114 = arith.addf %110, %113 : vector<8x32xf32>
    %115 = arith.addf %96, %114 : vector<8x32xf32>
    %c0_73 = arith.constant 0 : index
    %c1 = arith.constant 1 : index
    %c0_74 = arith.constant 0 : index
    %c0_75 = arith.constant 0 : index
    %116 = vector.load %arg12[%c0_73, %c1, %c0_74, %c0_75] : memref<1x2x1x32xf32, #tpu.memory_space<vmem>>, vector<1x1x1x32xf32>
    %117 = vector.shape_cast %116 : vector<1x1x1x32xf32> to vector<1x32xf32>
    %c0_76 = arith.constant 0 : index
    %c1_77 = arith.constant 1 : index
    %c0_78 = arith.constant 0 : index
    %c0_79 = arith.constant 0 : index
    %118 = vector.load %arg13[%c0_76, %c1_77, %c0_78, %c0_79] : memref<1x2x1x32xf32, #tpu.memory_space<vmem>>, vector<1x1x1x32xf32>
    %119 = vector.shape_cast %118 : vector<1x1x1x32xf32> to vector<1x32xf32>
    %cst_80 = arith.constant dense<0.000000e+00> : vector<8xf32>
    %120 = vector.multi_reduction <add>, %115, %cst_80 [1] : vector<8x32xf32> to vector<8xf32>
    %121 = vector.shape_cast %120 : vector<8xf32> to vector<8x1xf32>
    %cst_81 = arith.constant 3.200000e+01 : f32
    %122 = vector.broadcast %cst_81 : f32 to vector<8x1xf32>
    %123 = arith.divf %121, %122 : vector<8x1xf32>
    %124 = vector.broadcast %123 : vector<8x1xf32> to vector<8x32xf32>
    %125 = arith.subf %115, %124 : vector<8x32xf32>
    %126 = arith.mulf %125, %125 : vector<8x32xf32>
    %cst_82 = arith.constant dense<0.000000e+00> : vector<8xf32>
    %127 = vector.multi_reduction <add>, %126, %cst_82 [1] : vector<8x32xf32> to vector<8xf32>
    %128 = vector.shape_cast %127 : vector<8xf32> to vector<8x1xf32>
    %cst_83 = arith.constant 3.200000e+01 : f32
    %129 = vector.broadcast %cst_83 : f32 to vector<8x1xf32>
    %130 = arith.divf %128, %129 : vector<8x1xf32>
    %131 = vector.broadcast %123 : vector<8x1xf32> to vector<8x32xf32>
    %132 = arith.subf %115, %131 : vector<8x32xf32>
    %cst_84 = arith.constant 9.99999974E-6 : f32
    %133 = vector.broadcast %cst_84 : f32 to vector<8x1xf32>
    %134 = arith.addf %130, %133 : vector<8x1xf32>
    %135 = math.rsqrt %134 : vector<8x1xf32>
    %136 = vector.broadcast %135 : vector<8x1xf32> to vector<8x32xf32>
    %137 = arith.mulf %132, %136 : vector<8x32xf32>
    %138 = vector.broadcast %117 : vector<1x32xf32> to vector<8x32xf32>
    %139 = arith.mulf %137, %138 : vector<8x32xf32>
    %140 = vector.broadcast %119 : vector<1x32xf32> to vector<8x32xf32>
    %141 = arith.addf %139, %140 : vector<8x32xf32>
    %c0_85 = arith.constant 0 : index
    %c0_86 = arith.constant 0 : index
    %142 = vector.load %arg17[%c0_85, %c0_86] : memref<8x32xf32, #tpu.memory_space<vmem>>, vector<8x32xf32>
    tpu.vector_store %arg17[%c0_85, %c0_86], %141 {strides = array<i32>} : memref<8x32xf32, #tpu.memory_space<vmem>>, vector<8x32xf32>,
    %c1_i32 = arith.constant 1 : i32
    %143 = arith.cmpi eq, %arg1, %c1_i32 : i32
    %144 = arith.extui %143 : i1 to i32
    %c0_i32_87 = arith.constant 0 : i32
    %145 = arith.cmpi ne, %144, %c0_i32_87 : i32
    scf.if %145 {
      %c0_88 = arith.constant 0 : index
      %c0_89 = arith.constant 0 : index
      %146 = vector.load %arg14[%c0_88, %c0_89] : memref<1x32xf32, #tpu.memory_space<vmem>>, vector<1x32xf32>
      %c0_90 = arith.constant 0 : index
      %c0_91 = arith.constant 0 : index
      %147 = vector.load %arg15[%c0_90, %c0_91] : memref<1x32xf32, #tpu.memory_space<vmem>>, vector<1x32xf32>
      %cst_92 = arith.constant dense<0.000000e+00> : vector<8xf32>
      %148 = vector.multi_reduction <add>, %141, %cst_92 [1] : vector<8x32xf32> to vector<8xf32>
      %149 = vector.shape_cast %148 : vector<8xf32> to vector<8x1xf32>
      %cst_93 = arith.constant 3.200000e+01 : f32
      %150 = vector.broadcast %cst_93 : f32 to vector<8x1xf32>
      %151 = arith.divf %149, %150 : vector<8x1xf32>
      %152 = vector.broadcast %151 : vector<8x1xf32> to vector<8x32xf32>
      %153 = arith.subf %141, %152 : vector<8x32xf32>
      %154 = arith.mulf %153, %153 : vector<8x32xf32>
      %cst_94 = arith.constant dense<0.000000e+00> : vector<8xf32>
      %155 = vector.multi_reduction <add>, %154, %cst_94 [1] : vector<8x32xf32> to vector<8xf32>
      %156 = vector.shape_cast %155 : vector<8xf32> to vector<8x1xf32>
      %cst_95 = arith.constant 3.200000e+01 : f32
      %157 = vector.broadcast %cst_95 : f32 to vector<8x1xf32>
      %158 = arith.divf %156, %157 : vector<8x1xf32>
      %159 = vector.broadcast %151 : vector<8x1xf32> to vector<8x32xf32>
      %160 = arith.subf %141, %159 : vector<8x32xf32>
      %cst_96 = arith.constant 9.99999974E-6 : f32
      %161 = vector.broadcast %cst_96 : f32 to vector<8x1xf32>
      %162 = arith.addf %158, %161 : vector<8x1xf32>
      %163 = math.rsqrt %162 : vector<8x1xf32>
      %164 = vector.broadcast %163 : vector<8x1xf32> to vector<8x32xf32>
      %165 = arith.mulf %160, %164 : vector<8x32xf32>
      %166 = vector.broadcast %146 : vector<1x32xf32> to vector<8x32xf32>
      %167 = arith.mulf %165, %166 : vector<8x32xf32>
      %168 = vector.broadcast %147 : vector<1x32xf32> to vector<8x32xf32>
      %169 = arith.addf %167, %168 : vector<8x32xf32>
      %c0_97 = arith.constant 0 : index
      %c0_98 = arith.constant 0 : index
      %170 = vector.load %arg16[%c0_97, %c0_98] : memref<8x32xf32, #tpu.memory_space<vmem>>, vector<8x32xf32>
      tpu.vector_store %arg16[%c0_97, %c0_98], %169 {strides = array<i32>} : memref<8x32xf32, #tpu.memory_space<vmem>>, vector<8x32xf32>,
    } else {
    }
    return
  }
  func.func @transform_0(%arg0: i32, %arg1: i32) -> (i32, i32, i32) {
    %c0_i32 = arith.constant 0 : i32
    %c0_i32_0 = arith.constant 0 : i32
    %c0_i32_1 = arith.constant 0 : i32
    return %arg0, %c0_i32, %c0_i32_0 : i32, i32, i32
  }
  func.func @transform_1(%arg0: i32, %arg1: i32) -> (i32, i32) {
    %c0_i32 = arith.constant 0 : i32
    %c0_i32_0 = arith.constant 0 : i32
    return %arg0, %c0_i32 : i32, i32
  }
  func.func @transform_2(%arg0: i32, %arg1: i32) -> (i32, i32, i32, i32) {
    %c0_i32 = arith.constant 0 : i32
    %c0_i32_0 = arith.constant 0 : i32
    %c0_i32_1 = arith.constant 0 : i32
    %c0_i32_2 = arith.constant 0 : i32
    return %arg1, %c0_i32, %c0_i32_0, %c0_i32_1 : i32, i32, i32, i32
  }
  func.func @transform_3(%arg0: i32, %arg1: i32) -> (i32, i32, i32, i32) {
    %c0_i32 = arith.constant 0 : i32
    %c0_i32_0 = arith.constant 0 : i32
    %c0_i32_1 = arith.constant 0 : i32
    %c0_i32_2 = arith.constant 0 : i32
    return %arg1, %c0_i32, %c0_i32_0, %c0_i32_1 : i32, i32, i32, i32
  }
  func.func @transform_4(%arg0: i32, %arg1: i32) -> (i32, i32, i32, i32) {
    %c0_i32 = arith.constant 0 : i32
    %c0_i32_0 = arith.constant 0 : i32
    %c0_i32_1 = arith.constant 0 : i32
    %c0_i32_2 = arith.constant 0 : i32
    return %arg1, %c0_i32, %c0_i32_0, %c0_i32_1 : i32, i32, i32, i32
  }
  func.func @transform_5(%arg0: i32, %arg1: i32) -> (i32, i32, i32) {
    %c0_i32 = arith.constant 0 : i32
    %c0_i32_0 = arith.constant 0 : i32
    %c0_i32_1 = arith.constant 0 : i32
    return %arg1, %c0_i32, %c0_i32_0 : i32, i32, i32
  }
  func.func @transform_6(%arg0: i32, %arg1: i32) -> (i32, i32, i32) {
    %c0_i32 = arith.constant 0 : i32
    %c0_i32_0 = arith.constant 0 : i32
    %c0_i32_1 = arith.constant 0 : i32
    return %arg1, %c0_i32, %c0_i32_0 : i32, i32, i32
  }
  func.func @transform_7(%arg0: i32, %arg1: i32) -> (i32, i32, i32) {
    %c0_i32 = arith.constant 0 : i32
    %c0_i32_0 = arith.constant 0 : i32
    %c0_i32_1 = arith.constant 0 : i32
    return %arg1, %c0_i32, %c0_i32_0 : i32, i32, i32
  }
  func.func @transform_8(%arg0: i32, %arg1: i32) -> (i32, i32, i32) {
    %c0_i32 = arith.constant 0 : i32
    %c0_i32_0 = arith.constant 0 : i32
    %c0_i32_1 = arith.constant 0 : i32
    return %arg1, %c0_i32, %c0_i32_0 : i32, i32, i32
  }
  func.func @transform_9(%arg0: i32, %arg1: i32) -> (i32, i32, i32) {
    %c0_i32 = arith.constant 0 : i32
    %c0_i32_0 = arith.constant 0 : i32
    %c0_i32_1 = arith.constant 0 : i32
    return %arg1, %c0_i32, %c0_i32_0 : i32, i32, i32
  }
  func.func @transform_10(%arg0: i32, %arg1: i32) -> (i32, i32, i32, i32) {
    %c0_i32 = arith.constant 0 : i32
    %c0_i32_0 = arith.constant 0 : i32
    %c0_i32_1 = arith.constant 0 : i32
    %c0_i32_2 = arith.constant 0 : i32
    return %arg1, %c0_i32, %c0_i32_0, %c0_i32_1 : i32, i32, i32, i32
  }
  func.func @transform_11(%arg0: i32, %arg1: i32) -> (i32, i32, i32, i32) {
    %c0_i32 = arith.constant 0 : i32
    %c0_i32_0 = arith.constant 0 : i32
    %c0_i32_1 = arith.constant 0 : i32
    %c0_i32_2 = arith.constant 0 : i32
    return %arg1, %c0_i32, %c0_i32_0, %c0_i32_1 : i32, i32, i32, i32
  }
  func.func @transform_12(%arg0: i32, %arg1: i32) -> (i32, i32) {
    %c0_i32 = arith.constant 0 : i32
    %c0_i32_0 = arith.constant 0 : i32
    %c0_i32_1 = arith.constant 0 : i32
    return %c0_i32, %c0_i32_0 : i32, i32
  }
  func.func @transform_13(%arg0: i32, %arg1: i32) -> (i32, i32) {
    %c0_i32 = arith.constant 0 : i32
    %c0_i32_0 = arith.constant 0 : i32
    %c0_i32_1 = arith.constant 0 : i32
    return %c0_i32, %c0_i32_0 : i32, i32
  }
  func.func @transform_14(%arg0: i32, %arg1: i32) -> (i32, i32) {
    %c0_i32 = arith.constant 0 : i32
    %c0_i32_0 = arith.constant 0 : i32
    return %arg0, %c0_i32 : i32, i32
  }
}

</mosaic_0001>

<llo_original>
// kernel: generate_task_model_forward.2
$region0: #{generate_task_model_forward.2}
  #allocation0 [shape = 'u32[]', space=smem, size = 0x4, offset = 0x4, fixed_abs, tag = 'smem constant byte address 0x4 - core index']
  #allocation1 [shape = 'u32[144,128]{1,0:T(1,128)}', space=vmem, size = 0x12000, scoped, tag = 'internal scratch']
  #allocation2 [shape = 'f32[8,32]{1,0:T(8,128)}', space=vmem, size = 0x1000, scoped, tag = 'scratch operand']
  %s0 = inlined_call_operand.vmem [shape: s32[2,1,8], index: 0, kind: input, shape index: {}]
  %s1 = inlined_call_operand.vmem [shape: f32[16,32], index: 1, kind: input, shape index: {}]
  %s2 = inlined_call_operand.vmem [shape: bf16[2,12,32,8], index: 2, kind: input, shape index: {}]
  %s3 = inlined_call_operand.vmem [shape: f32[2,12,1,8], index: 3, kind: input, shape index: {}]
  %s4 = inlined_call_operand.vmem [shape: bf16[2,4,8,32], index: 4, kind: input, shape index: {}]
  %s5 = inlined_call_operand.vmem [shape: f32[2,1,32], index: 5, kind: input, shape index: {}]
  %s6 = inlined_call_operand.vmem [shape: bf16[2,32,32], index: 6, kind: input, shape index: {}]
  %s7 = inlined_call_operand.vmem [shape: f32[2,1,32], index: 7, kind: input, shape index: {}]
  %s8 = inlined_call_operand.vmem [shape: bf16[2,32,32], index: 8, kind: input, shape index: {}]
  %s9 = inlined_call_operand.vmem [shape: f32[2,1,32], index: 9, kind: input, shape index: {}]
  %s10 = inlined_call_operand.vmem [shape: f32[2,2,1,32], index: 10, kind: input, shape index: {}]
  %s11 = inlined_call_operand.vmem [shape: f32[2,2,1,32], index: 11, kind: input, shape index: {}]
  %s12 = inlined_call_operand.vmem [shape: f32[1,32], index: 12, kind: input, shape index: {}]
  %s13 = inlined_call_operand.vmem [shape: f32[1,32], index: 13, kind: input, shape index: {}]
  %s14 = inlined_call_operand.vmem [shape: f32[16,32], index: 14, kind: output, shape index: {}]
  %s15 = sld [smem:[#allocation0]]
  $region97: #{generate_task_model_forward.2} parent=0
    _
  %s17 = ssub.s32 1, %s15
  %s18 = scalar_select 0, %s17, %s15
  loop: start=0, step=1, limit=6
  $region2: #{generate_task_model_forward.2} parent=0 // loop_pre_header
    _
  $region3: #{generate_task_model_forward.2} parent=0 // loop_header
    %s20 = sphi 0, %s24
    %p21 = scmp.ge.s32.totalorder %s20, 6
    %s27 = sphi 0, %s39
    %s28 = sphi 0, %s35
    %s29 = sphi 0, %s27
    %s30 = sphi 0, %s28
    %s31 = sphi 0, %s29
    %s32 = sphi 0, %s30
    %s42 = sphi 0, %s44
    %s45 = sphi 0, %s42
    %s46 = sphi 0, %s45
    %s62 = sphi 0, %s46
    %s68 = sphi 0, %s70
    %s71 = sphi 0, %s68
    %s72 = sphi 0, %s71
    %s88 = sphi 0, %s72
    %s94 = sphi 0, %s96
    %s97 = sphi 0, %s94
    %s98 = sphi 0, %s97
    %s114 = sphi 0, %s98
    %s120 = sphi 0, %s122
    %s123 = sphi 0, %s120
    %s124 = sphi 0, %s123
    %s140 = sphi 0, %s124
    %s146 = sphi 0, %s148
    %s149 = sphi 0, %s146
    %s150 = sphi 0, %s149
    %s166 = sphi 0, %s150
    %s172 = sphi 0, %s174
    %s175 = sphi 0, %s172
    %s176 = sphi 0, %s175
    %s192 = sphi 0, %s176
    %s198 = sphi 0, %s200
    %s201 = sphi 0, %s198
    %s202 = sphi 0, %s201
    %s218 = sphi 0, %s202
    %s224 = sphi 0, %s226
    %s227 = sphi 0, %s224
    %s228 = sphi 0, %s227
    %s244 = sphi 0, %s228
    %s250 = sphi 0, %s252
    %s253 = sphi 0, %s250
    %s254 = sphi 0, %s253
    %s270 = sphi 0, %s254
    %s276 = sphi 0, %s278
    %s279 = sphi 0, %s276
    %s280 = sphi 0, %s279
    %s296 = sphi 0, %s280
    %s302 = sphi 0, %s304
    %s305 = sphi 0, %s302
    %s306 = sphi 0, %s305
    %s322 = sphi 0, %s306
    %s328 = sphi 0, %s330
    %s331 = sphi 0, %s328
    %s332 = sphi 0, %s331
    %s348 = sphi 0, %s332
    %s352 = sphi 0, %s352
    %s354 = sphi 0, %s352
    %s355 = sphi 0, %s354
    %s369 = sphi 0, %s355
    %s373 = sphi 0, %s373
    %s375 = sphi 0, %s373
    %s376 = sphi 0, %s375
    %s390 = sphi 0, %s376
    %s396 = sphi 0, %s398
    %s399 = sphi 0, %s396
    %s400 = sphi 0, %s399
    %s416 = sphi 0, %s400
  $region4: #{generate_task_model_forward.2} parent=0 // loop_header_branch
    %23 = sbr.rel (%p21) target = $region8
  $region5: #{generate_task_model_forward.2} parent=0 // loop_body
    %s25 = ssub.s32 %s20, 1
    %s26 = ssub.s32 %s20, 2
    %s33 = sadd.s32 1, %s28
    %p34 = scmp.ge.s32.totalorder %s33, 2
    %s35 = scalar_select %p34, 0, %s33
    %s36 = sadd.s32 1, %s27
    %s37 = scalar_select %p34, %s36, %s27
    %p38 = scmp.ge.s32.totalorder %s37, 2
    %s39 = scalar_select %p38, 0, %s37
    %s40 = ssub.s32 %s27, %s39
    %p41 = scmp.eq.s32.totalorder %s40, 0
    %s43 = sadd.s32 %s42, 1
    %s44 = scalar_select %p41, %s42, %s43
    %p47 = pneg %p41
    %p48 = scmp.eq.s32.totalorder %s20, 3
    %p49 = por %p47, %p48
    %p50 = scmp.ne.s32.totalorder %s42, %s45
    %p51 = scmp.eq.s32.totalorder %s20, 0
    %p52 = por %p50, %p51
    %p53 = scmp.ne.s32.totalorder %s42, %s45
    %p54 = scmp.eq.s32.totalorder %s25, 3
    %p55 = por %p53, %p54
    %p56 = scmp.ne.s32.totalorder %s45, %s46
    %p57 = scmp.eq.s32.totalorder %s25, 0
    %p58 = por %p56, %p57
    %p59 = scmp.ne.s32.totalorder %s45, %s46
    %p60 = scmp.eq.s32.totalorder %s26, 3
    %p61 = por %p59, %p60
    %p63 = scmp.ne.s32.totalorder %s46, %s62
    %p64 = scmp.eq.s32.totalorder %s26, 0
    %p65 = por %p63, %p64
    %s66 = ssub.s32 %s27, %s39
    %p67 = scmp.eq.s32.totalorder %s66, 0
    %s69 = sadd.s32 %s68, 1
    %s70 = scalar_select %p67, %s68, %s69
    %p73 = pneg %p67
    %p74 = scmp.eq.s32.totalorder %s20, 3
    %p75 = por %p73, %p74
    %p76 = scmp.ne.s32.totalorder %s68, %s71
    %p77 = scmp.eq.s32.totalorder %s20, 0
    %p78 = por %p76, %p77
    %p79 = scmp.ne.s32.totalorder %s68, %s71
    %p80 = scmp.eq.s32.totalorder %s25, 3
    %p81 = por %p79, %p80
    %p82 = scmp.ne.s32.totalorder %s71, %s72
    %p83 = scmp.eq.s32.totalorder %s25, 0
    %p84 = por %p82, %p83
    %p85 = scmp.ne.s32.totalorder %s71, %s72
    %p86 = scmp.eq.s32.totalorder %s26, 3
    %p87 = por %p85, %p86
    %p89 = scmp.ne.s32.totalorder %s72, %s88
    %p90 = scmp.eq.s32.totalorder %s26, 0
    %p91 = por %p89, %p90
    %s92 = ssub.s32 %s28, %s35
    %p93 = scmp.eq.s32.totalorder %s92, 0
    %s95 = sadd.s32 %s94, 1
    %s96 = scalar_select %p93, %s94, %s95
    %p99 = pneg %p93
    %p100 = scmp.eq.s32.totalorder %s20, 3
    %p101 = por %p99, %p100
    %p102 = scmp.ne.s32.totalorder %s94, %s97
    %p103 = scmp.eq.s32.totalorder %s20, 0
    %p104 = por %p102, %p103
    %p105 = scmp.ne.s32.totalorder %s94, %s97
    %p106 = scmp.eq.s32.totalorder %s25, 3
    %p107 = por %p105, %p106
    %p108 = scmp.ne.s32.totalorder %s97, %s98
    %p109 = scmp.eq.s32.totalorder %s25, 0
    %p110 = por %p108, %p109
    %p111 = scmp.ne.s32.totalorder %s97, %s98
    %p112 = scmp.eq.s32.totalorder %s26, 3
    %p113 = por %p111, %p112
    %p115 = scmp.ne.s32.totalorder %s98, %s114
    %p116 = scmp.eq.s32.totalorder %s26, 0
    %p117 = por %p115, %p116
    %s118 = ssub.s32 %s28, %s35
    %p119 = scmp.eq.s32.totalorder %s118, 0
    %s121 = sadd.s32 %s120, 1
    %s122 = scalar_select %p119, %s120, %s121
    %p125 = pneg %p119
    %p126 = scmp.eq.s32.totalorder %s20, 3
    %p127 = por %p125, %p126
    %p128 = scmp.ne.s32.totalorder %s120, %s123
    %p129 = scmp.eq.s32.totalorder %s20, 0
    %p130 = por %p128, %p129
    %p131 = scmp.ne.s32.totalorder %s120, %s123
    %p132 = scmp.eq.s32.totalorder %s25, 3
    %p133 = por %p131, %p132
    %p134 = scmp.ne.s32.totalorder %s123, %s124
    %p135 = scmp.eq.s32.totalorder %s25, 0
    %p136 = por %p134, %p135
    %p137 = scmp.ne.s32.totalorder %s123, %s124
    %p138 = scmp.eq.s32.totalorder %s26, 3
    %p139 = por %p137, %p138
    %p141 = scmp.ne.s32.totalorder %s124, %s140
    %p142 = scmp.eq.s32.totalorder %s26, 0
    %p143 = por %p141, %p142
    %s144 = ssub.s32 %s28, %s35
    %p145 = scmp.eq.s32.totalorder %s144, 0
    %s147 = sadd.s32 %s146, 1
    %s148 = scalar_select %p145, %s146, %s147
    %p151 = pneg %p145
    %p152 = scmp.eq.s32.totalorder %s20, 3
    %p153 = por %p151, %p152
    %p154 = scmp.ne.s32.totalorder %s146, %s149
    %p155 = scmp.eq.s32.totalorder %s20, 0
    %p156 = por %p154, %p155
    %p157 = scmp.ne.s32.totalorder %s146, %s149
    %p158 = scmp.eq.s32.totalorder %s25, 3
    %p159 = por %p157, %p158
    %p160 = scmp.ne.s32.totalorder %s149, %s150
    %p161 = scmp.eq.s32.totalorder %s25, 0
    %p162 = por %p160, %p161
    %p163 = scmp.ne.s32.totalorder %s149, %s150
    %p164 = scmp.eq.s32.totalorder %s26, 3
    %p165 = por %p163, %p164
    %p167 = scmp.ne.s32.totalorder %s150, %s166
    %p168 = scmp.eq.s32.totalorder %s26, 0
    %p169 = por %p167, %p168
    %s170 = ssub.s32 %s28, %s35
    %p171 = scmp.eq.s32.totalorder %s170, 0
    %s173 = sadd.s32 %s172, 1
    %s174 = scalar_select %p171, %s172, %s173
    %p177 = pneg %p171
    %p178 = scmp.eq.s32.totalorder %s20, 3
    %p179 = por %p177, %p178
    %p180 = scmp.ne.s32.totalorder %s172, %s175
    %p181 = scmp.eq.s32.totalorder %s20, 0
    %p182 = por %p180, %p181
    %p183 = scmp.ne.s32.totalorder %s172, %s175
    %p184 = scmp.eq.s32.totalorder %s25, 3
    %p185 = por %p183, %p184
    %p186 = scmp.ne.s32.totalorder %s175, %s176
    %p187 = scmp.eq.s32.totalorder %s25, 0
    %p188 = por %p186, %p187
    %p189 = scmp.ne.s32.totalorder %s175, %s176
    %p190 = scmp.eq.s32.totalorder %s26, 3
    %p191 = por %p189, %p190
    %p193 = scmp.ne.s32.totalorder %s176, %s192
    %p194 = scmp.eq.s32.totalorder %s26, 0
    %p195 = por %p193, %p194
    %s196 = ssub.s32 %s28, %s35
    %p197 = scmp.eq.s32.totalorder %s196, 0
    %s199 = sadd.s32 %s198, 1
    %s200 = scalar_select %p197, %s198, %s199
    %p203 = pneg %p197
    %p204 = scmp.eq.s32.totalorder %s20, 3
    %p205 = por %p203, %p204
    %p206 = scmp.ne.s32.totalorder %s198, %s201
    %p207 = scmp.eq.s32.totalorder %s20, 0
    %p208 = por %p206, %p207
    %p209 = scmp.ne.s32.totalorder %s198, %s201
    %p210 = scmp.eq.s32.totalorder %s25, 3
    %p211 = por %p209, %p210
    %p212 = scmp.ne.s32.totalorder %s201, %s202
    %p213 = scmp.eq.s32.totalorder %s25, 0
    %p214 = por %p212, %p213
    %p215 = scmp.ne.s32.totalorder %s201, %s202
    %p216 = scmp.eq.s32.totalorder %s26, 3
    %p217 = por %p215, %p216
    %p219 = scmp.ne.s32.totalorder %s202, %s218
    %p220 = scmp.eq.s32.totalorder %s26, 0
    %p221 = por %p219, %p220
    %s222 = ssub.s32 %s28, %s35
    %p223 = scmp.eq.s32.totalorder %s222, 0
    %s225 = sadd.s32 %s224, 1
    %s226 = scalar_select %p223, %s224, %s225
    %p229 = pneg %p223
    %p230 = scmp.eq.s32.totalorder %s20, 3
    %p231 = por %p229, %p230
    %p232 = scmp.ne.s32.totalorder %s224, %s227
    %p233 = scmp.eq.s32.totalorder %s20, 0
    %p234 = por %p232, %p233
    %p235 = scmp.ne.s32.totalorder %s224, %s227
    %p236 = scmp.eq.s32.totalorder %s25, 3
    %p237 = por %p235, %p236
    %p238 = scmp.ne.s32.totalorder %s227, %s228
    %p239 = scmp.eq.s32.totalorder %s25, 0
    %p240 = por %p238, %p239
    %p241 = scmp.ne.s32.totalorder %s227, %s228
    %p242 = scmp.eq.s32.totalorder %s26, 3
    %p243 = por %p241, %p242
    %p245 = scmp.ne.s32.totalorder %s228, %s244
    %p246 = scmp.eq.s32.totalorder %s26, 0
    %p247 = por %p245, %p246
    %s248 = ssub.s32 %s28, %s35
    %p249 = scmp.eq.s32.totalorder %s248, 0
    %s251 = sadd.s32 %s250, 1
    %s252 = scalar_select %p249, %s250, %s251
    %p255 = pneg %p249
    %p256 = scmp.eq.s32.totalorder %s20, 3
    %p257 = por %p255, %p256
    %p258 = scmp.ne.s32.totalorder %s250, %s253
    %p259 = scmp.eq.s32.totalorder %s20, 0
    %p260 = por %p258, %p259
    %p261 = scmp.ne.s32.totalorder %s250, %s253
    %p262 = scmp.eq.s32.totalorder %s25, 3
    %p263 = por %p261, %p262
    %p264 = scmp.ne.s32.totalorder %s253, %s254
    %p265 = scmp.eq.s32.totalorder %s25, 0
    %p266 = por %p264, %p265
    %p267 = scmp.ne.s32.totalorder %s253, %s254
    %p268 = scmp.eq.s32.totalorder %s26, 3
    %p269 = por %p267, %p268
    %p271 = scmp.ne.s32.totalorder %s254, %s270
    %p272 = scmp.eq.s32.totalorder %s26, 0
    %p273 = por %p271, %p272
    %s274 = ssub.s32 %s28, %s35
    %p275 = scmp.eq.s32.totalorder %s274, 0
    %s277 = sadd.s32 %s276, 1
    %s278 = scalar_select %p275, %s276, %s277
    %p281 = pneg %p275
    %p282 = scmp.eq.s32.totalorder %s20, 3
    %p283 = por %p281, %p282
    %p284 = scmp.ne.s32.totalorder %s276, %s279
    %p285 = scmp.eq.s32.totalorder %s20, 0
    %p286 = por %p284, %p285
    %p287 = scmp.ne.s32.totalorder %s276, %s279
    %p288 = scmp.eq.s32.totalorder %s25, 3
    %p289 = por %p287, %p288
    %p290 = scmp.ne.s32.totalorder %s279, %s280
    %p291 = scmp.eq.s32.totalorder %s25, 0
    %p292 = por %p290, %p291
    %p293 = scmp.ne.s32.totalorder %s279, %s280
    %p294 = scmp.eq.s32.totalorder %s26, 3
    %p295 = por %p293, %p294
    %p297 = scmp.ne.s32.totalorder %s280, %s296
    %p298 = scmp.eq.s32.totalorder %s26, 0
    %p299 = por %p297, %p298
    %s300 = ssub.s32 %s28, %s35
    %p301 = scmp.eq.s32.totalorder %s300, 0
    %s303 = sadd.s32 %s302, 1
    %s304 = scalar_select %p301, %s302, %s303
    %p307 = pneg %p301
    %p308 = scmp.eq.s32.totalorder %s20, 3
    %p309 = por %p307, %p308
    %p310 = scmp.ne.s32.totalorder %s302, %s305
    %p311 = scmp.eq.s32.totalorder %s20, 0
    %p312 = por %p310, %p311
    %p313 = scmp.ne.s32.totalorder %s302, %s305
    %p314 = scmp.eq.s32.totalorder %s25, 3
    %p315 = por %p313, %p314
    %p316 = scmp.ne.s32.totalorder %s305, %s306
    %p317 = scmp.eq.s32.totalorder %s25, 0
    %p318 = por %p316, %p317
    %p319 = scmp.ne.s32.totalorder %s305, %s306
    %p320 = scmp.eq.s32.totalorder %s26, 3
    %p321 = por %p319, %p320
    %p323 = scmp.ne.s32.totalorder %s306, %s322
    %p324 = scmp.eq.s32.totalorder %s26, 0
    %p325 = por %p323, %p324
    %s326 = ssub.s32 %s28, %s35
    %p327 = scmp.eq.s32.totalorder %s326, 0
    %s329 = sadd.s32 %s328, 1
    %s330 = scalar_select %p327, %s328, %s329
    %p333 = pneg %p327
    %p334 = scmp.eq.s32.totalorder %s20, 3
    %p335 = por %p333, %p334
    %p336 = scmp.ne.s32.totalorder %s328, %s331
    %p337 = scmp.eq.s32.totalorder %s20, 0
    %p338 = por %p336, %p337
    %p339 = scmp.ne.s32.totalorder %s328, %s331
    %p340 = scmp.eq.s32.totalorder %s25, 3
    %p341 = por %p339, %p340
    %p342 = scmp.ne.s32.totalorder %s331, %s332
    %p343 = scmp.eq.s32.totalorder %s25, 0
    %p344 = por %p342, %p343
    %p345 = scmp.ne.s32.totalorder %s331, %s332
    %p346 = scmp.eq.s32.totalorder %s26, 3
    %p347 = por %p345, %p346
    %p349 = scmp.ne.s32.totalorder %s332, %s348
    %p350 = scmp.eq.s32.totalorder %s26, 0
    %p351 = por %p349, %p350
    %s353 = sadd.s32 %s352, 1
    %p356 = scmp.eq.s32.totalorder %s20, 3
    %p357 = scmp.ne.s32.totalorder %s352, %s354
    %p358 = scmp.eq.s32.totalorder %s20, 0
    %p359 = por %p357, %p358
    %p360 = scmp.ne.s32.totalorder %s352, %s354
    %p361 = scmp.eq.s32.totalorder %s25, 3
    %p362 = por %p360, %p361
    %p363 = scmp.ne.s32.totalorder %s354, %s355
    %p364 = scmp.eq.s32.totalorder %s25, 0
    %p365 = por %p363, %p364
    %p366 = scmp.ne.s32.totalorder %s354, %s355
    %p367 = scmp.eq.s32.totalorder %s26, 3
    %p368 = por %p366, %p367
    %p370 = scmp.ne.s32.totalorder %s355, %s369
    %p371 = scmp.eq.s32.totalorder %s26, 0
    %p372 = por %p370, %p371
    %s374 = sadd.s32 %s373, 1
    %p377 = scmp.eq.s32.totalorder %s20, 3
    %p378 = scmp.ne.s32.totalorder %s373, %s375
    %p379 = scmp.eq.s32.totalorder %s20, 0
    %p380 = por %p378, %p379
    %p381 = scmp.ne.s32.totalorder %s373, %s375
    %p382 = scmp.eq.s32.totalorder %s25, 3
    %p383 = por %p381, %p382
    %p384 = scmp.ne.s32.totalorder %s375, %s376
    %p385 = scmp.eq.s32.totalorder %s25, 0
    %p386 = por %p384, %p385
    %p387 = scmp.ne.s32.totalorder %s375, %s376
    %p388 = scmp.eq.s32.totalorder %s26, 3
    %p389 = por %p387, %p388
    %p391 = scmp.ne.s32.totalorder %s376, %s390
    %p392 = scmp.eq.s32.totalorder %s26, 0
    %p393 = por %p391, %p392
    %s394 = ssub.s32 %s27, %s39
    %p395 = scmp.eq.s32.totalorder %s394, 0
    %s397 = sadd.s32 %s396, 1
    %s398 = scalar_select %p395, %s396, %s397
    %p401 = pneg %p395
    %p402 = scmp.eq.s32.totalorder %s20, 3
    %p403 = por %p401, %p402
    %p404 = scmp.ne.s32.totalorder %s396, %s399
    %p405 = scmp.eq.s32.totalorder %s20, 0
    %p406 = por %p404, %p405
    %p407 = scmp.ne.s32.totalorder %s396, %s399
    %p408 = scmp.eq.s32.totalorder %s25, 3
    %p409 = por %p407, %p408
    %p410 = scmp.ne.s32.totalorder %s399, %s400
    %p411 = scmp.eq.s32.totalorder %s25, 0
    %p412 = por %p410, %p411
    %p413 = scmp.ne.s32.totalorder %s399, %s400
    %p414 = scmp.eq.s32.totalorder %s26, 3
    %p415 = por %p413, %p414
    %p417 = scmp.ne.s32.totalorder %s400, %s416
    %p418 = scmp.eq.s32.totalorder %s26, 0
    %p419 = por %p417, %p418
    %p420 = scmp.le.s32.totalorder 1, %s20
    %p421 = scmp.lt.s32.totalorder %s20, 5
    %p422 = pnand %p420, %p421
    %p423 = pneg %p422
    // Predicated region
    $region9: #{generate_task_model_forward.2} parent=5 // pred_check
      _
    $region10: #{generate_task_model_forward.2} parent=5 // pred_check_branch
      %425 = sbr.rel (%p422) target = $region12
    $region11: #{generate_task_model_forward.2} parent=5 // pred_region
      %s426 = ssub.s32 %s20, 1
      // Predicated region
      $region13: #{generate_task_model_forward.2} parent=11 // pred_check
        %p427 = pneg %p365
      $region14: #{generate_task_model_forward.2} parent=11 // pred_check_branch
        %429 = sbr.rel (%p427) target = $region16
      $region15: #{generate_task_model_forward.2} parent=11 // pred_region
        _
      $region16: #{generate_task_model_forward.2} parent=11 // pred_fallthru
        _
      // Predicated region
      $region17: #{generate_task_model_forward.2} parent=11 // pred_check
        %p430 = pneg %p386
      $region18: #{generate_task_model_forward.2} parent=11 // pred_check_branch
        %432 = sbr.rel (%p430) target = $region20
      $region19: #{generate_task_model_forward.2} parent=11 // pred_region
        _
      $region20: #{generate_task_model_forward.2} parent=11 // pred_fallthru
        _
    $region12: #{generate_task_model_forward.2} parent=5 // pred_fallthru
      _
    %p433 = scmp.lt.s32.totalorder %s20, 4
    // Predicated region
    $region21: #{generate_task_model_forward.2} parent=5 // pred_check
      %p434 = pneg %p433
    $region22: #{generate_task_model_forward.2} parent=5 // pred_check_branch
      %436 = sbr.rel (%p434) target = $region24
    $region23: #{generate_task_model_forward.2} parent=5 // pred_region
      // Predicated region
      $region25: #{generate_task_model_forward.2} parent=23 // pred_check
        %p437 = pneg %p52
      $region26: #{generate_task_model_forward.2} parent=23 // pred_check_branch
        %439 = sbr.rel (%p437) target = $region28
      $region27: #{generate_task_model_forward.2} parent=23 // pred_region
        %p440 = scmp.lt.s32.totalorder %s27, 1
        %s441 = scalar_select %p440, %s27, 1
        %s442 = scalar_lea.vmem %s0, %s441
      $region28: #{generate_task_model_forward.2} parent=23 // pred_fallthru
        _
      // Predicated region
      $region29: #{generate_task_model_forward.2} parent=23 // pred_check
        %p443 = pneg %p78
      $region30: #{generate_task_model_forward.2} parent=23 // pred_check_branch
        %445 = sbr.rel (%p443) target = $region32
      $region31: #{generate_task_model_forward.2} parent=23 // pred_region
        %p446 = scmp.lt.s32.totalorder %s27, 1
        %s447 = scalar_select %p446, %s27, 1
        %s448 = smul.addr %s447, 8
        %s449 = scalar_lea.vmem %s1, %s448
      $region32: #{generate_task_model_forward.2} parent=23 // pred_fallthru
        _
      // Predicated region
      $region33: #{generate_task_model_forward.2} parent=23 // pred_check
        %p450 = pneg %p104
      $region34: #{generate_task_model_forward.2} parent=23 // pred_check_branch
        %452 = sbr.rel (%p450) target = $region36
      $region35: #{generate_task_model_forward.2} parent=23 // pred_region
        %p453 = scmp.lt.s32.totalorder %s28, 1
        %s454 = scalar_select %p453, %s28, 1
        %s455 = smul.addr %s454, 48
        %s456 = smul.addr %s455, 4
        %s457 = scalar_lea.vmem %s2, %s456
      $region36: #{generate_task_model_forward.2} parent=23 // pred_fallthru
        _
      // Predicated region
      $region37: #{generate_task_model_forward.2} parent=23 // pred_check
        %p458 = pneg %p130
      $region38: #{generate_task_model_forward.2} parent=23 // pred_check_branch
        %460 = sbr.rel (%p458) target = $region40
      $region39: #{generate_task_model_forward.2} parent=23 // pred_region
        %p461 = scmp.lt.s32.totalorder %s28, 1
        %s462 = scalar_select %p461, %s28, 1
        %s463 = smul.addr %s462, 12
        %s464 = scalar_lea.vmem %s3, %s463
      $region40: #{generate_task_model_forward.2} parent=23 // pred_fallthru
        _
      // Predicated region
      $region41: #{generate_task_model_forward.2} parent=23 // pred_check
        %p465 = pneg %p156
      $region42: #{generate_task_model_forward.2} parent=23 // pred_check_branch
        %467 = sbr.rel (%p465) target = $region44
      $region43: #{generate_task_model_forward.2} parent=23 // pred_region
        %p468 = scmp.lt.s32.totalorder %s28, 1
        %s469 = scalar_select %p468, %s28, 1
        %s470 = smul.addr %s469, 4
        %s471 = smul.addr %s470, 4
        %s472 = scalar_lea.vmem %s4, %s471
      $region44: #{generate_task_model_forward.2} parent=23 // pred_fallthru
        _
      // Predicated region
      $region45: #{generate_task_model_forward.2} parent=23 // pred_check
        %p473 = pneg %p182
      $region46: #{generate_task_model_forward.2} parent=23 // pred_check_branch
        %475 = sbr.rel (%p473) target = $region48
      $region47: #{generate_task_model_forward.2} parent=23 // pred_region
        %p476 = scmp.lt.s32.totalorder %s28, 1
        %s477 = scalar_select %p476, %s28, 1
        %s478 = scalar_lea.vmem %s5, %s477
      $region48: #{generate_task_model_forward.2} parent=23 // pred_fallthru
        _
      // Predicated region
      $region49: #{generate_task_model_forward.2} parent=23 // pred_check
        %p479 = pneg %p208
      $region50: #{generate_task_model_forward.2} parent=23 // pred_check_branch
        %481 = sbr.rel (%p479) target = $region52
      $region51: #{generate_task_model_forward.2} parent=23 // pred_region
        %p482 = scmp.lt.s32.totalorder %s28, 1
        %s483 = scalar_select %p482, %s28, 1
        %s484 = smul.addr %s483, 4
        %s485 = smul.addr %s484, 4
        %s486 = scalar_lea.vmem %s6, %s485
      $region52: #{generate_task_model_forward.2} parent=23 // pred_fallthru
        _
      // Predicated region
      $region53: #{generate_task_model_forward.2} parent=23 // pred_check
        %p487 = pneg %p234
      $region54: #{generate_task_model_forward.2} parent=23 // pred_check_branch
        %489 = sbr.rel (%p487) target = $region56
      $region55: #{generate_task_model_forward.2} parent=23 // pred_region
        %p490 = scmp.lt.s32.totalorder %s28, 1
        %s491 = scalar_select %p490, %s28, 1
        %s492 = scalar_lea.vmem %s7, %s491
      $region56: #{generate_task_model_forward.2} parent=23 // pred_fallthru
        _
      // Predicated region
      $region57: #{generate_task_model_forward.2} parent=23 // pred_check
        %p493 = pneg %p260
      $region58: #{generate_task_model_forward.2} parent=23 // pred_check_branch
        %495 = sbr.rel (%p493) target = $region60
      $region59: #{generate_task_model_forward.2} parent=23 // pred_region
        %p496 = scmp.lt.s32.totalorder %s28, 1
        %s497 = scalar_select %p496, %s28, 1
        %s498 = smul.addr %s497, 4
        %s499 = smul.addr %s498, 4
        %s500 = scalar_lea.vmem %s8, %s499
      $region60: #{generate_task_model_forward.2} parent=23 // pred_fallthru
        _
      // Predicated region
      $region61: #{generate_task_model_forward.2} parent=23 // pred_check
        %p501 = pneg %p286
      $region62: #{generate_task_model_forward.2} parent=23 // pred_check_branch
        %503 = sbr.rel (%p501) target = $region64
      $region63: #{generate_task_model_forward.2} parent=23 // pred_region
        %p504 = scmp.lt.s32.totalorder %s28, 1
        %s505 = scalar_select %p504, %s28, 1
        %s506 = scalar_lea.vmem %s9, %s505
      $region64: #{generate_task_model_forward.2} parent=23 // pred_fallthru
        _
      // Predicated region
      $region65: #{generate_task_model_forward.2} parent=23 // pred_check
        %p507 = pneg %p312
      $region66: #{generate_task_model_forward.2} parent=23 // pred_check_branch
        %509 = sbr.rel (%p507) target = $region68
      $region67: #{generate_task_model_forward.2} parent=23 // pred_region
        %p510 = scmp.lt.s32.totalorder %s28, 1
        %s511 = scalar_select %p510, %s28, 1
        %s512 = smul.addr %s511, 2
        %s513 = scalar_lea.vmem %s10, %s512
      $region68: #{generate_task_model_forward.2} parent=23 // pred_fallthru
        _
      // Predicated region
      $region69: #{generate_task_model_forward.2} parent=23 // pred_check
        %p514 = pneg %p338
      $region70: #{generate_task_model_forward.2} parent=23 // pred_check_branch
        %516 = sbr.rel (%p514) target = $region72
      $region71: #{generate_task_model_forward.2} parent=23 // pred_region
        %p517 = scmp.lt.s32.totalorder %s28, 1
        %s518 = scalar_select %p517, %s28, 1
        %s519 = smul.addr %s518, 2
        %s520 = scalar_lea.vmem %s11, %s519
      $region72: #{generate_task_model_forward.2} parent=23 // pred_fallthru
        _
    $region24: #{generate_task_model_forward.2} parent=5 // pred_fallthru
      _
    %p521 = scmp.le.s32.totalorder 1, %s20
    %p522 = scmp.lt.s32.totalorder %s20, 5
    %p523 = pnand %p521, %p522
    %p524 = pneg %p523
    // Predicated region
    $region73: #{generate_task_model_forward.2} parent=5 // pred_check
      _
    $region74: #{generate_task_model_forward.2} parent=5 // pred_check_branch
      %526 = sbr.rel (%p523) target = $region76
    $region75: #{generate_task_model_forward.2} parent=5 // pred_region
      %s527 = ssub.s32 %s20, 1
      %p528 = scmp.lt.s32.totalorder %s29, 1
      %s529 = scalar_select %p528, %s29, 1
      %s530 = scalar_lea.vmem %s0, %s529
      %p531 = pneg %p58
      %p532 = pneg %p55
      %p533 = scmp.lt.s32.totalorder %s29, 1
      %s534 = scalar_select %p533, %s29, 1
      %s535 = smul.addr %s534, 8
      %s536 = scalar_lea.vmem %s1, %s535
      %p537 = pneg %p84
      %p538 = pneg %p81
      %p539 = scmp.lt.s32.totalorder %s30, 1
      %s540 = scalar_select %p539, %s30, 1
      %s541 = smul.addr %s540, 48
      %s542 = smul.addr %s541, 4
      %s543 = scalar_lea.vmem %s2, %s542
      %p544 = pneg %p110
      %p545 = pneg %p107
      %p546 = scmp.lt.s32.totalorder %s30, 1
      %s547 = scalar_select %p546, %s30, 1
      %s548 = smul.addr %s547, 12
      %s549 = scalar_lea.vmem %s3, %s548
      %p550 = pneg %p136
      %p551 = pneg %p133
      %p552 = scmp.lt.s32.totalorder %s30, 1
      %s553 = scalar_select %p552, %s30, 1
      %s554 = smul.addr %s553, 4
      %s555 = smul.addr %s554, 4
      %s556 = scalar_lea.vmem %s4, %s555
      %p557 = pneg %p162
      %p558 = pneg %p159
      %p559 = scmp.lt.s32.totalorder %s30, 1
      %s560 = scalar_select %p559, %s30, 1
      %s561 = scalar_lea.vmem %s5, %s560
      %p562 = pneg %p188
      %p563 = pneg %p185
      %p564 = scmp.lt.s32.totalorder %s30, 1
      %s565 = scalar_select %p564, %s30, 1
      %s566 = smul.addr %s565, 4
      %s567 = smul.addr %s566, 4
      %s568 = scalar_lea.vmem %s6, %s567
      %p569 = pneg %p214
      %p570 = pneg %p211
      %p571 = scmp.lt.s32.totalorder %s30, 1
      %s572 = scalar_select %p571, %s30, 1
      %s573 = scalar_lea.vmem %s7, %s572
      %p574 = pneg %p240
      %p575 = pneg %p237
      %p576 = scmp.lt.s32.totalorder %s30, 1
      %s577 = scalar_select %p576, %s30, 1
      %s578 = smul.addr %s577, 4
      %s579 = smul.addr %s578, 4
      %s580 = scalar_lea.vmem %s8, %s579
      %p581 = pneg %p266
      %p582 = pneg %p263
      %p583 = scmp.lt.s32.totalorder %s30, 1
      %s584 = scalar_select %p583, %s30, 1
      %s585 = scalar_lea.vmem %s9, %s584
      %p586 = pneg %p292
      %p587 = pneg %p289
      %p588 = scmp.lt.s32.totalorder %s30, 1
      %s589 = scalar_select %p588, %s30, 1
      %s590 = smul.addr %s589, 2
      %s591 = scalar_lea.vmem %s10, %s590
      %p592 = pneg %p318
      %p593 = pneg %p315
      %p594 = scmp.lt.s32.totalorder %s30, 1
      %s595 = scalar_select %p594, %s30, 1
      %s596 = smul.addr %s595, 2
      %s597 = scalar_lea.vmem %s11, %s596
      %p598 = pneg %p344
      %p599 = pneg %p341
      %p600 = pneg %p365
      %p601 = pneg %p362
      %p602 = pneg %p386
      %p603 = pneg %p383
      %p604 = pneg %p412
      %p605 = pneg %p409
      %p606 = scmp.lt.s32.totalorder %s29, 1
      %s607 = scalar_select %p606, %s29, 1
      %s608 = smul.addr %s607, 8
      %s609 = scalar_lea.vmem %s14, %s608
      %p610 = scmp.lt.s32.totalorder %s29, 1
      %s611 = scalar_select %p610, %s29, 1
      %s612 = scalar_lea.vmem %s0, %s611
      %p613 = scmp.lt.s32.totalorder %s29, 1
      %s614 = scalar_select %p613, %s29, 1
      %s615 = smul.addr %s614, 8
      %s616 = scalar_lea.vmem %s1, %s615
      %p617 = scmp.lt.s32.totalorder %s30, 1
      %s618 = scalar_select %p617, %s30, 1
      %s619 = smul.addr %s618, 48
      %s620 = smul.addr %s619, 4
      %s621 = scalar_lea.vmem %s2, %s620
      %p622 = scmp.lt.s32.totalorder %s30, 1
      %s623 = scalar_select %p622, %s30, 1
      %s624 = smul.addr %s623, 12
      %s625 = scalar_lea.vmem %s3, %s624
      %p626 = scmp.lt.s32.totalorder %s30, 1
      %s627 = scalar_select %p626, %s30, 1
      %s628 = smul.addr %s627, 4
      %s629 = smul.addr %s628, 4
      %s630 = scalar_lea.vmem %s4, %s629
      %p631 = scmp.lt.s32.totalorder %s30, 1
      %s632 = scalar_select %p631, %s30, 1
      %s633 = scalar_lea.vmem %s5, %s632
      %p634 = scmp.lt.s32.totalorder %s30, 1
      %s635 = scalar_select %p634, %s30, 1
      %s636 = smul.addr %s635, 4
      %s637 = smul.addr %s636, 4
      %s638 = scalar_lea.vmem %s6, %s637
      %p639 = scmp.lt.s32.totalorder %s30, 1
      %s640 = scalar_select %p639, %s30, 1
      %s641 = scalar_lea.vmem %s7, %s640
      %p642 = scmp.lt.s32.totalorder %s30, 1
      %s643 = scalar_select %p642, %s30, 1
      %s644 = smul.addr %s643, 4
      %s645 = smul.addr %s644, 4
      %s646 = scalar_lea.vmem %s8, %s645
      %p647 = scmp.lt.s32.totalorder %s30, 1
      %s648 = scalar_select %p647, %s30, 1
      %s649 = scalar_lea.vmem %s9, %s648
      %p650 = scmp.lt.s32.totalorder %s30, 1
      %s651 = scalar_select %p650, %s30, 1
      %s652 = smul.addr %s651, 2
      %s653 = scalar_lea.vmem %s10, %s652
      %p654 = scmp.lt.s32.totalorder %s30, 1
      %s655 = scalar_select %p654, %s30, 1
      %s656 = smul.addr %s655, 2
      %s657 = scalar_lea.vmem %s11, %s656
      %p658 = scmp.lt.s32.totalorder %s29, 1
      %s659 = scalar_select %p658, %s29, 1
      %s660 = smul.addr %s659, 8
      %s661 = scalar_lea.vmem %s14, %s660
      %p663 = scmp.eq.s32.totalorder %s30, 0
      // Predicated region
      $region77: #{generate_task_model_forward.2} parent=75 // pred_check
        %p664 = pneg %p663
      $region78: #{generate_task_model_forward.2} parent=75 // pred_check_branch
        %666 = sbr.rel (%p664) target = $region80
      $region79: #{generate_task_model_forward.2} parent=75 // pred_region
        %v667 = vld [vmem:[%s616] sm:$0xff]
        %vm668 = vcmask 261120
        %669 = vst.msk [vmem:[#allocation2] sm:$0xff] %vm668, %v667
      $region80: #{generate_task_model_forward.2} parent=75 // pred_fallthru
        _
      %v670 = vld [vmem:[#allocation2] sm:$0xff]
      %v671 = vld [vmem:[%s612] sm:$0x1]
      %vm672 = vcmp.eq.s32.totalorder %v671, 2
      %v673 = vsel %vm672, -1e+30, 0.0
      %v674 = vpack.c.bf16 %v670, %v670
      %v675 = vld [vmem:[%s621] sm:$0xf]
      %v676 = vld [vmem:[%s621 + $0x4] sm:$0xf]
      %v677 = vld [vmem:[%s621 + $0x8] sm:$0xf]
      %v678 = vld [vmem:[%s621 + $0xc] sm:$0xf]
      %v679 = vld [vmem:[%s621 + $0x10] sm:$0xf]
      %v680 = vld [vmem:[%s621 + $0x14] sm:$0xf]
      %v681 = vld [vmem:[%s621 + $0x18] sm:$0xf]
      %v682 = vld [vmem:[%s621 + $0x1c] sm:$0xf]
      %v683 = vld [vmem:[%s621 + $0x20] sm:$0xf]
      %v684 = vld [vmem:[%s621 + $0x24] sm:$0xf]
      %v685 = vld [vmem:[%s621 + $0x28] sm:$0xf]
      %v686 = vld [vmem:[%s621 + $0x2c] sm:$0xf]
      %v687 = vld [vmem:[%s621 + $0x30] sm:$0xf]
      %v688 = vld [vmem:[%s621 + $0x34] sm:$0xf]
      %v689 = vld [vmem:[%s621 + $0x38] sm:$0xf]
      %v690 = vld [vmem:[%s621 + $0x3c] sm:$0xf]
      %s691 = scalar_lea.vmem %s621, 64
      %v692 = vld [vmem:[%s691] sm:$0xf]
      %v693 = vld [vmem:[%s691 + $0x4] sm:$0xf]
      %v694 = vld [vmem:[%s691 + $0x8] sm:$0xf]
      %v695 = vld [vmem:[%s691 + $0xc] sm:$0xf]
      %v696 = vld [vmem:[%s691 + $0x10] sm:$0xf]
      %v697 = vld [vmem:[%s691 + $0x14] sm:$0xf]
      %v698 = vld [vmem:[%s691 + $0x18] sm:$0xf]
      %v699 = vld [vmem:[%s691 + $0x1c] sm:$0xf]
      %v700 = vld [vmem:[%s691 + $0x20] sm:$0xf]
      %v701 = vld [vmem:[%s691 + $0x24] sm:$0xf]
      %v702 = vld [vmem:[%s691 + $0x28] sm:$0xf]
      %v703 = vld [vmem:[%s691 + $0x2c] sm:$0xf]
      %v704 = vld [vmem:[%s691 + $0x30] sm:$0xf]
      %v705 = vld [vmem:[%s691 + $0x34] sm:$0xf]
      %v706 = vld [vmem:[%s691 + $0x38] sm:$0xf]
      %v707 = vld [vmem:[%s691 + $0x3c] sm:$0xf]
      %s708 = scalar_lea.vmem %s621, 128
      %v709 = vld [vmem:[%s708] sm:$0xf]
      %v710 = vld [vmem:[%s708 + $0x4] sm:$0xf]
      %v711 = vld [vmem:[%s708 + $0x8] sm:$0xf]
      %v712 = vld [vmem:[%s708 + $0xc] sm:$0xf]
      %v713 = vld [vmem:[%s708 + $0x10] sm:$0xf]
      %v714 = vld [vmem:[%s708 + $0x14] sm:$0xf]
      %v715 = vld [vmem:[%s708 + $0x18] sm:$0xf]
      %v716 = vld [vmem:[%s708 + $0x1c] sm:$0xf]
      %v717 = vld [vmem:[%s708 + $0x20] sm:$0xf]
      %v718 = vld [vmem:[%s708 + $0x24] sm:$0xf]
      %v719 = vld [vmem:[%s708 + $0x28] sm:$0xf]
      %v720 = vld [vmem:[%s708 + $0x2c] sm:$0xf]
      %v721 = vld [vmem:[%s708 + $0x30] sm:$0xf]
      %v722 = vld [vmem:[%s708 + $0x34] sm:$0xf]
      %v723 = vld [vmem:[%s708 + $0x38] sm:$0xf]
      %v724 = vld [vmem:[%s708 + $0x3c] sm:$0xf]
      %v725 = vld [vmem:[%s625] sm:$0x1]
      %v726 = vld [vmem:[%s625 + $0x1] sm:$0x1]
      %v727 = vld [vmem:[%s625 + $0x2] sm:$0x1]
      %v728 = vld [vmem:[%s625 + $0x3] sm:$0x1]
      %s729 = scalar_lea.vmem %s625, 4
      %v730 = vld [vmem:[%s729] sm:$0x1]
      %v731 = vld [vmem:[%s729 + $0x1] sm:$0x1]
      %v732 = vld [vmem:[%s729 + $0x2] sm:$0x1]
      %v733 = vld [vmem:[%s729 + $0x3] sm:$0x1]
      %s734 = scalar_lea.vmem %s625, 8
      %v735 = vld [vmem:[%s734] sm:$0x1]
      %v736 = vld [vmem:[%s734 + $0x1] sm:$0x1]
      %v737 = vld [vmem:[%s734 + $0x2] sm:$0x1]
      %v738 = vld [vmem:[%s734 + $0x3] sm:$0x1]
      %v743 = vlaneseq
      %v744 = vshrl.u32 %v743, 7
      %v745 = vsub.s32 0, %v744
      %v746 = vrot.slane %v725, %v745
      %v747 = vlaneseq
      %v748 = vshrl.u32 %v747, 7
      %v749 = vsub.s32 0, %v748
      %v750 = vrot.slane %v726, %v749
      %v751 = vlaneseq
      %v752 = vshrl.u32 %v751, 7
      %v753 = vsub.s32 0, %v752
      %v754 = vrot.slane %v727, %v753
      %v755 = vlaneseq
      %v756 = vshrl.u32 %v755, 7
      %v757 = vsub.s32 0, %v756
      %v758 = vrot.slane %v728, %v757
      %v767 = vunpack.c.l.b16 %v675
      %v768 = vunpack.c.l.b16 %v676
      %v769 = vunpack.c.l.b16 %v677
      %v770 = vunpack.c.l.b16 %v678
      %v771 = vpack.c.b16 %v768, %v767
      %v772 = vpack.c.b16 %v770, %v769
      %vm775 = vcmask 261120
      %v777 = vsel %vm775, %v674, 0
      %779 = vmatprep.subr.bf16.mxu0 0
      %780 = vmatpush1.bf16.msra.mxu0 %v771
      %781 = vmatprep.subr.bf16.mxu0 0
      %782 = vmatpush1.bf16.msra.mxu0 %v772
      %783 = vmatprep.subr.bf16.mxu0 0
      %784 = vmatpush1.bf16.msra.mxu0 0
      %785 = vmatprep.subr.bf16.mxu0 0
      %786 = vmatpush1.bf16.msra.mxu0 0
      %787 = vmatprep.subr.bf16.mxu0 0
      %788 = vmatpush1.bf16.msra.mxu0 0
      %789 = vmatprep.subr.bf16.mxu0 0
      %790 = vmatpush1.bf16.msra.mxu0 0
      %791 = vmatprep.subr.bf16.mxu0 0
      %792 = vmatpush1.bf16.msra.mxu0 0
      %793 = vmatprep.subr.bf16.mxu0 0
      %794 = vmatpush1.bf16.msra.mxu0 0
      %795 = vmatprep.subr.bf16.mxu0 0
      %796 = vmatpush1.bf16.msra.mxu0 0
      %797 = vmatprep.subr.bf16.mxu0 0
      %798 = vmatpush1.bf16.msra.mxu0 0
      %799 = vmatprep.subr.bf16.mxu0 0
      %800 = vmatpush1.bf16.msra.mxu0 0
      %801 = vmatprep.subr.bf16.mxu0 0
      %802 = vmatpush1.bf16.msra.mxu0 0
      %803 = vmatprep.subr.bf16.mxu0 0
      %804 = vmatpush1.bf16.msra.mxu0 0
      %805 = vmatprep.subr.bf16.mxu0 0
      %806 = vmatpush1.bf16.msra.mxu0 0
      %807 = vmatprep.subr.bf16.mxu0 0
      %808 = vmatpush1.bf16.msra.mxu0 0
      %809 = vmatprep.subr.bf16.mxu0 0
      %810 = vmatpush1.bf16.msra.mxu0 0
      %811 = vmatprep.mubr.bf16.mxu0 0
      %812 = vmatmul.mubr.bf16.gmra.mrb[0].mxu0 %v777
      %v813 = vpop.f32.mrb[0].mxu0
      %v814 = vadd.f32 %v746, %v813
      %v815 = vpop.f32.mrb[0].mxu0
      %v816 = vpop.f32.mrb[0].mxu0
      %v817 = vpop.f32.mrb[0].mxu0
      %818 = vdwg.mxu0
      %v823 = vunpack.c.l.b16 %v679
      %v824 = vunpack.c.l.b16 %v680
      %v825 = vunpack.c.l.b16 %v681
      %v826 = vunpack.c.l.b16 %v682
      %v827 = vpack.c.b16 %v824, %v823
      %v828 = vpack.c.b16 %v826, %v825
      %831 = vmatprep.subr.bf16.mxu0 0
      %832 = vmatpush1.bf16.msra.mxu0 %v827
      %833 = vmatprep.subr.bf16.mxu0 0
      %834 = vmatpush1.bf16.msra.mxu0 %v828
      %835 = vmatprep.subr.bf16.mxu0 0
      %836 = vmatpush1.bf16.msra.mxu0 0
      %837 = vmatprep.subr.bf16.mxu0 0
      %838 = vmatpush1.bf16.msra.mxu0 0
      %839 = vmatprep.subr.bf16.mxu0 0
      %840 = vmatpush1.bf16.msra.mxu0 0
      %841 = vmatprep.subr.bf16.mxu0 0
      %842 = vmatpush1.bf16.msra.mxu0 0
      %843 = vmatprep.subr.bf16.mxu0 0
      %844 = vmatpush1.bf16.msra.mxu0 0
      %845 = vmatprep.subr.bf16.mxu0 0
      %846 = vmatpush1.bf16.msra.mxu0 0
      %847 = vmatprep.subr.bf16.mxu0 0
      %848 = vmatpush1.bf16.msra.mxu0 0
      %849 = vmatprep.subr.bf16.mxu0 0
      %850 = vmatpush1.bf16.msra.mxu0 0
      %851 = vmatprep.subr.bf16.mxu0 0
      %852 = vmatpush1.bf16.msra.mxu0 0
      %853 = vmatprep.subr.bf16.mxu0 0
      %854 = vmatpush1.bf16.msra.mxu0 0
      %855 = vmatprep.subr.bf16.mxu0 0
      %856 = vmatpush1.bf16.msra.mxu0 0
      %857 = vmatprep.subr.bf16.mxu0 0
      %858 = vmatpush1.bf16.msra.mxu0 0
      %859 = vmatprep.subr.bf16.mxu0 0
      %860 = vmatpush1.bf16.msra.mxu0 0
      %861 = vmatprep.subr.bf16.mxu0 0
      %862 = vmatpush1.bf16.msra.mxu0 0
      %863 = vmatprep.mubr.bf16.mxu0 0
      %864 = vmatmul.mubr.bf16.gmra.mrb[0].mxu0 %v777
      %v865 = vpop.f32.mrb[0].mxu0
      %v866 = vadd.f32 %v750, %v865
      %v867 = vpop.f32.mrb[0].mxu0
      %v868 = vpop.f32.mrb[0].mxu0
      %v869 = vpop.f32.mrb[0].mxu0
      %870 = vdwg.mxu0
      %v875 = vunpack.c.l.b16 %v683
      %v876 = vunpack.c.l.b16 %v684
      %v877 = vunpack.c.l.b16 %v685
      %v878 = vunpack.c.l.b16 %v686
      %v879 = vpack.c.b16 %v876, %v875
      %v880 = vpack.c.b16 %v878, %v877
      %883 = vmatprep.subr.bf16.mxu0 0
      %884 = vmatpush1.bf16.msra.mxu0 %v879
      %885 = vmatprep.subr.bf16.mxu0 0
      %886 = vmatpush1.bf16.msra.mxu0 %v880
      %887 = vmatprep.subr.bf16.mxu0 0
      %888 = vmatpush1.bf16.msra.mxu0 0
      %889 = vmatprep.subr.bf16.mxu0 0
      %890 = vmatpush1.bf16.msra.mxu0 0
      %891 = vmatprep.subr.bf16.mxu0 0
      %892 = vmatpush1.bf16.msra.mxu0 0
      %893 = vmatprep.subr.bf16.mxu0 0
      %894 = vmatpush1.bf16.msra.mxu0 0
      %895 = vmatprep.subr.bf16.mxu0 0
      %896 = vmatpush1.bf16.msra.mxu0 0
      %897 = vmatprep.subr.bf16.mxu0 0
      %898 = vmatpush1.bf16.msra.mxu0 0
      %899 = vmatprep.subr.bf16.mxu0 0
      %900 = vmatpush1.bf16.msra.mxu0 0
      %901 = vmatprep.subr.bf16.mxu0 0
      %902 = vmatpush1.bf16.msra.mxu0 0
      %903 = vmatprep.subr.bf16.mxu0 0
      %904 = vmatpush1.bf16.msra.mxu0 0
      %905 = vmatprep.subr.bf16.mxu0 0
      %906 = vmatpush1.bf16.msra.mxu0 0
      %907 = vmatprep.subr.bf16.mxu0 0
      %908 = vmatpush1.bf16.msra.mxu0 0
      %909 = vmatprep.subr.bf16.mxu0 0
      %910 = vmatpush1.bf16.msra.mxu0 0
      %911 = vmatprep.subr.bf16.mxu0 0
      %912 = vmatpush1.bf16.msra.mxu0 0
      %913 = vmatprep.subr.bf16.mxu0 0
      %914 = vmatpush1.bf16.msra.mxu0 0
      %915 = vmatprep.mubr.bf16.mxu0 0
      %916 = vmatmul.mubr.bf16.gmra.mrb[0].mxu0 %v777
      %v917 = vpop.f32.mrb[0].mxu0
      %v918 = vadd.f32 %v754, %v917
      %v919 = vpop.f32.mrb[0].mxu0
      %v920 = vpop.f32.mrb[0].mxu0
      %v921 = vpop.f32.mrb[0].mxu0
      %922 = vdwg.mxu0
      %v927 = vunpack.c.l.b16 %v687
      %v928 = vunpack.c.l.b16 %v688
      %v929 = vunpack.c.l.b16 %v689
      %v930 = vunpack.c.l.b16 %v690
      %v931 = vpack.c.b16 %v928, %v927
      %v932 = vpack.c.b16 %v930, %v929
      %935 = vmatprep.subr.bf16.mxu0 0
      %936 = vmatpush1.bf16.msra.mxu0 %v931
      %937 = vmatprep.subr.bf16.mxu0 0
      %938 = vmatpush1.bf16.msra.mxu0 %v932
      %939 = vmatprep.subr.bf16.mxu0 0
      %940 = vmatpush1.bf16.msra.mxu0 0
      %941 = vmatprep.subr.bf16.mxu0 0
      %942 = vmatpush1.bf16.msra.mxu0 0
      %943 = vmatprep.subr.bf16.mxu0 0
      %944 = vmatpush1.bf16.msra.mxu0 0
      %945 = vmatprep.subr.bf16.mxu0 0
      %946 = vmatpush1.bf16.msra.mxu0 0
      %947 = vmatprep.subr.bf16.mxu0 0
      %948 = vmatpush1.bf16.msra.mxu0 0
      %949 = vmatprep.subr.bf16.mxu0 0
      %950 = vmatpush1.bf16.msra.mxu0 0
      %951 = vmatprep.subr.bf16.mxu0 0
      %952 = vmatpush1.bf16.msra.mxu0 0
      %953 = vmatprep.subr.bf16.mxu0 0
      %954 = vmatpush1.bf16.msra.mxu0 0
      %955 = vmatprep.subr.bf16.mxu0 0
      %956 = vmatpush1.bf16.msra.mxu0 0
      %957 = vmatprep.subr.bf16.mxu0 0
      %958 = vmatpush1.bf16.msra.mxu0 0
      %959 = vmatprep.subr.bf16.mxu0 0
      %960 = vmatpush1.bf16.msra.mxu0 0
      %961 = vmatprep.subr.bf16.mxu0 0
      %962 = vmatpush1.bf16.msra.mxu0 0
      %963 = vmatprep.subr.bf16.mxu0 0
      %964 = vmatpush1.bf16.msra.mxu0 0
      %965 = vmatprep.subr.bf16.mxu0 0
      %966 = vmatpush1.bf16.msra.mxu0 0
      %967 = vmatprep.mubr.bf16.mxu0 0
      %968 = vmatmul.mubr.bf16.gmra.mrb[0].mxu0 %v777
      %v969 = vpop.f32.mrb[0].mxu0
      %v970 = vadd.f32 %v758, %v969
      %v971 = vpop.f32.mrb[0].mxu0
      %v972 = vpop.f32.mrb[0].mxu0
      %v973 = vpop.f32.mrb[0].mxu0
      %974 = vdwg.mxu0
      %v979 = vlaneseq
      %v980 = vshrl.u32 %v979, 7
      %v981 = vsub.s32 0, %v980
      %v982 = vrot.slane %v730, %v981
      %v983 = vlaneseq
      %v984 = vshrl.u32 %v983, 7
      %v985 = vsub.s32 0, %v984
      %v986 = vrot.slane %v731, %v985
      %v987 = vlaneseq
      %v988 = vshrl.u32 %v987, 7
      %v989 = vsub.s32 0, %v988
      %v990 = vrot.slane %v732, %v989
      %v991 = vlaneseq
      %v992 = vshrl.u32 %v991, 7
      %v993 = vsub.s32 0, %v992
      %v994 = vrot.slane %v733, %v993
      %v1003 = vunpack.c.l.b16 %v692
      %v1004 = vunpack.c.l.b16 %v693
      %v1005 = vunpack.c.l.b16 %v694
      %v1006 = vunpack.c.l.b16 %v695
      %v1007 = vpack.c.b16 %v1004, %v1003
      %v1008 = vpack.c.b16 %v1006, %v1005
      %1011 = vmatprep.subr.bf16.mxu0 0
      %1012 = vmatpush1.bf16.msra.mxu0 %v1007
      %1013 = vmatprep.subr.bf16.mxu0 0
      %1014 = vmatpush1.bf16.msra.mxu0 %v1008
      %1015 = vmatprep.subr.bf16.mxu0 0
      %1016 = vmatpush1.bf16.msra.mxu0 0
      %1017 = vmatprep.subr.bf16.mxu0 0
      %1018 = vmatpush1.bf16.msra.mxu0 0
      %1019 = vmatprep.subr.bf16.mxu0 0
      %1020 = vmatpush1.bf16.msra.mxu0 0
      %1021 = vmatprep.subr.bf16.mxu0 0
      %1022 = vmatpush1.bf16.msra.mxu0 0
      %1023 = vmatprep.subr.bf16.mxu0 0
      %1024 = vmatpush1.bf16.msra.mxu0 0
      %1025 = vmatprep.subr.bf16.mxu0 0
      %1026 = vmatpush1.bf16.msra.mxu0 0
      %1027 = vmatprep.subr.bf16.mxu0 0
      %1028 = vmatpush1.bf16.msra.mxu0 0
      %1029 = vmatprep.subr.bf16.mxu0 0
      %1030 = vmatpush1.bf16.msra.mxu0 0
      %1031 = vmatprep.subr.bf16.mxu0 0
      %1032 = vmatpush1.bf16.msra.mxu0 0
      %1033 = vmatprep.subr.bf16.mxu0 0
      %1034 = vmatpush1.bf16.msra.mxu0 0
      %1035 = vmatprep.subr.bf16.mxu0 0
      %1036 = vmatpush1.bf16.msra.mxu0 0
      %1037 = vmatprep.subr.bf16.mxu0 0
      %1038 = vmatpush1.bf16.msra.mxu0 0
      %1039 = vmatprep.subr.bf16.mxu0 0
      %1040 = vmatpush1.bf16.msra.mxu0 0
      %1041 = vmatprep.subr.bf16.mxu0 0
      %1042 = vmatpush1.bf16.msra.mxu0 0
      %1043 = vmatprep.mubr.bf16.mxu0 0
      %1044 = vmatmul.mubr.bf16.gmra.mrb[0].mxu0 %v777
      %v1045 = vpop.f32.mrb[0].mxu0
      %v1046 = vadd.f32 %v982, %v1045
      %v1047 = vpop.f32.mrb[0].mxu0
      %v1048 = vpop.f32.mrb[0].mxu0
      %v1049 = vpop.f32.mrb[0].mxu0
      %1050 = vdwg.mxu0
      %v1055 = vunpack.c.l.b16 %v696
      %v1056 = vunpack.c.l.b16 %v697
      %v1057 = vunpack.c.l.b16 %v698
      %v1058 = vunpack.c.l.b16 %v699
      %v1059 = vpack.c.b16 %v1056, %v1055
      %v1060 = vpack.c.b16 %v1058, %v1057
      %1063 = vmatprep.subr.bf16.mxu0 0
      %1064 = vmatpush1.bf16.msra.mxu0 %v1059
      %1065 = vmatprep.subr.bf16.mxu0 0
      %1066 = vmatpush1.bf16.msra.mxu0 %v1060
      %1067 = vmatprep.subr.bf16.mxu0 0
      %1068 = vmatpush1.bf16.msra.mxu0 0
      %1069 = vmatprep.subr.bf16.mxu0 0
      %1070 = vmatpush1.bf16.msra.mxu0 0
      %1071 = vmatprep.subr.bf16.mxu0 0
      %1072 = vmatpush1.bf16.msra.mxu0 0
      %1073 = vmatprep.subr.bf16.mxu0 0
      %1074 = vmatpush1.bf16.msra.mxu0 0
      %1075 = vmatprep.subr.bf16.mxu0 0
      %1076 = vmatpush1.bf16.msra.mxu0 0
      %1077 = vmatprep.subr.bf16.mxu0 0
      %1078 = vmatpush1.bf16.msra.mxu0 0
      %1079 = vmatprep.subr.bf16.mxu0 0
      %1080 = vmatpush1.bf16.msra.mxu0 0
      %1081 = vmatprep.subr.bf16.mxu0 0
      %1082 = vmatpush1.bf16.msra.mxu0 0
      %1083 = vmatprep.subr.bf16.mxu0 0
      %1084 = vmatpush1.bf16.msra.mxu0 0
      %1085 = vmatprep.subr.bf16.mxu0 0
      %1086 = vmatpush1.bf16.msra.mxu0 0
      %1087 = vmatprep.subr.bf16.mxu0 0
      %1088 = vmatpush1.bf16.msra.mxu0 0
      %1089 = vmatprep.subr.bf16.mxu0 0
      %1090 = vmatpush1.bf16.msra.mxu0 0
      %1091 = vmatprep.subr.bf16.mxu0 0
      %1092 = vmatpush1.bf16.msra.mxu0 0
      %1093 = vmatprep.subr.bf16.mxu0 0
      %1094 = vmatpush1.bf16.msra.mxu0 0
      %1095 = vmatprep.mubr.bf16.mxu0 0
      %1096 = vmatmul.mubr.bf16.gmra.mrb[0].mxu0 %v777
      %v1097 = vpop.f32.mrb[0].mxu0
      %v1098 = vadd.f32 %v986, %v1097
      %v1099 = vpop.f32.mrb[0].mxu0
      %v1100 = vpop.f32.mrb[0].mxu0
      %v1101 = vpop.f32.mrb[0].mxu0
      %1102 = vdwg.mxu0
      %v1107 = vunpack.c.l.b16 %v700
      %v1108 = vunpack.c.l.b16 %v701
      %v1109 = vunpack.c.l.b16 %v702
      %v1110 = vunpack.c.l.b16 %v703
      %v1111 = vpack.c.b16 %v1108, %v1107
      %v1112 = vpack.c.b16 %v1110, %v1109
      %1115 = vmatprep.subr.bf16.mxu0 0
      %1116 = vmatpush1.bf16.msra.mxu0 %v1111
      %1117 = vmatprep.subr.bf16.mxu0 0
      %1118 = vmatpush1.bf16.msra.mxu0 %v1112
      %1119 = vmatprep.subr.bf16.mxu0 0
      %1120 = vmatpush1.bf16.msra.mxu0 0
      %1121 = vmatprep.subr.bf16.mxu0 0
      %1122 = vmatpush1.bf16.msra.mxu0 0
      %1123 = vmatprep.subr.bf16.mxu0 0
      %1124 = vmatpush1.bf16.msra.mxu0 0
      %1125 = vmatprep.subr.bf16.mxu0 0
      %1126 = vmatpush1.bf16.msra.mxu0 0
      %1127 = vmatprep.subr.bf16.mxu0 0
      %1128 = vmatpush1.bf16.msra.mxu0 0
      %1129 = vmatprep.subr.bf16.mxu0 0
      %1130 = vmatpush1.bf16.msra.mxu0 0
      %1131 = vmatprep.subr.bf16.mxu0 0
      %1132 = vmatpush1.bf16.msra.mxu0 0
      %1133 = vmatprep.subr.bf16.mxu0 0
      %1134 = vmatpush1.bf16.msra.mxu0 0
      %1135 = vmatprep.subr.bf16.mxu0 0
      %1136 = vmatpush1.bf16.msra.mxu0 0
      %1137 = vmatprep.subr.bf16.mxu0 0
      %1138 = vmatpush1.bf16.msra.mxu0 0
      %1139 = vmatprep.subr.bf16.mxu0 0
      %1140 = vmatpush1.bf16.msra.mxu0 0
      %1141 = vmatprep.subr.bf16.mxu0 0
      %1142 = vmatpush1.bf16.msra.mxu0 0
      %1143 = vmatprep.subr.bf16.mxu0 0
      %1144 = vmatpush1.bf16.msra.mxu0 0
      %1145 = vmatprep.subr.bf16.mxu0 0
      %1146 = vmatpush1.bf16.msra.mxu0 0
      %1147 = vmatprep.mubr.bf16.mxu0 0
      %1148 = vmatmul.mubr.bf16.gmra.mrb[0].mxu0 %v777
      %v1149 = vpop.f32.mrb[0].mxu0
      %v1150 = vadd.f32 %v990, %v1149
      %v1151 = vpop.f32.mrb[0].mxu0
      %v1152 = vpop.f32.mrb[0].mxu0
      %v1153 = vpop.f32.mrb[0].mxu0
      %1154 = vdwg.mxu0
      %v1159 = vunpack.c.l.b16 %v704
      %v1160 = vunpack.c.l.b16 %v705
      %v1161 = vunpack.c.l.b16 %v706
      %v1162 = vunpack.c.l.b16 %v707
      %v1163 = vpack.c.b16 %v1160, %v1159
      %v1164 = vpack.c.b16 %v1162, %v1161
      %1167 = vmatprep.subr.bf16.mxu0 0
      %1168 = vmatpush1.bf16.msra.mxu0 %v1163
      %1169 = vmatprep.subr.bf16.mxu0 0
      %1170 = vmatpush1.bf16.msra.mxu0 %v1164
      %1171 = vmatprep.subr.bf16.mxu0 0
      %1172 = vmatpush1.bf16.msra.mxu0 0
      %1173 = vmatprep.subr.bf16.mxu0 0
      %1174 = vmatpush1.bf16.msra.mxu0 0
      %1175 = vmatprep.subr.bf16.mxu0 0
      %1176 = vmatpush1.bf16.msra.mxu0 0
      %1177 = vmatprep.subr.bf16.mxu0 0
      %1178 = vmatpush1.bf16.msra.mxu0 0
      %1179 = vmatprep.subr.bf16.mxu0 0
      %1180 = vmatpush1.bf16.msra.mxu0 0
      %1181 = vmatprep.subr.bf16.mxu0 0
      %1182 = vmatpush1.bf16.msra.mxu0 0
      %1183 = vmatprep.subr.bf16.mxu0 0
      %1184 = vmatpush1.bf16.msra.mxu0 0
      %1185 = vmatprep.subr.bf16.mxu0 0
      %1186 = vmatpush1.bf16.msra.mxu0 0
      %1187 = vmatprep.subr.bf16.mxu0 0
      %1188 = vmatpush1.bf16.msra.mxu0 0
      %1189 = vmatprep.subr.bf16.mxu0 0
      %1190 = vmatpush1.bf16.msra.mxu0 0
      %1191 = vmatprep.subr.bf16.mxu0 0
      %1192 = vmatpush1.bf16.msra.mxu0 0
      %1193 = vmatprep.subr.bf16.mxu0 0
      %1194 = vmatpush1.bf16.msra.mxu0 0
      %1195 = vmatprep.subr.bf16.mxu0 0
      %1196 = vmatpush1.bf16.msra.mxu0 0
      %1197 = vmatprep.subr.bf16.mxu0 0
      %1198 = vmatpush1.bf16.msra.mxu0 0
      %1199 = vmatprep.mubr.bf16.mxu0 0
      %1200 = vmatmul.mubr.bf16.gmra.mrb[0].mxu0 %v777
      %v1201 = vpop.f32.mrb[0].mxu0
      %v1202 = vadd.f32 %v994, %v1201
      %v1203 = vpop.f32.mrb[0].mxu0
      %v1204 = vpop.f32.mrb[0].mxu0
      %v1205 = vpop.f32.mrb[0].mxu0
      %1206 = vdwg.mxu0
      %v1211 = vlaneseq
      %v1212 = vshrl.u32 %v1211, 7
      %v1213 = vsub.s32 0, %v1212
      %v1214 = vrot.slane %v735, %v1213
      %v1215 = vlaneseq
      %v1216 = vshrl.u32 %v1215, 7
      %v1217 = vsub.s32 0, %v1216
      %v1218 = vrot.slane %v736, %v1217
      %v1219 = vlaneseq
      %v1220 = vshrl.u32 %v1219, 7
      %v1221 = vsub.s32 0, %v1220
      %v1222 = vrot.slane %v737, %v1221
      %v1223 = vlaneseq
      %v1224 = vshrl.u32 %v1223, 7
      %v1225 = vsub.s32 0, %v1224
      %v1226 = vrot.slane %v738, %v1225
      %v1235 = vunpack.c.l.b16 %v709
      %v1236 = vunpack.c.l.b16 %v710
      %v1237 = vunpack.c.l.b16 %v711
      %v1238 = vunpack.c.l.b16 %v712
      %v1239 = vpack.c.b16 %v1236, %v1235
      %v1240 = vpack.c.b16 %v1238, %v1237
      %1243 = vmatprep.subr.bf16.mxu0 0
      %1244 = vmatpush1.bf16.msra.mxu0 %v1239
      %1245 = vmatprep.subr.bf16.mxu0 0
      %1246 = vmatpush1.bf16.msra.mxu0 %v1240
      %1247 = vmatprep.subr.bf16.mxu0 0
      %1248 = vmatpush1.bf16.msra.mxu0 0
      %1249 = vmatprep.subr.bf16.mxu0 0
      %1250 = vmatpush1.bf16.msra.mxu0 0
      %1251 = vmatprep.subr.bf16.mxu0 0
      %1252 = vmatpush1.bf16.msra.mxu0 0
      %1253 = vmatprep.subr.bf16.mxu0 0
      %1254 = vmatpush1.bf16.msra.mxu0 0
      %1255 = vmatprep.subr.bf16.mxu0 0
      %1256 = vmatpush1.bf16.msra.mxu0 0
      %1257 = vmatprep.subr.bf16.mxu0 0
      %1258 = vmatpush1.bf16.msra.mxu0 0
      %1259 = vmatprep.subr.bf16.mxu0 0
      %1260 = vmatpush1.bf16.msra.mxu0 0
      %1261 = vmatprep.subr.bf16.mxu0 0
      %1262 = vmatpush1.bf16.msra.mxu0 0
      %1263 = vmatprep.subr.bf16.mxu0 0
      %1264 = vmatpush1.bf16.msra.mxu0 0
      %1265 = vmatprep.subr.bf16.mxu0 0
      %1266 = vmatpush1.bf16.msra.mxu0 0
      %1267 = vmatprep.subr.bf16.mxu0 0
      %1268 = vmatpush1.bf16.msra.mxu0 0
      %1269 = vmatprep.subr.bf16.mxu0 0
      %1270 = vmatpush1.bf16.msra.mxu0 0
      %1271 = vmatprep.subr.bf16.mxu0 0
      %1272 = vmatpush1.bf16.msra.mxu0 0
      %1273 = vmatprep.subr.bf16.mxu0 0
      %1274 = vmatpush1.bf16.msra.mxu0 0
      %1275 = vmatprep.mubr.bf16.mxu0 0
      %1276 = vmatmul.mubr.bf16.gmra.mrb[0].mxu0 %v777
      %v1277 = vpop.f32.mrb[0].mxu0
      %v1278 = vadd.f32 %v1214, %v1277
      %v1279 = vpop.f32.mrb[0].mxu0
      %v1280 = vpop.f32.mrb[0].mxu0
      %v1281 = vpop.f32.mrb[0].mxu0
      %1282 = vdwg.mxu0
      %v1287 = vunpack.c.l.b16 %v713
      %v1288 = vunpack.c.l.b16 %v714
      %v1289 = vunpack.c.l.b16 %v715
      %v1290 = vunpack.c.l.b16 %v716
      %v1291 = vpack.c.b16 %v1288, %v1287
      %v1292 = vpack.c.b16 %v1290, %v1289
      %1295 = vmatprep.subr.bf16.mxu0 0
      %1296 = vmatpush1.bf16.msra.mxu0 %v1291
      %1297 = vmatprep.subr.bf16.mxu0 0
      %1298 = vmatpush1.bf16.msra.mxu0 %v1292
      %1299 = vmatprep.subr.bf16.mxu0 0
      %1300 = vmatpush1.bf16.msra.mxu0 0
      %1301 = vmatprep.subr.bf16.mxu0 0
      %1302 = vmatpush1.bf16.msra.mxu0 0
      %1303 = vmatprep.subr.bf16.mxu0 0
      %1304 = vmatpush1.bf16.msra.mxu0 0
      %1305 = vmatprep.subr.bf16.mxu0 0
      %1306 = vmatpush1.bf16.msra.mxu0 0
      %1307 = vmatprep.subr.bf16.mxu0 0
      %1308 = vmatpush1.bf16.msra.mxu0 0
      %1309 = vmatprep.subr.bf16.mxu0 0
      %1310 = vmatpush1.bf16.msra.mxu0 0
      %1311 = vmatprep.subr.bf16.mxu0 0
      %1312 = vmatpush1.bf16.msra.mxu0 0
      %1313 = vmatprep.subr.bf16.mxu0 0
      %1314 = vmatpush1.bf16.msra.mxu0 0
      %1315 = vmatprep.subr.bf16.mxu0 0
      %1316 = vmatpush1.bf16.msra.mxu0 0
      %1317 = vmatprep.subr.bf16.mxu0 0
      %1318 = vmatpush1.bf16.msra.mxu0 0
      %1319 = vmatprep.subr.bf16.mxu0 0
      %1320 = vmatpush1.bf16.msra.mxu0 0
      %1321 = vmatprep.subr.bf16.mxu0 0
      %1322 = vmatpush1.bf16.msra.mxu0 0
      %1323 = vmatprep.subr.bf16.mxu0 0
      %1324 = vmatpush1.bf16.msra.mxu0 0
      %1325 = vmatprep.subr.bf16.mxu0 0
      %1326 = vmatpush1.bf16.msra.mxu0 0
      %1327 = vmatprep.mubr.bf16.mxu0 0
      %1328 = vmatmul.mubr.bf16.gmra.mrb[0].mxu0 %v777
      %v1329 = vpop.f32.mrb[0].mxu0
      %v1330 = vadd.f32 %v1218, %v1329
      %v1331 = vpop.f32.mrb[0].mxu0
      %v1332 = vpop.f32.mrb[0].mxu0
      %v1333 = vpop.f32.mrb[0].mxu0
      %1334 = vdwg.mxu0
      %v1339 = vunpack.c.l.b16 %v717
      %v1340 = vunpack.c.l.b16 %v718
      %v1341 = vunpack.c.l.b16 %v719
      %v1342 = vunpack.c.l.b16 %v720
      %v1343 = vpack.c.b16 %v1340, %v1339
      %v1344 = vpack.c.b16 %v1342, %v1341
      %1347 = vmatprep.subr.bf16.mxu0 0
      %1348 = vmatpush1.bf16.msra.mxu0 %v1343
      %1349 = vmatprep.subr.bf16.mxu0 0
      %1350 = vmatpush1.bf16.msra.mxu0 %v1344
      %1351 = vmatprep.subr.bf16.mxu0 0
      %1352 = vmatpush1.bf16.msra.mxu0 0
      %1353 = vmatprep.subr.bf16.mxu0 0
      %1354 = vmatpush1.bf16.msra.mxu0 0
      %1355 = vmatprep.subr.bf16.mxu0 0
      %1356 = vmatpush1.bf16.msra.mxu0 0
      %1357 = vmatprep.subr.bf16.mxu0 0
      %1358 = vmatpush1.bf16.msra.mxu0 0
      %1359 = vmatprep.subr.bf16.mxu0 0
      %1360 = vmatpush1.bf16.msra.mxu0 0
      %1361 = vmatprep.subr.bf16.mxu0 0
      %1362 = vmatpush1.bf16.msra.mxu0 0
      %1363 = vmatprep.subr.bf16.mxu0 0
      %1364 = vmatpush1.bf16.msra.mxu0 0
      %1365 = vmatprep.subr.bf16.mxu0 0
      %1366 = vmatpush1.bf16.msra.mxu0 0
      %1367 = vmatprep.subr.bf16.mxu0 0
      %1368 = vmatpush1.bf16.msra.mxu0 0
      %1369 = vmatprep.subr.bf16.mxu0 0
      %1370 = vmatpush1.bf16.msra.mxu0 0
      %1371 = vmatprep.subr.bf16.mxu0 0
      %1372 = vmatpush1.bf16.msra.mxu0 0
      %1373 = vmatprep.subr.bf16.mxu0 0
      %1374 = vmatpush1.bf16.msra.mxu0 0
      %1375 = vmatprep.subr.bf16.mxu0 0
      %1376 = vmatpush1.bf16.msra.mxu0 0
      %1377 = vmatprep.subr.bf16.mxu0 0
      %1378 = vmatpush1.bf16.msra.mxu0 0
      %1379 = vmatprep.mubr.bf16.mxu0 0
      %1380 = vmatmul.mubr.bf16.gmra.mrb[0].mxu0 %v777
      %v1381 = vpop.f32.mrb[0].mxu0
      %v1382 = vadd.f32 %v1222, %v1381
      %v1383 = vpop.f32.mrb[0].mxu0
      %v1384 = vpop.f32.mrb[0].mxu0
      %v1385 = vpop.f32.mrb[0].mxu0
      %1386 = vdwg.mxu0
      %v1391 = vunpack.c.l.b16 %v721
      %v1392 = vunpack.c.l.b16 %v722
      %v1393 = vunpack.c.l.b16 %v723
      %v1394 = vunpack.c.l.b16 %v724
      %v1395 = vpack.c.b16 %v1392, %v1391
      %v1396 = vpack.c.b16 %v1394, %v1393
      %1399 = vmatprep.subr.bf16.mxu0 0
      %1400 = vmatpush1.bf16.msra.mxu0 %v1395
      %1401 = vmatprep.subr.bf16.mxu0 0
      %1402 = vmatpush1.bf16.msra.mxu0 %v1396
      %1403 = vmatprep.subr.bf16.mxu0 0
      %1404 = vmatpush1.bf16.msra.mxu0 0
      %1405 = vmatprep.subr.bf16.mxu0 0
      %1406 = vmatpush1.bf16.msra.mxu0 0
      %1407 = vmatprep.subr.bf16.mxu0 0
      %1408 = vmatpush1.bf16.msra.mxu0 0
      %1409 = vmatprep.subr.bf16.mxu0 0
      %1410 = vmatpush1.bf16.msra.mxu0 0
      %1411 = vmatprep.subr.bf16.mxu0 0
      %1412 = vmatpush1.bf16.msra.mxu0 0
      %1413 = vmatprep.subr.bf16.mxu0 0
      %1414 = vmatpush1.bf16.msra.mxu0 0
      %1415 = vmatprep.subr.bf16.mxu0 0
      %1416 = vmatpush1.bf16.msra.mxu0 0
      %1417 = vmatprep.subr.bf16.mxu0 0
      %1418 = vmatpush1.bf16.msra.mxu0 0
      %1419 = vmatprep.subr.bf16.mxu0 0
      %1420 = vmatpush1.bf16.msra.mxu0 0
      %1421 = vmatprep.subr.bf16.mxu0 0
      %1422 = vmatpush1.bf16.msra.mxu0 0
      %1423 = vmatprep.subr.bf16.mxu0 0
      %1424 = vmatpush1.bf16.msra.mxu0 0
      %1425 = vmatprep.subr.bf16.mxu0 0
      %1426 = vmatpush1.bf16.msra.mxu0 0
      %1427 = vmatprep.subr.bf16.mxu0 0
      %1428 = vmatpush1.bf16.msra.mxu0 0
      %1429 = vmatprep.subr.bf16.mxu0 0
      %1430 = vmatpush1.bf16.msra.mxu0 0
      %1431 = vmatprep.mubr.bf16.mxu0 0
      %1432 = vmatmul.mubr.bf16.gmra.mrb[0].mxu0 %v777
      %v1433 = vpop.f32.mrb[0].mxu0
      %v1434 = vadd.f32 %v1226, %v1433
      %v1435 = vpop.f32.mrb[0].mxu0
      %v1436 = vpop.f32.mrb[0].mxu0
      %v1437 = vpop.f32.mrb[0].mxu0
      %1438 = vdwg.mxu0
      %v1439 = vpack.c.bf16 %v814, %v814
      %v1440 = vpack.c.bf16 %v866, %v866
      %v1441 = vpack.c.bf16 %v918, %v918
      %v1442 = vpack.c.bf16 %v970, %v970
      %v1443 = vpack.c.bf16 %v1046, %v1046
      %v1444 = vpack.c.bf16 %v1098, %v1098
      %v1445 = vpack.c.bf16 %v1150, %v1150
      %v1446 = vpack.c.bf16 %v1202, %v1202
      %vm1447 = vcmask 64512
      %v1449 = vsel %vm1447, %v1439, 0
      %v1452 = vsel %vm1447, %v1443, 0
      %1454 = vmatprep.subr.bf16.mxu0 0
      %1455 = vmatpush1.bf16.xpose.msra.mxu0 %v1452
      %1456 = vmatprep.subr.bf16.mxu0 0
      %1457 = vmatpush1.bf16.xpose.msra.mxu0 0
      %1458 = vmatprep.subr.bf16.mxu0 0
      %1459 = vmatpush1.bf16.xpose.msra.mxu0 0
      %1460 = vmatprep.subr.bf16.mxu0 0
      %1461 = vmatpush1.bf16.xpose.msra.mxu0 0
      %1462 = vmatprep.subr.bf16.mxu0 0
      %1463 = vmatpush1.bf16.xpose.msra.mxu0 0
      %1464 = vmatprep.subr.bf16.mxu0 0
      %1465 = vmatpush1.bf16.xpose.msra.mxu0 0
      %1466 = vmatprep.subr.bf16.mxu0 0
      %1467 = vmatpush1.bf16.xpose.msra.mxu0 0
      %1468 = vmatprep.subr.bf16.mxu0 0
      %1469 = vmatpush1.bf16.xpose.msra.mxu0 0
      %1470 = vmatprep.subr.bf16.mxu0 0
      %1471 = vmatpush1.bf16.xpose.msra.mxu0 0
      %1472 = vmatprep.subr.bf16.mxu0 0
      %1473 = vmatpush1.bf16.xpose.msra.mxu0 0
      %1474 = vmatprep.subr.bf16.mxu0 0
      %1475 = vmatpush1.bf16.xpose.msra.mxu0 0
      %1476 = vmatprep.subr.bf16.mxu0 0
      %1477 = vmatpush1.bf16.xpose.msra.mxu0 0
      %1478 = vmatprep.subr.bf16.mxu0 0
      %1479 = vmatpush1.bf16.xpose.msra.mxu0 0
      %1480 = vmatprep.subr.bf16.mxu0 0
      %1481 = vmatpush1.bf16.xpose.msra.mxu0 0
      %1482 = vmatprep.subr.bf16.mxu0 0
      %1483 = vmatpush1.bf16.xpose.msra.mxu0 0
      %1484 = vmatprep.subr.bf16.mxu0 0
      %1485 = vmatpush1.bf16.xpose.msra.mxu0 0
      %1486 = vmatprep.mubr.bf16.mxu0 0
      %1487 = vmatmul.mubr.bf16.gmra.mrb[0].mxu0 %v1449
      %v1488 = vpop.f32.mrb[0].mxu0
      %v1489 = vadd.f32 0.0, %v1488
      %v1490 = vpop.f32.mrb[0].mxu0
      %v1491 = vpop.f32.mrb[0].mxu0
      %v1492 = vpop.f32.mrb[0].mxu0
      %1493 = vdwg.mxu0
      %v1495 = vsel %vm1447, %v1440, 0
      %v1498 = vsel %vm1447, %v1444, 0
      %1500 = vmatprep.subr.bf16.mxu0 0
      %1501 = vmatpush1.bf16.xpose.msra.mxu0 %v1498
      %1502 = vmatprep.subr.bf16.mxu0 0
      %1503 = vmatpush1.bf16.xpose.msra.mxu0 0
      %1504 = vmatprep.subr.bf16.mxu0 0
      %1505 = vmatpush1.bf16.xpose.msra.mxu0 0
      %1506 = vmatprep.subr.bf16.mxu0 0
      %1507 = vmatpush1.bf16.xpose.msra.mxu0 0
      %1508 = vmatprep.subr.bf16.mxu0 0
      %1509 = vmatpush1.bf16.xpose.msra.mxu0 0
      %1510 = vmatprep.subr.bf16.mxu0 0
      %1511 = vmatpush1.bf16.xpose.msra.mxu0 0
      %1512 = vmatprep.subr.bf16.mxu0 0
      %1513 = vmatpush1.bf16.xpose.msra.mxu0 0
      %1514 = vmatprep.subr.bf16.mxu0 0
      %1515 = vmatpush1.bf16.xpose.msra.mxu0 0
      %1516 = vmatprep.subr.bf16.mxu0 0
      %1517 = vmatpush1.bf16.xpose.msra.mxu0 0
      %1518 = vmatprep.subr.bf16.mxu0 0
      %1519 = vmatpush1.bf16.xpose.msra.mxu0 0
      %1520 = vmatprep.subr.bf16.mxu0 0
      %1521 = vmatpush1.bf16.xpose.msra.mxu0 0
      %1522 = vmatprep.subr.bf16.mxu0 0
      %1523 = vmatpush1.bf16.xpose.msra.mxu0 0
      %1524 = vmatprep.subr.bf16.mxu0 0
      %1525 = vmatpush1.bf16.xpose.msra.mxu0 0
      %1526 = vmatprep.subr.bf16.mxu0 0
      %1527 = vmatpush1.bf16.xpose.msra.mxu0 0
      %1528 = vmatprep.subr.bf16.mxu0 0
      %1529 = vmatpush1.bf16.xpose.msra.mxu0 0
      %1530 = vmatprep.subr.bf16.mxu0 0
      %1531 = vmatpush1.bf16.xpose.msra.mxu0 0
      %1532 = vmatprep.mubr.bf16.mxu0 0
      %1533 = vmatmul.mubr.bf16.gmra.mrb[0].mxu0 %v1495
      %v1534 = vpop.f32.mrb[0].mxu0
      %v1535 = vadd.f32 0.0, %v1534
      %v1536 = vpop.f32.mrb[0].mxu0
      %v1537 = vpop.f32.mrb[0].mxu0
      %v1538 = vpop.f32.mrb[0].mxu0
      %1539 = vdwg.mxu0
      %v1541 = vsel %vm1447, %v1441, 0
      %v1544 = vsel %vm1447, %v1445, 0
      %1546 = vmatprep.subr.bf16.mxu0 0
      %1547 = vmatpush1.bf16.xpose.msra.mxu0 %v1544
      %1548 = vmatprep.subr.bf16.mxu0 0
      %1549 = vmatpush1.bf16.xpose.msra.mxu0 0
      %1550 = vmatprep.subr.bf16.mxu0 0
      %1551 = vmatpush1.bf16.xpose.msra.mxu0 0
      %1552 = vmatprep.subr.bf16.mxu0 0
      %1553 = vmatpush1.bf16.xpose.msra.mxu0 0
      %1554 = vmatprep.subr.bf16.mxu0 0
      %1555 = vmatpush1.bf16.xpose.msra.mxu0 0
      %1556 = vmatprep.subr.bf16.mxu0 0
      %1557 = vmatpush1.bf16.xpose.msra.mxu0 0
      %1558 = vmatprep.subr.bf16.mxu0 0
      %1559 = vmatpush1.bf16.xpose.msra.mxu0 0
      %1560 = vmatprep.subr.bf16.mxu0 0
      %1561 = vmatpush1.bf16.xpose.msra.mxu0 0
      %1562 = vmatprep.subr.bf16.mxu0 0
      %1563 = vmatpush1.bf16.xpose.msra.mxu0 0
      %1564 = vmatprep.subr.bf16.mxu0 0
      %1565 = vmatpush1.bf16.xpose.msra.mxu0 0
      %1566 = vmatprep.subr.bf16.mxu0 0
      %1567 = vmatpush1.bf16.xpose.msra.mxu0 0
      %1568 = vmatprep.subr.bf16.mxu0 0
      %1569 = vmatpush1.bf16.xpose.msra.mxu0 0
      %1570 = vmatprep.subr.bf16.mxu0 0
      %1571 = vmatpush1.bf16.xpose.msra.mxu0 0
      %1572 = vmatprep.subr.bf16.mxu0 0
      %1573 = vmatpush1.bf16.xpose.msra.mxu0 0
      %1574 = vmatprep.subr.bf16.mxu0 0
      %1575 = vmatpush1.bf16.xpose.msra.mxu0 0
      %1576 = vmatprep.subr.bf16.mxu0 0
      %1577 = vmatpush1.bf16.xpose.msra.mxu0 0
      %1578 = vmatprep.mubr.bf16.mxu0 0
      %1579 = vmatmul.mubr.bf16.gmra.mrb[0].mxu0 %v1541
      %v1580 = vpop.f32.mrb[0].mxu0
      %v1581 = vadd.f32 0.0, %v1580
      %v1582 = vpop.f32.mrb[0].mxu0
      %v1583 = vpop.f32.mrb[0].mxu0
      %v1584 = vpop.f32.mrb[0].mxu0
      %1585 = vdwg.mxu0
      %v1587 = vsel %vm1447, %v1442, 0
      %v1590 = vsel %vm1447, %v1446, 0
      %1592 = vmatprep.subr.bf16.mxu0 0
      %1593 = vmatpush1.bf16.xpose.msra.mxu0 %v1590
      %1594 = vmatprep.subr.bf16.mxu0 0
      %1595 = vmatpush1.bf16.xpose.msra.mxu0 0
      %1596 = vmatprep.subr.bf16.mxu0 0
      %1597 = vmatpush1.bf16.xpose.msra.mxu0 0
      %1598 = vmatprep.subr.bf16.mxu0 0
      %1599 = vmatpush1.bf16.xpose.msra.mxu0 0
      %1600 = vmatprep.subr.bf16.mxu0 0
      %1601 = vmatpush1.bf16.xpose.msra.mxu0 0
      %1602 = vmatprep.subr.bf16.mxu0 0
      %1603 = vmatpush1.bf16.xpose.msra.mxu0 0
      %1604 = vmatprep.subr.bf16.mxu0 0
      %1605 = vmatpush1.bf16.xpose.msra.mxu0 0
      %1606 = vmatprep.subr.bf16.mxu0 0
      %1607 = vmatpush1.bf16.xpose.msra.mxu0 0
      %1608 = vmatprep.subr.bf16.mxu0 0
      %1609 = vmatpush1.bf16.xpose.msra.mxu0 0
      %1610 = vmatprep.subr.bf16.mxu0 0
      %1611 = vmatpush1.bf16.xpose.msra.mxu0 0
      %1612 = vmatprep.subr.bf16.mxu0 0
      %1613 = vmatpush1.bf16.xpose.msra.mxu0 0
      %1614 = vmatprep.subr.bf16.mxu0 0
      %1615 = vmatpush1.bf16.xpose.msra.mxu0 0
      %1616 = vmatprep.subr.bf16.mxu0 0
      %1617 = vmatpush1.bf16.xpose.msra.mxu0 0
      %1618 = vmatprep.subr.bf16.mxu0 0
      %1619 = vmatpush1.bf16.xpose.msra.mxu0 0
      %1620 = vmatprep.subr.bf16.mxu0 0
      %1621 = vmatpush1.bf16.xpose.msra.mxu0 0
      %1622 = vmatprep.subr.bf16.mxu0 0
      %1623 = vmatpush1.bf16.xpose.msra.mxu0 0
      %1624 = vmatprep.mubr.bf16.mxu0 0
      %1625 = vmatmul.mubr.bf16.gmra.mrb[0].mxu0 %v1587
      %v1626 = vpop.f32.mrb[0].mxu0
      %v1627 = vadd.f32 0.0, %v1626
      %v1628 = vpop.f32.mrb[0].mxu0
      %v1629 = vpop.f32.mrb[0].mxu0
      %v1630 = vpop.f32.mrb[0].mxu0
      %1631 = vdwg.mxu0
      %v1632 = vmul.f32 %v1489, 0.35355338
      %v1633 = vmul.f32 %v1535, 0.35355338
      %v1634 = vmul.f32 %v1581, 0.35355338
      %v1635 = vmul.f32 %v1627, 0.35355338
      %v1637 = vlaneseq
      %v1638 = vshrl.u32 %v1637, 7
      %v1639 = vsub.s32 0, %v1638
      %v1640 = vrot.slane %v673, %v1639
      %v1642 = vadd.f32 %v1632, %v1640
      %v1643 = vadd.f32 %v1633, %v1640
      %v1644 = vadd.f32 %v1634, %v1640
      %v1645 = vadd.f32 %v1635, %v1640
      %v1646 = vsel %vm1447, %v1642, -inf
      %1647 = vmax.xlane.f32.xlu0 %v1646
      %v1648 = vpop.xlane.xlu0 %1647
      %v1649 = vsel %vm1447, %v1643, -inf
      %1650 = vmax.xlane.f32.xlu0 %v1649
      %v1651 = vpop.xlane.xlu0 %1650
      %v1652 = vsel %vm1447, %v1644, -inf
      %1653 = vmax.xlane.f32.xlu0 %v1652
      %v1654 = vpop.xlane.xlu0 %1653
      %v1655 = vsel %vm1447, %v1645, -inf
      %1656 = vmax.xlane.f32.xlu0 %v1655
      %v1657 = vpop.xlane.xlu0 %1656
      %v1658 = vsub.f32 %v1642, %v1648
      %v1659 = vsub.f32 %v1643, %v1651
      %v1660 = vsub.f32 %v1644, %v1654
      %v1661 = vsub.f32 %v1645, %v1657
      %v1662 = vmul.f32 %v1658, 1.442695
      %v1663 = vpow.pop %v1662
      %v1664 = vmul.f32 %v1659, 1.442695
      %v1665 = vpow.pop %v1664
      %v1666 = vmul.f32 %v1660, 1.442695
      %v1667 = vpow.pop %v1666
      %v1668 = vmul.f32 %v1661, 1.442695
      %v1669 = vpow.pop %v1668
      %v1670 = vsel %vm1447, %v1663, 0.0
      %1671 = vadd.xlane.f32.xlu0 %v1670
      %v1672 = vpop.xlane.xlu0 %1671
      %v1673 = vsel %vm1447, %v1665, 0.0
      %1674 = vadd.xlane.f32.xlu0 %v1673
      %v1675 = vpop.xlane.xlu0 %1674
      %v1676 = vsel %vm1447, %v1667, 0.0
      %1677 = vadd.xlane.f32.xlu0 %v1676
      %v1678 = vpop.xlane.xlu0 %1677
      %v1679 = vsel %vm1447, %v1669, 0.0
      %1680 = vadd.xlane.f32.xlu0 %v1679
      %v1681 = vpop.xlane.xlu0 %1680
      %v1682 = vrcp.pop %v1672
      %v1683 = vrcp.pop %v1675
      %v1684 = vrcp.pop %v1678
      %v1685 = vrcp.pop %v1681
      %v1686 = vmul.f32 %v1663, %v1682
      %v1687 = vmul.f32 %v1665, %v1683
      %v1688 = vmul.f32 %v1667, %v1684
      %v1689 = vmul.f32 %v1669, %v1685
      %v1690 = vpack.c.bf16 %v1686, %v1686
      %v1691 = vpack.c.bf16 %v1687, %v1687
      %v1692 = vpack.c.bf16 %v1688, %v1688
      %v1693 = vpack.c.bf16 %v1689, %v1689
      %v1694 = vpack.c.bf16 %v1278, %v1278
      %v1695 = vpack.c.bf16 %v1330, %v1330
      %v1696 = vpack.c.bf16 %v1382, %v1382
      %v1697 = vpack.c.bf16 %v1434, %v1434
      %v1699 = vsel %vm1447, %v1690, 0
      %vm1701 = vcmask 1043456
      %v1703 = vsel %vm1701, %v1694, 0
      %1705 = vmatprep.subr.bf16.mxu0 0
      %1706 = vmatpush1.bf16.msra.mxu0 %v1703
      %1707 = vmatprep.subr.bf16.mxu0 0
      %1708 = vmatpush1.bf16.msra.mxu0 0
      %1709 = vmatprep.subr.bf16.mxu0 0
      %1710 = vmatpush1.bf16.msra.mxu0 0
      %1711 = vmatprep.subr.bf16.mxu0 0
      %1712 = vmatpush1.bf16.msra.mxu0 0
      %1713 = vmatprep.subr.bf16.mxu0 0
      %1714 = vmatpush1.bf16.msra.mxu0 0
      %1715 = vmatprep.subr.bf16.mxu0 0
      %1716 = vmatpush1.bf16.msra.mxu0 0
      %1717 = vmatprep.subr.bf16.mxu0 0
      %1718 = vmatpush1.bf16.msra.mxu0 0
      %1719 = vmatprep.subr.bf16.mxu0 0
      %1720 = vmatpush1.bf16.msra.mxu0 0
      %1721 = vmatprep.subr.bf16.mxu0 0
      %1722 = vmatpush1.bf16.msra.mxu0 0
      %1723 = vmatprep.subr.bf16.mxu0 0
      %1724 = vmatpush1.bf16.msra.mxu0 0
      %1725 = vmatprep.subr.bf16.mxu0 0
      %1726 = vmatpush1.bf16.msra.mxu0 0
      %1727 = vmatprep.subr.bf16.mxu0 0
      %1728 = vmatpush1.bf16.msra.mxu0 0
      %1729 = vmatprep.subr.bf16.mxu0 0
      %1730 = vmatpush1.bf16.msra.mxu0 0
      %1731 = vmatprep.subr.bf16.mxu0 0
      %1732 = vmatpush1.bf16.msra.mxu0 0
      %1733 = vmatprep.subr.bf16.mxu0 0
      %1734 = vmatpush1.bf16.msra.mxu0 0
      %1735 = vmatprep.subr.bf16.mxu0 0
      %1736 = vmatpush1.bf16.msra.mxu0 0
      %1737 = vmatprep.mubr.bf16.mxu0 0
      %1738 = vmatmul.mubr.bf16.gmra.mrb[0].mxu0 %v1699
      %v1739 = vpop.f32.mrb[0].mxu0
      %v1740 = vadd.f32 0.0, %v1739
      %v1741 = vpop.f32.mrb[0].mxu0
      %v1742 = vpop.f32.mrb[0].mxu0
      %v1743 = vpop.f32.mrb[0].mxu0
      %1744 = vdwg.mxu0
      %v1746 = vsel %vm1447, %v1691, 0
      %v1749 = vsel %vm1701, %v1695, 0
      %1751 = vmatprep.subr.bf16.mxu0 0
      %1752 = vmatpush1.bf16.msra.mxu0 %v1749
      %1753 = vmatprep.subr.bf16.mxu0 0
      %1754 = vmatpush1.bf16.msra.mxu0 0
      %1755 = vmatprep.subr.bf16.mxu0 0
      %1756 = vmatpush1.bf16.msra.mxu0 0
      %1757 = vmatprep.subr.bf16.mxu0 0
      %1758 = vmatpush1.bf16.msra.mxu0 0
      %1759 = vmatprep.subr.bf16.mxu0 0
      %1760 = vmatpush1.bf16.msra.mxu0 0
      %1761 = vmatprep.subr.bf16.mxu0 0
      %1762 = vmatpush1.bf16.msra.mxu0 0
      %1763 = vmatprep.subr.bf16.mxu0 0
      %1764 = vmatpush1.bf16.msra.mxu0 0
      %1765 = vmatprep.subr.bf16.mxu0 0
      %1766 = vmatpush1.bf16.msra.mxu0 0
      %1767 = vmatprep.subr.bf16.mxu0 0
      %1768 = vmatpush1.bf16.msra.mxu0 0
      %1769 = vmatprep.subr.bf16.mxu0 0
      %1770 = vmatpush1.bf16.msra.mxu0 0
      %1771 = vmatprep.subr.bf16.mxu0 0
      %1772 = vmatpush1.bf16.msra.mxu0 0
      %1773 = vmatprep.subr.bf16.mxu0 0
      %1774 = vmatpush1.bf16.msra.mxu0 0
      %1775 = vmatprep.subr.bf16.mxu0 0
      %1776 = vmatpush1.bf16.msra.mxu0 0
      %1777 = vmatprep.subr.bf16.mxu0 0
      %1778 = vmatpush1.bf16.msra.mxu0 0
      %1779 = vmatprep.subr.bf16.mxu0 0
      %1780 = vmatpush1.bf16.msra.mxu0 0
      %1781 = vmatprep.subr.bf16.mxu0 0
      %1782 = vmatpush1.bf16.msra.mxu0 0
      %1783 = vmatprep.mubr.bf16.mxu0 0
      %1784 = vmatmul.mubr.bf16.gmra.mrb[0].mxu0 %v1746
      %v1785 = vpop.f32.mrb[0].mxu0
      %v1786 = vadd.f32 0.0, %v1785
      %v1787 = vpop.f32.mrb[0].mxu0
      %v1788 = vpop.f32.mrb[0].mxu0
      %v1789 = vpop.f32.mrb[0].mxu0
      %1790 = vdwg.mxu0
      %v1792 = vsel %vm1447, %v1692, 0
      %v1795 = vsel %vm1701, %v1696, 0
      %1797 = vmatprep.subr.bf16.mxu0 0
      %1798 = vmatpush1.bf16.msra.mxu0 %v1795
      %1799 = vmatprep.subr.bf16.mxu0 0
      %1800 = vmatpush1.bf16.msra.mxu0 0
      %1801 = vmatprep.subr.bf16.mxu0 0
      %1802 = vmatpush1.bf16.msra.mxu0 0
      %1803 = vmatprep.subr.bf16.mxu0 0
      %1804 = vmatpush1.bf16.msra.mxu0 0
      %1805 = vmatprep.subr.bf16.mxu0 0
      %1806 = vmatpush1.bf16.msra.mxu0 0
      %1807 = vmatprep.subr.bf16.mxu0 0
      %1808 = vmatpush1.bf16.msra.mxu0 0
      %1809 = vmatprep.subr.bf16.mxu0 0
      %1810 = vmatpush1.bf16.msra.mxu0 0
      %1811 = vmatprep.subr.bf16.mxu0 0
      %1812 = vmatpush1.bf16.msra.mxu0 0
      %1813 = vmatprep.subr.bf16.mxu0 0
      %1814 = vmatpush1.bf16.msra.mxu0 0
      %1815 = vmatprep.subr.bf16.mxu0 0
      %1816 = vmatpush1.bf16.msra.mxu0 0
      %1817 = vmatprep.subr.bf16.mxu0 0
      %1818 = vmatpush1.bf16.msra.mxu0 0
      %1819 = vmatprep.subr.bf16.mxu0 0
      %1820 = vmatpush1.bf16.msra.mxu0 0
      %1821 = vmatprep.subr.bf16.mxu0 0
      %1822 = vmatpush1.bf16.msra.mxu0 0
      %1823 = vmatprep.subr.bf16.mxu0 0
      %1824 = vmatpush1.bf16.msra.mxu0 0
      %1825 = vmatprep.subr.bf16.mxu0 0
      %1826 = vmatpush1.bf16.msra.mxu0 0
      %1827 = vmatprep.subr.bf16.mxu0 0
      %1828 = vmatpush1.bf16.msra.mxu0 0
      %1829 = vmatprep.mubr.bf16.mxu0 0
      %1830 = vmatmul.mubr.bf16.gmra.mrb[0].mxu0 %v1792
      %v1831 = vpop.f32.mrb[0].mxu0
      %v1832 = vadd.f32 0.0, %v1831
      %v1833 = vpop.f32.mrb[0].mxu0
      %v1834 = vpop.f32.mrb[0].mxu0
      %v1835 = vpop.f32.mrb[0].mxu0
      %1836 = vdwg.mxu0
      %v1838 = vsel %vm1447, %v1693, 0
      %v1841 = vsel %vm1701, %v1697, 0
      %1843 = vmatprep.subr.bf16.mxu0 0
      %1844 = vmatpush1.bf16.msra.mxu0 %v1841
      %1845 = vmatprep.subr.bf16.mxu0 0
      %1846 = vmatpush1.bf16.msra.mxu0 0
      %1847 = vmatprep.subr.bf16.mxu0 0
      %1848 = vmatpush1.bf16.msra.mxu0 0
      %1849 = vmatprep.subr.bf16.mxu0 0
      %1850 = vmatpush1.bf16.msra.mxu0 0
      %1851 = vmatprep.subr.bf16.mxu0 0
      %1852 = vmatpush1.bf16.msra.mxu0 0
      %1853 = vmatprep.subr.bf16.mxu0 0
      %1854 = vmatpush1.bf16.msra.mxu0 0
      %1855 = vmatprep.subr.bf16.mxu0 0
      %1856 = vmatpush1.bf16.msra.mxu0 0
      %1857 = vmatprep.subr.bf16.mxu0 0
      %1858 = vmatpush1.bf16.msra.mxu0 0
      %1859 = vmatprep.subr.bf16.mxu0 0
      %1860 = vmatpush1.bf16.msra.mxu0 0
      %1861 = vmatprep.subr.bf16.mxu0 0
      %1862 = vmatpush1.bf16.msra.mxu0 0
      %1863 = vmatprep.subr.bf16.mxu0 0
      %1864 = vmatpush1.bf16.msra.mxu0 0
      %1865 = vmatprep.subr.bf16.mxu0 0
      %1866 = vmatpush1.bf16.msra.mxu0 0
      %1867 = vmatprep.subr.bf16.mxu0 0
      %1868 = vmatpush1.bf16.msra.mxu0 0
      %1869 = vmatprep.subr.bf16.mxu0 0
      %1870 = vmatpush1.bf16.msra.mxu0 0
      %1871 = vmatprep.subr.bf16.mxu0 0
      %1872 = vmatpush1.bf16.msra.mxu0 0
      %1873 = vmatprep.subr.bf16.mxu0 0
      %1874 = vmatpush1.bf16.msra.mxu0 0
      %1875 = vmatprep.mubr.bf16.mxu0 0
      %1876 = vmatmul.mubr.bf16.gmra.mrb[0].mxu0 %v1838
      %v1877 = vpop.f32.mrb[0].mxu0
      %v1878 = vadd.f32 0.0, %v1877
      %v1879 = vpop.f32.mrb[0].mxu0
      %v1880 = vpop.f32.mrb[0].mxu0
      %v1881 = vpop.f32.mrb[0].mxu0
      %1882 = vdwg.mxu0
      %v1883 = vpack.c.bf16 %v1740, %v1740
      %v1884 = vpack.c.bf16 %v1786, %v1786
      %v1885 = vpack.c.bf16 %v1832, %v1832
      %v1886 = vpack.c.bf16 %v1878, %v1878
      %v1887 = vld [vmem:[%s630] sm:$0xf]
      %v1888 = vld [vmem:[%s630 + $0x4] sm:$0xf]
      %v1889 = vld [vmem:[%s630 + $0x8] sm:$0xf]
      %v1890 = vld [vmem:[%s630 + $0xc] sm:$0xf]
      %v1892 = vsel %vm1447, %v1883, 0
      %v1895 = vsel %vm1701, %v1887, 0
      %1897 = vmatprep.subr.bf16.mxu0 0
      %1898 = vmatpush1.bf16.msra.mxu0 %v1895
      %1899 = vmatprep.subr.bf16.mxu0 0
      %1900 = vmatpush1.bf16.msra.mxu0 0
      %1901 = vmatprep.subr.bf16.mxu0 0
      %1902 = vmatpush1.bf16.msra.mxu0 0
      %1903 = vmatprep.subr.bf16.mxu0 0
      %1904 = vmatpush1.bf16.msra.mxu0 0
      %1905 = vmatprep.subr.bf16.mxu0 0
      %1906 = vmatpush1.bf16.msra.mxu0 0
      %1907 = vmatprep.subr.bf16.mxu0 0
      %1908 = vmatpush1.bf16.msra.mxu0 0
      %1909 = vmatprep.subr.bf16.mxu0 0
      %1910 = vmatpush1.bf16.msra.mxu0 0
      %1911 = vmatprep.subr.bf16.mxu0 0
      %1912 = vmatpush1.bf16.msra.mxu0 0
      %1913 = vmatprep.subr.bf16.mxu0 0
      %1914 = vmatpush1.bf16.msra.mxu0 0
      %1915 = vmatprep.subr.bf16.mxu0 0
      %1916 = vmatpush1.bf16.msra.mxu0 0
      %1917 = vmatprep.subr.bf16.mxu0 0
      %1918 = vmatpush1.bf16.msra.mxu0 0
      %1919 = vmatprep.subr.bf16.mxu0 0
      %1920 = vmatpush1.bf16.msra.mxu0 0
      %1921 = vmatprep.subr.bf16.mxu0 0
      %1922 = vmatpush1.bf16.msra.mxu0 0
      %1923 = vmatprep.subr.bf16.mxu0 0
      %1924 = vmatpush1.bf16.msra.mxu0 0
      %1925 = vmatprep.subr.bf16.mxu0 0
      %1926 = vmatpush1.bf16.msra.mxu0 0
      %1927 = vmatprep.subr.bf16.mxu0 0
      %1928 = vmatpush1.bf16.msra.mxu0 0
      %1929 = vmatprep.mubr.bf16.mxu0 0
      %1930 = vmatmul.mubr.bf16.gmra.mrb[0].mxu0 %v1892
      %v1931 = vpop.f32.mrb[0].mxu0
      %v1932 = vadd.f32 0.0, %v1931
      %v1933 = vpop.f32.mrb[0].mxu0
      %v1934 = vpop.f32.mrb[0].mxu0
      %v1935 = vpop.f32.mrb[0].mxu0
      %1936 = vdwg.mxu0
      %v1938 = vsel %vm1447, %v1884, 0
      %v1941 = vsel %vm1701, %v1888, 0
      %1943 = vmatprep.subr.bf16.mxu0 0
      %1944 = vmatpush1.bf16.msra.mxu0 %v1941
      %1945 = vmatprep.subr.bf16.mxu0 0
      %1946 = vmatpush1.bf16.msra.mxu0 0
      %1947 = vmatprep.subr.bf16.mxu0 0
      %1948 = vmatpush1.bf16.msra.mxu0 0
      %1949 = vmatprep.subr.bf16.mxu0 0
      %1950 = vmatpush1.bf16.msra.mxu0 0
      %1951 = vmatprep.subr.bf16.mxu0 0
      %1952 = vmatpush1.bf16.msra.mxu0 0
      %1953 = vmatprep.subr.bf16.mxu0 0
      %1954 = vmatpush1.bf16.msra.mxu0 0
      %1955 = vmatprep.subr.bf16.mxu0 0
      %1956 = vmatpush1.bf16.msra.mxu0 0
      %1957 = vmatprep.subr.bf16.mxu0 0
      %1958 = vmatpush1.bf16.msra.mxu0 0
      %1959 = vmatprep.subr.bf16.mxu0 0
      %1960 = vmatpush1.bf16.msra.mxu0 0
      %1961 = vmatprep.subr.bf16.mxu0 0
      %1962 = vmatpush1.bf16.msra.mxu0 0
      %1963 = vmatprep.subr.bf16.mxu0 0
      %1964 = vmatpush1.bf16.msra.mxu0 0
      %1965 = vmatprep.subr.bf16.mxu0 0
      %1966 = vmatpush1.bf16.msra.mxu0 0
      %1967 = vmatprep.subr.bf16.mxu0 0
      %1968 = vmatpush1.bf16.msra.mxu0 0
      %1969 = vmatprep.subr.bf16.mxu0 0
      %1970 = vmatpush1.bf16.msra.mxu0 0
      %1971 = vmatprep.subr.bf16.mxu0 0
      %1972 = vmatpush1.bf16.msra.mxu0 0
      %1973 = vmatprep.subr.bf16.mxu0 0
      %1974 = vmatpush1.bf16.msra.mxu0 0
      %1975 = vmatprep.mubr.bf16.mxu0 0
      %1976 = vmatmul.mubr.bf16.gmra.mrb[0].mxu0 %v1938
      %v1977 = vpop.f32.mrb[0].mxu0
      %v1978 = vadd.f32 0.0, %v1977
      %v1979 = vpop.f32.mrb[0].mxu0
      %v1980 = vpop.f32.mrb[0].mxu0
      %v1981 = vpop.f32.mrb[0].mxu0
      %1982 = vdwg.mxu0
      %v1984 = vsel %vm1447, %v1885, 0
      %v1987 = vsel %vm1701, %v1889, 0
      %1989 = vmatprep.subr.bf16.mxu0 0
      %1990 = vmatpush1.bf16.msra.mxu0 %v1987
      %1991 = vmatprep.subr.bf16.mxu0 0
      %1992 = vmatpush1.bf16.msra.mxu0 0
      %1993 = vmatprep.subr.bf16.mxu0 0
      %1994 = vmatpush1.bf16.msra.mxu0 0
      %1995 = vmatprep.subr.bf16.mxu0 0
      %1996 = vmatpush1.bf16.msra.mxu0 0
      %1997 = vmatprep.subr.bf16.mxu0 0
      %1998 = vmatpush1.bf16.msra.mxu0 0
      %1999 = vmatprep.subr.bf16.mxu0 0
      %2000 = vmatpush1.bf16.msra.mxu0 0
      %2001 = vmatprep.subr.bf16.mxu0 0
      %2002 = vmatpush1.bf16.msra.mxu0 0
      %2003 = vmatprep.subr.bf16.mxu0 0
      %2004 = vmatpush1.bf16.msra.mxu0 0
      %2005 = vmatprep.subr.bf16.mxu0 0
      %2006 = vmatpush1.bf16.msra.mxu0 0
      %2007 = vmatprep.subr.bf16.mxu0 0
      %2008 = vmatpush1.bf16.msra.mxu0 0
      %2009 = vmatprep.subr.bf16.mxu0 0
      %2010 = vmatpush1.bf16.msra.mxu0 0
      %2011 = vmatprep.subr.bf16.mxu0 0
      %2012 = vmatpush1.bf16.msra.mxu0 0
      %2013 = vmatprep.subr.bf16.mxu0 0
      %2014 = vmatpush1.bf16.msra.mxu0 0
      %2015 = vmatprep.subr.bf16.mxu0 0
      %2016 = vmatpush1.bf16.msra.mxu0 0
      %2017 = vmatprep.subr.bf16.mxu0 0
      %2018 = vmatpush1.bf16.msra.mxu0 0
      %2019 = vmatprep.subr.bf16.mxu0 0
      %2020 = vmatpush1.bf16.msra.mxu0 0
      %2021 = vmatprep.mubr.bf16.mxu0 0
      %2022 = vmatmul.mubr.bf16.gmra.mrb[0].mxu0 %v1984
      %v2023 = vpop.f32.mrb[0].mxu0
      %v2024 = vadd.f32 0.0, %v2023
      %v2025 = vpop.f32.mrb[0].mxu0
      %v2026 = vpop.f32.mrb[0].mxu0
      %v2027 = vpop.f32.mrb[0].mxu0
      %2028 = vdwg.mxu0
      %v2030 = vsel %vm1447, %v1886, 0
      %v2033 = vsel %vm1701, %v1890, 0
      %2035 = vmatprep.subr.bf16.mxu0 0
      %2036 = vmatpush1.bf16.msra.mxu0 %v2033
      %2037 = vmatprep.subr.bf16.mxu0 0
      %2038 = vmatpush1.bf16.msra.mxu0 0
      %2039 = vmatprep.subr.bf16.mxu0 0
      %2040 = vmatpush1.bf16.msra.mxu0 0
      %2041 = vmatprep.subr.bf16.mxu0 0
      %2042 = vmatpush1.bf16.msra.mxu0 0
      %2043 = vmatprep.subr.bf16.mxu0 0
      %2044 = vmatpush1.bf16.msra.mxu0 0
      %2045 = vmatprep.subr.bf16.mxu0 0
      %2046 = vmatpush1.bf16.msra.mxu0 0
      %2047 = vmatprep.subr.bf16.mxu0 0
      %2048 = vmatpush1.bf16.msra.mxu0 0
      %2049 = vmatprep.subr.bf16.mxu0 0
      %2050 = vmatpush1.bf16.msra.mxu0 0
      %2051 = vmatprep.subr.bf16.mxu0 0
      %2052 = vmatpush1.bf16.msra.mxu0 0
      %2053 = vmatprep.subr.bf16.mxu0 0
      %2054 = vmatpush1.bf16.msra.mxu0 0
      %2055 = vmatprep.subr.bf16.mxu0 0
      %2056 = vmatpush1.bf16.msra.mxu0 0
      %2057 = vmatprep.subr.bf16.mxu0 0
      %2058 = vmatpush1.bf16.msra.mxu0 0
      %2059 = vmatprep.subr.bf16.mxu0 0
      %2060 = vmatpush1.bf16.msra.mxu0 0
      %2061 = vmatprep.subr.bf16.mxu0 0
      %2062 = vmatpush1.bf16.msra.mxu0 0
      %2063 = vmatprep.subr.bf16.mxu0 0
      %2064 = vmatpush1.bf16.msra.mxu0 0
      %2065 = vmatprep.subr.bf16.mxu0 0
      %2066 = vmatpush1.bf16.msra.mxu0 0
      %2067 = vmatprep.mubr.bf16.mxu0 0
      %2068 = vmatmul.mubr.bf16.gmra.mrb[0].mxu0 %v2030
      %v2069 = vpop.f32.mrb[0].mxu0
      %v2070 = vadd.f32 0.0, %v2069
      %v2071 = vpop.f32.mrb[0].mxu0
      %v2072 = vpop.f32.mrb[0].mxu0
      %v2073 = vpop.f32.mrb[0].mxu0
      %2074 = vdwg.mxu0
      %v2075 = vsel %vm775, %v1932, 0.0
      %v2076 = vsel %vm775, %v1978, 0.0
      %v2077 = vadd.f32 %v2075, %v2076
      %v2078 = vsel %vm775, %v2024, 0.0
      %v2079 = vadd.f32 %v2077, %v2078
      %v2080 = vsel %vm775, %v2070, 0.0
      %v2081 = vadd.f32 %v2079, %v2080
      %v2082 = vld [vmem:[%s633] sm:$0x1]
      %v2084 = vlaneseq
      %v2085 = vshrl.u32 %v2084, 7
      %v2086 = vsub.s32 0, %v2085
      %v2087 = vrot.slane %v2082, %v2086
      %v2089 = vadd.f32 %v2081, %v2087
      %v2090 = vadd.f32 %v670, %v2089
      %v2091 = vld [vmem:[%s653] sm:$0x1]
      %v2092 = vld [vmem:[%s657] sm:$0x1]
      %v2093 = vsel %vm775, %v2090, 0.0
      %2094 = vadd.xlane.f32.xlu0 %v2093
      %v2095 = vpop.xlane.xlu0 %2094
      %v2096 = vrcp.pop 32.0
      %v2097 = vmul.f32 %v2095, %v2096
      %v2098 = vsub.f32 %v2090, %v2097
      %v2099 = vmul.f32 %v2098, %v2098
      %v2100 = vsel %vm775, %v2099, 0.0
      %2101 = vadd.xlane.f32.xlu0 %v2100
      %v2102 = vpop.xlane.xlu0 %2101
      %v2103 = vmul.f32 %v2102, %v2096
      %v2104 = vadd.f32 %v2103, 1e-05
      %v2105 = vrsqrt.pop %v2104
      %v2106 = vmul.f32 %v2098, %v2105
      %v2108 = vlaneseq
      %v2109 = vshrl.u32 %v2108, 7
      %v2110 = vsub.s32 0, %v2109
      %v2111 = vrot.slane %v2091, %v2110
      %v2113 = vmul.f32 %v2106, %v2111
      %v2115 = vlaneseq
      %v2116 = vshrl.u32 %v2115, 7
      %v2117 = vsub.s32 0, %v2116
      %v2118 = vrot.slane %v2092, %v2117
      %v2120 = vadd.f32 %v2113, %v2118
      %v2121 = vpack.c.bf16 %v2120, %v2120
      %v2122 = vld [vmem:[%s638] sm:$0xf]
      %v2123 = vld [vmem:[%s638 + $0x4] sm:$0xf]
      %v2124 = vld [vmem:[%s638 + $0x8] sm:$0xf]
      %v2125 = vld [vmem:[%s638 + $0xc] sm:$0xf]
      %v2126 = vld [vmem:[%s641] sm:$0x1]
      %v2128 = vlaneseq
      %v2129 = vshrl.u32 %v2128, 7
      %v2130 = vsub.s32 0, %v2129
      %v2131 = vrot.slane %v2126, %v2130
      %v2137 = vunpack.c.l.b16 %v2122
      %v2138 = vunpack.c.l.b16 %v2123
      %v2139 = vunpack.c.l.b16 %v2124
      %v2140 = vunpack.c.l.b16 %v2125
      %v2141 = vpack.c.b16 %v2138, %v2137
      %v2142 = vpack.c.b16 %v2140, %v2139
      %v2146 = vsel %vm775, %v2121, 0
      %2148 = vmatprep.subr.bf16.mxu0 0
      %2149 = vmatpush1.bf16.msra.mxu0 %v2141
      %2150 = vmatprep.subr.bf16.mxu0 0
      %2151 = vmatpush1.bf16.msra.mxu0 %v2142
      %2152 = vmatprep.subr.bf16.mxu0 0
      %2153 = vmatpush1.bf16.msra.mxu0 0
      %2154 = vmatprep.subr.bf16.mxu0 0
      %2155 = vmatpush1.bf16.msra.mxu0 0
      %2156 = vmatprep.subr.bf16.mxu0 0
      %2157 = vmatpush1.bf16.msra.mxu0 0
      %2158 = vmatprep.subr.bf16.mxu0 0
      %2159 = vmatpush1.bf16.msra.mxu0 0
      %2160 = vmatprep.subr.bf16.mxu0 0
      %2161 = vmatpush1.bf16.msra.mxu0 0
      %2162 = vmatprep.subr.bf16.mxu0 0
      %2163 = vmatpush1.bf16.msra.mxu0 0
      %2164 = vmatprep.subr.bf16.mxu0 0
      %2165 = vmatpush1.bf16.msra.mxu0 0
      %2166 = vmatprep.subr.bf16.mxu0 0
      %2167 = vmatpush1.bf16.msra.mxu0 0
      %2168 = vmatprep.subr.bf16.mxu0 0
      %2169 = vmatpush1.bf16.msra.mxu0 0
      %2170 = vmatprep.subr.bf16.mxu0 0
      %2171 = vmatpush1.bf16.msra.mxu0 0
      %2172 = vmatprep.subr.bf16.mxu0 0
      %2173 = vmatpush1.bf16.msra.mxu0 0
      %2174 = vmatprep.subr.bf16.mxu0 0
      %2175 = vmatpush1.bf16.msra.mxu0 0
      %2176 = vmatprep.subr.bf16.mxu0 0
      %2177 = vmatpush1.bf16.msra.mxu0 0
      %2178 = vmatprep.subr.bf16.mxu0 0
      %2179 = vmatpush1.bf16.msra.mxu0 0
      %2180 = vmatprep.mubr.bf16.mxu0 0
      %2181 = vmatmul.mubr.bf16.gmra.mrb[0].mxu0 %v2146
      %v2182 = vpop.f32.mrb[0].mxu0
      %v2183 = vadd.f32 %v2131, %v2182
      %v2184 = vpop.f32.mrb[0].mxu0
      %v2185 = vpop.f32.mrb[0].mxu0
      %v2186 = vpop.f32.mrb[0].mxu0
      %2187 = vdwg.mxu0
      %v2188 = vmax.f32 %v2183, 0.0
      %v2189 = vpack.c.bf16 %v2188, %v2188
      %v2190 = vld [vmem:[%s646] sm:$0xf]
      %v2191 = vld [vmem:[%s646 + $0x4] sm:$0xf]
      %v2192 = vld [vmem:[%s646 + $0x8] sm:$0xf]
      %v2193 = vld [vmem:[%s646 + $0xc] sm:$0xf]
      %v2194 = vld [vmem:[%s649] sm:$0x1]
      %v2196 = vlaneseq
      %v2197 = vshrl.u32 %v2196, 7
      %v2198 = vsub.s32 0, %v2197
      %v2199 = vrot.slane %v2194, %v2198
      %v2205 = vunpack.c.l.b16 %v2190
      %v2206 = vunpack.c.l.b16 %v2191
      %v2207 = vunpack.c.l.b16 %v2192
      %v2208 = vunpack.c.l.b16 %v2193
      %v2209 = vpack.c.b16 %v2206, %v2205
      %v2210 = vpack.c.b16 %v2208, %v2207
      %v2214 = vsel %vm775, %v2189, 0
      %2216 = vmatprep.subr.bf16.mxu0 0
      %2217 = vmatpush1.bf16.msra.mxu0 %v2209
      %2218 = vmatprep.subr.bf16.mxu0 0
      %2219 = vmatpush1.bf16.msra.mxu0 %v2210
      %2220 = vmatprep.subr.bf16.mxu0 0
      %2221 = vmatpush1.bf16.msra.mxu0 0
      %2222 = vmatprep.subr.bf16.mxu0 0
      %2223 = vmatpush1.bf16.msra.mxu0 0
      %2224 = vmatprep.subr.bf16.mxu0 0
      %2225 = vmatpush1.bf16.msra.mxu0 0
      %2226 = vmatprep.subr.bf16.mxu0 0
      %2227 = vmatpush1.bf16.msra.mxu0 0
      %2228 = vmatprep.subr.bf16.mxu0 0
      %2229 = vmatpush1.bf16.msra.mxu0 0
      %2230 = vmatprep.subr.bf16.mxu0 0
      %2231 = vmatpush1.bf16.msra.mxu0 0
      %2232 = vmatprep.subr.bf16.mxu0 0
      %2233 = vmatpush1.bf16.msra.mxu0 0
      %2234 = vmatprep.subr.bf16.mxu0 0
      %2235 = vmatpush1.bf16.msra.mxu0 0
      %2236 = vmatprep.subr.bf16.mxu0 0
      %2237 = vmatpush1.bf16.msra.mxu0 0
      %2238 = vmatprep.subr.bf16.mxu0 0
      %2239 = vmatpush1.bf16.msra.mxu0 0
      %2240 = vmatprep.subr.bf16.mxu0 0
      %2241 = vmatpush1.bf16.msra.mxu0 0
      %2242 = vmatprep.subr.bf16.mxu0 0
      %2243 = vmatpush1.bf16.msra.mxu0 0
      %2244 = vmatprep.subr.bf16.mxu0 0
      %2245 = vmatpush1.bf16.msra.mxu0 0
      %2246 = vmatprep.subr.bf16.mxu0 0
      %2247 = vmatpush1.bf16.msra.mxu0 0
      %2248 = vmatprep.mubr.bf16.mxu0 0
      %2249 = vmatmul.mubr.bf16.gmra.mrb[0].mxu0 %v2214
      %v2250 = vpop.f32.mrb[0].mxu0
      %v2251 = vadd.f32 %v2199, %v2250
      %v2252 = vpop.f32.mrb[0].mxu0
      %v2253 = vpop.f32.mrb[0].mxu0
      %v2254 = vpop.f32.mrb[0].mxu0
      %2255 = vdwg.mxu0
      %v2256 = vadd.f32 %v2120, %v2251
      %s2257 = scalar_lea.vmem %s653, 1
      %v2258 = vld [vmem:[%s2257] sm:$0x1]
      %s2259 = scalar_lea.vmem %s657, 1
      %v2260 = vld [vmem:[%s2259] sm:$0x1]
      %v2261 = vsel %vm775, %v2256, 0.0
      %2262 = vadd.xlane.f32.xlu0 %v2261
      %v2263 = vpop.xlane.xlu0 %2262
      %v2264 = vmul.f32 %v2263, %v2096
      %v2265 = vsub.f32 %v2256, %v2264
      %v2266 = vmul.f32 %v2265, %v2265
      %v2267 = vsel %vm775, %v2266, 0.0
      %2268 = vadd.xlane.f32.xlu0 %v2267
      %v2269 = vpop.xlane.xlu0 %2268
      %v2270 = vmul.f32 %v2269, %v2096
      %v2271 = vadd.f32 %v2270, 1e-05
      %v2272 = vrsqrt.pop %v2271
      %v2273 = vmul.f32 %v2265, %v2272
      %v2275 = vlaneseq
      %v2276 = vshrl.u32 %v2275, 7
      %v2277 = vsub.s32 0, %v2276
      %v2278 = vrot.slane %v2258, %v2277
      %v2280 = vmul.f32 %v2273, %v2278
      %v2282 = vlaneseq
      %v2283 = vshrl.u32 %v2282, 7
      %v2284 = vsub.s32 0, %v2283
      %v2285 = vrot.slane %v2260, %v2284
      %v2287 = vadd.f32 %v2280, %v2285
      %2288 = vst.msk [vmem:[#allocation2] sm:$0xff] %vm775, %v2287
      %p2289 = scmp.eq.s32.totalorder %s30, 1
      // Predicated region
      $region81: #{generate_task_model_forward.2} parent=75 // pred_check
        %p2290 = pneg %p2289
      $region82: #{generate_task_model_forward.2} parent=75 // pred_check_branch
        %2292 = sbr.rel (%p2290) target = $region84
      $region83: #{generate_task_model_forward.2} parent=75 // pred_region
        %v2293 = vld [vmem:[%s12] sm:$0x1]
        %v2294 = vld [vmem:[%s13] sm:$0x1]
        %v2295 = vsel %vm775, %v2287, 0.0
        %2296 = vadd.xlane.f32.xlu0 %v2295
        %v2297 = vpop.xlane.xlu0 %2296
        %v2298 = vmul.f32 %v2297, %v2096
        %v2299 = vsub.f32 %v2287, %v2298
        %v2300 = vmul.f32 %v2299, %v2299
        %v2301 = vsel %vm775, %v2300, 0.0
        %2302 = vadd.xlane.f32.xlu0 %v2301
        %v2303 = vpop.xlane.xlu0 %2302
        %v2304 = vmul.f32 %v2303, %v2096
        %v2305 = vadd.f32 %v2304, 1e-05
        %v2306 = vrsqrt.pop %v2305
        %v2307 = vmul.f32 %v2299, %v2306
        %v2309 = vlaneseq
        %v2310 = vshrl.u32 %v2309, 7
        %v2311 = vsub.s32 0, %v2310
        %v2312 = vrot.slane %v2293, %v2311
        %v2314 = vmul.f32 %v2307, %v2312
        %v2316 = vlaneseq
        %v2317 = vshrl.u32 %v2316, 7
        %v2318 = vsub.s32 0, %v2317
        %v2319 = vrot.slane %v2294, %v2318
        %v2321 = vadd.f32 %v2314, %v2319
        %2322 = vst.msk [vmem:[%s661] sm:$0xff] %vm775, %v2321
      $region84: #{generate_task_model_forward.2} parent=75 // pred_fallthru
        _
      %p2323 = scmp.lt.s32.totalorder %s29, 1
      %s2324 = scalar_select %p2323, %s29, 1
      %s2325 = smul.addr %s2324, 8
      %s2326 = scalar_lea.vmem %s14, %s2325
      // Predicated region
      $region85: #{generate_task_model_forward.2} parent=75 // pred_check
        %p2327 = pneg %p409
      $region86: #{generate_task_model_forward.2} parent=75 // pred_check_branch
        %2329 = sbr.rel (%p2327) target = $region88
      $region87: #{generate_task_model_forward.2} parent=75 // pred_region
        _
      $region88: #{generate_task_model_forward.2} parent=75 // pred_fallthru
        _
    $region76: #{generate_task_model_forward.2} parent=5 // pred_fallthru
      _
    %p2330 = scmp.le.s32.totalorder 2, %s20
    // Predicated region
    $region89: #{generate_task_model_forward.2} parent=5 // pred_check
      %p2331 = pneg %p2330
    $region90: #{generate_task_model_forward.2} parent=5 // pred_check_branch
      %2333 = sbr.rel (%p2331) target = $region92
    $region91: #{generate_task_model_forward.2} parent=5 // pred_region
      %s2334 = ssub.s32 %s20, 2
      // Predicated region
      $region93: #{generate_task_model_forward.2} parent=91 // pred_check
        %p2335 = pneg %p415
      $region94: #{generate_task_model_forward.2} parent=91 // pred_check_branch
        %2337 = sbr.rel (%p2335) target = $region96
      $region95: #{generate_task_model_forward.2} parent=91 // pred_region
        %p2338 = scmp.lt.s32.totalorder %s31, 1
        %s2339 = scalar_select %p2338, %s31, 1
        %s2340 = smul.addr %s2339, 8
        %s2341 = scalar_lea.vmem %s14, %s2340
      $region96: #{generate_task_model_forward.2} parent=91 // pred_fallthru
        _
    $region92: #{generate_task_model_forward.2} parent=5 // pred_fallthru
      _
  $region6: #{generate_task_model_forward.2} parent=0 // loop_footer
    %s24 = sadd.s32 1, %s20
  $region7: #{generate_task_model_forward.2} parent=0 // loop_footer_branch
    %19 = sbr.rel target = $region3
  $region8: #{generate_task_model_forward.2} parent=0 // loop_exit
    _

// kernel: generate_task_model_forward.3
$region0: #{generate_task_model_forward.3}
  #allocation0 [shape = 'u32[]', space=smem, size = 0x4, offset = 0x4, fixed_abs, tag = 'smem constant byte address 0x4 - core index']
  #allocation1 [shape = 'u32[144,128]{1,0:T(1,128)}', space=vmem, size = 0x12000, scoped, tag = 'internal scratch']
  #allocation2 [shape = 'f32[8,32]{1,0:T(8,128)}', space=vmem, size = 0x1000, scoped, tag = 'scratch operand']
  %s0 = inlined_call_operand.vmem [shape: s32[2,1,8], index: 0, kind: input, shape index: {}]
  %s1 = inlined_call_operand.vmem [shape: f32[16,32], index: 1, kind: input, shape index: {}]
  %s2 = inlined_call_operand.vmem [shape: f32[16,32], index: 2, kind: input, shape index: {}]
  %s3 = inlined_call_operand.vmem [shape: bf16[2,12,32,8], index: 3, kind: input, shape index: {}]
  %s4 = inlined_call_operand.vmem [shape: f32[2,12,1,8], index: 4, kind: input, shape index: {}]
  %s5 = inlined_call_operand.vmem [shape: bf16[2,4,8,32], index: 5, kind: input, shape index: {}]
  %s6 = inlined_call_operand.vmem [shape: f32[2,1,32], index: 6, kind: input, shape index: {}]
  %s7 = inlined_call_operand.vmem [shape: bf16[2,12,32,8], index: 7, kind: input, shape index: {}]
  %s8 = inlined_call_operand.vmem [shape: f32[2,12,1,8], index: 8, kind: input, shape index: {}]
  %s9 = inlined_call_operand.vmem [shape: bf16[2,4,8,32], index: 9, kind: input, shape index: {}]
  %s10 = inlined_call_operand.vmem [shape: f32[2,1,32], index: 10, kind: input, shape index: {}]
  %s11 = inlined_call_operand.vmem [shape: bf16[2,32,32], index: 11, kind: input, shape index: {}]
  %s12 = inlined_call_operand.vmem [shape: f32[2,1,32], index: 12, kind: input, shape index: {}]
  %s13 = inlined_call_operand.vmem [shape: bf16[2,32,32], index: 13, kind: input, shape index: {}]
  %s14 = inlined_call_operand.vmem [shape: f32[2,1,32], index: 14, kind: input, shape index: {}]
  %s15 = inlined_call_operand.vmem [shape: f32[2,3,1,32], index: 15, kind: input, shape index: {}]
  %s16 = inlined_call_operand.vmem [shape: f32[2,3,1,32], index: 16, kind: input, shape index: {}]
  %s17 = inlined_call_operand.vmem [shape: f32[1,32], index: 17, kind: input, shape index: {}]
  %s18 = inlined_call_operand.vmem [shape: f32[1,32], index: 18, kind: input, shape index: {}]
  %s19 = inlined_call_operand.hbm [shape: f32[16,32], index: 19, kind: output, shape index: {}]
  %s20 = sld [smem:[#allocation0]]
  $region117: #{generate_task_model_forward.3} parent=0
    _
  %s22 = ssub.s32 1, %s20
  %s23 = scalar_select 0, %s22, %s20
  $region1: #{generate_task_model_forward.3} parent=0
    #allocation3 [shape = 'u8[8192]{0}', space=vmem, size = 0x2000, scoped, tag = 'output window, operand 0']
    #allocation4 [shape = 's32[2]{0}', space=sflag, size = 0x8, scoped, tag = 'scoped memory for generate_task_model_forward.3']
    %24 = vsyncpa [#allocation4], 0
    %s25 = scalar_lea.sflag [#allocation4], 1
    %26 = vsyncpa %s25, 0
    loop: start=0, step=1, limit=6
    $region2: #{generate_task_model_forward.3} parent=1 // loop_pre_header
      _
    $region3: #{generate_task_model_forward.3} parent=1 // loop_header
      %s28 = sphi 0, %s32
      %p29 = scmp.ge.s32.totalorder %s28, 6
      %s35 = sphi 0, %s47
      %s36 = sphi 0, %s43
      %s37 = sphi 0, %s35
      %s38 = sphi 0, %s36
      %s39 = sphi 0, %s37
      %s40 = sphi 0, %s38
      %s50 = sphi 0, %s52
      %s53 = sphi 0, %s50
      %s54 = sphi 0, %s53
      %s70 = sphi 0, %s54
      %s76 = sphi 0, %s78
      %s79 = sphi 0, %s76
      %s80 = sphi 0, %s79
      %s96 = sphi 0, %s80
      %s102 = sphi 0, %s104
      %s105 = sphi 0, %s102
      %s106 = sphi 0, %s105
      %s122 = sphi 0, %s106
      %s128 = sphi 0, %s130
      %s131 = sphi 0, %s128
      %s132 = sphi 0, %s131
      %s148 = sphi 0, %s132
      %s154 = sphi 0, %s156
      %s157 = sphi 0, %s154
      %s158 = sphi 0, %s157
      %s174 = sphi 0, %s158
      %s180 = sphi 0, %s182
      %s183 = sphi 0, %s180
      %s184 = sphi 0, %s183
      %s200 = sphi 0, %s184
      %s206 = sphi 0, %s208
      %s209 = sphi 0, %s206
      %s210 = sphi 0, %s209
      %s226 = sphi 0, %s210
      %s232 = sphi 0, %s234
      %s235 = sphi 0, %s232
      %s236 = sphi 0, %s235
      %s252 = sphi 0, %s236
      %s258 = sphi 0, %s260
      %s261 = sphi 0, %s258
      %s262 = sphi 0, %s261
      %s278 = sphi 0, %s262
      %s284 = sphi 0, %s286
      %s287 = sphi 0, %s284
      %s288 = sphi 0, %s287
      %s304 = sphi 0, %s288
      %s310 = sphi 0, %s312
      %s313 = sphi 0, %s310
      %s314 = sphi 0, %s313
      %s330 = sphi 0, %s314
      %s336 = sphi 0, %s338
      %s339 = sphi 0, %s336
      %s340 = sphi 0, %s339
      %s356 = sphi 0, %s340
      %s362 = sphi 0, %s364
      %s365 = sphi 0, %s362
      %s366 = sphi 0, %s365
      %s382 = sphi 0, %s366
      %s388 = sphi 0, %s390
      %s391 = sphi 0, %s388
      %s392 = sphi 0, %s391
      %s408 = sphi 0, %s392
      %s414 = sphi 0, %s416
      %s417 = sphi 0, %s414
      %s418 = sphi 0, %s417
      %s434 = sphi 0, %s418
      %s440 = sphi 0, %s442
      %s443 = sphi 0, %s440
      %s444 = sphi 0, %s443
      %s460 = sphi 0, %s444
      %s466 = sphi 0, %s468
      %s469 = sphi 0, %s466
      %s470 = sphi 0, %s469
      %s486 = sphi 0, %s470
      %s490 = sphi 0, %s490
      %s492 = sphi 0, %s490
      %s493 = sphi 0, %s492
      %s507 = sphi 0, %s493
      %s511 = sphi 0, %s511
      %s513 = sphi 0, %s511
      %s514 = sphi 0, %s513
      %s528 = sphi 0, %s514
      %s534 = sphi 0, %s536
      %s537 = sphi 0, %s534
      %s538 = sphi 0, %s537
      %s554 = sphi 0, %s538
    $region4: #{generate_task_model_forward.3} parent=1 // loop_header_branch
      %31 = sbr.rel (%p29) target = $region8
    $region5: #{generate_task_model_forward.3} parent=1 // loop_body
      %s33 = ssub.s32 %s28, 1
      %s34 = ssub.s32 %s28, 2
      %s41 = sadd.s32 1, %s36
      %p42 = scmp.ge.s32.totalorder %s41, 2
      %s43 = scalar_select %p42, 0, %s41
      %s44 = sadd.s32 1, %s35
      %s45 = scalar_select %p42, %s44, %s35
      %p46 = scmp.ge.s32.totalorder %s45, 2
      %s47 = scalar_select %p46, 0, %s45
      %s48 = ssub.s32 %s35, %s47
      %p49 = scmp.eq.s32.totalorder %s48, 0
      %s51 = sadd.s32 %s50, 1
      %s52 = scalar_select %p49, %s50, %s51
      %p55 = pneg %p49
      %p56 = scmp.eq.s32.totalorder %s28, 3
      %p57 = por %p55, %p56
      %p58 = scmp.ne.s32.totalorder %s50, %s53
      %p59 = scmp.eq.s32.totalorder %s28, 0
      %p60 = por %p58, %p59
      %p61 = scmp.ne.s32.totalorder %s50, %s53
      %p62 = scmp.eq.s32.totalorder %s33, 3
      %p63 = por %p61, %p62
      %p64 = scmp.ne.s32.totalorder %s53, %s54
      %p65 = scmp.eq.s32.totalorder %s33, 0
      %p66 = por %p64, %p65
      %p67 = scmp.ne.s32.totalorder %s53, %s54
      %p68 = scmp.eq.s32.totalorder %s34, 3
      %p69 = por %p67, %p68
      %p71 = scmp.ne.s32.totalorder %s54, %s70
      %p72 = scmp.eq.s32.totalorder %s34, 0
      %p73 = por %p71, %p72
      %s74 = ssub.s32 %s35, %s47
      %p75 = scmp.eq.s32.totalorder %s74, 0
      %s77 = sadd.s32 %s76, 1
      %s78 = scalar_select %p75, %s76, %s77
      %p81 = pneg %p75
      %p82 = scmp.eq.s32.totalorder %s28, 3
      %p83 = por %p81, %p82
      %p84 = scmp.ne.s32.totalorder %s76, %s79
      %p85 = scmp.eq.s32.totalorder %s28, 0
      %p86 = por %p84, %p85
      %p87 = scmp.ne.s32.totalorder %s76, %s79
      %p88 = scmp.eq.s32.totalorder %s33, 3
      %p89 = por %p87, %p88
      %p90 = scmp.ne.s32.totalorder %s79, %s80
      %p91 = scmp.eq.s32.totalorder %s33, 0
      %p92 = por %p90, %p91
      %p93 = scmp.ne.s32.totalorder %s79, %s80
      %p94 = scmp.eq.s32.totalorder %s34, 3
      %p95 = por %p93, %p94
      %p97 = scmp.ne.s32.totalorder %s80, %s96
      %p98 = scmp.eq.s32.totalorder %s34, 0
      %p99 = por %p97, %p98
      %s100 = ssub.s32 %s35, %s47
      %p101 = scmp.eq.s32.totalorder %s100, 0
      %s103 = sadd.s32 %s102, 1
      %s104 = scalar_select %p101, %s102, %s103
      %p107 = pneg %p101
      %p108 = scmp.eq.s32.totalorder %s28, 3
      %p109 = por %p107, %p108
      %p110 = scmp.ne.s32.totalorder %s102, %s105
      %p111 = scmp.eq.s32.totalorder %s28, 0
      %p112 = por %p110, %p111
      %p113 = scmp.ne.s32.totalorder %s102, %s105
      %p114 = scmp.eq.s32.totalorder %s33, 3
      %p115 = por %p113, %p114
      %p116 = scmp.ne.s32.totalorder %s105, %s106
      %p117 = scmp.eq.s32.totalorder %s33, 0
      %p118 = por %p116, %p117
      %p119 = scmp.ne.s32.totalorder %s105, %s106
      %p120 = scmp.eq.s32.totalorder %s34, 3
      %p121 = por %p119, %p120
      %p123 = scmp.ne.s32.totalorder %s106, %s122
      %p124 = scmp.eq.s32.totalorder %s34, 0
      %p125 = por %p123, %p124
      %s126 = ssub.s32 %s36, %s43
      %p127 = scmp.eq.s32.totalorder %s126, 0
      %s129 = sadd.s32 %s128, 1
      %s130 = scalar_select %p127, %s128, %s129
      %p133 = pneg %p127
      %p134 = scmp.eq.s32.totalorder %s28, 3
      %p135 = por %p133, %p134
      %p136 = scmp.ne.s32.totalorder %s128, %s131
      %p137 = scmp.eq.s32.totalorder %s28, 0
      %p138 = por %p136, %p137
      %p139 = scmp.ne.s32.totalorder %s128, %s131
      %p140 = scmp.eq.s32.totalorder %s33, 3
      %p141 = por %p139, %p140
      %p142 = scmp.ne.s32.totalorder %s131, %s132
      %p143 = scmp.eq.s32.totalorder %s33, 0
      %p144 = por %p142, %p143
      %p145 = scmp.ne.s32.totalorder %s131, %s132
      %p146 = scmp.eq.s32.totalorder %s34, 3
      %p147 = por %p145, %p146
      %p149 = scmp.ne.s32.totalorder %s132, %s148
      %p150 = scmp.eq.s32.totalorder %s34, 0
      %p151 = por %p149, %p150
      %s152 = ssub.s32 %s36, %s43
      %p153 = scmp.eq.s32.totalorder %s152, 0
      %s155 = sadd.s32 %s154, 1
      %s156 = scalar_select %p153, %s154, %s155
      %p159 = pneg %p153
      %p160 = scmp.eq.s32.totalorder %s28, 3
      %p161 = por %p159, %p160
      %p162 = scmp.ne.s32.totalorder %s154, %s157
      %p163 = scmp.eq.s32.totalorder %s28, 0
      %p164 = por %p162, %p163
      %p165 = scmp.ne.s32.totalorder %s154, %s157
      %p166 = scmp.eq.s32.totalorder %s33, 3
      %p167 = por %p165, %p166
      %p168 = scmp.ne.s32.totalorder %s157, %s158
      %p169 = scmp.eq.s32.totalorder %s33, 0
      %p170 = por %p168, %p169
      %p171 = scmp.ne.s32.totalorder %s157, %s158
      %p172 = scmp.eq.s32.totalorder %s34, 3
      %p173 = por %p171, %p172
      %p175 = scmp.ne.s32.totalorder %s158, %s174
      %p176 = scmp.eq.s32.totalorder %s34, 0
      %p177 = por %p175, %p176
      %s178 = ssub.s32 %s36, %s43
      %p179 = scmp.eq.s32.totalorder %s178, 0
      %s181 = sadd.s32 %s180, 1
      %s182 = scalar_select %p179, %s180, %s181
      %p185 = pneg %p179
      %p186 = scmp.eq.s32.totalorder %s28, 3
      %p187 = por %p185, %p186
      %p188 = scmp.ne.s32.totalorder %s180, %s183
      %p189 = scmp.eq.s32.totalorder %s28, 0
      %p190 = por %p188, %p189
      %p191 = scmp.ne.s32.totalorder %s180, %s183
      %p192 = scmp.eq.s32.totalorder %s33, 3
      %p193 = por %p191, %p192
      %p194 = scmp.ne.s32.totalorder %s183, %s184
      %p195 = scmp.eq.s32.totalorder %s33, 0
      %p196 = por %p194, %p195
      %p197 = scmp.ne.s32.totalorder %s183, %s184
      %p198 = scmp.eq.s32.totalorder %s34, 3
      %p199 = por %p197, %p198
      %p201 = scmp.ne.s32.totalorder %s184, %s200
      %p202 = scmp.eq.s32.totalorder %s34, 0
      %p203 = por %p201, %p202
      %s204 = ssub.s32 %s36, %s43
      %p205 = scmp.eq.s32.totalorder %s204, 0
      %s207 = sadd.s32 %s206, 1
      %s208 = scalar_select %p205, %s206, %s207
      %p211 = pneg %p205
      %p212 = scmp.eq.s32.totalorder %s28, 3
      %p213 = por %p211, %p212
      %p214 = scmp.ne.s32.totalorder %s206, %s209
      %p215 = scmp.eq.s32.totalorder %s28, 0
      %p216 = por %p214, %p215
      %p217 = scmp.ne.s32.totalorder %s206, %s209
      %p218 = scmp.eq.s32.totalorder %s33, 3
      %p219 = por %p217, %p218
      %p220 = scmp.ne.s32.totalorder %s209, %s210
      %p221 = scmp.eq.s32.totalorder %s33, 0
      %p222 = por %p220, %p221
      %p223 = scmp.ne.s32.totalorder %s209, %s210
      %p224 = scmp.eq.s32.totalorder %s34, 3
      %p225 = por %p223, %p224
      %p227 = scmp.ne.s32.totalorder %s210, %s226
      %p228 = scmp.eq.s32.totalorder %s34, 0
      %p229 = por %p227, %p228
      %s230 = ssub.s32 %s36, %s43
      %p231 = scmp.eq.s32.totalorder %s230, 0
      %s233 = sadd.s32 %s232, 1
      %s234 = scalar_select %p231, %s232, %s233
      %p237 = pneg %p231
      %p238 = scmp.eq.s32.totalorder %s28, 3
      %p239 = por %p237, %p238
      %p240 = scmp.ne.s32.totalorder %s232, %s235
      %p241 = scmp.eq.s32.totalorder %s28, 0
      %p242 = por %p240, %p241
      %p243 = scmp.ne.s32.totalorder %s232, %s235
      %p244 = scmp.eq.s32.totalorder %s33, 3
      %p245 = por %p243, %p244
      %p246 = scmp.ne.s32.totalorder %s235, %s236
      %p247 = scmp.eq.s32.totalorder %s33, 0
      %p248 = por %p246, %p247
      %p249 = scmp.ne.s32.totalorder %s235, %s236
      %p250 = scmp.eq.s32.totalorder %s34, 3
      %p251 = por %p249, %p250
      %p253 = scmp.ne.s32.totalorder %s236, %s252
      %p254 = scmp.eq.s32.totalorder %s34, 0
      %p255 = por %p253, %p254
      %s256 = ssub.s32 %s36, %s43
      %p257 = scmp.eq.s32.totalorder %s256, 0
      %s259 = sadd.s32 %s258, 1
      %s260 = scalar_select %p257, %s258, %s259
      %p263 = pneg %p257
      %p264 = scmp.eq.s32.totalorder %s28, 3
      %p265 = por %p263, %p264
      %p266 = scmp.ne.s32.totalorder %s258, %s261
      %p267 = scmp.eq.s32.totalorder %s28, 0
      %p268 = por %p266, %p267
      %p269 = scmp.ne.s32.totalorder %s258, %s261
      %p270 = scmp.eq.s32.totalorder %s33, 3
      %p271 = por %p269, %p270
      %p272 = scmp.ne.s32.totalorder %s261, %s262
      %p273 = scmp.eq.s32.totalorder %s33, 0
      %p274 = por %p272, %p273
      %p275 = scmp.ne.s32.totalorder %s261, %s262
      %p276 = scmp.eq.s32.totalorder %s34, 3
      %p277 = por %p275, %p276
      %p279 = scmp.ne.s32.totalorder %s262, %s278
      %p280 = scmp.eq.s32.totalorder %s34, 0
      %p281 = por %p279, %p280
      %s282 = ssub.s32 %s36, %s43
      %p283 = scmp.eq.s32.totalorder %s282, 0
      %s285 = sadd.s32 %s284, 1
      %s286 = scalar_select %p283, %s284, %s285
      %p289 = pneg %p283
      %p290 = scmp.eq.s32.totalorder %s28, 3
      %p291 = por %p289, %p290
      %p292 = scmp.ne.s32.totalorder %s284, %s287
      %p293 = scmp.eq.s32.totalorder %s28, 0
      %p294 = por %p292, %p293
      %p295 = scmp.ne.s32.totalorder %s284, %s287
      %p296 = scmp.eq.s32.totalorder %s33, 3
      %p297 = por %p295, %p296
      %p298 = scmp.ne.s32.totalorder %s287, %s288
      %p299 = scmp.eq.s32.totalorder %s33, 0
      %p300 = por %p298, %p299
      %p301 = scmp.ne.s32.totalorder %s287, %s288
      %p302 = scmp.eq.s32.totalorder %s34, 3
      %p303 = por %p301, %p302
      %p305 = scmp.ne.s32.totalorder %s288, %s304
      %p306 = scmp.eq.s32.totalorder %s34, 0
      %p307 = por %p305, %p306
      %s308 = ssub.s32 %s36, %s43
      %p309 = scmp.eq.s32.totalorder %s308, 0
      %s311 = sadd.s32 %s310, 1
      %s312 = scalar_select %p309, %s310, %s311
      %p315 = pneg %p309
      %p316 = scmp.eq.s32.totalorder %s28, 3
      %p317 = por %p315, %p316
      %p318 = scmp.ne.s32.totalorder %s310, %s313
      %p319 = scmp.eq.s32.totalorder %s28, 0
      %p320 = por %p318, %p319
      %p321 = scmp.ne.s32.totalorder %s310, %s313
      %p322 = scmp.eq.s32.totalorder %s33, 3
      %p323 = por %p321, %p322
      %p324 = scmp.ne.s32.totalorder %s313, %s314
      %p325 = scmp.eq.s32.totalorder %s33, 0
      %p326 = por %p324, %p325
      %p327 = scmp.ne.s32.totalorder %s313, %s314
      %p328 = scmp.eq.s32.totalorder %s34, 3
      %p329 = por %p327, %p328
      %p331 = scmp.ne.s32.totalorder %s314, %s330
      %p332 = scmp.eq.s32.totalorder %s34, 0
      %p333 = por %p331, %p332
      %s334 = ssub.s32 %s36, %s43
      %p335 = scmp.eq.s32.totalorder %s334, 0
      %s337 = sadd.s32 %s336, 1
      %s338 = scalar_select %p335, %s336, %s337
      %p341 = pneg %p335
      %p342 = scmp.eq.s32.totalorder %s28, 3
      %p343 = por %p341, %p342
      %p344 = scmp.ne.s32.totalorder %s336, %s339
      %p345 = scmp.eq.s32.totalorder %s28, 0
      %p346 = por %p344, %p345
      %p347 = scmp.ne.s32.totalorder %s336, %s339
      %p348 = scmp.eq.s32.totalorder %s33, 3
      %p349 = por %p347, %p348
      %p350 = scmp.ne.s32.totalorder %s339, %s340
      %p351 = scmp.eq.s32.totalorder %s33, 0
      %p352 = por %p350, %p351
      %p353 = scmp.ne.s32.totalorder %s339, %s340
      %p354 = scmp.eq.s32.totalorder %s34, 3
      %p355 = por %p353, %p354
      %p357 = scmp.ne.s32.totalorder %s340, %s356
      %p358 = scmp.eq.s32.totalorder %s34, 0
      %p359 = por %p357, %p358
      %s360 = ssub.s32 %s36, %s43
      %p361 = scmp.eq.s32.totalorder %s360, 0
      %s363 = sadd.s32 %s362, 1
      %s364 = scalar_select %p361, %s362, %s363
      %p367 = pneg %p361
      %p368 = scmp.eq.s32.totalorder %s28, 3
      %p369 = por %p367, %p368
      %p370 = scmp.ne.s32.totalorder %s362, %s365
      %p371 = scmp.eq.s32.totalorder %s28, 0
      %p372 = por %p370, %p371
      %p373 = scmp.ne.s32.totalorder %s362, %s365
      %p374 = scmp.eq.s32.totalorder %s33, 3
      %p375 = por %p373, %p374
      %p376 = scmp.ne.s32.totalorder %s365, %s366
      %p377 = scmp.eq.s32.totalorder %s33, 0
      %p378 = por %p376, %p377
      %p379 = scmp.ne.s32.totalorder %s365, %s366
      %p380 = scmp.eq.s32.totalorder %s34, 3
      %p381 = por %p379, %p380
      %p383 = scmp.ne.s32.totalorder %s366, %s382
      %p384 = scmp.eq.s32.totalorder %s34, 0
      %p385 = por %p383, %p384
      %s386 = ssub.s32 %s36, %s43
      %p387 = scmp.eq.s32.totalorder %s386, 0
      %s389 = sadd.s32 %s388, 1
      %s390 = scalar_select %p387, %s388, %s389
      %p393 = pneg %p387
      %p394 = scmp.eq.s32.totalorder %s28, 3
      %p395 = por %p393, %p394
      %p396 = scmp.ne.s32.totalorder %s388, %s391
      %p397 = scmp.eq.s32.totalorder %s28, 0
      %p398 = por %p396, %p397
      %p399 = scmp.ne.s32.totalorder %s388, %s391
      %p400 = scmp.eq.s32.totalorder %s33, 3
      %p401 = por %p399, %p400
      %p402 = scmp.ne.s32.totalorder %s391, %s392
      %p403 = scmp.eq.s32.totalorder %s33, 0
      %p404 = por %p402, %p403
      %p405 = scmp.ne.s32.totalorder %s391, %s392
      %p406 = scmp.eq.s32.totalorder %s34, 3
      %p407 = por %p405, %p406
      %p409 = scmp.ne.s32.totalorder %s392, %s408
      %p410 = scmp.eq.s32.totalorder %s34, 0
      %p411 = por %p409, %p410
      %s412 = ssub.s32 %s36, %s43
      %p413 = scmp.eq.s32.totalorder %s412, 0
      %s415 = sadd.s32 %s414, 1
      %s416 = scalar_select %p413, %s414, %s415
      %p419 = pneg %p413
      %p420 = scmp.eq.s32.totalorder %s28, 3
      %p421 = por %p419, %p420
      %p422 = scmp.ne.s32.totalorder %s414, %s417
      %p423 = scmp.eq.s32.totalorder %s28, 0
      %p424 = por %p422, %p423
      %p425 = scmp.ne.s32.totalorder %s414, %s417
      %p426 = scmp.eq.s32.totalorder %s33, 3
      %p427 = por %p425, %p426
      %p428 = scmp.ne.s32.totalorder %s417, %s418
      %p429 = scmp.eq.s32.totalorder %s33, 0
      %p430 = por %p428, %p429
      %p431 = scmp.ne.s32.totalorder %s417, %s418
      %p432 = scmp.eq.s32.totalorder %s34, 3
      %p433 = por %p431, %p432
      %p435 = scmp.ne.s32.totalorder %s418, %s434
      %p436 = scmp.eq.s32.totalorder %s34, 0
      %p437 = por %p435, %p436
      %s438 = ssub.s32 %s36, %s43
      %p439 = scmp.eq.s32.totalorder %s438, 0
      %s441 = sadd.s32 %s440, 1
      %s442 = scalar_select %p439, %s440, %s441
      %p445 = pneg %p439
      %p446 = scmp.eq.s32.totalorder %s28, 3
      %p447 = por %p445, %p446
      %p448 = scmp.ne.s32.totalorder %s440, %s443
      %p449 = scmp.eq.s32.totalorder %s28, 0
      %p450 = por %p448, %p449
      %p451 = scmp.ne.s32.totalorder %s440, %s443
      %p452 = scmp.eq.s32.totalorder %s33, 3
      %p453 = por %p451, %p452
      %p454 = scmp.ne.s32.totalorder %s443, %s444
      %p455 = scmp.eq.s32.totalorder %s33, 0
      %p456 = por %p454, %p455
      %p457 = scmp.ne.s32.totalorder %s443, %s444
      %p458 = scmp.eq.s32.totalorder %s34, 3
      %p459 = por %p457, %p458
      %p461 = scmp.ne.s32.totalorder %s444, %s460
      %p462 = scmp.eq.s32.totalorder %s34, 0
      %p463 = por %p461, %p462
      %s464 = ssub.s32 %s36, %s43
      %p465 = scmp.eq.s32.totalorder %s464, 0
      %s467 = sadd.s32 %s466, 1
      %s468 = scalar_select %p465, %s466, %s467
      %p471 = pneg %p465
      %p472 = scmp.eq.s32.totalorder %s28, 3
      %p473 = por %p471, %p472
      %p474 = scmp.ne.s32.totalorder %s466, %s469
      %p475 = scmp.eq.s32.totalorder %s28, 0
      %p476 = por %p474, %p475
      %p477 = scmp.ne.s32.totalorder %s466, %s469
      %p478 = scmp.eq.s32.totalorder %s33, 3
      %p479 = por %p477, %p478
      %p480 = scmp.ne.s32.totalorder %s469, %s470
      %p481 = scmp.eq.s32.totalorder %s33, 0
      %p482 = por %p480, %p481
      %p483 = scmp.ne.s32.totalorder %s469, %s470
      %p484 = scmp.eq.s32.totalorder %s34, 3
      %p485 = por %p483, %p484
      %p487 = scmp.ne.s32.totalorder %s470, %s486
      %p488 = scmp.eq.s32.totalorder %s34, 0
      %p489 = por %p487, %p488
      %s491 = sadd.s32 %s490, 1
      %p494 = scmp.eq.s32.totalorder %s28, 3
      %p495 = scmp.ne.s32.totalorder %s490, %s492
      %p496 = scmp.eq.s32.totalorder %s28, 0
      %p497 = por %p495, %p496
      %p498 = scmp.ne.s32.totalorder %s490, %s492
      %p499 = scmp.eq.s32.totalorder %s33, 3
      %p500 = por %p498, %p499
      %p501 = scmp.ne.s32.totalorder %s492, %s493
      %p502 = scmp.eq.s32.totalorder %s33, 0
      %p503 = por %p501, %p502
      %p504 = scmp.ne.s32.totalorder %s492, %s493
      %p505 = scmp.eq.s32.totalorder %s34, 3
      %p506 = por %p504, %p505
      %p508 = scmp.ne.s32.totalorder %s493, %s507
      %p509 = scmp.eq.s32.totalorder %s34, 0
      %p510 = por %p508, %p509
      %s512 = sadd.s32 %s511, 1
      %p515 = scmp.eq.s32.totalorder %s28, 3
      %p516 = scmp.ne.s32.totalorder %s511, %s513
      %p517 = scmp.eq.s32.totalorder %s28, 0
      %p518 = por %p516, %p517
      %p519 = scmp.ne.s32.totalorder %s511, %s513
      %p520 = scmp.eq.s32.totalorder %s33, 3
      %p521 = por %p519, %p520
      %p522 = scmp.ne.s32.totalorder %s513, %s514
      %p523 = scmp.eq.s32.totalorder %s33, 0
      %p524 = por %p522, %p523
      %p525 = scmp.ne.s32.totalorder %s513, %s514
      %p526 = scmp.eq.s32.totalorder %s34, 3
      %p527 = por %p525, %p526
      %p529 = scmp.ne.s32.totalorder %s514, %s528
      %p530 = scmp.eq.s32.totalorder %s34, 0
      %p531 = por %p529, %p530
      %s532 = ssub.s32 %s35, %s47
      %p533 = scmp.eq.s32.totalorder %s532, 0
      %s535 = sadd.s32 %s534, 1
      %s536 = scalar_select %p533, %s534, %s535
      %p539 = pneg %p533
      %p540 = scmp.eq.s32.totalorder %s28, 3
      %p541 = por %p539, %p540
      %p542 = scmp.ne.s32.totalorder %s534, %s537
      %p543 = scmp.eq.s32.totalorder %s28, 0
      %p544 = por %p542, %p543
      %p545 = scmp.ne.s32.totalorder %s534, %s537
      %p546 = scmp.eq.s32.totalorder %s33, 3
      %p547 = por %p545, %p546
      %p548 = scmp.ne.s32.totalorder %s537, %s538
      %p549 = scmp.eq.s32.totalorder %s33, 0
      %p550 = por %p548, %p549
      %p551 = scmp.ne.s32.totalorder %s537, %s538
      %p552 = scmp.eq.s32.totalorder %s34, 3
      %p553 = por %p551, %p552
      %p555 = scmp.ne.s32.totalorder %s538, %s554
      %p556 = scmp.eq.s32.totalorder %s34, 0
      %p557 = por %p555, %p556
      %p558 = scmp.le.s32.totalorder 1, %s28
      %p559 = scmp.lt.s32.totalorder %s28, 5
      %p560 = pnand %p558, %p559
      %p561 = pneg %p560
      // Predicated region
      $region9: #{generate_task_model_forward.3} parent=5 // pred_check
        _
      $region10: #{generate_task_model_forward.3} parent=5 // pred_check_branch
        %563 = sbr.rel (%p560) target = $region12
      $region11: #{generate_task_model_forward.3} parent=5 // pred_region
        %s564 = ssub.s32 %s28, 1
        // Predicated region
        $region13: #{generate_task_model_forward.3} parent=11 // pred_check
          %p565 = pneg %p503
        $region14: #{generate_task_model_forward.3} parent=11 // pred_check_branch
          %567 = sbr.rel (%p565) target = $region16
        $region15: #{generate_task_model_forward.3} parent=11 // pred_region
          _
        $region16: #{generate_task_model_forward.3} parent=11 // pred_fallthru
          _
        // Predicated region
        $region17: #{generate_task_model_forward.3} parent=11 // pred_check
          %p568 = pneg %p524
        $region18: #{generate_task_model_forward.3} parent=11 // pred_check_branch
          %570 = sbr.rel (%p568) target = $region20
        $region19: #{generate_task_model_forward.3} parent=11 // pred_region
          _
        $region20: #{generate_task_model_forward.3} parent=11 // pred_fallthru
          _
      $region12: #{generate_task_model_forward.3} parent=5 // pred_fallthru
        _
      %p571 = scmp.lt.s32.totalorder %s28, 4
      // Predicated region
      $region21: #{generate_task_model_forward.3} parent=5 // pred_check
        %p572 = pneg %p571
      $region22: #{generate_task_model_forward.3} parent=5 // pred_check_branch
        %574 = sbr.rel (%p572) target = $region24
      $region23: #{generate_task_model_forward.3} parent=5 // pred_region
        // Predicated region
        $region25: #{generate_task_model_forward.3} parent=23 // pred_check
          %p575 = pneg %p60
        $region26: #{generate_task_model_forward.3} parent=23 // pred_check_branch
          %577 = sbr.rel (%p575) target = $region28
        $region27: #{generate_task_model_forward.3} parent=23 // pred_region
          %p578 = scmp.lt.s32.totalorder %s35, 1
          %s579 = scalar_select %p578, %s35, 1
          %s580 = scalar_lea.vmem %s0, %s579
        $region28: #{generate_task_model_forward.3} parent=23 // pred_fallthru
          _
        // Predicated region
        $region29: #{generate_task_model_forward.3} parent=23 // pred_check
          %p581 = pneg %p86
        $region30: #{generate_task_model_forward.3} parent=23 // pred_check_branch
          %583 = sbr.rel (%p581) target = $region32
        $region31: #{generate_task_model_forward.3} parent=23 // pred_region
          %p584 = scmp.lt.s32.totalorder %s35, 1
          %s585 = scalar_select %p584, %s35, 1
          %s586 = smul.addr %s585, 8
          %s587 = scalar_lea.vmem %s1, %s586
        $region32: #{generate_task_model_forward.3} parent=23 // pred_fallthru
          _
        // Predicated region
        $region33: #{generate_task_model_forward.3} parent=23 // pred_check
          %p588 = pneg %p112
        $region34: #{generate_task_model_forward.3} parent=23 // pred_check_branch
          %590 = sbr.rel (%p588) target = $region36
        $region35: #{generate_task_model_forward.3} parent=23 // pred_region
          %p591 = scmp.lt.s32.totalorder %s35, 1
          %s592 = scalar_select %p591, %s35, 1
          %s593 = smul.addr %s592, 8
          %s594 = scalar_lea.vmem %s2, %s593
        $region36: #{generate_task_model_forward.3} parent=23 // pred_fallthru
          _
        // Predicated region
        $region37: #{generate_task_model_forward.3} parent=23 // pred_check
          %p595 = pneg %p138
        $region38: #{generate_task_model_forward.3} parent=23 // pred_check_branch
          %597 = sbr.rel (%p595) target = $region40
        $region39: #{generate_task_model_forward.3} parent=23 // pred_region
          %p598 = scmp.lt.s32.totalorder %s36, 1
          %s599 = scalar_select %p598, %s36, 1
          %s600 = smul.addr %s599, 48
          %s601 = smul.addr %s600, 4
          %s602 = scalar_lea.vmem %s3, %s601
        $region40: #{generate_task_model_forward.3} parent=23 // pred_fallthru
          _
        // Predicated region
        $region41: #{generate_task_model_forward.3} parent=23 // pred_check
          %p603 = pneg %p164
        $region42: #{generate_task_model_forward.3} parent=23 // pred_check_branch
          %605 = sbr.rel (%p603) target = $region44
        $region43: #{generate_task_model_forward.3} parent=23 // pred_region
          %p606 = scmp.lt.s32.totalorder %s36, 1
          %s607 = scalar_select %p606, %s36, 1
          %s608 = smul.addr %s607, 12
          %s609 = scalar_lea.vmem %s4, %s608
        $region44: #{generate_task_model_forward.3} parent=23 // pred_fallthru
          _
        // Predicated region
        $region45: #{generate_task_model_forward.3} parent=23 // pred_check
          %p610 = pneg %p190
        $region46: #{generate_task_model_forward.3} parent=23 // pred_check_branch
          %612 = sbr.rel (%p610) target = $region48
        $region47: #{generate_task_model_forward.3} parent=23 // pred_region
          %p613 = scmp.lt.s32.totalorder %s36, 1
          %s614 = scalar_select %p613, %s36, 1
          %s615 = smul.addr %s614, 4
          %s616 = smul.addr %s615, 4
          %s617 = scalar_lea.vmem %s5, %s616
        $region48: #{generate_task_model_forward.3} parent=23 // pred_fallthru
          _
        // Predicated region
        $region49: #{generate_task_model_forward.3} parent=23 // pred_check
          %p618 = pneg %p216
        $region50: #{generate_task_model_forward.3} parent=23 // pred_check_branch
          %620 = sbr.rel (%p618) target = $region52
        $region51: #{generate_task_model_forward.3} parent=23 // pred_region
          %p621 = scmp.lt.s32.totalorder %s36, 1
          %s622 = scalar_select %p621, %s36, 1
          %s623 = scalar_lea.vmem %s6, %s622
        $region52: #{generate_task_model_forward.3} parent=23 // pred_fallthru
          _
        // Predicated region
        $region53: #{generate_task_model_forward.3} parent=23 // pred_check
          %p624 = pneg %p242
        $region54: #{generate_task_model_forward.3} parent=23 // pred_check_branch
          %626 = sbr.rel (%p624) target = $region56
        $region55: #{generate_task_model_forward.3} parent=23 // pred_region
          %p627 = scmp.lt.s32.totalorder %s36, 1
          %s628 = scalar_select %p627, %s36, 1
          %s629 = smul.addr %s628, 48
          %s630 = smul.addr %s629, 4
          %s631 = scalar_lea.vmem %s7, %s630
        $region56: #{generate_task_model_forward.3} parent=23 // pred_fallthru
          _
        // Predicated region
        $region57: #{generate_task_model_forward.3} parent=23 // pred_check
          %p632 = pneg %p268
        $region58: #{generate_task_model_forward.3} parent=23 // pred_check_branch
          %634 = sbr.rel (%p632) target = $region60
        $region59: #{generate_task_model_forward.3} parent=23 // pred_region
          %p635 = scmp.lt.s32.totalorder %s36, 1
          %s636 = scalar_select %p635, %s36, 1
          %s637 = smul.addr %s636, 12
          %s638 = scalar_lea.vmem %s8, %s637
        $region60: #{generate_task_model_forward.3} parent=23 // pred_fallthru
          _
        // Predicated region
        $region61: #{generate_task_model_forward.3} parent=23 // pred_check
          %p639 = pneg %p294
        $region62: #{generate_task_model_forward.3} parent=23 // pred_check_branch
          %641 = sbr.rel (%p639) target = $region64
        $region63: #{generate_task_model_forward.3} parent=23 // pred_region
          %p642 = scmp.lt.s32.totalorder %s36, 1
          %s643 = scalar_select %p642, %s36, 1
          %s644 = smul.addr %s643, 4
          %s645 = smul.addr %s644, 4
          %s646 = scalar_lea.vmem %s9, %s645
        $region64: #{generate_task_model_forward.3} parent=23 // pred_fallthru
          _
        // Predicated region
        $region65: #{generate_task_model_forward.3} parent=23 // pred_check
          %p647 = pneg %p320
        $region66: #{generate_task_model_forward.3} parent=23 // pred_check_branch
          %649 = sbr.rel (%p647) target = $region68
        $region67: #{generate_task_model_forward.3} parent=23 // pred_region
          %p650 = scmp.lt.s32.totalorder %s36, 1
          %s651 = scalar_select %p650, %s36, 1
          %s652 = scalar_lea.vmem %s10, %s651
        $region68: #{generate_task_model_forward.3} parent=23 // pred_fallthru
          _
        // Predicated region
        $region69: #{generate_task_model_forward.3} parent=23 // pred_check
          %p653 = pneg %p346
        $region70: #{generate_task_model_forward.3} parent=23 // pred_check_branch
          %655 = sbr.rel (%p653) target = $region72
        $region71: #{generate_task_model_forward.3} parent=23 // pred_region
          %p656 = scmp.lt.s32.totalorder %s36, 1
          %s657 = scalar_select %p656, %s36, 1
          %s658 = smul.addr %s657, 4
          %s659 = smul.addr %s658, 4
          %s660 = scalar_lea.vmem %s11, %s659
        $region72: #{generate_task_model_forward.3} parent=23 // pred_fallthru
          _
        // Predicated region
        $region73: #{generate_task_model_forward.3} parent=23 // pred_check
          %p661 = pneg %p372
        $region74: #{generate_task_model_forward.3} parent=23 // pred_check_branch
          %663 = sbr.rel (%p661) target = $region76
        $region75: #{generate_task_model_forward.3} parent=23 // pred_region
          %p664 = scmp.lt.s32.totalorder %s36, 1
          %s665 = scalar_select %p664, %s36, 1
          %s666 = scalar_lea.vmem %s12, %s665
        $region76: #{generate_task_model_forward.3} parent=23 // pred_fallthru
          _
        // Predicated region
        $region77: #{generate_task_model_forward.3} parent=23 // pred_check
          %p667 = pneg %p398
        $region78: #{generate_task_model_forward.3} parent=23 // pred_check_branch
          %669 = sbr.rel (%p667) target = $region80
        $region79: #{generate_task_model_forward.3} parent=23 // pred_region
          %p670 = scmp.lt.s32.totalorder %s36, 1
          %s671 = scalar_select %p670, %s36, 1
          %s672 = smul.addr %s671, 4
          %s673 = smul.addr %s672, 4
          %s674 = scalar_lea.vmem %s13, %s673
        $region80: #{generate_task_model_forward.3} parent=23 // pred_fallthru
          _
        // Predicated region
        $region81: #{generate_task_model_forward.3} parent=23 // pred_check
          %p675 = pneg %p424
        $region82: #{generate_task_model_forward.3} parent=23 // pred_check_branch
          %677 = sbr.rel (%p675) target = $region84
        $region83: #{generate_task_model_forward.3} parent=23 // pred_region
          %p678 = scmp.lt.s32.totalorder %s36, 1
          %s679 = scalar_select %p678, %s36, 1
          %s680 = scalar_lea.vmem %s14, %s679
        $region84: #{generate_task_model_forward.3} parent=23 // pred_fallthru
          _
        // Predicated region
        $region85: #{generate_task_model_forward.3} parent=23 // pred_check
          %p681 = pneg %p450
        $region86: #{generate_task_model_forward.3} parent=23 // pred_check_branch
          %683 = sbr.rel (%p681) target = $region88
        $region87: #{generate_task_model_forward.3} parent=23 // pred_region
          %p684 = scmp.lt.s32.totalorder %s36, 1
          %s685 = scalar_select %p684, %s36, 1
          %s686 = smul.addr %s685, 3
          %s687 = scalar_lea.vmem %s15, %s686
        $region88: #{generate_task_model_forward.3} parent=23 // pred_fallthru
          _
        // Predicated region
        $region89: #{generate_task_model_forward.3} parent=23 // pred_check
          %p688 = pneg %p476
        $region90: #{generate_task_model_forward.3} parent=23 // pred_check_branch
          %690 = sbr.rel (%p688) target = $region92
        $region91: #{generate_task_model_forward.3} parent=23 // pred_region
          %p691 = scmp.lt.s32.totalorder %s36, 1
          %s692 = scalar_select %p691, %s36, 1
          %s693 = smul.addr %s692, 3
          %s694 = scalar_lea.vmem %s16, %s693
        $region92: #{generate_task_model_forward.3} parent=23 // pred_fallthru
          _
      $region24: #{generate_task_model_forward.3} parent=5 // pred_fallthru
        _
      %p695 = scmp.le.s32.totalorder 1, %s28
      %p696 = scmp.lt.s32.totalorder %s28, 5
      %p697 = pnand %p695, %p696
      %p698 = pneg %p697
      // Predicated region
      $region93: #{generate_task_model_forward.3} parent=5 // pred_check
        _
      $region94: #{generate_task_model_forward.3} parent=5 // pred_check_branch
        %700 = sbr.rel (%p697) target = $region96
      $region95: #{generate_task_model_forward.3} parent=5 // pred_region
        %s701 = ssub.s32 %s28, 1
        %p702 = scmp.lt.s32.totalorder %s37, 1
        %s703 = scalar_select %p702, %s37, 1
        %s704 = scalar_lea.vmem %s0, %s703
        %p705 = pneg %p66
        %p706 = pneg %p63
        %p707 = scmp.lt.s32.totalorder %s37, 1
        %s708 = scalar_select %p707, %s37, 1
        %s709 = smul.addr %s708, 8
        %s710 = scalar_lea.vmem %s1, %s709
        %p711 = pneg %p92
        %p712 = pneg %p89
        %p713 = scmp.lt.s32.totalorder %s37, 1
        %s714 = scalar_select %p713, %s37, 1
        %s715 = smul.addr %s714, 8
        %s716 = scalar_lea.vmem %s2, %s715
        %p717 = pneg %p118
        %p718 = pneg %p115
        %p719 = scmp.lt.s32.totalorder %s38, 1
        %s720 = scalar_select %p719, %s38, 1
        %s721 = smul.addr %s720, 48
        %s722 = smul.addr %s721, 4
        %s723 = scalar_lea.vmem %s3, %s722
        %p724 = pneg %p144
        %p725 = pneg %p141
        %p726 = scmp.lt.s32.totalorder %s38, 1
        %s727 = scalar_select %p726, %s38, 1
        %s728 = smul.addr %s727, 12
        %s729 = scalar_lea.vmem %s4, %s728
        %p730 = pneg %p170
        %p731 = pneg %p167
        %p732 = scmp.lt.s32.totalorder %s38, 1
        %s733 = scalar_select %p732, %s38, 1
        %s734 = smul.addr %s733, 4
        %s735 = smul.addr %s734, 4
        %s736 = scalar_lea.vmem %s5, %s735
        %p737 = pneg %p196
        %p738 = pneg %p193
        %p739 = scmp.lt.s32.totalorder %s38, 1
        %s740 = scalar_select %p739, %s38, 1
        %s741 = scalar_lea.vmem %s6, %s740
        %p742 = pneg %p222
        %p743 = pneg %p219
        %p744 = scmp.lt.s32.totalorder %s38, 1
        %s745 = scalar_select %p744, %s38, 1
        %s746 = smul.addr %s745, 48
        %s747 = smul.addr %s746, 4
        %s748 = scalar_lea.vmem %s7, %s747
        %p749 = pneg %p248
        %p750 = pneg %p245
        %p751 = scmp.lt.s32.totalorder %s38, 1
        %s752 = scalar_select %p751, %s38, 1
        %s753 = smul.addr %s752, 12
        %s754 = scalar_lea.vmem %s8, %s753
        %p755 = pneg %p274
        %p756 = pneg %p271
        %p757 = scmp.lt.s32.totalorder %s38, 1
        %s758 = scalar_select %p757, %s38, 1
        %s759 = smul.addr %s758, 4
        %s760 = smul.addr %s759, 4
        %s761 = scalar_lea.vmem %s9, %s760
        %p762 = pneg %p300
        %p763 = pneg %p297
        %p764 = scmp.lt.s32.totalorder %s38, 1
        %s765 = scalar_select %p764, %s38, 1
        %s766 = scalar_lea.vmem %s10, %s765
        %p767 = pneg %p326
        %p768 = pneg %p323
        %p769 = scmp.lt.s32.totalorder %s38, 1
        %s770 = scalar_select %p769, %s38, 1
        %s771 = smul.addr %s770, 4
        %s772 = smul.addr %s771, 4
        %s773 = scalar_lea.vmem %s11, %s772
        %p774 = pneg %p352
        %p775 = pneg %p349
        %p776 = scmp.lt.s32.totalorder %s38, 1
        %s777 = scalar_select %p776, %s38, 1
        %s778 = scalar_lea.vmem %s12, %s777
        %p779 = pneg %p378
        %p780 = pneg %p375
        %p781 = scmp.lt.s32.totalorder %s38, 1
        %s782 = scalar_select %p781, %s38, 1
        %s783 = smul.addr %s782, 4
        %s784 = smul.addr %s783, 4
        %s785 = scalar_lea.vmem %s13, %s784
        %p786 = pneg %p404
        %p787 = pneg %p401
        %p788 = scmp.lt.s32.totalorder %s38, 1
        %s789 = scalar_select %p788, %s38, 1
        %s790 = scalar_lea.vmem %s14, %s789
        %p791 = pneg %p430
        %p792 = pneg %p427
        %p793 = scmp.lt.s32.totalorder %s38, 1
        %s794 = scalar_select %p793, %s38, 1
        %s795 = smul.addr %s794, 3
        %s796 = scalar_lea.vmem %s15, %s795
        %p797 = pneg %p456
        %p798 = pneg %p453
        %p799 = scmp.lt.s32.totalorder %s38, 1
        %s800 = scalar_select %p799, %s38, 1
        %s801 = smul.addr %s800, 3
        %s802 = scalar_lea.vmem %s16, %s801
        %p803 = pneg %p482
        %p804 = pneg %p479
        %p805 = pneg %p503
        %p806 = pneg %p500
        %p807 = pneg %p524
        %p808 = pneg %p521
        %p809 = pneg %p550
        %p810 = pneg %p547
        %s811 = sand.u32 %s537, 1
        %s812 = scalar_lea.sflag [#allocation4], %s811
        %s813 = sand.u32 %s537, 1
        %s814 = smul.addr %s813, 8
        %s815 = scalar_lea.vmem [#allocation3], %s814
        %p816 = scmp.lt.s32.totalorder %s37, 1
        %s817 = scalar_select %p816, %s37, 1
        %s818 = scalar_lea.vmem %s0, %s817
        %p819 = scmp.lt.s32.totalorder %s37, 1
        %s820 = scalar_select %p819, %s37, 1
        %s821 = smul.addr %s820, 8
        %s822 = scalar_lea.vmem %s1, %s821
        %p823 = scmp.lt.s32.totalorder %s37, 1
        %s824 = scalar_select %p823, %s37, 1
        %s825 = smul.addr %s824, 8
        %s826 = scalar_lea.vmem %s2, %s825
        %p827 = scmp.lt.s32.totalorder %s38, 1
        %s828 = scalar_select %p827, %s38, 1
        %s829 = smul.addr %s828, 48
        %s830 = smul.addr %s829, 4
        %s831 = scalar_lea.vmem %s3, %s830
        %p832 = scmp.lt.s32.totalorder %s38, 1
        %s833 = scalar_select %p832, %s38, 1
        %s834 = smul.addr %s833, 12
        %s835 = scalar_lea.vmem %s4, %s834
        %p836 = scmp.lt.s32.totalorder %s38, 1
        %s837 = scalar_select %p836, %s38, 1
        %s838 = smul.addr %s837, 4
        %s839 = smul.addr %s838, 4
        %s840 = scalar_lea.vmem %s5, %s839
        %p841 = scmp.lt.s32.totalorder %s38, 1
        %s842 = scalar_select %p841, %s38, 1
        %s843 = scalar_lea.vmem %s6, %s842
        %p844 = scmp.lt.s32.totalorder %s38, 1
        %s845 = scalar_select %p844, %s38, 1
        %s846 = smul.addr %s845, 48
        %s847 = smul.addr %s846, 4
        %s848 = scalar_lea.vmem %s7, %s847
        %p849 = scmp.lt.s32.totalorder %s38, 1
        %s850 = scalar_select %p849, %s38, 1
        %s851 = smul.addr %s850, 12
        %s852 = scalar_lea.vmem %s8, %s851
        %p853 = scmp.lt.s32.totalorder %s38, 1
        %s854 = scalar_select %p853, %s38, 1
        %s855 = smul.addr %s854, 4
        %s856 = smul.addr %s855, 4
        %s857 = scalar_lea.vmem %s9, %s856
        %p858 = scmp.lt.s32.totalorder %s38, 1
        %s859 = scalar_select %p858, %s38, 1
        %s860 = scalar_lea.vmem %s10, %s859
        %p861 = scmp.lt.s32.totalorder %s38, 1
        %s862 = scalar_select %p861, %s38, 1
        %s863 = smul.addr %s862, 4
        %s864 = smul.addr %s863, 4
        %s865 = scalar_lea.vmem %s11, %s864
        %p866 = scmp.lt.s32.totalorder %s38, 1
        %s867 = scalar_select %p866, %s38, 1
        %s868 = scalar_lea.vmem %s12, %s867
        %p869 = scmp.lt.s32.totalorder %s38, 1
        %s870 = scalar_select %p869, %s38, 1
        %s871 = smul.addr %s870, 4
        %s872 = smul.addr %s871, 4
        %s873 = scalar_lea.vmem %s13, %s872
        %p874 = scmp.lt.s32.totalorder %s38, 1
        %s875 = scalar_select %p874, %s38, 1
        %s876 = scalar_lea.vmem %s14, %s875
        %p877 = scmp.lt.s32.totalorder %s38, 1
        %s878 = scalar_select %p877, %s38, 1
        %s879 = smul.addr %s878, 3
        %s880 = scalar_lea.vmem %s15, %s879
        %p881 = scmp.lt.s32.totalorder %s38, 1
        %s882 = scalar_select %p881, %s38, 1
        %s883 = smul.addr %s882, 3
        %s884 = scalar_lea.vmem %s16, %s883
        %p886 = scmp.eq.s32.totalorder %s38, 0
        // Predicated region
        $region97: #{generate_task_model_forward.3} parent=95 // pred_check
          %p887 = pneg %p886
        $region98: #{generate_task_model_forward.3} parent=95 // pred_check_branch
          %889 = sbr.rel (%p887) target = $region100
        $region99: #{generate_task_model_forward.3} parent=95 // pred_region
          %v890 = vld [vmem:[%s822] sm:$0xff]
          %vm891 = vcmask 261120
          %892 = vst.msk [vmem:[#allocation2] sm:$0xff] %vm891, %v890
        $region100: #{generate_task_model_forward.3} parent=95 // pred_fallthru
          _
        %v893 = vld [vmem:[#allocation2] sm:$0xff]
        %v894 = vld [vmem:[%s826] sm:$0xff]
        %v895 = vlaneseq
        %v896 = vshrl.u32 %v895, 7
        %v897 = vlaneseq
        %v898 = vand.u32 %v897, 127
        %vm899 = vcmp.gt.s32.totalorder %v898, %v896
        %v900 = vsel %vm899, -1e+30, 0.0
        %v901 = vld [vmem:[%s818] sm:$0x1]
        %vm902 = vcmp.eq.s32.totalorder %v901, 2
        %v903 = vsel %vm902, -1e+30, 0.0
        %v905 = vlaneseq
        %v906 = vshrl.u32 %v905, 7
        %v907 = vsub.s32 0, %v906
        %v908 = vrot.slane %v903, %v907
        %v910 = vadd.f32 %v900, %v908
        %v911 = vpack.c.bf16 %v893, %v893
        %v912 = vld [vmem:[%s831] sm:$0xf]
        %v913 = vld [vmem:[%s831 + $0x4] sm:$0xf]
        %v914 = vld [vmem:[%s831 + $0x8] sm:$0xf]
        %v915 = vld [vmem:[%s831 + $0xc] sm:$0xf]
        %v916 = vld [vmem:[%s831 + $0x10] sm:$0xf]
        %v917 = vld [vmem:[%s831 + $0x14] sm:$0xf]
        %v918 = vld [vmem:[%s831 + $0x18] sm:$0xf]
        %v919 = vld [vmem:[%s831 + $0x1c] sm:$0xf]
        %v920 = vld [vmem:[%s831 + $0x20] sm:$0xf]
        %v921 = vld [vmem:[%s831 + $0x24] sm:$0xf]
        %v922 = vld [vmem:[%s831 + $0x28] sm:$0xf]
        %v923 = vld [vmem:[%s831 + $0x2c] sm:$0xf]
        %v924 = vld [vmem:[%s831 + $0x30] sm:$0xf]
        %v925 = vld [vmem:[%s831 + $0x34] sm:$0xf]
        %v926 = vld [vmem:[%s831 + $0x38] sm:$0xf]
        %v927 = vld [vmem:[%s831 + $0x3c] sm:$0xf]
        %s928 = scalar_lea.vmem %s831, 64
        %v929 = vld [vmem:[%s928] sm:$0xf]
        %v930 = vld [vmem:[%s928 + $0x4] sm:$0xf]
        %v931 = vld [vmem:[%s928 + $0x8] sm:$0xf]
        %v932 = vld [vmem:[%s928 + $0xc] sm:$0xf]
        %v933 = vld [vmem:[%s928 + $0x10] sm:$0xf]
        %v934 = vld [vmem:[%s928 + $0x14] sm:$0xf]
        %v935 = vld [vmem:[%s928 + $0x18] sm:$0xf]
        %v936 = vld [vmem:[%s928 + $0x1c] sm:$0xf]
        %v937 = vld [vmem:[%s928 + $0x20] sm:$0xf]
        %v938 = vld [vmem:[%s928 + $0x24] sm:$0xf]
        %v939 = vld [vmem:[%s928 + $0x28] sm:$0xf]
        %v940 = vld [vmem:[%s928 + $0x2c] sm:$0xf]
        %v941 = vld [vmem:[%s928 + $0x30] sm:$0xf]
        %v942 = vld [vmem:[%s928 + $0x34] sm:$0xf]
        %v943 = vld [vmem:[%s928 + $0x38] sm:$0xf]
        %v944 = vld [vmem:[%s928 + $0x3c] sm:$0xf]
        %s945 = scalar_lea.vmem %s831, 128
        %v946 = vld [vmem:[%s945] sm:$0xf]
        %v947 = vld [vmem:[%s945 + $0x4] sm:$0xf]
        %v948 = vld [vmem:[%s945 + $0x8] sm:$0xf]
        %v949 = vld [vmem:[%s945 + $0xc] sm:$0xf]
        %v950 = vld [vmem:[%s945 + $0x10] sm:$0xf]
        %v951 = vld [vmem:[%s945 + $0x14] sm:$0xf]
        %v952 = vld [vmem:[%s945 + $0x18] sm:$0xf]
        %v953 = vld [vmem:[%s945 + $0x1c] sm:$0xf]
        %v954 = vld [vmem:[%s945 + $0x20] sm:$0xf]
        %v955 = vld [vmem:[%s945 + $0x24] sm:$0xf]
        %v956 = vld [vmem:[%s945 + $0x28] sm:$0xf]
        %v957 = vld [vmem:[%s945 + $0x2c] sm:$0xf]
        %v958 = vld [vmem:[%s945 + $0x30] sm:$0xf]
        %v959 = vld [vmem:[%s945 + $0x34] sm:$0xf]
        %v960 = vld [vmem:[%s945 + $0x38] sm:$0xf]
        %v961 = vld [vmem:[%s945 + $0x3c] sm:$0xf]
        %v962 = vld [vmem:[%s835] sm:$0x1]
        %v963 = vld [vmem:[%s835 + $0x1] sm:$0x1]
        %v964 = vld [vmem:[%s835 + $0x2] sm:$0x1]
        %v965 = vld [vmem:[%s835 + $0x3] sm:$0x1]
        %s966 = scalar_lea.vmem %s835, 4
        %v967 = vld [vmem:[%s966] sm:$0x1]
        %v968 = vld [vmem:[%s966 + $0x1] sm:$0x1]
        %v969 = vld [vmem:[%s966 + $0x2] sm:$0x1]
        %v970 = vld [vmem:[%s966 + $0x3] sm:$0x1]
        %s971 = scalar_lea.vmem %s835, 8
        %v972 = vld [vmem:[%s971] sm:$0x1]
        %v973 = vld [vmem:[%s971 + $0x1] sm:$0x1]
        %v974 = vld [vmem:[%s971 + $0x2] sm:$0x1]
        %v975 = vld [vmem:[%s971 + $0x3] sm:$0x1]
        %v980 = vlaneseq
        %v981 = vshrl.u32 %v980, 7
        %v982 = vsub.s32 0, %v981
        %v983 = vrot.slane %v962, %v982
        %v984 = vlaneseq
        %v985 = vshrl.u32 %v984, 7
        %v986 = vsub.s32 0, %v985
        %v987 = vrot.slane %v963, %v986
        %v988 = vlaneseq
        %v989 = vshrl.u32 %v988, 7
        %v990 = vsub.s32 0, %v989
        %v991 = vrot.slane %v964, %v990
        %v992 = vlaneseq
        %v993 = vshrl.u32 %v992, 7
        %v994 = vsub.s32 0, %v993
        %v995 = vrot.slane %v965, %v994
        %v1004 = vunpack.c.l.b16 %v912
        %v1005 = vunpack.c.l.b16 %v913
        %v1006 = vunpack.c.l.b16 %v914
        %v1007 = vunpack.c.l.b16 %v915
        %v1008 = vpack.c.b16 %v1005, %v1004
        %v1009 = vpack.c.b16 %v1007, %v1006
        %vm1012 = vcmask 261120
        %v1014 = vsel %vm1012, %v911, 0
        %1016 = vmatprep.subr.bf16.mxu0 0
        %1017 = vmatpush1.bf16.msra.mxu0 %v1008
        %1018 = vmatprep.subr.bf16.mxu0 0
        %1019 = vmatpush1.bf16.msra.mxu0 %v1009
        %1020 = vmatprep.subr.bf16.mxu0 0
        %1021 = vmatpush1.bf16.msra.mxu0 0
        %1022 = vmatprep.subr.bf16.mxu0 0
        %1023 = vmatpush1.bf16.msra.mxu0 0
        %1024 = vmatprep.subr.bf16.mxu0 0
        %1025 = vmatpush1.bf16.msra.mxu0 0
        %1026 = vmatprep.subr.bf16.mxu0 0
        %1027 = vmatpush1.bf16.msra.mxu0 0
        %1028 = vmatprep.subr.bf16.mxu0 0
        %1029 = vmatpush1.bf16.msra.mxu0 0
        %1030 = vmatprep.subr.bf16.mxu0 0
        %1031 = vmatpush1.bf16.msra.mxu0 0
        %1032 = vmatprep.subr.bf16.mxu0 0
        %1033 = vmatpush1.bf16.msra.mxu0 0
        %1034 = vmatprep.subr.bf16.mxu0 0
        %1035 = vmatpush1.bf16.msra.mxu0 0
        %1036 = vmatprep.subr.bf16.mxu0 0
        %1037 = vmatpush1.bf16.msra.mxu0 0
        %1038 = vmatprep.subr.bf16.mxu0 0
        %1039 = vmatpush1.bf16.msra.mxu0 0
        %1040 = vmatprep.subr.bf16.mxu0 0
        %1041 = vmatpush1.bf16.msra.mxu0 0
        %1042 = vmatprep.subr.bf16.mxu0 0
        %1043 = vmatpush1.bf16.msra.mxu0 0
        %1044 = vmatprep.subr.bf16.mxu0 0
        %1045 = vmatpush1.bf16.msra.mxu0 0
        %1046 = vmatprep.subr.bf16.mxu0 0
        %1047 = vmatpush1.bf16.msra.mxu0 0
        %1048 = vmatprep.mubr.bf16.mxu0 0
        %1049 = vmatmul.mubr.bf16.gmra.mrb[0].mxu0 %v1014
        %v1050 = vpop.f32.mrb[0].mxu0
        %v1051 = vadd.f32 %v983, %v1050
        %v1052 = vpop.f32.mrb[0].mxu0
        %v1053 = vpop.f32.mrb[0].mxu0
        %v1054 = vpop.f32.mrb[0].mxu0
        %1055 = vdwg.mxu0
        %v1060 = vunpack.c.l.b16 %v916
        %v1061 = vunpack.c.l.b16 %v917
        %v1062 = vunpack.c.l.b16 %v918
        %v1063 = vunpack.c.l.b16 %v919
        %v1064 = vpack.c.b16 %v1061, %v1060
        %v1065 = vpack.c.b16 %v1063, %v1062
        %1068 = vmatprep.subr.bf16.mxu0 0
        %1069 = vmatpush1.bf16.msra.mxu0 %v1064
        %1070 = vmatprep.subr.bf16.mxu0 0
        %1071 = vmatpush1.bf16.msra.mxu0 %v1065
        %1072 = vmatprep.subr.bf16.mxu0 0
        %1073 = vmatpush1.bf16.msra.mxu0 0
        %1074 = vmatprep.subr.bf16.mxu0 0
        %1075 = vmatpush1.bf16.msra.mxu0 0
        %1076 = vmatprep.subr.bf16.mxu0 0
        %1077 = vmatpush1.bf16.msra.mxu0 0
        %1078 = vmatprep.subr.bf16.mxu0 0
        %1079 = vmatpush1.bf16.msra.mxu0 0
        %1080 = vmatprep.subr.bf16.mxu0 0
        %1081 = vmatpush1.bf16.msra.mxu0 0
        %1082 = vmatprep.subr.bf16.mxu0 0
        %1083 = vmatpush1.bf16.msra.mxu0 0
        %1084 = vmatprep.subr.bf16.mxu0 0
        %1085 = vmatpush1.bf16.msra.mxu0 0
        %1086 = vmatprep.subr.bf16.mxu0 0
        %1087 = vmatpush1.bf16.msra.mxu0 0
        %1088 = vmatprep.subr.bf16.mxu0 0
        %1089 = vmatpush1.bf16.msra.mxu0 0
        %1090 = vmatprep.subr.bf16.mxu0 0
        %1091 = vmatpush1.bf16.msra.mxu0 0
        %1092 = vmatprep.subr.bf16.mxu0 0
        %1093 = vmatpush1.bf16.msra.mxu0 0
        %1094 = vmatprep.subr.bf16.mxu0 0
        %1095 = vmatpush1.bf16.msra.mxu0 0
        %1096 = vmatprep.subr.bf16.mxu0 0
        %1097 = vmatpush1.bf16.msra.mxu0 0
        %1098 = vmatprep.subr.bf16.mxu0 0
        %1099 = vmatpush1.bf16.msra.mxu0 0
        %1100 = vmatprep.mubr.bf16.mxu0 0
        %1101 = vmatmul.mubr.bf16.gmra.mrb[0].mxu0 %v1014
        %v1102 = vpop.f32.mrb[0].mxu0
        %v1103 = vadd.f32 %v987, %v1102
        %v1104 = vpop.f32.mrb[0].mxu0
        %v1105 = vpop.f32.mrb[0].mxu0
        %v1106 = vpop.f32.mrb[0].mxu0
        %1107 = vdwg.mxu0
        %v1112 = vunpack.c.l.b16 %v920
        %v1113 = vunpack.c.l.b16 %v921
        %v1114 = vunpack.c.l.b16 %v922
        %v1115 = vunpack.c.l.b16 %v923
        %v1116 = vpack.c.b16 %v1113, %v1112
        %v1117 = vpack.c.b16 %v1115, %v1114
        %1120 = vmatprep.subr.bf16.mxu0 0
        %1121 = vmatpush1.bf16.msra.mxu0 %v1116
        %1122 = vmatprep.subr.bf16.mxu0 0
        %1123 = vmatpush1.bf16.msra.mxu0 %v1117
        %1124 = vmatprep.subr.bf16.mxu0 0
        %1125 = vmatpush1.bf16.msra.mxu0 0
        %1126 = vmatprep.subr.bf16.mxu0 0
        %1127 = vmatpush1.bf16.msra.mxu0 0
        %1128 = vmatprep.subr.bf16.mxu0 0
        %1129 = vmatpush1.bf16.msra.mxu0 0
        %1130 = vmatprep.subr.bf16.mxu0 0
        %1131 = vmatpush1.bf16.msra.mxu0 0
        %1132 = vmatprep.subr.bf16.mxu0 0
        %1133 = vmatpush1.bf16.msra.mxu0 0
        %1134 = vmatprep.subr.bf16.mxu0 0
        %1135 = vmatpush1.bf16.msra.mxu0 0
        %1136 = vmatprep.subr.bf16.mxu0 0
        %1137 = vmatpush1.bf16.msra.mxu0 0
        %1138 = vmatprep.subr.bf16.mxu0 0
        %1139 = vmatpush1.bf16.msra.mxu0 0
        %1140 = vmatprep.subr.bf16.mxu0 0
        %1141 = vmatpush1.bf16.msra.mxu0 0
        %1142 = vmatprep.subr.bf16.mxu0 0
        %1143 = vmatpush1.bf16.msra.mxu0 0
        %1144 = vmatprep.subr.bf16.mxu0 0
        %1145 = vmatpush1.bf16.msra.mxu0 0
        %1146 = vmatprep.subr.bf16.mxu0 0
        %1147 = vmatpush1.bf16.msra.mxu0 0
        %1148 = vmatprep.subr.bf16.mxu0 0
        %1149 = vmatpush1.bf16.msra.mxu0 0
        %1150 = vmatprep.subr.bf16.mxu0 0
        %1151 = vmatpush1.bf16.msra.mxu0 0
        %1152 = vmatprep.mubr.bf16.mxu0 0
        %1153 = vmatmul.mubr.bf16.gmra.mrb[0].mxu0 %v1014
        %v1154 = vpop.f32.mrb[0].mxu0
        %v1155 = vadd.f32 %v991, %v1154
        %v1156 = vpop.f32.mrb[0].mxu0
        %v1157 = vpop.f32.mrb[0].mxu0
        %v1158 = vpop.f32.mrb[0].mxu0
        %1159 = vdwg.mxu0
        %v1164 = vunpack.c.l.b16 %v924
        %v1165 = vunpack.c.l.b16 %v925
        %v1166 = vunpack.c.l.b16 %v926
        %v1167 = vunpack.c.l.b16 %v927
        %v1168 = vpack.c.b16 %v1165, %v1164
        %v1169 = vpack.c.b16 %v1167, %v1166
        %1172 = vmatprep.subr.bf16.mxu0 0
        %1173 = vmatpush1.bf16.msra.mxu0 %v1168
        %1174 = vmatprep.subr.bf16.mxu0 0
        %1175 = vmatpush1.bf16.msra.mxu0 %v1169
        %1176 = vmatprep.subr.bf16.mxu0 0
        %1177 = vmatpush1.bf16.msra.mxu0 0
        %1178 = vmatprep.subr.bf16.mxu0 0
        %1179 = vmatpush1.bf16.msra.mxu0 0
        %1180 = vmatprep.subr.bf16.mxu0 0
        %1181 = vmatpush1.bf16.msra.mxu0 0
        %1182 = vmatprep.subr.bf16.mxu0 0
        %1183 = vmatpush1.bf16.msra.mxu0 0
        %1184 = vmatprep.subr.bf16.mxu0 0
        %1185 = vmatpush1.bf16.msra.mxu0 0
        %1186 = vmatprep.subr.bf16.mxu0 0
        %1187 = vmatpush1.bf16.msra.mxu0 0
        %1188 = vmatprep.subr.bf16.mxu0 0
        %1189 = vmatpush1.bf16.msra.mxu0 0
        %1190 = vmatprep.subr.bf16.mxu0 0
        %1191 = vmatpush1.bf16.msra.mxu0 0
        %1192 = vmatprep.subr.bf16.mxu0 0
        %1193 = vmatpush1.bf16.msra.mxu0 0
        %1194 = vmatprep.subr.bf16.mxu0 0
        %1195 = vmatpush1.bf16.msra.mxu0 0
        %1196 = vmatprep.subr.bf16.mxu0 0
        %1197 = vmatpush1.bf16.msra.mxu0 0
        %1198 = vmatprep.subr.bf16.mxu0 0
        %1199 = vmatpush1.bf16.msra.mxu0 0
        %1200 = vmatprep.subr.bf16.mxu0 0
        %1201 = vmatpush1.bf16.msra.mxu0 0
        %1202 = vmatprep.subr.bf16.mxu0 0
        %1203 = vmatpush1.bf16.msra.mxu0 0
        %1204 = vmatprep.mubr.bf16.mxu0 0
        %1205 = vmatmul.mubr.bf16.gmra.mrb[0].mxu0 %v1014
        %v1206 = vpop.f32.mrb[0].mxu0
        %v1207 = vadd.f32 %v995, %v1206
        %v1208 = vpop.f32.mrb[0].mxu0
        %v1209 = vpop.f32.mrb[0].mxu0
        %v1210 = vpop.f32.mrb[0].mxu0
        %1211 = vdwg.mxu0
        %v1216 = vlaneseq
        %v1217 = vshrl.u32 %v1216, 7
        %v1218 = vsub.s32 0, %v1217
        %v1219 = vrot.slane %v967, %v1218
        %v1220 = vlaneseq
        %v1221 = vshrl.u32 %v1220, 7
        %v1222 = vsub.s32 0, %v1221
        %v1223 = vrot.slane %v968, %v1222
        %v1224 = vlaneseq
        %v1225 = vshrl.u32 %v1224, 7
        %v1226 = vsub.s32 0, %v1225
        %v1227 = vrot.slane %v969, %v1226
        %v1228 = vlaneseq
        %v1229 = vshrl.u32 %v1228, 7
        %v1230 = vsub.s32 0, %v1229
        %v1231 = vrot.slane %v970, %v1230
        %v1240 = vunpack.c.l.b16 %v929
        %v1241 = vunpack.c.l.b16 %v930
        %v1242 = vunpack.c.l.b16 %v931
        %v1243 = vunpack.c.l.b16 %v932
        %v1244 = vpack.c.b16 %v1241, %v1240
        %v1245 = vpack.c.b16 %v1243, %v1242
        %1248 = vmatprep.subr.bf16.mxu0 0
        %1249 = vmatpush1.bf16.msra.mxu0 %v1244
        %1250 = vmatprep.subr.bf16.mxu0 0
        %1251 = vmatpush1.bf16.msra.mxu0 %v1245
        %1252 = vmatprep.subr.bf16.mxu0 0
        %1253 = vmatpush1.bf16.msra.mxu0 0
        %1254 = vmatprep.subr.bf16.mxu0 0
        %1255 = vmatpush1.bf16.msra.mxu0 0
        %1256 = vmatprep.subr.bf16.mxu0 0
        %1257 = vmatpush1.bf16.msra.mxu0 0
        %1258 = vmatprep.subr.bf16.mxu0 0
        %1259 = vmatpush1.bf16.msra.mxu0 0
        %1260 = vmatprep.subr.bf16.mxu0 0
        %1261 = vmatpush1.bf16.msra.mxu0 0
        %1262 = vmatprep.subr.bf16.mxu0 0
        %1263 = vmatpush1.bf16.msra.mxu0 0
        %1264 = vmatprep.subr.bf16.mxu0 0
        %1265 = vmatpush1.bf16.msra.mxu0 0
        %1266 = vmatprep.subr.bf16.mxu0 0
        %1267 = vmatpush1.bf16.msra.mxu0 0
        %1268 = vmatprep.subr.bf16.mxu0 0
        %1269 = vmatpush1.bf16.msra.mxu0 0
        %1270 = vmatprep.subr.bf16.mxu0 0
        %1271 = vmatpush1.bf16.msra.mxu0 0
        %1272 = vmatprep.subr.bf16.mxu0 0
        %1273 = vmatpush1.bf16.msra.mxu0 0
        %1274 = vmatprep.subr.bf16.mxu0 0
        %1275 = vmatpush1.bf16.msra.mxu0 0
        %1276 = vmatprep.subr.bf16.mxu0 0
        %1277 = vmatpush1.bf16.msra.mxu0 0
        %1278 = vmatprep.subr.bf16.mxu0 0
        %1279 = vmatpush1.bf16.msra.mxu0 0
        %1280 = vmatprep.mubr.bf16.mxu0 0
        %1281 = vmatmul.mubr.bf16.gmra.mrb[0].mxu0 %v1014
        %v1282 = vpop.f32.mrb[0].mxu0
        %v1283 = vadd.f32 %v1219, %v1282
        %v1284 = vpop.f32.mrb[0].mxu0
        %v1285 = vpop.f32.mrb[0].mxu0
        %v1286 = vpop.f32.mrb[0].mxu0
        %1287 = vdwg.mxu0
        %v1292 = vunpack.c.l.b16 %v933
        %v1293 = vunpack.c.l.b16 %v934
        %v1294 = vunpack.c.l.b16 %v935
        %v1295 = vunpack.c.l.b16 %v936
        %v1296 = vpack.c.b16 %v1293, %v1292
        %v1297 = vpack.c.b16 %v1295, %v1294
        %1300 = vmatprep.subr.bf16.mxu0 0
        %1301 = vmatpush1.bf16.msra.mxu0 %v1296
        %1302 = vmatprep.subr.bf16.mxu0 0
        %1303 = vmatpush1.bf16.msra.mxu0 %v1297
        %1304 = vmatprep.subr.bf16.mxu0 0
        %1305 = vmatpush1.bf16.msra.mxu0 0
        %1306 = vmatprep.subr.bf16.mxu0 0
        %1307 = vmatpush1.bf16.msra.mxu0 0
        %1308 = vmatprep.subr.bf16.mxu0 0
        %1309 = vmatpush1.bf16.msra.mxu0 0
        %1310 = vmatprep.subr.bf16.mxu0 0
        %1311 = vmatpush1.bf16.msra.mxu0 0
        %1312 = vmatprep.subr.bf16.mxu0 0
        %1313 = vmatpush1.bf16.msra.mxu0 0
        %1314 = vmatprep.subr.bf16.mxu0 0
        %1315 = vmatpush1.bf16.msra.mxu0 0
        %1316 = vmatprep.subr.bf16.mxu0 0
        %1317 = vmatpush1.bf16.msra.mxu0 0
        %1318 = vmatprep.subr.bf16.mxu0 0
        %1319 = vmatpush1.bf16.msra.mxu0 0
        %1320 = vmatprep.subr.bf16.mxu0 0
        %1321 = vmatpush1.bf16.msra.mxu0 0
        %1322 = vmatprep.subr.bf16.mxu0 0
        %1323 = vmatpush1.bf16.msra.mxu0 0
        %1324 = vmatprep.subr.bf16.mxu0 0
        %1325 = vmatpush1.bf16.msra.mxu0 0
        %1326 = vmatprep.subr.bf16.mxu0 0
        %1327 = vmatpush1.bf16.msra.mxu0 0
        %1328 = vmatprep.subr.bf16.mxu0 0
        %1329 = vmatpush1.bf16.msra.mxu0 0
        %1330 = vmatprep.subr.bf16.mxu0 0
        %1331 = vmatpush1.bf16.msra.mxu0 0
        %1332 = vmatprep.mubr.bf16.mxu0 0
        %1333 = vmatmul.mubr.bf16.gmra.mrb[0].mxu0 %v1014
        %v1334 = vpop.f32.mrb[0].mxu0
        %v1335 = vadd.f32 %v1223, %v1334
        %v1336 = vpop.f32.mrb[0].mxu0
        %v1337 = vpop.f32.mrb[0].mxu0
        %v1338 = vpop.f32.mrb[0].mxu0
        %1339 = vdwg.mxu0
        %v1344 = vunpack.c.l.b16 %v937
        %v1345 = vunpack.c.l.b16 %v938
        %v1346 = vunpack.c.l.b16 %v939
        %v1347 = vunpack.c.l.b16 %v940
        %v1348 = vpack.c.b16 %v1345, %v1344
        %v1349 = vpack.c.b16 %v1347, %v1346
        %1352 = vmatprep.subr.bf16.mxu0 0
        %1353 = vmatpush1.bf16.msra.mxu0 %v1348
        %1354 = vmatprep.subr.bf16.mxu0 0
        %1355 = vmatpush1.bf16.msra.mxu0 %v1349
        %1356 = vmatprep.subr.bf16.mxu0 0
        %1357 = vmatpush1.bf16.msra.mxu0 0
        %1358 = vmatprep.subr.bf16.mxu0 0
        %1359 = vmatpush1.bf16.msra.mxu0 0
        %1360 = vmatprep.subr.bf16.mxu0 0
        %1361 = vmatpush1.bf16.msra.mxu0 0
        %1362 = vmatprep.subr.bf16.mxu0 0
        %1363 = vmatpush1.bf16.msra.mxu0 0
        %1364 = vmatprep.subr.bf16.mxu0 0
        %1365 = vmatpush1.bf16.msra.mxu0 0
        %1366 = vmatprep.subr.bf16.mxu0 0
        %1367 = vmatpush1.bf16.msra.mxu0 0
        %1368 = vmatprep.subr.bf16.mxu0 0
        %1369 = vmatpush1.bf16.msra.mxu0 0
        %1370 = vmatprep.subr.bf16.mxu0 0
        %1371 = vmatpush1.bf16.msra.mxu0 0
        %1372 = vmatprep.subr.bf16.mxu0 0
        %1373 = vmatpush1.bf16.msra.mxu0 0
        %1374 = vmatprep.subr.bf16.mxu0 0
        %1375 = vmatpush1.bf16.msra.mxu0 0
        %1376 = vmatprep.subr.bf16.mxu0 0
        %1377 = vmatpush1.bf16.msra.mxu0 0
        %1378 = vmatprep.subr.bf16.mxu0 0
        %1379 = vmatpush1.bf16.msra.mxu0 0
        %1380 = vmatprep.subr.bf16.mxu0 0
        %1381 = vmatpush1.bf16.msra.mxu0 0
        %1382 = vmatprep.subr.bf16.mxu0 0
        %1383 = vmatpush1.bf16.msra.mxu0 0
        %1384 = vmatprep.mubr.bf16.mxu0 0
        %1385 = vmatmul.mubr.bf16.gmra.mrb[0].mxu0 %v1014
        %v1386 = vpop.f32.mrb[0].mxu0
        %v1387 = vadd.f32 %v1227, %v1386
        %v1388 = vpop.f32.mrb[0].mxu0
        %v1389 = vpop.f32.mrb[0].mxu0
        %v1390 = vpop.f32.mrb[0].mxu0
        %1391 = vdwg.mxu0
        %v1396 = vunpack.c.l.b16 %v941
        %v1397 = vunpack.c.l.b16 %v942
        %v1398 = vunpack.c.l.b16 %v943
        %v1399 = vunpack.c.l.b16 %v944
        %v1400 = vpack.c.b16 %v1397, %v1396
        %v1401 = vpack.c.b16 %v1399, %v1398
        %1404 = vmatprep.subr.bf16.mxu0 0
        %1405 = vmatpush1.bf16.msra.mxu0 %v1400
        %1406 = vmatprep.subr.bf16.mxu0 0
        %1407 = vmatpush1.bf16.msra.mxu0 %v1401
        %1408 = vmatprep.subr.bf16.mxu0 0
        %1409 = vmatpush1.bf16.msra.mxu0 0
        %1410 = vmatprep.subr.bf16.mxu0 0
        %1411 = vmatpush1.bf16.msra.mxu0 0
        %1412 = vmatprep.subr.bf16.mxu0 0
        %1413 = vmatpush1.bf16.msra.mxu0 0
        %1414 = vmatprep.subr.bf16.mxu0 0
        %1415 = vmatpush1.bf16.msra.mxu0 0
        %1416 = vmatprep.subr.bf16.mxu0 0
        %1417 = vmatpush1.bf16.msra.mxu0 0
        %1418 = vmatprep.subr.bf16.mxu0 0
        %1419 = vmatpush1.bf16.msra.mxu0 0
        %1420 = vmatprep.subr.bf16.mxu0 0
        %1421 = vmatpush1.bf16.msra.mxu0 0
        %1422 = vmatprep.subr.bf16.mxu0 0
        %1423 = vmatpush1.bf16.msra.mxu0 0
        %1424 = vmatprep.subr.bf16.mxu0 0
        %1425 = vmatpush1.bf16.msra.mxu0 0
        %1426 = vmatprep.subr.bf16.mxu0 0
        %1427 = vmatpush1.bf16.msra.mxu0 0
        %1428 = vmatprep.subr.bf16.mxu0 0
        %1429 = vmatpush1.bf16.msra.mxu0 0
        %1430 = vmatprep.subr.bf16.mxu0 0
        %1431 = vmatpush1.bf16.msra.mxu0 0
        %1432 = vmatprep.subr.bf16.mxu0 0
        %1433 = vmatpush1.bf16.msra.mxu0 0
        %1434 = vmatprep.subr.bf16.mxu0 0
        %1435 = vmatpush1.bf16.msra.mxu0 0
        %1436 = vmatprep.mubr.bf16.mxu0 0
        %1437 = vmatmul.mubr.bf16.gmra.mrb[0].mxu0 %v1014
        %v1438 = vpop.f32.mrb[0].mxu0
        %v1439 = vadd.f32 %v1231, %v1438
        %v1440 = vpop.f32.mrb[0].mxu0
        %v1441 = vpop.f32.mrb[0].mxu0
        %v1442 = vpop.f32.mrb[0].mxu0
        %1443 = vdwg.mxu0
        %v1448 = vlaneseq
        %v1449 = vshrl.u32 %v1448, 7
        %v1450 = vsub.s32 0, %v1449
        %v1451 = vrot.slane %v972, %v1450
        %v1452 = vlaneseq
        %v1453 = vshrl.u32 %v1452, 7
        %v1454 = vsub.s32 0, %v1453
        %v1455 = vrot.slane %v973, %v1454
        %v1456 = vlaneseq
        %v1457 = vshrl.u32 %v1456, 7
        %v1458 = vsub.s32 0, %v1457
        %v1459 = vrot.slane %v974, %v1458
        %v1460 = vlaneseq
        %v1461 = vshrl.u32 %v1460, 7
        %v1462 = vsub.s32 0, %v1461
        %v1463 = vrot.slane %v975, %v1462
        %v1472 = vunpack.c.l.b16 %v946
        %v1473 = vunpack.c.l.b16 %v947
        %v1474 = vunpack.c.l.b16 %v948
        %v1475 = vunpack.c.l.b16 %v949
        %v1476 = vpack.c.b16 %v1473, %v1472
        %v1477 = vpack.c.b16 %v1475, %v1474
        %1480 = vmatprep.subr.bf16.mxu0 0
        %1481 = vmatpush1.bf16.msra.mxu0 %v1476
        %1482 = vmatprep.subr.bf16.mxu0 0
        %1483 = vmatpush1.bf16.msra.mxu0 %v1477
        %1484 = vmatprep.subr.bf16.mxu0 0
        %1485 = vmatpush1.bf16.msra.mxu0 0
        %1486 = vmatprep.subr.bf16.mxu0 0
        %1487 = vmatpush1.bf16.msra.mxu0 0
        %1488 = vmatprep.subr.bf16.mxu0 0
        %1489 = vmatpush1.bf16.msra.mxu0 0
        %1490 = vmatprep.subr.bf16.mxu0 0
        %1491 = vmatpush1.bf16.msra.mxu0 0
        %1492 = vmatprep.subr.bf16.mxu0 0
        %1493 = vmatpush1.bf16.msra.mxu0 0
        %1494 = vmatprep.subr.bf16.mxu0 0
        %1495 = vmatpush1.bf16.msra.mxu0 0
        %1496 = vmatprep.subr.bf16.mxu0 0
        %1497 = vmatpush1.bf16.msra.mxu0 0
        %1498 = vmatprep.subr.bf16.mxu0 0
        %1499 = vmatpush1.bf16.msra.mxu0 0
        %1500 = vmatprep.subr.bf16.mxu0 0
        %1501 = vmatpush1.bf16.msra.mxu0 0
        %1502 = vmatprep.subr.bf16.mxu0 0
        %1503 = vmatpush1.bf16.msra.mxu0 0
        %1504 = vmatprep.subr.bf16.mxu0 0
        %1505 = vmatpush1.bf16.msra.mxu0 0
        %1506 = vmatprep.subr.bf16.mxu0 0
        %1507 = vmatpush1.bf16.msra.mxu0 0
        %1508 = vmatprep.subr.bf16.mxu0 0
        %1509 = vmatpush1.bf16.msra.mxu0 0
        %1510 = vmatprep.subr.bf16.mxu0 0
        %1511 = vmatpush1.bf16.msra.mxu0 0
        %1512 = vmatprep.mubr.bf16.mxu0 0
        %1513 = vmatmul.mubr.bf16.gmra.mrb[0].mxu0 %v1014
        %v1514 = vpop.f32.mrb[0].mxu0
        %v1515 = vadd.f32 %v1451, %v1514
        %v1516 = vpop.f32.mrb[0].mxu0
        %v1517 = vpop.f32.mrb[0].mxu0
        %v1518 = vpop.f32.mrb[0].mxu0
        %1519 = vdwg.mxu0
        %v1524 = vunpack.c.l.b16 %v950
        %v1525 = vunpack.c.l.b16 %v951
        %v1526 = vunpack.c.l.b16 %v952
        %v1527 = vunpack.c.l.b16 %v953
        %v1528 = vpack.c.b16 %v1525, %v1524
        %v1529 = vpack.c.b16 %v1527, %v1526
        %1532 = vmatprep.subr.bf16.mxu0 0
        %1533 = vmatpush1.bf16.msra.mxu0 %v1528
        %1534 = vmatprep.subr.bf16.mxu0 0
        %1535 = vmatpush1.bf16.msra.mxu0 %v1529
        %1536 = vmatprep.subr.bf16.mxu0 0
        %1537 = vmatpush1.bf16.msra.mxu0 0
        %1538 = vmatprep.subr.bf16.mxu0 0
        %1539 = vmatpush1.bf16.msra.mxu0 0
        %1540 = vmatprep.subr.bf16.mxu0 0
        %1541 = vmatpush1.bf16.msra.mxu0 0
        %1542 = vmatprep.subr.bf16.mxu0 0
        %1543 = vmatpush1.bf16.msra.mxu0 0
        %1544 = vmatprep.subr.bf16.mxu0 0
        %1545 = vmatpush1.bf16.msra.mxu0 0
        %1546 = vmatprep.subr.bf16.mxu0 0
        %1547 = vmatpush1.bf16.msra.mxu0 0
        %1548 = vmatprep.subr.bf16.mxu0 0
        %1549 = vmatpush1.bf16.msra.mxu0 0
        %1550 = vmatprep.subr.bf16.mxu0 0
        %1551 = vmatpush1.bf16.msra.mxu0 0
        %1552 = vmatprep.subr.bf16.mxu0 0
        %1553 = vmatpush1.bf16.msra.mxu0 0
        %1554 = vmatprep.subr.bf16.mxu0 0
        %1555 = vmatpush1.bf16.msra.mxu0 0
        %1556 = vmatprep.subr.bf16.mxu0 0
        %1557 = vmatpush1.bf16.msra.mxu0 0
        %1558 = vmatprep.subr.bf16.mxu0 0
        %1559 = vmatpush1.bf16.msra.mxu0 0
        %1560 = vmatprep.subr.bf16.mxu0 0
        %1561 = vmatpush1.bf16.msra.mxu0 0
        %1562 = vmatprep.subr.bf16.mxu0 0
        %1563 = vmatpush1.bf16.msra.mxu0 0
        %1564 = vmatprep.mubr.bf16.mxu0 0
        %1565 = vmatmul.mubr.bf16.gmra.mrb[0].mxu0 %v1014
        %v1566 = vpop.f32.mrb[0].mxu0
        %v1567 = vadd.f32 %v1455, %v1566
        %v1568 = vpop.f32.mrb[0].mxu0
        %v1569 = vpop.f32.mrb[0].mxu0
        %v1570 = vpop.f32.mrb[0].mxu0
        %1571 = vdwg.mxu0
        %v1576 = vunpack.c.l.b16 %v954
        %v1577 = vunpack.c.l.b16 %v955
        %v1578 = vunpack.c.l.b16 %v956
        %v1579 = vunpack.c.l.b16 %v957
        %v1580 = vpack.c.b16 %v1577, %v1576
        %v1581 = vpack.c.b16 %v1579, %v1578
        %1584 = vmatprep.subr.bf16.mxu0 0
        %1585 = vmatpush1.bf16.msra.mxu0 %v1580
        %1586 = vmatprep.subr.bf16.mxu0 0
        %1587 = vmatpush1.bf16.msra.mxu0 %v1581
        %1588 = vmatprep.subr.bf16.mxu0 0
        %1589 = vmatpush1.bf16.msra.mxu0 0
        %1590 = vmatprep.subr.bf16.mxu0 0
        %1591 = vmatpush1.bf16.msra.mxu0 0
        %1592 = vmatprep.subr.bf16.mxu0 0
        %1593 = vmatpush1.bf16.msra.mxu0 0
        %1594 = vmatprep.subr.bf16.mxu0 0
        %1595 = vmatpush1.bf16.msra.mxu0 0
        %1596 = vmatprep.subr.bf16.mxu0 0
        %1597 = vmatpush1.bf16.msra.mxu0 0
        %1598 = vmatprep.subr.bf16.mxu0 0
        %1599 = vmatpush1.bf16.msra.mxu0 0
        %1600 = vmatprep.subr.bf16.mxu0 0
        %1601 = vmatpush1.bf16.msra.mxu0 0
        %1602 = vmatprep.subr.bf16.mxu0 0
        %1603 = vmatpush1.bf16.msra.mxu0 0
        %1604 = vmatprep.subr.bf16.mxu0 0
        %1605 = vmatpush1.bf16.msra.mxu0 0
        %1606 = vmatprep.subr.bf16.mxu0 0
        %1607 = vmatpush1.bf16.msra.mxu0 0
        %1608 = vmatprep.subr.bf16.mxu0 0
        %1609 = vmatpush1.bf16.msra.mxu0 0
        %1610 = vmatprep.subr.bf16.mxu0 0
        %1611 = vmatpush1.bf16.msra.mxu0 0
        %1612 = vmatprep.subr.bf16.mxu0 0
        %1613 = vmatpush1.bf16.msra.mxu0 0
        %1614 = vmatprep.subr.bf16.mxu0 0
        %1615 = vmatpush1.bf16.msra.mxu0 0
        %1616 = vmatprep.mubr.bf16.mxu0 0
        %1617 = vmatmul.mubr.bf16.gmra.mrb[0].mxu0 %v1014
        %v1618 = vpop.f32.mrb[0].mxu0
        %v1619 = vadd.f32 %v1459, %v1618
        %v1620 = vpop.f32.mrb[0].mxu0
        %v1621 = vpop.f32.mrb[0].mxu0
        %v1622 = vpop.f32.mrb[0].mxu0
        %1623 = vdwg.mxu0
        %v1628 = vunpack.c.l.b16 %v958
        %v1629 = vunpack.c.l.b16 %v959
        %v1630 = vunpack.c.l.b16 %v960
        %v1631 = vunpack.c.l.b16 %v961
        %v1632 = vpack.c.b16 %v1629, %v1628
        %v1633 = vpack.c.b16 %v1631, %v1630
        %1636 = vmatprep.subr.bf16.mxu0 0
        %1637 = vmatpush1.bf16.msra.mxu0 %v1632
        %1638 = vmatprep.subr.bf16.mxu0 0
        %1639 = vmatpush1.bf16.msra.mxu0 %v1633
        %1640 = vmatprep.subr.bf16.mxu0 0
        %1641 = vmatpush1.bf16.msra.mxu0 0
        %1642 = vmatprep.subr.bf16.mxu0 0
        %1643 = vmatpush1.bf16.msra.mxu0 0
        %1644 = vmatprep.subr.bf16.mxu0 0
        %1645 = vmatpush1.bf16.msra.mxu0 0
        %1646 = vmatprep.subr.bf16.mxu0 0
        %1647 = vmatpush1.bf16.msra.mxu0 0
        %1648 = vmatprep.subr.bf16.mxu0 0
        %1649 = vmatpush1.bf16.msra.mxu0 0
        %1650 = vmatprep.subr.bf16.mxu0 0
        %1651 = vmatpush1.bf16.msra.mxu0 0
        %1652 = vmatprep.subr.bf16.mxu0 0
        %1653 = vmatpush1.bf16.msra.mxu0 0
        %1654 = vmatprep.subr.bf16.mxu0 0
        %1655 = vmatpush1.bf16.msra.mxu0 0
        %1656 = vmatprep.subr.bf16.mxu0 0
        %1657 = vmatpush1.bf16.msra.mxu0 0
        %1658 = vmatprep.subr.bf16.mxu0 0
        %1659 = vmatpush1.bf16.msra.mxu0 0
        %1660 = vmatprep.subr.bf16.mxu0 0
        %1661 = vmatpush1.bf16.msra.mxu0 0
        %1662 = vmatprep.subr.bf16.mxu0 0
        %1663 = vmatpush1.bf16.msra.mxu0 0
        %1664 = vmatprep.subr.bf16.mxu0 0
        %1665 = vmatpush1.bf16.msra.mxu0 0
        %1666 = vmatprep.subr.bf16.mxu0 0
        %1667 = vmatpush1.bf16.msra.mxu0 0
        %1668 = vmatprep.mubr.bf16.mxu0 0
        %1669 = vmatmul.mubr.bf16.gmra.mrb[0].mxu0 %v1014
        %v1670 = vpop.f32.mrb[0].mxu0
        %v1671 = vadd.f32 %v1463, %v1670
        %v1672 = vpop.f32.mrb[0].mxu0
        %v1673 = vpop.f32.mrb[0].mxu0
        %v1674 = vpop.f32.mrb[0].mxu0
        %1675 = vdwg.mxu0
        %v1676 = vpack.c.bf16 %v1051, %v1051
        %v1677 = vpack.c.bf16 %v1103, %v1103
        %v1678 = vpack.c.bf16 %v1155, %v1155
        %v1679 = vpack.c.bf16 %v1207, %v1207
        %v1680 = vpack.c.bf16 %v1283, %v1283
        %v1681 = vpack.c.bf16 %v1335, %v1335
        %v1682 = vpack.c.bf16 %v1387, %v1387
        %v1683 = vpack.c.bf16 %v1439, %v1439
        %vm1684 = vcmask 64512
        %v1686 = vsel %vm1684, %v1676, 0
        %v1689 = vsel %vm1684, %v1680, 0
        %1691 = vmatprep.subr.bf16.mxu0 0
        %1692 = vmatpush1.bf16.xpose.msra.mxu0 %v1689
        %1693 = vmatprep.subr.bf16.mxu0 0
        %1694 = vmatpush1.bf16.xpose.msra.mxu0 0
        %1695 = vmatprep.subr.bf16.mxu0 0
        %1696 = vmatpush1.bf16.xpose.msra.mxu0 0
        %1697 = vmatprep.subr.bf16.mxu0 0
        %1698 = vmatpush1.bf16.xpose.msra.mxu0 0
        %1699 = vmatprep.subr.bf16.mxu0 0
        %1700 = vmatpush1.bf16.xpose.msra.mxu0 0
        %1701 = vmatprep.subr.bf16.mxu0 0
        %1702 = vmatpush1.bf16.xpose.msra.mxu0 0
        %1703 = vmatprep.subr.bf16.mxu0 0
        %1704 = vmatpush1.bf16.xpose.msra.mxu0 0
        %1705 = vmatprep.subr.bf16.mxu0 0
        %1706 = vmatpush1.bf16.xpose.msra.mxu0 0
        %1707 = vmatprep.subr.bf16.mxu0 0
        %1708 = vmatpush1.bf16.xpose.msra.mxu0 0
        %1709 = vmatprep.subr.bf16.mxu0 0
        %1710 = vmatpush1.bf16.xpose.msra.mxu0 0
        %1711 = vmatprep.subr.bf16.mxu0 0
        %1712 = vmatpush1.bf16.xpose.msra.mxu0 0
        %1713 = vmatprep.subr.bf16.mxu0 0
        %1714 = vmatpush1.bf16.xpose.msra.mxu0 0
        %1715 = vmatprep.subr.bf16.mxu0 0
        %1716 = vmatpush1.bf16.xpose.msra.mxu0 0
        %1717 = vmatprep.subr.bf16.mxu0 0
        %1718 = vmatpush1.bf16.xpose.msra.mxu0 0
        %1719 = vmatprep.subr.bf16.mxu0 0
        %1720 = vmatpush1.bf16.xpose.msra.mxu0 0
        %1721 = vmatprep.subr.bf16.mxu0 0
        %1722 = vmatpush1.bf16.xpose.msra.mxu0 0
        %1723 = vmatprep.mubr.bf16.mxu0 0
        %1724 = vmatmul.mubr.bf16.gmra.mrb[0].mxu0 %v1686
        %v1725 = vpop.f32.mrb[0].mxu0
        %v1726 = vadd.f32 0.0, %v1725
        %v1727 = vpop.f32.mrb[0].mxu0
        %v1728 = vpop.f32.mrb[0].mxu0
        %v1729 = vpop.f32.mrb[0].mxu0
        %1730 = vdwg.mxu0
        %v1732 = vsel %vm1684, %v1677, 0
        %v1735 = vsel %vm1684, %v1681, 0
        %1737 = vmatprep.subr.bf16.mxu0 0
        %1738 = vmatpush1.bf16.xpose.msra.mxu0 %v1735
        %1739 = vmatprep.subr.bf16.mxu0 0
        %1740 = vmatpush1.bf16.xpose.msra.mxu0 0
        %1741 = vmatprep.subr.bf16.mxu0 0
        %1742 = vmatpush1.bf16.xpose.msra.mxu0 0
        %1743 = vmatprep.subr.bf16.mxu0 0
        %1744 = vmatpush1.bf16.xpose.msra.mxu0 0
        %1745 = vmatprep.subr.bf16.mxu0 0
        %1746 = vmatpush1.bf16.xpose.msra.mxu0 0
        %1747 = vmatprep.subr.bf16.mxu0 0
        %1748 = vmatpush1.bf16.xpose.msra.mxu0 0
        %1749 = vmatprep.subr.bf16.mxu0 0
        %1750 = vmatpush1.bf16.xpose.msra.mxu0 0
        %1751 = vmatprep.subr.bf16.mxu0 0
        %1752 = vmatpush1.bf16.xpose.msra.mxu0 0
        %1753 = vmatprep.subr.bf16.mxu0 0
        %1754 = vmatpush1.bf16.xpose.msra.mxu0 0
        %1755 = vmatprep.subr.bf16.mxu0 0
        %1756 = vmatpush1.bf16.xpose.msra.mxu0 0
        %1757 = vmatprep.subr.bf16.mxu0 0
        %1758 = vmatpush1.bf16.xpose.msra.mxu0 0
        %1759 = vmatprep.subr.bf16.mxu0 0
        %1760 = vmatpush1.bf16.xpose.msra.mxu0 0
        %1761 = vmatprep.subr.bf16.mxu0 0
        %1762 = vmatpush1.bf16.xpose.msra.mxu0 0
        %1763 = vmatprep.subr.bf16.mxu0 0
        %1764 = vmatpush1.bf16.xpose.msra.mxu0 0
        %1765 = vmatprep.subr.bf16.mxu0 0
        %1766 = vmatpush1.bf16.xpose.msra.mxu0 0
        %1767 = vmatprep.subr.bf16.mxu0 0
        %1768 = vmatpush1.bf16.xpose.msra.mxu0 0
        %1769 = vmatprep.mubr.bf16.mxu0 0
        %1770 = vmatmul.mubr.bf16.gmra.mrb[0].mxu0 %v1732
        %v1771 = vpop.f32.mrb[0].mxu0
        %v1772 = vadd.f32 0.0, %v1771
        %v1773 = vpop.f32.mrb[0].mxu0
        %v1774 = vpop.f32.mrb[0].mxu0
        %v1775 = vpop.f32.mrb[0].mxu0
        %1776 = vdwg.mxu0
        %v1778 = vsel %vm1684, %v1678, 0
        %v1781 = vsel %vm1684, %v1682, 0
        %1783 = vmatprep.subr.bf16.mxu0 0
        %1784 = vmatpush1.bf16.xpose.msra.mxu0 %v1781
        %1785 = vmatprep.subr.bf16.mxu0 0
        %1786 = vmatpush1.bf16.xpose.msra.mxu0 0
        %1787 = vmatprep.subr.bf16.mxu0 0
        %1788 = vmatpush1.bf16.xpose.msra.mxu0 0
        %1789 = vmatprep.subr.bf16.mxu0 0
        %1790 = vmatpush1.bf16.xpose.msra.mxu0 0
        %1791 = vmatprep.subr.bf16.mxu0 0
        %1792 = vmatpush1.bf16.xpose.msra.mxu0 0
        %1793 = vmatprep.subr.bf16.mxu0 0
        %1794 = vmatpush1.bf16.xpose.msra.mxu0 0
        %1795 = vmatprep.subr.bf16.mxu0 0
        %1796 = vmatpush1.bf16.xpose.msra.mxu0 0
        %1797 = vmatprep.subr.bf16.mxu0 0
        %1798 = vmatpush1.bf16.xpose.msra.mxu0 0
        %1799 = vmatprep.subr.bf16.mxu0 0
        %1800 = vmatpush1.bf16.xpose.msra.mxu0 0
        %1801 = vmatprep.subr.bf16.mxu0 0
        %1802 = vmatpush1.bf16.xpose.msra.mxu0 0
        %1803 = vmatprep.subr.bf16.mxu0 0
        %1804 = vmatpush1.bf16.xpose.msra.mxu0 0
        %1805 = vmatprep.subr.bf16.mxu0 0
        %1806 = vmatpush1.bf16.xpose.msra.mxu0 0
        %1807 = vmatprep.subr.bf16.mxu0 0
        %1808 = vmatpush1.bf16.xpose.msra.mxu0 0
        %1809 = vmatprep.subr.bf16.mxu0 0
        %1810 = vmatpush1.bf16.xpose.msra.mxu0 0
        %1811 = vmatprep.subr.bf16.mxu0 0
        %1812 = vmatpush1.bf16.xpose.msra.mxu0 0
        %1813 = vmatprep.subr.bf16.mxu0 0
        %1814 = vmatpush1.bf16.xpose.msra.mxu0 0
        %1815 = vmatprep.mubr.bf16.mxu0 0
        %1816 = vmatmul.mubr.bf16.gmra.mrb[0].mxu0 %v1778
        %v1817 = vpop.f32.mrb[0].mxu0
        %v1818 = vadd.f32 0.0, %v1817
        %v1819 = vpop.f32.mrb[0].mxu0
        %v1820 = vpop.f32.mrb[0].mxu0
        %v1821 = vpop.f32.mrb[0].mxu0
        %1822 = vdwg.mxu0
        %v1824 = vsel %vm1684, %v1679, 0
        %v1827 = vsel %vm1684, %v1683, 0
        %1829 = vmatprep.subr.bf16.mxu0 0
        %1830 = vmatpush1.bf16.xpose.msra.mxu0 %v1827
        %1831 = vmatprep.subr.bf16.mxu0 0
        %1832 = vmatpush1.bf16.xpose.msra.mxu0 0
        %1833 = vmatprep.subr.bf16.mxu0 0
        %1834 = vmatpush1.bf16.xpose.msra.mxu0 0
        %1835 = vmatprep.subr.bf16.mxu0 0
        %1836 = vmatpush1.bf16.xpose.msra.mxu0 0
        %1837 = vmatprep.subr.bf16.mxu0 0
        %1838 = vmatpush1.bf16.xpose.msra.mxu0 0
        %1839 = vmatprep.subr.bf16.mxu0 0
        %1840 = vmatpush1.bf16.xpose.msra.mxu0 0
        %1841 = vmatprep.subr.bf16.mxu0 0
        %1842 = vmatpush1.bf16.xpose.msra.mxu0 0
        %1843 = vmatprep.subr.bf16.mxu0 0
        %1844 = vmatpush1.bf16.xpose.msra.mxu0 0
        %1845 = vmatprep.subr.bf16.mxu0 0
        %1846 = vmatpush1.bf16.xpose.msra.mxu0 0
        %1847 = vmatprep.subr.bf16.mxu0 0
        %1848 = vmatpush1.bf16.xpose.msra.mxu0 0
        %1849 = vmatprep.subr.bf16.mxu0 0
        %1850 = vmatpush1.bf16.xpose.msra.mxu0 0
        %1851 = vmatprep.subr.bf16.mxu0 0
        %1852 = vmatpush1.bf16.xpose.msra.mxu0 0
        %1853 = vmatprep.subr.bf16.mxu0 0
        %1854 = vmatpush1.bf16.xpose.msra.mxu0 0
        %1855 = vmatprep.subr.bf16.mxu0 0
        %1856 = vmatpush1.bf16.xpose.msra.mxu0 0
        %1857 = vmatprep.subr.bf16.mxu0 0
        %1858 = vmatpush1.bf16.xpose.msra.mxu0 0
        %1859 = vmatprep.subr.bf16.mxu0 0
        %1860 = vmatpush1.bf16.xpose.msra.mxu0 0
        %1861 = vmatprep.mubr.bf16.mxu0 0
        %1862 = vmatmul.mubr.bf16.gmra.mrb[0].mxu0 %v1824
        %v1863 = vpop.f32.mrb[0].mxu0
        %v1864 = vadd.f32 0.0, %v1863
        %v1865 = vpop.f32.mrb[0].mxu0
        %v1866 = vpop.f32.mrb[0].mxu0
        %v1867 = vpop.f32.mrb[0].mxu0
        %1868 = vdwg.mxu0
        %v1869 = vmul.f32 %v1726, 0.35355338
        %v1870 = vmul.f32 %v1772, 0.35355338
        %v1871 = vmul.f32 %v1818, 0.35355338
        %v1872 = vmul.f32 %v1864, 0.35355338
        %v1873 = vadd.f32 %v1869, %v910
        %v1874 = vadd.f32 %v1870, %v910
        %v1875 = vadd.f32 %v1871, %v910
        %v1876 = vadd.f32 %v1872, %v910
        %v1877 = vsel %vm1684, %v1873, -inf
        %1878 = vmax.xlane.f32.xlu0 %v1877
        %v1879 = vpop.xlane.xlu0 %1878
        %v1880 = vsel %vm1684, %v1874, -inf
        %1881 = vmax.xlane.f32.xlu0 %v1880
        %v1882 = vpop.xlane.xlu0 %1881
        %v1883 = vsel %vm1684, %v1875, -inf
        %1884 = vmax.xlane.f32.xlu0 %v1883
        %v1885 = vpop.xlane.xlu0 %1884
        %v1886 = vsel %vm1684, %v1876, -inf
        %1887 = vmax.xlane.f32.xlu0 %v1886
        %v1888 = vpop.xlane.xlu0 %1887
        %v1889 = vsub.f32 %v1873, %v1879
        %v1890 = vsub.f32 %v1874, %v1882
        %v1891 = vsub.f32 %v1875, %v1885
        %v1892 = vsub.f32 %v1876, %v1888
        %v1893 = vmul.f32 %v1889, 1.442695
        %v1894 = vpow.pop %v1893
        %v1895 = vmul.f32 %v1890, 1.442695
        %v1896 = vpow.pop %v1895
        %v1897 = vmul.f32 %v1891, 1.442695
        %v1898 = vpow.pop %v1897
        %v1899 = vmul.f32 %v1892, 1.442695
        %v1900 = vpow.pop %v1899
        %v1901 = vsel %vm1684, %v1894, 0.0
        %1902 = vadd.xlane.f32.xlu0 %v1901
        %v1903 = vpop.xlane.xlu0 %1902
        %v1904 = vsel %vm1684, %v1896, 0.0
        %1905 = vadd.xlane.f32.xlu0 %v1904
        %v1906 = vpop.xlane.xlu0 %1905
        %v1907 = vsel %vm1684, %v1898, 0.0
        %1908 = vadd.xlane.f32.xlu0 %v1907
        %v1909 = vpop.xlane.xlu0 %1908
        %v1910 = vsel %vm1684, %v1900, 0.0
        %1911 = vadd.xlane.f32.xlu0 %v1910
        %v1912 = vpop.xlane.xlu0 %1911
        %v1913 = vrcp.pop %v1903
        %v1914 = vrcp.pop %v1906
        %v1915 = vrcp.pop %v1909
        %v1916 = vrcp.pop %v1912
        %v1917 = vmul.f32 %v1894, %v1913
        %v1918 = vmul.f32 %v1896, %v1914
        %v1919 = vmul.f32 %v1898, %v1915
        %v1920 = vmul.f32 %v1900, %v1916
        %v1921 = vpack.c.bf16 %v1917, %v1917
        %v1922 = vpack.c.bf16 %v1918, %v1918
        %v1923 = vpack.c.bf16 %v1919, %v1919
        %v1924 = vpack.c.bf16 %v1920, %v1920
        %v1925 = vpack.c.bf16 %v1515, %v1515
        %v1926 = vpack.c.bf16 %v1567, %v1567
        %v1927 = vpack.c.bf16 %v1619, %v1619
        %v1928 = vpack.c.bf16 %v1671, %v1671
        %v1930 = vsel %vm1684, %v1921, 0
        %vm1932 = vcmask 1043456
        %v1934 = vsel %vm1932, %v1925, 0
        %1936 = vmatprep.subr.bf16.mxu0 0
        %1937 = vmatpush1.bf16.msra.mxu0 %v1934
        %1938 = vmatprep.subr.bf16.mxu0 0
        %1939 = vmatpush1.bf16.msra.mxu0 0
        %1940 = vmatprep.subr.bf16.mxu0 0
        %1941 = vmatpush1.bf16.msra.mxu0 0
        %1942 = vmatprep.subr.bf16.mxu0 0
        %1943 = vmatpush1.bf16.msra.mxu0 0
        %1944 = vmatprep.subr.bf16.mxu0 0
        %1945 = vmatpush1.bf16.msra.mxu0 0
        %1946 = vmatprep.subr.bf16.mxu0 0
        %1947 = vmatpush1.bf16.msra.mxu0 0
        %1948 = vmatprep.subr.bf16.mxu0 0
        %1949 = vmatpush1.bf16.msra.mxu0 0
        %1950 = vmatprep.subr.bf16.mxu0 0
        %1951 = vmatpush1.bf16.msra.mxu0 0
        %1952 = vmatprep.subr.bf16.mxu0 0
        %1953 = vmatpush1.bf16.msra.mxu0 0
        %1954 = vmatprep.subr.bf16.mxu0 0
        %1955 = vmatpush1.bf16.msra.mxu0 0
        %1956 = vmatprep.subr.bf16.mxu0 0
        %1957 = vmatpush1.bf16.msra.mxu0 0
        %1958 = vmatprep.subr.bf16.mxu0 0
        %1959 = vmatpush1.bf16.msra.mxu0 0
        %1960 = vmatprep.subr.bf16.mxu0 0
        %1961 = vmatpush1.bf16.msra.mxu0 0
        %1962 = vmatprep.subr.bf16.mxu0 0
        %1963 = vmatpush1.bf16.msra.mxu0 0
        %1964 = vmatprep.subr.bf16.mxu0 0
        %1965 = vmatpush1.bf16.msra.mxu0 0
        %1966 = vmatprep.subr.bf16.mxu0 0
        %1967 = vmatpush1.bf16.msra.mxu0 0
        %1968 = vmatprep.mubr.bf16.mxu0 0
        %1969 = vmatmul.mubr.bf16.gmra.mrb[0].mxu0 %v1930
        %v1970 = vpop.f32.mrb[0].mxu0
        %v1971 = vadd.f32 0.0, %v1970
        %v1972 = vpop.f32.mrb[0].mxu0
        %v1973 = vpop.f32.mrb[0].mxu0
        %v1974 = vpop.f32.mrb[0].mxu0
        %1975 = vdwg.mxu0
        %v1977 = vsel %vm1684, %v1922, 0
        %v1980 = vsel %vm1932, %v1926, 0
        %1982 = vmatprep.subr.bf16.mxu0 0
        %1983 = vmatpush1.bf16.msra.mxu0 %v1980
        %1984 = vmatprep.subr.bf16.mxu0 0
        %1985 = vmatpush1.bf16.msra.mxu0 0
        %1986 = vmatprep.subr.bf16.mxu0 0
        %1987 = vmatpush1.bf16.msra.mxu0 0
        %1988 = vmatprep.subr.bf16.mxu0 0
        %1989 = vmatpush1.bf16.msra.mxu0 0
        %1990 = vmatprep.subr.bf16.mxu0 0
        %1991 = vmatpush1.bf16.msra.mxu0 0
        %1992 = vmatprep.subr.bf16.mxu0 0
        %1993 = vmatpush1.bf16.msra.mxu0 0
        %1994 = vmatprep.subr.bf16.mxu0 0
        %1995 = vmatpush1.bf16.msra.mxu0 0
        %1996 = vmatprep.subr.bf16.mxu0 0
        %1997 = vmatpush1.bf16.msra.mxu0 0
        %1998 = vmatprep.subr.bf16.mxu0 0
        %1999 = vmatpush1.bf16.msra.mxu0 0
        %2000 = vmatprep.subr.bf16.mxu0 0
        %2001 = vmatpush1.bf16.msra.mxu0 0
        %2002 = vmatprep.subr.bf16.mxu0 0
        %2003 = vmatpush1.bf16.msra.mxu0 0
        %2004 = vmatprep.subr.bf16.mxu0 0
        %2005 = vmatpush1.bf16.msra.mxu0 0
        %2006 = vmatprep.subr.bf16.mxu0 0
        %2007 = vmatpush1.bf16.msra.mxu0 0
        %2008 = vmatprep.subr.bf16.mxu0 0
        %2009 = vmatpush1.bf16.msra.mxu0 0
        %2010 = vmatprep.subr.bf16.mxu0 0
        %2011 = vmatpush1.bf16.msra.mxu0 0
        %2012 = vmatprep.subr.bf16.mxu0 0
        %2013 = vmatpush1.bf16.msra.mxu0 0
        %2014 = vmatprep.mubr.bf16.mxu0 0
        %2015 = vmatmul.mubr.bf16.gmra.mrb[0].mxu0 %v1977
        %v2016 = vpop.f32.mrb[0].mxu0
        %v2017 = vadd.f32 0.0, %v2016
        %v2018 = vpop.f32.mrb[0].mxu0
        %v2019 = vpop.f32.mrb[0].mxu0
        %v2020 = vpop.f32.mrb[0].mxu0
        %2021 = vdwg.mxu0
        %v2023 = vsel %vm1684, %v1923, 0
        %v2026 = vsel %vm1932, %v1927, 0
        %2028 = vmatprep.subr.bf16.mxu0 0
        %2029 = vmatpush1.bf16.msra.mxu0 %v2026
        %2030 = vmatprep.subr.bf16.mxu0 0
        %2031 = vmatpush1.bf16.msra.mxu0 0
        %2032 = vmatprep.subr.bf16.mxu0 0
        %2033 = vmatpush1.bf16.msra.mxu0 0
        %2034 = vmatprep.subr.bf16.mxu0 0
        %2035 = vmatpush1.bf16.msra.mxu0 0
        %2036 = vmatprep.subr.bf16.mxu0 0
        %2037 = vmatpush1.bf16.msra.mxu0 0
        %2038 = vmatprep.subr.bf16.mxu0 0
        %2039 = vmatpush1.bf16.msra.mxu0 0
        %2040 = vmatprep.subr.bf16.mxu0 0
        %2041 = vmatpush1.bf16.msra.mxu0 0
        %2042 = vmatprep.subr.bf16.mxu0 0
        %2043 = vmatpush1.bf16.msra.mxu0 0
        %2044 = vmatprep.subr.bf16.mxu0 0
        %2045 = vmatpush1.bf16.msra.mxu0 0
        %2046 = vmatprep.subr.bf16.mxu0 0
        %2047 = vmatpush1.bf16.msra.mxu0 0
        %2048 = vmatprep.subr.bf16.mxu0 0
        %2049 = vmatpush1.bf16.msra.mxu0 0
        %2050 = vmatprep.subr.bf16.mxu0 0
        %2051 = vmatpush1.bf16.msra.mxu0 0
        %2052 = vmatprep.subr.bf16.mxu0 0
        %2053 = vmatpush1.bf16.msra.mxu0 0
        %2054 = vmatprep.subr.bf16.mxu0 0
        %2055 = vmatpush1.bf16.msra.mxu0 0
        %2056 = vmatprep.subr.bf16.mxu0 0
        %2057 = vmatpush1.bf16.msra.mxu0 0
        %2058 = vmatprep.subr.bf16.mxu0 0
        %2059 = vmatpush1.bf16.msra.mxu0 0
        %2060 = vmatprep.mubr.bf16.mxu0 0
        %2061 = vmatmul.mubr.bf16.gmra.mrb[0].mxu0 %v2023
        %v2062 = vpop.f32.mrb[0].mxu0
        %v2063 = vadd.f32 0.0, %v2062
        %v2064 = vpop.f32.mrb[0].mxu0
        %v2065 = vpop.f32.mrb[0].mxu0
        %v2066 = vpop.f32.mrb[0].mxu0
        %2067 = vdwg.mxu0
        %v2069 = vsel %vm1684, %v1924, 0
        %v2072 = vsel %vm1932, %v1928, 0
        %2074 = vmatprep.subr.bf16.mxu0 0
        %2075 = vmatpush1.bf16.msra.mxu0 %v2072
        %2076 = vmatprep.subr.bf16.mxu0 0
        %2077 = vmatpush1.bf16.msra.mxu0 0
        %2078 = vmatprep.subr.bf16.mxu0 0
        %2079 = vmatpush1.bf16.msra.mxu0 0
        %2080 = vmatprep.subr.bf16.mxu0 0
        %2081 = vmatpush1.bf16.msra.mxu0 0
        %2082 = vmatprep.subr.bf16.mxu0 0
        %2083 = vmatpush1.bf16.msra.mxu0 0
        %2084 = vmatprep.subr.bf16.mxu0 0
        %2085 = vmatpush1.bf16.msra.mxu0 0
        %2086 = vmatprep.subr.bf16.mxu0 0
        %2087 = vmatpush1.bf16.msra.mxu0 0
        %2088 = vmatprep.subr.bf16.mxu0 0
        %2089 = vmatpush1.bf16.msra.mxu0 0
        %2090 = vmatprep.subr.bf16.mxu0 0
        %2091 = vmatpush1.bf16.msra.mxu0 0
        %2092 = vmatprep.subr.bf16.mxu0 0
        %2093 = vmatpush1.bf16.msra.mxu0 0
        %2094 = vmatprep.subr.bf16.mxu0 0
        %2095 = vmatpush1.bf16.msra.mxu0 0
        %2096 = vmatprep.subr.bf16.mxu0 0
        %2097 = vmatpush1.bf16.msra.mxu0 0
        %2098 = vmatprep.subr.bf16.mxu0 0
        %2099 = vmatpush1.bf16.msra.mxu0 0
        %2100 = vmatprep.subr.bf16.mxu0 0
        %2101 = vmatpush1.bf16.msra.mxu0 0
        %2102 = vmatprep.subr.bf16.mxu0 0
        %2103 = vmatpush1.bf16.msra.mxu0 0
        %2104 = vmatprep.subr.bf16.mxu0 0
        %2105 = vmatpush1.bf16.msra.mxu0 0
        %2106 = vmatprep.mubr.bf16.mxu0 0
        %2107 = vmatmul.mubr.bf16.gmra.mrb[0].mxu0 %v2069
        %v2108 = vpop.f32.mrb[0].mxu0
        %v2109 = vadd.f32 0.0, %v2108
        %v2110 = vpop.f32.mrb[0].mxu0
        %v2111 = vpop.f32.mrb[0].mxu0
        %v2112 = vpop.f32.mrb[0].mxu0
        %2113 = vdwg.mxu0
        %v2114 = vpack.c.bf16 %v1971, %v1971
        %v2115 = vpack.c.bf16 %v2017, %v2017
        %v2116 = vpack.c.bf16 %v2063, %v2063
        %v2117 = vpack.c.bf16 %v2109, %v2109
        %v2118 = vld [vmem:[%s840] sm:$0xf]
        %v2119 = vld [vmem:[%s840 + $0x4] sm:$0xf]
        %v2120 = vld [vmem:[%s840 + $0x8] sm:$0xf]
        %v2121 = vld [vmem:[%s840 + $0xc] sm:$0xf]
        %v2123 = vsel %vm1684, %v2114, 0
        %v2126 = vsel %vm1932, %v2118, 0
        %2128 = vmatprep.subr.bf16.mxu0 0
        %2129 = vmatpush1.bf16.msra.mxu0 %v2126
        %2130 = vmatprep.subr.bf16.mxu0 0
        %2131 = vmatpush1.bf16.msra.mxu0 0
        %2132 = vmatprep.subr.bf16.mxu0 0
        %2133 = vmatpush1.bf16.msra.mxu0 0
        %2134 = vmatprep.subr.bf16.mxu0 0
        %2135 = vmatpush1.bf16.msra.mxu0 0
        %2136 = vmatprep.subr.bf16.mxu0 0
        %2137 = vmatpush1.bf16.msra.mxu0 0
        %2138 = vmatprep.subr.bf16.mxu0 0
        %2139 = vmatpush1.bf16.msra.mxu0 0
        %2140 = vmatprep.subr.bf16.mxu0 0
        %2141 = vmatpush1.bf16.msra.mxu0 0
        %2142 = vmatprep.subr.bf16.mxu0 0
        %2143 = vmatpush1.bf16.msra.mxu0 0
        %2144 = vmatprep.subr.bf16.mxu0 0
        %2145 = vmatpush1.bf16.msra.mxu0 0
        %2146 = vmatprep.subr.bf16.mxu0 0
        %2147 = vmatpush1.bf16.msra.mxu0 0
        %2148 = vmatprep.subr.bf16.mxu0 0
        %2149 = vmatpush1.bf16.msra.mxu0 0
        %2150 = vmatprep.subr.bf16.mxu0 0
        %2151 = vmatpush1.bf16.msra.mxu0 0
        %2152 = vmatprep.subr.bf16.mxu0 0
        %2153 = vmatpush1.bf16.msra.mxu0 0
        %2154 = vmatprep.subr.bf16.mxu0 0
        %2155 = vmatpush1.bf16.msra.mxu0 0
        %2156 = vmatprep.subr.bf16.mxu0 0
        %2157 = vmatpush1.bf16.msra.mxu0 0
        %2158 = vmatprep.subr.bf16.mxu0 0
        %2159 = vmatpush1.bf16.msra.mxu0 0
        %2160 = vmatprep.mubr.bf16.mxu0 0
        %2161 = vmatmul.mubr.bf16.gmra.mrb[0].mxu0 %v2123
        %v2162 = vpop.f32.mrb[0].mxu0
        %v2163 = vadd.f32 0.0, %v2162
        %v2164 = vpop.f32.mrb[0].mxu0
        %v2165 = vpop.f32.mrb[0].mxu0
        %v2166 = vpop.f32.mrb[0].mxu0
        %2167 = vdwg.mxu0
        %v2169 = vsel %vm1684, %v2115, 0
        %v2172 = vsel %vm1932, %v2119, 0
        %2174 = vmatprep.subr.bf16.mxu0 0
        %2175 = vmatpush1.bf16.msra.mxu0 %v2172
        %2176 = vmatprep.subr.bf16.mxu0 0
        %2177 = vmatpush1.bf16.msra.mxu0 0
        %2178 = vmatprep.subr.bf16.mxu0 0
        %2179 = vmatpush1.bf16.msra.mxu0 0
        %2180 = vmatprep.subr.bf16.mxu0 0
        %2181 = vmatpush1.bf16.msra.mxu0 0
        %2182 = vmatprep.subr.bf16.mxu0 0
        %2183 = vmatpush1.bf16.msra.mxu0 0
        %2184 = vmatprep.subr.bf16.mxu0 0
        %2185 = vmatpush1.bf16.msra.mxu0 0
        %2186 = vmatprep.subr.bf16.mxu0 0
        %2187 = vmatpush1.bf16.msra.mxu0 0
        %2188 = vmatprep.subr.bf16.mxu0 0
        %2189 = vmatpush1.bf16.msra.mxu0 0
        %2190 = vmatprep.subr.bf16.mxu0 0
        %2191 = vmatpush1.bf16.msra.mxu0 0
        %2192 = vmatprep.subr.bf16.mxu0 0
        %2193 = vmatpush1.bf16.msra.mxu0 0
        %2194 = vmatprep.subr.bf16.mxu0 0
        %2195 = vmatpush1.bf16.msra.mxu0 0
        %2196 = vmatprep.subr.bf16.mxu0 0
        %2197 = vmatpush1.bf16.msra.mxu0 0
        %2198 = vmatprep.subr.bf16.mxu0 0
        %2199 = vmatpush1.bf16.msra.mxu0 0
        %2200 = vmatprep.subr.bf16.mxu0 0
        %2201 = vmatpush1.bf16.msra.mxu0 0
        %2202 = vmatprep.subr.bf16.mxu0 0
        %2203 = vmatpush1.bf16.msra.mxu0 0
        %2204 = vmatprep.subr.bf16.mxu0 0
        %2205 = vmatpush1.bf16.msra.mxu0 0
        %2206 = vmatprep.mubr.bf16.mxu0 0
        %2207 = vmatmul.mubr.bf16.gmra.mrb[0].mxu0 %v2169
        %v2208 = vpop.f32.mrb[0].mxu0
        %v2209 = vadd.f32 0.0, %v2208
        %v2210 = vpop.f32.mrb[0].mxu0
        %v2211 = vpop.f32.mrb[0].mxu0
        %v2212 = vpop.f32.mrb[0].mxu0
        %2213 = vdwg.mxu0
        %v2215 = vsel %vm1684, %v2116, 0
        %v2218 = vsel %vm1932, %v2120, 0
        %2220 = vmatprep.subr.bf16.mxu0 0
        %2221 = vmatpush1.bf16.msra.mxu0 %v2218
        %2222 = vmatprep.subr.bf16.mxu0 0
        %2223 = vmatpush1.bf16.msra.mxu0 0
        %2224 = vmatprep.subr.bf16.mxu0 0
        %2225 = vmatpush1.bf16.msra.mxu0 0
        %2226 = vmatprep.subr.bf16.mxu0 0
        %2227 = vmatpush1.bf16.msra.mxu0 0
        %2228 = vmatprep.subr.bf16.mxu0 0
        %2229 = vmatpush1.bf16.msra.mxu0 0
        %2230 = vmatprep.subr.bf16.mxu0 0
        %2231 = vmatpush1.bf16.msra.mxu0 0
        %2232 = vmatprep.subr.bf16.mxu0 0
        %2233 = vmatpush1.bf16.msra.mxu0 0
        %2234 = vmatprep.subr.bf16.mxu0 0
        %2235 = vmatpush1.bf16.msra.mxu0 0
        %2236 = vmatprep.subr.bf16.mxu0 0
        %2237 = vmatpush1.bf16.msra.mxu0 0
        %2238 = vmatprep.subr.bf16.mxu0 0
        %2239 = vmatpush1.bf16.msra.mxu0 0
        %2240 = vmatprep.subr.bf16.mxu0 0
        %2241 = vmatpush1.bf16.msra.mxu0 0
        %2242 = vmatprep.subr.bf16.mxu0 0
        %2243 = vmatpush1.bf16.msra.mxu0 0
        %2244 = vmatprep.subr.bf16.mxu0 0
        %2245 = vmatpush1.bf16.msra.mxu0 0
        %2246 = vmatprep.subr.bf16.mxu0 0
        %2247 = vmatpush1.bf16.msra.mxu0 0
        %2248 = vmatprep.subr.bf16.mxu0 0
        %2249 = vmatpush1.bf16.msra.mxu0 0
        %2250 = vmatprep.subr.bf16.mxu0 0
        %2251 = vmatpush1.bf16.msra.mxu0 0
        %2252 = vmatprep.mubr.bf16.mxu0 0
        %2253 = vmatmul.mubr.bf16.gmra.mrb[0].mxu0 %v2215
        %v2254 = vpop.f32.mrb[0].mxu0
        %v2255 = vadd.f32 0.0, %v2254
        %v2256 = vpop.f32.mrb[0].mxu0
        %v2257 = vpop.f32.mrb[0].mxu0
        %v2258 = vpop.f32.mrb[0].mxu0
        %2259 = vdwg.mxu0
        %v2261 = vsel %vm1684, %v2117, 0
        %v2264 = vsel %vm1932, %v2121, 0
        %2266 = vmatprep.subr.bf16.mxu0 0
        %2267 = vmatpush1.bf16.msra.mxu0 %v2264
        %2268 = vmatprep.subr.bf16.mxu0 0
        %2269 = vmatpush1.bf16.msra.mxu0 0
        %2270 = vmatprep.subr.bf16.mxu0 0
        %2271 = vmatpush1.bf16.msra.mxu0 0
        %2272 = vmatprep.subr.bf16.mxu0 0
        %2273 = vmatpush1.bf16.msra.mxu0 0
        %2274 = vmatprep.subr.bf16.mxu0 0
        %2275 = vmatpush1.bf16.msra.mxu0 0
        %2276 = vmatprep.subr.bf16.mxu0 0
        %2277 = vmatpush1.bf16.msra.mxu0 0
        %2278 = vmatprep.subr.bf16.mxu0 0
        %2279 = vmatpush1.bf16.msra.mxu0 0
        %2280 = vmatprep.subr.bf16.mxu0 0
        %2281 = vmatpush1.bf16.msra.mxu0 0
        %2282 = vmatprep.subr.bf16.mxu0 0
        %2283 = vmatpush1.bf16.msra.mxu0 0
        %2284 = vmatprep.subr.bf16.mxu0 0
        %2285 = vmatpush1.bf16.msra.mxu0 0
        %2286 = vmatprep.subr.bf16.mxu0 0
        %2287 = vmatpush1.bf16.msra.mxu0 0
        %2288 = vmatprep.subr.bf16.mxu0 0
        %2289 = vmatpush1.bf16.msra.mxu0 0
        %2290 = vmatprep.subr.bf16.mxu0 0
        %2291 = vmatpush1.bf16.msra.mxu0 0
        %2292 = vmatprep.subr.bf16.mxu0 0
        %2293 = vmatpush1.bf16.msra.mxu0 0
        %2294 = vmatprep.subr.bf16.mxu0 0
        %2295 = vmatpush1.bf16.msra.mxu0 0
        %2296 = vmatprep.subr.bf16.mxu0 0
        %2297 = vmatpush1.bf16.msra.mxu0 0
        %2298 = vmatprep.mubr.bf16.mxu0 0
        %2299 = vmatmul.mubr.bf16.gmra.mrb[0].mxu0 %v2261
        %v2300 = vpop.f32.mrb[0].mxu0
        %v2301 = vadd.f32 0.0, %v2300
        %v2302 = vpop.f32.mrb[0].mxu0
        %v2303 = vpop.f32.mrb[0].mxu0
        %v2304 = vpop.f32.mrb[0].mxu0
        %2305 = vdwg.mxu0
        %v2306 = vsel %vm1012, %v2163, 0.0
        %v2307 = vsel %vm1012, %v2209, 0.0
        %v2308 = vadd.f32 %v2306, %v2307
        %v2309 = vsel %vm1012, %v2255, 0.0
        %v2310 = vadd.f32 %v2308, %v2309
        %v2311 = vsel %vm1012, %v2301, 0.0
        %v2312 = vadd.f32 %v2310, %v2311
        %v2313 = vld [vmem:[%s843] sm:$0x1]
        %v2315 = vlaneseq
        %v2316 = vshrl.u32 %v2315, 7
        %v2317 = vsub.s32 0, %v2316
        %v2318 = vrot.slane %v2313, %v2317
        %v2320 = vadd.f32 %v2312, %v2318
        %v2321 = vadd.f32 %v893, %v2320
        %v2322 = vld [vmem:[%s880] sm:$0x1]
        %v2323 = vld [vmem:[%s884] sm:$0x1]
        %v2324 = vsel %vm1012, %v2321, 0.0
        %2325 = vadd.xlane.f32.xlu0 %v2324
        %v2326 = vpop.xlane.xlu0 %2325
        %v2327 = vrcp.pop 32.0
        %v2328 = vmul.f32 %v2326, %v2327
        %v2329 = vsub.f32 %v2321, %v2328
        %v2330 = vmul.f32 %v2329, %v2329
        %v2331 = vsel %vm1012, %v2330, 0.0
        %2332 = vadd.xlane.f32.xlu0 %v2331
        %v2333 = vpop.xlane.xlu0 %2332
        %v2334 = vmul.f32 %v2333, %v2327
        %v2335 = vadd.f32 %v2334, 1e-05
        %v2336 = vrsqrt.pop %v2335
        %v2337 = vmul.f32 %v2329, %v2336
        %v2339 = vlaneseq
        %v2340 = vshrl.u32 %v2339, 7
        %v2341 = vsub.s32 0, %v2340
        %v2342 = vrot.slane %v2322, %v2341
        %v2344 = vmul.f32 %v2337, %v2342
        %v2346 = vlaneseq
        %v2347 = vshrl.u32 %v2346, 7
        %v2348 = vsub.s32 0, %v2347
        %v2349 = vrot.slane %v2323, %v2348
        %v2351 = vadd.f32 %v2344, %v2349
        %v2352 = vpack.c.bf16 %v2351, %v2351
        %v2353 = vpack.c.bf16 %v894, %v894
        %v2354 = vld [vmem:[%s848] sm:$0xf]
        %v2355 = vld [vmem:[%s848 + $0x4] sm:$0xf]
        %v2356 = vld [vmem:[%s848 + $0x8] sm:$0xf]
        %v2357 = vld [vmem:[%s848 + $0xc] sm:$0xf]
        %v2358 = vld [vmem:[%s848 + $0x10] sm:$0xf]
        %v2359 = vld [vmem:[%s848 + $0x14] sm:$0xf]
        %v2360 = vld [vmem:[%s848 + $0x18] sm:$0xf]
        %v2361 = vld [vmem:[%s848 + $0x1c] sm:$0xf]
        %v2362 = vld [vmem:[%s848 + $0x20] sm:$0xf]
        %v2363 = vld [vmem:[%s848 + $0x24] sm:$0xf]
        %v2364 = vld [vmem:[%s848 + $0x28] sm:$0xf]
        %v2365 = vld [vmem:[%s848 + $0x2c] sm:$0xf]
        %v2366 = vld [vmem:[%s848 + $0x30] sm:$0xf]
        %v2367 = vld [vmem:[%s848 + $0x34] sm:$0xf]
        %v2368 = vld [vmem:[%s848 + $0x38] sm:$0xf]
        %v2369 = vld [vmem:[%s848 + $0x3c] sm:$0xf]
        %s2370 = scalar_lea.vmem %s848, 64
        %v2371 = vld [vmem:[%s2370] sm:$0xf]
        %v2372 = vld [vmem:[%s2370 + $0x4] sm:$0xf]
        %v2373 = vld [vmem:[%s2370 + $0x8] sm:$0xf]
        %v2374 = vld [vmem:[%s2370 + $0xc] sm:$0xf]
        %v2375 = vld [vmem:[%s2370 + $0x10] sm:$0xf]
        %v2376 = vld [vmem:[%s2370 + $0x14] sm:$0xf]
        %v2377 = vld [vmem:[%s2370 + $0x18] sm:$0xf]
        %v2378 = vld [vmem:[%s2370 + $0x1c] sm:$0xf]
        %v2379 = vld [vmem:[%s2370 + $0x20] sm:$0xf]
        %v2380 = vld [vmem:[%s2370 + $0x24] sm:$0xf]
        %v2381 = vld [vmem:[%s2370 + $0x28] sm:$0xf]
        %v2382 = vld [vmem:[%s2370 + $0x2c] sm:$0xf]
        %v2383 = vld [vmem:[%s2370 + $0x30] sm:$0xf]
        %v2384 = vld [vmem:[%s2370 + $0x34] sm:$0xf]
        %v2385 = vld [vmem:[%s2370 + $0x38] sm:$0xf]
        %v2386 = vld [vmem:[%s2370 + $0x3c] sm:$0xf]
        %s2387 = scalar_lea.vmem %s848, 128
        %v2388 = vld [vmem:[%s2387] sm:$0xf]
        %v2389 = vld [vmem:[%s2387 + $0x4] sm:$0xf]
        %v2390 = vld [vmem:[%s2387 + $0x8] sm:$0xf]
        %v2391 = vld [vmem:[%s2387 + $0xc] sm:$0xf]
        %v2392 = vld [vmem:[%s2387 + $0x10] sm:$0xf]
        %v2393 = vld [vmem:[%s2387 + $0x14] sm:$0xf]
        %v2394 = vld [vmem:[%s2387 + $0x18] sm:$0xf]
        %v2395 = vld [vmem:[%s2387 + $0x1c] sm:$0xf]
        %v2396 = vld [vmem:[%s2387 + $0x20] sm:$0xf]
        %v2397 = vld [vmem:[%s2387 + $0x24] sm:$0xf]
        %v2398 = vld [vmem:[%s2387 + $0x28] sm:$0xf]
        %v2399 = vld [vmem:[%s2387 + $0x2c] sm:$0xf]
        %v2400 = vld [vmem:[%s2387 + $0x30] sm:$0xf]
        %v2401 = vld [vmem:[%s2387 + $0x34] sm:$0xf]
        %v2402 = vld [vmem:[%s2387 + $0x38] sm:$0xf]
        %v2403 = vld [vmem:[%s2387 + $0x3c] sm:$0xf]
        %v2404 = vld [vmem:[%s852] sm:$0x1]
        %v2405 = vld [vmem:[%s852 + $0x1] sm:$0x1]
        %v2406 = vld [vmem:[%s852 + $0x2] sm:$0x1]
        %v2407 = vld [vmem:[%s852 + $0x3] sm:$0x1]
        %s2408 = scalar_lea.vmem %s852, 4
        %v2409 = vld [vmem:[%s2408] sm:$0x1]
        %v2410 = vld [vmem:[%s2408 + $0x1] sm:$0x1]
        %v2411 = vld [vmem:[%s2408 + $0x2] sm:$0x1]
        %v2412 = vld [vmem:[%s2408 + $0x3] sm:$0x1]
        %s2413 = scalar_lea.vmem %s852, 8
        %v2414 = vld [vmem:[%s2413] sm:$0x1]
        %v2415 = vld [vmem:[%s2413 + $0x1] sm:$0x1]
        %v2416 = vld [vmem:[%s2413 + $0x2] sm:$0x1]
        %v2417 = vld [vmem:[%s2413 + $0x3] sm:$0x1]
        %v2422 = vlaneseq
        %v2423 = vshrl.u32 %v2422, 7
        %v2424 = vsub.s32 0, %v2423
        %v2425 = vrot.slane %v2404, %v2424
        %v2426 = vlaneseq
        %v2427 = vshrl.u32 %v2426, 7
        %v2428 = vsub.s32 0, %v2427
        %v2429 = vrot.slane %v2405, %v2428
        %v2430 = vlaneseq
        %v2431 = vshrl.u32 %v2430, 7
        %v2432 = vsub.s32 0, %v2431
        %v2433 = vrot.slane %v2406, %v2432
        %v2434 = vlaneseq
        %v2435 = vshrl.u32 %v2434, 7
        %v2436 = vsub.s32 0, %v2435
        %v2437 = vrot.slane %v2407, %v2436
        %v2446 = vunpack.c.l.b16 %v2354
        %v2447 = vunpack.c.l.b16 %v2355
        %v2448 = vunpack.c.l.b16 %v2356
        %v2449 = vunpack.c.l.b16 %v2357
        %v2450 = vpack.c.b16 %v2447, %v2446
        %v2451 = vpack.c.b16 %v2449, %v2448
        %v2455 = vsel %vm1012, %v2352, 0
        %2457 = vmatprep.subr.bf16.mxu0 0
        %2458 = vmatpush1.bf16.msra.mxu0 %v2450
        %2459 = vmatprep.subr.bf16.mxu0 0
        %2460 = vmatpush1.bf16.msra.mxu0 %v2451
        %2461 = vmatprep.subr.bf16.mxu0 0
        %2462 = vmatpush1.bf16.msra.mxu0 0
        %2463 = vmatprep.subr.bf16.mxu0 0
        %2464 = vmatpush1.bf16.msra.mxu0 0
        %2465 = vmatprep.subr.bf16.mxu0 0
        %2466 = vmatpush1.bf16.msra.mxu0 0
        %2467 = vmatprep.subr.bf16.mxu0 0
        %2468 = vmatpush1.bf16.msra.mxu0 0
        %2469 = vmatprep.subr.bf16.mxu0 0
        %2470 = vmatpush1.bf16.msra.mxu0 0
        %2471 = vmatprep.subr.bf16.mxu0 0
        %2472 = vmatpush1.bf16.msra.mxu0 0
        %2473 = vmatprep.subr.bf16.mxu0 0
        %2474 = vmatpush1.bf16.msra.mxu0 0
        %2475 = vmatprep.subr.bf16.mxu0 0
        %2476 = vmatpush1.bf16.msra.mxu0 0
        %2477 = vmatprep.subr.bf16.mxu0 0
        %2478 = vmatpush1.bf16.msra.mxu0 0
        %2479 = vmatprep.subr.bf16.mxu0 0
        %2480 = vmatpush1.bf16.msra.mxu0 0
        %2481 = vmatprep.subr.bf16.mxu0 0
        %2482 = vmatpush1.bf16.msra.mxu0 0
        %2483 = vmatprep.subr.bf16.mxu0 0
        %2484 = vmatpush1.bf16.msra.mxu0 0
        %2485 = vmatprep.subr.bf16.mxu0 0
        %2486 = vmatpush1.bf16.msra.mxu0 0
        %2487 = vmatprep.subr.bf16.mxu0 0
        %2488 = vmatpush1.bf16.msra.mxu0 0
        %2489 = vmatprep.mubr.bf16.mxu0 0
        %2490 = vmatmul.mubr.bf16.gmra.mrb[0].mxu0 %v2455
        %v2491 = vpop.f32.mrb[0].mxu0
        %v2492 = vadd.f32 %v2425, %v2491
        %v2493 = vpop.f32.mrb[0].mxu0
        %v2494 = vpop.f32.mrb[0].mxu0
        %v2495 = vpop.f32.mrb[0].mxu0
        %2496 = vdwg.mxu0
        %v2501 = vunpack.c.l.b16 %v2358
        %v2502 = vunpack.c.l.b16 %v2359
        %v2503 = vunpack.c.l.b16 %v2360
        %v2504 = vunpack.c.l.b16 %v2361
        %v2505 = vpack.c.b16 %v2502, %v2501
        %v2506 = vpack.c.b16 %v2504, %v2503
        %2509 = vmatprep.subr.bf16.mxu0 0
        %2510 = vmatpush1.bf16.msra.mxu0 %v2505
        %2511 = vmatprep.subr.bf16.mxu0 0
        %2512 = vmatpush1.bf16.msra.mxu0 %v2506
        %2513 = vmatprep.subr.bf16.mxu0 0
        %2514 = vmatpush1.bf16.msra.mxu0 0
        %2515 = vmatprep.subr.bf16.mxu0 0
        %2516 = vmatpush1.bf16.msra.mxu0 0
        %2517 = vmatprep.subr.bf16.mxu0 0
        %2518 = vmatpush1.bf16.msra.mxu0 0
        %2519 = vmatprep.subr.bf16.mxu0 0
        %2520 = vmatpush1.bf16.msra.mxu0 0
        %2521 = vmatprep.subr.bf16.mxu0 0
        %2522 = vmatpush1.bf16.msra.mxu0 0
        %2523 = vmatprep.subr.bf16.mxu0 0
        %2524 = vmatpush1.bf16.msra.mxu0 0
        %2525 = vmatprep.subr.bf16.mxu0 0
        %2526 = vmatpush1.bf16.msra.mxu0 0
        %2527 = vmatprep.subr.bf16.mxu0 0
        %2528 = vmatpush1.bf16.msra.mxu0 0
        %2529 = vmatprep.subr.bf16.mxu0 0
        %2530 = vmatpush1.bf16.msra.mxu0 0
        %2531 = vmatprep.subr.bf16.mxu0 0
        %2532 = vmatpush1.bf16.msra.mxu0 0
        %2533 = vmatprep.subr.bf16.mxu0 0
        %2534 = vmatpush1.bf16.msra.mxu0 0
        %2535 = vmatprep.subr.bf16.mxu0 0
        %2536 = vmatpush1.bf16.msra.mxu0 0
        %2537 = vmatprep.subr.bf16.mxu0 0
        %2538 = vmatpush1.bf16.msra.mxu0 0
        %2539 = vmatprep.subr.bf16.mxu0 0
        %2540 = vmatpush1.bf16.msra.mxu0 0
        %2541 = vmatprep.mubr.bf16.mxu0 0
        %2542 = vmatmul.mubr.bf16.gmra.mrb[0].mxu0 %v2455
        %v2543 = vpop.f32.mrb[0].mxu0
        %v2544 = vadd.f32 %v2429, %v2543
        %v2545 = vpop.f32.mrb[0].mxu0
        %v2546 = vpop.f32.mrb[0].mxu0
        %v2547 = vpop.f32.mrb[0].mxu0
        %2548 = vdwg.mxu0
        %v2553 = vunpack.c.l.b16 %v2362
        %v2554 = vunpack.c.l.b16 %v2363
        %v2555 = vunpack.c.l.b16 %v2364
        %v2556 = vunpack.c.l.b16 %v2365
        %v2557 = vpack.c.b16 %v2554, %v2553
        %v2558 = vpack.c.b16 %v2556, %v2555
        %2561 = vmatprep.subr.bf16.mxu0 0
        %2562 = vmatpush1.bf16.msra.mxu0 %v2557
        %2563 = vmatprep.subr.bf16.mxu0 0
        %2564 = vmatpush1.bf16.msra.mxu0 %v2558
        %2565 = vmatprep.subr.bf16.mxu0 0
        %2566 = vmatpush1.bf16.msra.mxu0 0
        %2567 = vmatprep.subr.bf16.mxu0 0
        %2568 = vmatpush1.bf16.msra.mxu0 0
        %2569 = vmatprep.subr.bf16.mxu0 0
        %2570 = vmatpush1.bf16.msra.mxu0 0
        %2571 = vmatprep.subr.bf16.mxu0 0
        %2572 = vmatpush1.bf16.msra.mxu0 0
        %2573 = vmatprep.subr.bf16.mxu0 0
        %2574 = vmatpush1.bf16.msra.mxu0 0
        %2575 = vmatprep.subr.bf16.mxu0 0
        %2576 = vmatpush1.bf16.msra.mxu0 0
        %2577 = vmatprep.subr.bf16.mxu0 0
        %2578 = vmatpush1.bf16.msra.mxu0 0
        %2579 = vmatprep.subr.bf16.mxu0 0
        %2580 = vmatpush1.bf16.msra.mxu0 0
        %2581 = vmatprep.subr.bf16.mxu0 0
        %2582 = vmatpush1.bf16.msra.mxu0 0
        %2583 = vmatprep.subr.bf16.mxu0 0
        %2584 = vmatpush1.bf16.msra.mxu0 0
        %2585 = vmatprep.subr.bf16.mxu0 0
        %2586 = vmatpush1.bf16.msra.mxu0 0
        %2587 = vmatprep.subr.bf16.mxu0 0
        %2588 = vmatpush1.bf16.msra.mxu0 0
        %2589 = vmatprep.subr.bf16.mxu0 0
        %2590 = vmatpush1.bf16.msra.mxu0 0
        %2591 = vmatprep.subr.bf16.mxu0 0
        %2592 = vmatpush1.bf16.msra.mxu0 0
        %2593 = vmatprep.mubr.bf16.mxu0 0
        %2594 = vmatmul.mubr.bf16.gmra.mrb[0].mxu0 %v2455
        %v2595 = vpop.f32.mrb[0].mxu0
        %v2596 = vadd.f32 %v2433, %v2595
        %v2597 = vpop.f32.mrb[0].mxu0
        %v2598 = vpop.f32.mrb[0].mxu0
        %v2599 = vpop.f32.mrb[0].mxu0
        %2600 = vdwg.mxu0
        %v2605 = vunpack.c.l.b16 %v2366
        %v2606 = vunpack.c.l.b16 %v2367
        %v2607 = vunpack.c.l.b16 %v2368
        %v2608 = vunpack.c.l.b16 %v2369
        %v2609 = vpack.c.b16 %v2606, %v2605
        %v2610 = vpack.c.b16 %v2608, %v2607
        %2613 = vmatprep.subr.bf16.mxu0 0
        %2614 = vmatpush1.bf16.msra.mxu0 %v2609
        %2615 = vmatprep.subr.bf16.mxu0 0
        %2616 = vmatpush1.bf16.msra.mxu0 %v2610
        %2617 = vmatprep.subr.bf16.mxu0 0
        %2618 = vmatpush1.bf16.msra.mxu0 0
        %2619 = vmatprep.subr.bf16.mxu0 0
        %2620 = vmatpush1.bf16.msra.mxu0 0
        %2621 = vmatprep.subr.bf16.mxu0 0
        %2622 = vmatpush1.bf16.msra.mxu0 0
        %2623 = vmatprep.subr.bf16.mxu0 0
        %2624 = vmatpush1.bf16.msra.mxu0 0
        %2625 = vmatprep.subr.bf16.mxu0 0
        %2626 = vmatpush1.bf16.msra.mxu0 0
        %2627 = vmatprep.subr.bf16.mxu0 0
        %2628 = vmatpush1.bf16.msra.mxu0 0
        %2629 = vmatprep.subr.bf16.mxu0 0
        %2630 = vmatpush1.bf16.msra.mxu0 0
        %2631 = vmatprep.subr.bf16.mxu0 0
        %2632 = vmatpush1.bf16.msra.mxu0 0
        %2633 = vmatprep.subr.bf16.mxu0 0
        %2634 = vmatpush1.bf16.msra.mxu0 0
        %2635 = vmatprep.subr.bf16.mxu0 0
        %2636 = vmatpush1.bf16.msra.mxu0 0
        %2637 = vmatprep.subr.bf16.mxu0 0
        %2638 = vmatpush1.bf16.msra.mxu0 0
        %2639 = vmatprep.subr.bf16.mxu0 0
        %2640 = vmatpush1.bf16.msra.mxu0 0
        %2641 = vmatprep.subr.bf16.mxu0 0
        %2642 = vmatpush1.bf16.msra.mxu0 0
        %2643 = vmatprep.subr.bf16.mxu0 0
        %2644 = vmatpush1.bf16.msra.mxu0 0
        %2645 = vmatprep.mubr.bf16.mxu0 0
        %2646 = vmatmul.mubr.bf16.gmra.mrb[0].mxu0 %v2455
        %v2647 = vpop.f32.mrb[0].mxu0
        %v2648 = vadd.f32 %v2437, %v2647
        %v2649 = vpop.f32.mrb[0].mxu0
        %v2650 = vpop.f32.mrb[0].mxu0
        %v2651 = vpop.f32.mrb[0].mxu0
        %2652 = vdwg.mxu0
        %v2657 = vlaneseq
        %v2658 = vshrl.u32 %v2657, 7
        %v2659 = vsub.s32 0, %v2658
        %v2660 = vrot.slane %v2409, %v2659
        %v2661 = vlaneseq
        %v2662 = vshrl.u32 %v2661, 7
        %v2663 = vsub.s32 0, %v2662
        %v2664 = vrot.slane %v2410, %v2663
        %v2665 = vlaneseq
        %v2666 = vshrl.u32 %v2665, 7
        %v2667 = vsub.s32 0, %v2666
        %v2668 = vrot.slane %v2411, %v2667
        %v2669 = vlaneseq
        %v2670 = vshrl.u32 %v2669, 7
        %v2671 = vsub.s32 0, %v2670
        %v2672 = vrot.slane %v2412, %v2671
        %v2681 = vunpack.c.l.b16 %v2371
        %v2682 = vunpack.c.l.b16 %v2372
        %v2683 = vunpack.c.l.b16 %v2373
        %v2684 = vunpack.c.l.b16 %v2374
        %v2685 = vpack.c.b16 %v2682, %v2681
        %v2686 = vpack.c.b16 %v2684, %v2683
        %v2690 = vsel %vm1012, %v2353, 0
        %2692 = vmatprep.subr.bf16.mxu0 0
        %2693 = vmatpush1.bf16.msra.mxu0 %v2685
        %2694 = vmatprep.subr.bf16.mxu0 0
        %2695 = vmatpush1.bf16.msra.mxu0 %v2686
        %2696 = vmatprep.subr.bf16.mxu0 0
        %2697 = vmatpush1.bf16.msra.mxu0 0
        %2698 = vmatprep.subr.bf16.mxu0 0
        %2699 = vmatpush1.bf16.msra.mxu0 0
        %2700 = vmatprep.subr.bf16.mxu0 0
        %2701 = vmatpush1.bf16.msra.mxu0 0
        %2702 = vmatprep.subr.bf16.mxu0 0
        %2703 = vmatpush1.bf16.msra.mxu0 0
        %2704 = vmatprep.subr.bf16.mxu0 0
        %2705 = vmatpush1.bf16.msra.mxu0 0
        %2706 = vmatprep.subr.bf16.mxu0 0
        %2707 = vmatpush1.bf16.msra.mxu0 0
        %2708 = vmatprep.subr.bf16.mxu0 0
        %2709 = vmatpush1.bf16.msra.mxu0 0
        %2710 = vmatprep.subr.bf16.mxu0 0
        %2711 = vmatpush1.bf16.msra.mxu0 0
        %2712 = vmatprep.subr.bf16.mxu0 0
        %2713 = vmatpush1.bf16.msra.mxu0 0
        %2714 = vmatprep.subr.bf16.mxu0 0
        %2715 = vmatpush1.bf16.msra.mxu0 0
        %2716 = vmatprep.subr.bf16.mxu0 0
        %2717 = vmatpush1.bf16.msra.mxu0 0
        %2718 = vmatprep.subr.bf16.mxu0 0
        %2719 = vmatpush1.bf16.msra.mxu0 0
        %2720 = vmatprep.subr.bf16.mxu0 0
        %2721 = vmatpush1.bf16.msra.mxu0 0
        %2722 = vmatprep.subr.bf16.mxu0 0
        %2723 = vmatpush1.bf16.msra.mxu0 0
        %2724 = vmatprep.mubr.bf16.mxu0 0
        %2725 = vmatmul.mubr.bf16.gmra.mrb[0].mxu0 %v2690
        %v2726 = vpop.f32.mrb[0].mxu0
        %v2727 = vadd.f32 %v2660, %v2726
        %v2728 = vpop.f32.mrb[0].mxu0
        %v2729 = vpop.f32.mrb[0].mxu0
        %v2730 = vpop.f32.mrb[0].mxu0
        %2731 = vdwg.mxu0
        %v2736 = vunpack.c.l.b16 %v2375
        %v2737 = vunpack.c.l.b16 %v2376
        %v2738 = vunpack.c.l.b16 %v2377
        %v2739 = vunpack.c.l.b16 %v2378
        %v2740 = vpack.c.b16 %v2737, %v2736
        %v2741 = vpack.c.b16 %v2739, %v2738
        %2744 = vmatprep.subr.bf16.mxu0 0
        %2745 = vmatpush1.bf16.msra.mxu0 %v2740
        %2746 = vmatprep.subr.bf16.mxu0 0
        %2747 = vmatpush1.bf16.msra.mxu0 %v2741
        %2748 = vmatprep.subr.bf16.mxu0 0
        %2749 = vmatpush1.bf16.msra.mxu0 0
        %2750 = vmatprep.subr.bf16.mxu0 0
        %2751 = vmatpush1.bf16.msra.mxu0 0
        %2752 = vmatprep.subr.bf16.mxu0 0
        %2753 = vmatpush1.bf16.msra.mxu0 0
        %2754 = vmatprep.subr.bf16.mxu0 0
        %2755 = vmatpush1.bf16.msra.mxu0 0
        %2756 = vmatprep.subr.bf16.mxu0 0
        %2757 = vmatpush1.bf16.msra.mxu0 0
        %2758 = vmatprep.subr.bf16.mxu0 0
        %2759 = vmatpush1.bf16.msra.mxu0 0
        %2760 = vmatprep.subr.bf16.mxu0 0
        %2761 = vmatpush1.bf16.msra.mxu0 0
        %2762 = vmatprep.subr.bf16.mxu0 0
        %2763 = vmatpush1.bf16.msra.mxu0 0
        %2764 = vmatprep.subr.bf16.mxu0 0
        %2765 = vmatpush1.bf16.msra.mxu0 0
        %2766 = vmatprep.subr.bf16.mxu0 0
        %2767 = vmatpush1.bf16.msra.mxu0 0
        %2768 = vmatprep.subr.bf16.mxu0 0
        %2769 = vmatpush1.bf16.msra.mxu0 0
        %2770 = vmatprep.subr.bf16.mxu0 0
        %2771 = vmatpush1.bf16.msra.mxu0 0
        %2772 = vmatprep.subr.bf16.mxu0 0
        %2773 = vmatpush1.bf16.msra.mxu0 0
        %2774 = vmatprep.subr.bf16.mxu0 0
        %2775 = vmatpush1.bf16.msra.mxu0 0
        %2776 = vmatprep.mubr.bf16.mxu0 0
        %2777 = vmatmul.mubr.bf16.gmra.mrb[0].mxu0 %v2690
        %v2778 = vpop.f32.mrb[0].mxu0
        %v2779 = vadd.f32 %v2664, %v2778
        %v2780 = vpop.f32.mrb[0].mxu0
        %v2781 = vpop.f32.mrb[0].mxu0
        %v2782 = vpop.f32.mrb[0].mxu0
        %2783 = vdwg.mxu0
        %v2788 = vunpack.c.l.b16 %v2379
        %v2789 = vunpack.c.l.b16 %v2380
        %v2790 = vunpack.c.l.b16 %v2381
        %v2791 = vunpack.c.l.b16 %v2382
        %v2792 = vpack.c.b16 %v2789, %v2788
        %v2793 = vpack.c.b16 %v2791, %v2790
        %2796 = vmatprep.subr.bf16.mxu0 0
        %2797 = vmatpush1.bf16.msra.mxu0 %v2792
        %2798 = vmatprep.subr.bf16.mxu0 0
        %2799 = vmatpush1.bf16.msra.mxu0 %v2793
        %2800 = vmatprep.subr.bf16.mxu0 0
        %2801 = vmatpush1.bf16.msra.mxu0 0
        %2802 = vmatprep.subr.bf16.mxu0 0
        %2803 = vmatpush1.bf16.msra.mxu0 0
        %2804 = vmatprep.subr.bf16.mxu0 0
        %2805 = vmatpush1.bf16.msra.mxu0 0
        %2806 = vmatprep.subr.bf16.mxu0 0
        %2807 = vmatpush1.bf16.msra.mxu0 0
        %2808 = vmatprep.subr.bf16.mxu0 0
        %2809 = vmatpush1.bf16.msra.mxu0 0
        %2810 = vmatprep.subr.bf16.mxu0 0
        %2811 = vmatpush1.bf16.msra.mxu0 0
        %2812 = vmatprep.subr.bf16.mxu0 0
        %2813 = vmatpush1.bf16.msra.mxu0 0
        %2814 = vmatprep.subr.bf16.mxu0 0
        %2815 = vmatpush1.bf16.msra.mxu0 0
        %2816 = vmatprep.subr.bf16.mxu0 0
        %2817 = vmatpush1.bf16.msra.mxu0 0
        %2818 = vmatprep.subr.bf16.mxu0 0
        %2819 = vmatpush1.bf16.msra.mxu0 0
        %2820 = vmatprep.subr.bf16.mxu0 0
        %2821 = vmatpush1.bf16.msra.mxu0 0
        %2822 = vmatprep.subr.bf16.mxu0 0
        %2823 = vmatpush1.bf16.msra.mxu0 0
        %2824 = vmatprep.subr.bf16.mxu0 0
        %2825 = vmatpush1.bf16.msra.mxu0 0
        %2826 = vmatprep.subr.bf16.mxu0 0
        %2827 = vmatpush1.bf16.msra.mxu0 0
        %2828 = vmatprep.mubr.bf16.mxu0 0
        %2829 = vmatmul.mubr.bf16.gmra.mrb[0].mxu0 %v2690
        %v2830 = vpop.f32.mrb[0].mxu0
        %v2831 = vadd.f32 %v2668, %v2830
        %v2832 = vpop.f32.mrb[0].mxu0
        %v2833 = vpop.f32.mrb[0].mxu0
        %v2834 = vpop.f32.mrb[0].mxu0
        %2835 = vdwg.mxu0
        %v2840 = vunpack.c.l.b16 %v2383
        %v2841 = vunpack.c.l.b16 %v2384
        %v2842 = vunpack.c.l.b16 %v2385
        %v2843 = vunpack.c.l.b16 %v2386
        %v2844 = vpack.c.b16 %v2841, %v2840
        %v2845 = vpack.c.b16 %v2843, %v2842
        %2848 = vmatprep.subr.bf16.mxu0 0
        %2849 = vmatpush1.bf16.msra.mxu0 %v2844
        %2850 = vmatprep.subr.bf16.mxu0 0
        %2851 = vmatpush1.bf16.msra.mxu0 %v2845
        %2852 = vmatprep.subr.bf16.mxu0 0
        %2853 = vmatpush1.bf16.msra.mxu0 0
        %2854 = vmatprep.subr.bf16.mxu0 0
        %2855 = vmatpush1.bf16.msra.mxu0 0
        %2856 = vmatprep.subr.bf16.mxu0 0
        %2857 = vmatpush1.bf16.msra.mxu0 0
        %2858 = vmatprep.subr.bf16.mxu0 0
        %2859 = vmatpush1.bf16.msra.mxu0 0
        %2860 = vmatprep.subr.bf16.mxu0 0
        %2861 = vmatpush1.bf16.msra.mxu0 0
        %2862 = vmatprep.subr.bf16.mxu0 0
        %2863 = vmatpush1.bf16.msra.mxu0 0
        %2864 = vmatprep.subr.bf16.mxu0 0
        %2865 = vmatpush1.bf16.msra.mxu0 0
        %2866 = vmatprep.subr.bf16.mxu0 0
        %2867 = vmatpush1.bf16.msra.mxu0 0
        %2868 = vmatprep.subr.bf16.mxu0 0
        %2869 = vmatpush1.bf16.msra.mxu0 0
        %2870 = vmatprep.subr.bf16.mxu0 0
        %2871 = vmatpush1.bf16.msra.mxu0 0
        %2872 = vmatprep.subr.bf16.mxu0 0
        %2873 = vmatpush1.bf16.msra.mxu0 0
        %2874 = vmatprep.subr.bf16.mxu0 0
        %2875 = vmatpush1.bf16.msra.mxu0 0
        %2876 = vmatprep.subr.bf16.mxu0 0
        %2877 = vmatpush1.bf16.msra.mxu0 0
        %2878 = vmatprep.subr.bf16.mxu0 0
        %2879 = vmatpush1.bf16.msra.mxu0 0
        %2880 = vmatprep.mubr.bf16.mxu0 0
        %2881 = vmatmul.mubr.bf16.gmra.mrb[0].mxu0 %v2690
        %v2882 = vpop.f32.mrb[0].mxu0
        %v2883 = vadd.f32 %v2672, %v2882
        %v2884 = vpop.f32.mrb[0].mxu0
        %v2885 = vpop.f32.mrb[0].mxu0
        %v2886 = vpop.f32.mrb[0].mxu0
        %2887 = vdwg.mxu0
        %v2892 = vlaneseq
        %v2893 = vshrl.u32 %v2892, 7
        %v2894 = vsub.s32 0, %v2893
        %v2895 = vrot.slane %v2414, %v2894
        %v2896 = vlaneseq
        %v2897 = vshrl.u32 %v2896, 7
        %v2898 = vsub.s32 0, %v2897
        %v2899 = vrot.slane %v2415, %v2898
        %v2900 = vlaneseq
        %v2901 = vshrl.u32 %v2900, 7
        %v2902 = vsub.s32 0, %v2901
        %v2903 = vrot.slane %v2416, %v2902
        %v2904 = vlaneseq
        %v2905 = vshrl.u32 %v2904, 7
        %v2906 = vsub.s32 0, %v2905
        %v2907 = vrot.slane %v2417, %v2906
        %v2916 = vunpack.c.l.b16 %v2388
        %v2917 = vunpack.c.l.b16 %v2389
        %v2918 = vunpack.c.l.b16 %v2390
        %v2919 = vunpack.c.l.b16 %v2391
        %v2920 = vpack.c.b16 %v2917, %v2916
        %v2921 = vpack.c.b16 %v2919, %v2918
        %2924 = vmatprep.subr.bf16.mxu0 0
        %2925 = vmatpush1.bf16.msra.mxu0 %v2920
        %2926 = vmatprep.subr.bf16.mxu0 0
        %2927 = vmatpush1.bf16.msra.mxu0 %v2921
        %2928 = vmatprep.subr.bf16.mxu0 0
        %2929 = vmatpush1.bf16.msra.mxu0 0
        %2930 = vmatprep.subr.bf16.mxu0 0
        %2931 = vmatpush1.bf16.msra.mxu0 0
        %2932 = vmatprep.subr.bf16.mxu0 0
        %2933 = vmatpush1.bf16.msra.mxu0 0
        %2934 = vmatprep.subr.bf16.mxu0 0
        %2935 = vmatpush1.bf16.msra.mxu0 0
        %2936 = vmatprep.subr.bf16.mxu0 0
        %2937 = vmatpush1.bf16.msra.mxu0 0
        %2938 = vmatprep.subr.bf16.mxu0 0
        %2939 = vmatpush1.bf16.msra.mxu0 0
        %2940 = vmatprep.subr.bf16.mxu0 0
        %2941 = vmatpush1.bf16.msra.mxu0 0
        %2942 = vmatprep.subr.bf16.mxu0 0
        %2943 = vmatpush1.bf16.msra.mxu0 0
        %2944 = vmatprep.subr.bf16.mxu0 0
        %2945 = vmatpush1.bf16.msra.mxu0 0
        %2946 = vmatprep.subr.bf16.mxu0 0
        %2947 = vmatpush1.bf16.msra.mxu0 0
        %2948 = vmatprep.subr.bf16.mxu0 0
        %2949 = vmatpush1.bf16.msra.mxu0 0
        %2950 = vmatprep.subr.bf16.mxu0 0
        %2951 = vmatpush1.bf16.msra.mxu0 0
        %2952 = vmatprep.subr.bf16.mxu0 0
        %2953 = vmatpush1.bf16.msra.mxu0 0
        %2954 = vmatprep.subr.bf16.mxu0 0
        %2955 = vmatpush1.bf16.msra.mxu0 0
        %2956 = vmatprep.mubr.bf16.mxu0 0
        %2957 = vmatmul.mubr.bf16.gmra.mrb[0].mxu0 %v2690
        %v2958 = vpop.f32.mrb[0].mxu0
        %v2959 = vadd.f32 %v2895, %v2958
        %v2960 = vpop.f32.mrb[0].mxu0
        %v2961 = vpop.f32.mrb[0].mxu0
        %v2962 = vpop.f32.mrb[0].mxu0
        %2963 = vdwg.mxu0
        %v2968 = vunpack.c.l.b16 %v2392
        %v2969 = vunpack.c.l.b16 %v2393
        %v2970 = vunpack.c.l.b16 %v2394
        %v2971 = vunpack.c.l.b16 %v2395
        %v2972 = vpack.c.b16 %v2969, %v2968
        %v2973 = vpack.c.b16 %v2971, %v2970
        %2976 = vmatprep.subr.bf16.mxu0 0
        %2977 = vmatpush1.bf16.msra.mxu0 %v2972
        %2978 = vmatprep.subr.bf16.mxu0 0
        %2979 = vmatpush1.bf16.msra.mxu0 %v2973
        %2980 = vmatprep.subr.bf16.mxu0 0
        %2981 = vmatpush1.bf16.msra.mxu0 0
        %2982 = vmatprep.subr.bf16.mxu0 0
        %2983 = vmatpush1.bf16.msra.mxu0 0
        %2984 = vmatprep.subr.bf16.mxu0 0
        %2985 = vmatpush1.bf16.msra.mxu0 0
        %2986 = vmatprep.subr.bf16.mxu0 0
        %2987 = vmatpush1.bf16.msra.mxu0 0
        %2988 = vmatprep.subr.bf16.mxu0 0
        %2989 = vmatpush1.bf16.msra.mxu0 0
        %2990 = vmatprep.subr.bf16.mxu0 0
        %2991 = vmatpush1.bf16.msra.mxu0 0
        %2992 = vmatprep.subr.bf16.mxu0 0
        %2993 = vmatpush1.bf16.msra.mxu0 0
        %2994 = vmatprep.subr.bf16.mxu0 0
        %2995 = vmatpush1.bf16.msra.mxu0 0
        %2996 = vmatprep.subr.bf16.mxu0 0
        %2997 = vmatpush1.bf16.msra.mxu0 0
        %2998 = vmatprep.subr.bf16.mxu0 0
        %2999 = vmatpush1.bf16.msra.mxu0 0
        %3000 = vmatprep.subr.bf16.mxu0 0
        %3001 = vmatpush1.bf16.msra.mxu0 0
        %3002 = vmatprep.subr.bf16.mxu0 0
        %3003 = vmatpush1.bf16.msra.mxu0 0
        %3004 = vmatprep.subr.bf16.mxu0 0
        %3005 = vmatpush1.bf16.msra.mxu0 0
        %3006 = vmatprep.subr.bf16.mxu0 0
        %3007 = vmatpush1.bf16.msra.mxu0 0
        %3008 = vmatprep.mubr.bf16.mxu0 0
        %3009 = vmatmul.mubr.bf16.gmra.mrb[0].mxu0 %v2690
        %v3010 = vpop.f32.mrb[0].mxu0
        %v3011 = vadd.f32 %v2899, %v3010
        %v3012 = vpop.f32.mrb[0].mxu0
        %v3013 = vpop.f32.mrb[0].mxu0
        %v3014 = vpop.f32.mrb[0].mxu0
        %3015 = vdwg.mxu0
        %v3020 = vunpack.c.l.b16 %v2396
        %v3021 = vunpack.c.l.b16 %v2397
        %v3022 = vunpack.c.l.b16 %v2398
        %v3023 = vunpack.c.l.b16 %v2399
        %v3024 = vpack.c.b16 %v3021, %v3020
        %v3025 = vpack.c.b16 %v3023, %v3022
        %3028 = vmatprep.subr.bf16.mxu0 0
        %3029 = vmatpush1.bf16.msra.mxu0 %v3024
        %3030 = vmatprep.subr.bf16.mxu0 0
        %3031 = vmatpush1.bf16.msra.mxu0 %v3025
        %3032 = vmatprep.subr.bf16.mxu0 0
        %3033 = vmatpush1.bf16.msra.mxu0 0
        %3034 = vmatprep.subr.bf16.mxu0 0
        %3035 = vmatpush1.bf16.msra.mxu0 0
        %3036 = vmatprep.subr.bf16.mxu0 0
        %3037 = vmatpush1.bf16.msra.mxu0 0
        %3038 = vmatprep.subr.bf16.mxu0 0
        %3039 = vmatpush1.bf16.msra.mxu0 0
        %3040 = vmatprep.subr.bf16.mxu0 0
        %3041 = vmatpush1.bf16.msra.mxu0 0
        %3042 = vmatprep.subr.bf16.mxu0 0
        %3043 = vmatpush1.bf16.msra.mxu0 0
        %3044 = vmatprep.subr.bf16.mxu0 0
        %3045 = vmatpush1.bf16.msra.mxu0 0
        %3046 = vmatprep.subr.bf16.mxu0 0
        %3047 = vmatpush1.bf16.msra.mxu0 0
        %3048 = vmatprep.subr.bf16.mxu0 0
        %3049 = vmatpush1.bf16.msra.mxu0 0
        %3050 = vmatprep.subr.bf16.mxu0 0
        %3051 = vmatpush1.bf16.msra.mxu0 0
        %3052 = vmatprep.subr.bf16.mxu0 0
        %3053 = vmatpush1.bf16.msra.mxu0 0
        %3054 = vmatprep.subr.bf16.mxu0 0
        %3055 = vmatpush1.bf16.msra.mxu0 0
        %3056 = vmatprep.subr.bf16.mxu0 0
        %3057 = vmatpush1.bf16.msra.mxu0 0
        %3058 = vmatprep.subr.bf16.mxu0 0
        %3059 = vmatpush1.bf16.msra.mxu0 0
        %3060 = vmatprep.mubr.bf16.mxu0 0
        %3061 = vmatmul.mubr.bf16.gmra.mrb[0].mxu0 %v2690
        %v3062 = vpop.f32.mrb[0].mxu0
        %v3063 = vadd.f32 %v2903, %v3062
        %v3064 = vpop.f32.mrb[0].mxu0
        %v3065 = vpop.f32.mrb[0].mxu0
        %v3066 = vpop.f32.mrb[0].mxu0
        %3067 = vdwg.mxu0
        %v3072 = vunpack.c.l.b16 %v2400
        %v3073 = vunpack.c.l.b16 %v2401
        %v3074 = vunpack.c.l.b16 %v2402
        %v3075 = vunpack.c.l.b16 %v2403
        %v3076 = vpack.c.b16 %v3073, %v3072
        %v3077 = vpack.c.b16 %v3075, %v3074
        %3080 = vmatprep.subr.bf16.mxu0 0
        %3081 = vmatpush1.bf16.msra.mxu0 %v3076
        %3082 = vmatprep.subr.bf16.mxu0 0
        %3083 = vmatpush1.bf16.msra.mxu0 %v3077
        %3084 = vmatprep.subr.bf16.mxu0 0
        %3085 = vmatpush1.bf16.msra.mxu0 0
        %3086 = vmatprep.subr.bf16.mxu0 0
        %3087 = vmatpush1.bf16.msra.mxu0 0
        %3088 = vmatprep.subr.bf16.mxu0 0
        %3089 = vmatpush1.bf16.msra.mxu0 0
        %3090 = vmatprep.subr.bf16.mxu0 0
        %3091 = vmatpush1.bf16.msra.mxu0 0
        %3092 = vmatprep.subr.bf16.mxu0 0
        %3093 = vmatpush1.bf16.msra.mxu0 0
        %3094 = vmatprep.subr.bf16.mxu0 0
        %3095 = vmatpush1.bf16.msra.mxu0 0
        %3096 = vmatprep.subr.bf16.mxu0 0
        %3097 = vmatpush1.bf16.msra.mxu0 0
        %3098 = vmatprep.subr.bf16.mxu0 0
        %3099 = vmatpush1.bf16.msra.mxu0 0
        %3100 = vmatprep.subr.bf16.mxu0 0
        %3101 = vmatpush1.bf16.msra.mxu0 0
        %3102 = vmatprep.subr.bf16.mxu0 0
        %3103 = vmatpush1.bf16.msra.mxu0 0
        %3104 = vmatprep.subr.bf16.mxu0 0
        %3105 = vmatpush1.bf16.msra.mxu0 0
        %3106 = vmatprep.subr.bf16.mxu0 0
        %3107 = vmatpush1.bf16.msra.mxu0 0
        %3108 = vmatprep.subr.bf16.mxu0 0
        %3109 = vmatpush1.bf16.msra.mxu0 0
        %3110 = vmatprep.subr.bf16.mxu0 0
        %3111 = vmatpush1.bf16.msra.mxu0 0
        %3112 = vmatprep.mubr.bf16.mxu0 0
        %3113 = vmatmul.mubr.bf16.gmra.mrb[0].mxu0 %v2690
        %v3114 = vpop.f32.mrb[0].mxu0
        %v3115 = vadd.f32 %v2907, %v3114
        %v3116 = vpop.f32.mrb[0].mxu0
        %v3117 = vpop.f32.mrb[0].mxu0
        %v3118 = vpop.f32.mrb[0].mxu0
        %3119 = vdwg.mxu0
        %v3120 = vpack.c.bf16 %v2492, %v2492
        %v3121 = vpack.c.bf16 %v2544, %v2544
        %v3122 = vpack.c.bf16 %v2596, %v2596
        %v3123 = vpack.c.bf16 %v2648, %v2648
        %v3124 = vpack.c.bf16 %v2727, %v2727
        %v3125 = vpack.c.bf16 %v2779, %v2779
        %v3126 = vpack.c.bf16 %v2831, %v2831
        %v3127 = vpack.c.bf16 %v2883, %v2883
        %v3129 = vsel %vm1684, %v3120, 0
        %v3132 = vsel %vm1684, %v3124, 0
        %3134 = vmatprep.subr.bf16.mxu0 0
        %3135 = vmatpush1.bf16.xpose.msra.mxu0 %v3132
        %3136 = vmatprep.subr.bf16.mxu0 0
        %3137 = vmatpush1.bf16.xpose.msra.mxu0 0
        %3138 = vmatprep.subr.bf16.mxu0 0
        %3139 = vmatpush1.bf16.xpose.msra.mxu0 0
        %3140 = vmatprep.subr.bf16.mxu0 0
        %3141 = vmatpush1.bf16.xpose.msra.mxu0 0
        %3142 = vmatprep.subr.bf16.mxu0 0
        %3143 = vmatpush1.bf16.xpose.msra.mxu0 0
        %3144 = vmatprep.subr.bf16.mxu0 0
        %3145 = vmatpush1.bf16.xpose.msra.mxu0 0
        %3146 = vmatprep.subr.bf16.mxu0 0
        %3147 = vmatpush1.bf16.xpose.msra.mxu0 0
        %3148 = vmatprep.subr.bf16.mxu0 0
        %3149 = vmatpush1.bf16.xpose.msra.mxu0 0
        %3150 = vmatprep.subr.bf16.mxu0 0
        %3151 = vmatpush1.bf16.xpose.msra.mxu0 0
        %3152 = vmatprep.subr.bf16.mxu0 0
        %3153 = vmatpush1.bf16.xpose.msra.mxu0 0
        %3154 = vmatprep.subr.bf16.mxu0 0
        %3155 = vmatpush1.bf16.xpose.msra.mxu0 0
        %3156 = vmatprep.subr.bf16.mxu0 0
        %3157 = vmatpush1.bf16.xpose.msra.mxu0 0
        %3158 = vmatprep.subr.bf16.mxu0 0
        %3159 = vmatpush1.bf16.xpose.msra.mxu0 0
        %3160 = vmatprep.subr.bf16.mxu0 0
        %3161 = vmatpush1.bf16.xpose.msra.mxu0 0
        %3162 = vmatprep.subr.bf16.mxu0 0
        %3163 = vmatpush1.bf16.xpose.msra.mxu0 0
        %3164 = vmatprep.subr.bf16.mxu0 0
        %3165 = vmatpush1.bf16.xpose.msra.mxu0 0
        %3166 = vmatprep.mubr.bf16.mxu0 0
        %3167 = vmatmul.mubr.bf16.gmra.mrb[0].mxu0 %v3129
        %v3168 = vpop.f32.mrb[0].mxu0
        %v3169 = vadd.f32 0.0, %v3168
        %v3170 = vpop.f32.mrb[0].mxu0
        %v3171 = vpop.f32.mrb[0].mxu0
        %v3172 = vpop.f32.mrb[0].mxu0
        %3173 = vdwg.mxu0
        %v3175 = vsel %vm1684, %v3121, 0
        %v3178 = vsel %vm1684, %v3125, 0
        %3180 = vmatprep.subr.bf16.mxu0 0
        %3181 = vmatpush1.bf16.xpose.msra.mxu0 %v3178
        %3182 = vmatprep.subr.bf16.mxu0 0
        %3183 = vmatpush1.bf16.xpose.msra.mxu0 0
        %3184 = vmatprep.subr.bf16.mxu0 0
        %3185 = vmatpush1.bf16.xpose.msra.mxu0 0
        %3186 = vmatprep.subr.bf16.mxu0 0
        %3187 = vmatpush1.bf16.xpose.msra.mxu0 0
        %3188 = vmatprep.subr.bf16.mxu0 0
        %3189 = vmatpush1.bf16.xpose.msra.mxu0 0
        %3190 = vmatprep.subr.bf16.mxu0 0
        %3191 = vmatpush1.bf16.xpose.msra.mxu0 0
        %3192 = vmatprep.subr.bf16.mxu0 0
        %3193 = vmatpush1.bf16.xpose.msra.mxu0 0
        %3194 = vmatprep.subr.bf16.mxu0 0
        %3195 = vmatpush1.bf16.xpose.msra.mxu0 0
        %3196 = vmatprep.subr.bf16.mxu0 0
        %3197 = vmatpush1.bf16.xpose.msra.mxu0 0
        %3198 = vmatprep.subr.bf16.mxu0 0
        %3199 = vmatpush1.bf16.xpose.msra.mxu0 0
        %3200 = vmatprep.subr.bf16.mxu0 0
        %3201 = vmatpush1.bf16.xpose.msra.mxu0 0
        %3202 = vmatprep.subr.bf16.mxu0 0
        %3203 = vmatpush1.bf16.xpose.msra.mxu0 0
        %3204 = vmatprep.subr.bf16.mxu0 0
        %3205 = vmatpush1.bf16.xpose.msra.mxu0 0
        %3206 = vmatprep.subr.bf16.mxu0 0
        %3207 = vmatpush1.bf16.xpose.msra.mxu0 0
        %3208 = vmatprep.subr.bf16.mxu0 0
        %3209 = vmatpush1.bf16.xpose.msra.mxu0 0
        %3210 = vmatprep.subr.bf16.mxu0 0
        %3211 = vmatpush1.bf16.xpose.msra.mxu0 0
        %3212 = vmatprep.mubr.bf16.mxu0 0
        %3213 = vmatmul.mubr.bf16.gmra.mrb[0].mxu0 %v3175
        %v3214 = vpop.f32.mrb[0].mxu0
        %v3215 = vadd.f32 0.0, %v3214
        %v3216 = vpop.f32.mrb[0].mxu0
        %v3217 = vpop.f32.mrb[0].mxu0
        %v3218 = vpop.f32.mrb[0].mxu0
        %3219 = vdwg.mxu0
        %v3221 = vsel %vm1684, %v3122, 0
        %v3224 = vsel %vm1684, %v3126, 0
        %3226 = vmatprep.subr.bf16.mxu0 0
        %3227 = vmatpush1.bf16.xpose.msra.mxu0 %v3224
        %3228 = vmatprep.subr.bf16.mxu0 0
        %3229 = vmatpush1.bf16.xpose.msra.mxu0 0
        %3230 = vmatprep.subr.bf16.mxu0 0
        %3231 = vmatpush1.bf16.xpose.msra.mxu0 0
        %3232 = vmatprep.subr.bf16.mxu0 0
        %3233 = vmatpush1.bf16.xpose.msra.mxu0 0
        %3234 = vmatprep.subr.bf16.mxu0 0
        %3235 = vmatpush1.bf16.xpose.msra.mxu0 0
        %3236 = vmatprep.subr.bf16.mxu0 0
        %3237 = vmatpush1.bf16.xpose.msra.mxu0 0
        %3238 = vmatprep.subr.bf16.mxu0 0
        %3239 = vmatpush1.bf16.xpose.msra.mxu0 0
        %3240 = vmatprep.subr.bf16.mxu0 0
        %3241 = vmatpush1.bf16.xpose.msra.mxu0 0
        %3242 = vmatprep.subr.bf16.mxu0 0
        %3243 = vmatpush1.bf16.xpose.msra.mxu0 0
        %3244 = vmatprep.subr.bf16.mxu0 0
        %3245 = vmatpush1.bf16.xpose.msra.mxu0 0
        %3246 = vmatprep.subr.bf16.mxu0 0
        %3247 = vmatpush1.bf16.xpose.msra.mxu0 0
        %3248 = vmatprep.subr.bf16.mxu0 0
        %3249 = vmatpush1.bf16.xpose.msra.mxu0 0
        %3250 = vmatprep.subr.bf16.mxu0 0
        %3251 = vmatpush1.bf16.xpose.msra.mxu0 0
        %3252 = vmatprep.subr.bf16.mxu0 0
        %3253 = vmatpush1.bf16.xpose.msra.mxu0 0
        %3254 = vmatprep.subr.bf16.mxu0 0
        %3255 = vmatpush1.bf16.xpose.msra.mxu0 0
        %3256 = vmatprep.subr.bf16.mxu0 0
        %3257 = vmatpush1.bf16.xpose.msra.mxu0 0
        %3258 = vmatprep.mubr.bf16.mxu0 0
        %3259 = vmatmul.mubr.bf16.gmra.mrb[0].mxu0 %v3221
        %v3260 = vpop.f32.mrb[0].mxu0
        %v3261 = vadd.f32 0.0, %v3260
        %v3262 = vpop.f32.mrb[0].mxu0
        %v3263 = vpop.f32.mrb[0].mxu0
        %v3264 = vpop.f32.mrb[0].mxu0
        %3265 = vdwg.mxu0
        %v3267 = vsel %vm1684, %v3123, 0
        %v3270 = vsel %vm1684, %v3127, 0
        %3272 = vmatprep.subr.bf16.mxu0 0
        %3273 = vmatpush1.bf16.xpose.msra.mxu0 %v3270
        %3274 = vmatprep.subr.bf16.mxu0 0
        %3275 = vmatpush1.bf16.xpose.msra.mxu0 0
        %3276 = vmatprep.subr.bf16.mxu0 0
        %3277 = vmatpush1.bf16.xpose.msra.mxu0 0
        %3278 = vmatprep.subr.bf16.mxu0 0
        %3279 = vmatpush1.bf16.xpose.msra.mxu0 0
        %3280 = vmatprep.subr.bf16.mxu0 0
        %3281 = vmatpush1.bf16.xpose.msra.mxu0 0
        %3282 = vmatprep.subr.bf16.mxu0 0
        %3283 = vmatpush1.bf16.xpose.msra.mxu0 0
        %3284 = vmatprep.subr.bf16.mxu0 0
        %3285 = vmatpush1.bf16.xpose.msra.mxu0 0
        %3286 = vmatprep.subr.bf16.mxu0 0
        %3287 = vmatpush1.bf16.xpose.msra.mxu0 0
        %3288 = vmatprep.subr.bf16.mxu0 0
        %3289 = vmatpush1.bf16.xpose.msra.mxu0 0
        %3290 = vmatprep.subr.bf16.mxu0 0
        %3291 = vmatpush1.bf16.xpose.msra.mxu0 0
        %3292 = vmatprep.subr.bf16.mxu0 0
        %3293 = vmatpush1.bf16.xpose.msra.mxu0 0
        %3294 = vmatprep.subr.bf16.mxu0 0
        %3295 = vmatpush1.bf16.xpose.msra.mxu0 0
        %3296 = vmatprep.subr.bf16.mxu0 0
        %3297 = vmatpush1.bf16.xpose.msra.mxu0 0
        %3298 = vmatprep.subr.bf16.mxu0 0
        %3299 = vmatpush1.bf16.xpose.msra.mxu0 0
        %3300 = vmatprep.subr.bf16.mxu0 0
        %3301 = vmatpush1.bf16.xpose.msra.mxu0 0
        %3302 = vmatprep.subr.bf16.mxu0 0
        %3303 = vmatpush1.bf16.xpose.msra.mxu0 0
        %3304 = vmatprep.mubr.bf16.mxu0 0
        %3305 = vmatmul.mubr.bf16.gmra.mrb[0].mxu0 %v3267
        %v3306 = vpop.f32.mrb[0].mxu0
        %v3307 = vadd.f32 0.0, %v3306
        %v3308 = vpop.f32.mrb[0].mxu0
        %v3309 = vpop.f32.mrb[0].mxu0
        %v3310 = vpop.f32.mrb[0].mxu0
        %3311 = vdwg.mxu0
        %v3312 = vmul.f32 %v3169, 0.35355338
        %v3313 = vmul.f32 %v3215, 0.35355338
        %v3314 = vmul.f32 %v3261, 0.35355338
        %v3315 = vmul.f32 %v3307, 0.35355338
        %v3316 = vsel %vm1684, %v3312, -inf
        %3317 = vmax.xlane.f32.xlu0 %v3316
        %v3318 = vpop.xlane.xlu0 %3317
        %v3319 = vsel %vm1684, %v3313, -inf
        %3320 = vmax.xlane.f32.xlu0 %v3319
        %v3321 = vpop.xlane.xlu0 %3320
        %v3322 = vsel %vm1684, %v3314, -inf
        %3323 = vmax.xlane.f32.xlu0 %v3322
        %v3324 = vpop.xlane.xlu0 %3323
        %v3325 = vsel %vm1684, %v3315, -inf
        %3326 = vmax.xlane.f32.xlu0 %v3325
        %v3327 = vpop.xlane.xlu0 %3326
        %v3328 = vsub.f32 %v3312, %v3318
        %v3329 = vsub.f32 %v3313, %v3321
        %v3330 = vsub.f32 %v3314, %v3324
        %v3331 = vsub.f32 %v3315, %v3327
        %v3332 = vmul.f32 %v3328, 1.442695
        %v3333 = vpow.pop %v3332
        %v3334 = vmul.f32 %v3329, 1.442695
        %v3335 = vpow.pop %v3334
        %v3336 = vmul.f32 %v3330, 1.442695
        %v3337 = vpow.pop %v3336
        %v3338 = vmul.f32 %v3331, 1.442695
        %v3339 = vpow.pop %v3338
        %v3340 = vsel %vm1684, %v3333, 0.0
        %3341 = vadd.xlane.f32.xlu0 %v3340
        %v3342 = vpop.xlane.xlu0 %3341
        %v3343 = vsel %vm1684, %v3335, 0.0
        %3344 = vadd.xlane.f32.xlu0 %v3343
        %v3345 = vpop.xlane.xlu0 %3344
        %v3346 = vsel %vm1684, %v3337, 0.0
        %3347 = vadd.xlane.f32.xlu0 %v3346
        %v3348 = vpop.xlane.xlu0 %3347
        %v3349 = vsel %vm1684, %v3339, 0.0
        %3350 = vadd.xlane.f32.xlu0 %v3349
        %v3351 = vpop.xlane.xlu0 %3350
        %v3352 = vrcp.pop %v3342
        %v3353 = vrcp.pop %v3345
        %v3354 = vrcp.pop %v3348
        %v3355 = vrcp.pop %v3351
        %v3356 = vmul.f32 %v3333, %v3352
        %v3357 = vmul.f32 %v3335, %v3353
        %v3358 = vmul.f32 %v3337, %v3354
        %v3359 = vmul.f32 %v3339, %v3355
        %v3360 = vpack.c.bf16 %v3356, %v3356
        %v3361 = vpack.c.bf16 %v3357, %v3357
        %v3362 = vpack.c.bf16 %v3358, %v3358
        %v3363 = vpack.c.bf16 %v3359, %v3359
        %v3364 = vpack.c.bf16 %v2959, %v2959
        %v3365 = vpack.c.bf16 %v3011, %v3011
        %v3366 = vpack.c.bf16 %v3063, %v3063
        %v3367 = vpack.c.bf16 %v3115, %v3115
        %v3369 = vsel %vm1684, %v3360, 0
        %v3372 = vsel %vm1932, %v3364, 0
        %3374 = vmatprep.subr.bf16.mxu0 0
        %3375 = vmatpush1.bf16.msra.mxu0 %v3372
        %3376 = vmatprep.subr.bf16.mxu0 0
        %3377 = vmatpush1.bf16.msra.mxu0 0
        %3378 = vmatprep.subr.bf16.mxu0 0
        %3379 = vmatpush1.bf16.msra.mxu0 0
        %3380 = vmatprep.subr.bf16.mxu0 0
        %3381 = vmatpush1.bf16.msra.mxu0 0
        %3382 = vmatprep.subr.bf16.mxu0 0
        %3383 = vmatpush1.bf16.msra.mxu0 0
        %3384 = vmatprep.subr.bf16.mxu0 0
        %3385 = vmatpush1.bf16.msra.mxu0 0
        %3386 = vmatprep.subr.bf16.mxu0 0
        %3387 = vmatpush1.bf16.msra.mxu0 0
        %3388 = vmatprep.subr.bf16.mxu0 0
        %3389 = vmatpush1.bf16.msra.mxu0 0
        %3390 = vmatprep.subr.bf16.mxu0 0
        %3391 = vmatpush1.bf16.msra.mxu0 0
        %3392 = vmatprep.subr.bf16.mxu0 0
        %3393 = vmatpush1.bf16.msra.mxu0 0
        %3394 = vmatprep.subr.bf16.mxu0 0
        %3395 = vmatpush1.bf16.msra.mxu0 0
        %3396 = vmatprep.subr.bf16.mxu0 0
        %3397 = vmatpush1.bf16.msra.mxu0 0
        %3398 = vmatprep.subr.bf16.mxu0 0
        %3399 = vmatpush1.bf16.msra.mxu0 0
        %3400 = vmatprep.subr.bf16.mxu0 0
        %3401 = vmatpush1.bf16.msra.mxu0 0
        %3402 = vmatprep.subr.bf16.mxu0 0
        %3403 = vmatpush1.bf16.msra.mxu0 0
        %3404 = vmatprep.subr.bf16.mxu0 0
        %3405 = vmatpush1.bf16.msra.mxu0 0
        %3406 = vmatprep.mubr.bf16.mxu0 0
        %3407 = vmatmul.mubr.bf16.gmra.mrb[0].mxu0 %v3369
        %v3408 = vpop.f32.mrb[0].mxu0
        %v3409 = vadd.f32 0.0, %v3408
        %v3410 = vpop.f32.mrb[0].mxu0
        %v3411 = vpop.f32.mrb[0].mxu0
        %v3412 = vpop.f32.mrb[0].mxu0
        %3413 = vdwg.mxu0
        %v3415 = vsel %vm1684, %v3361, 0
        %v3418 = vsel %vm1932, %v3365, 0
        %3420 = vmatprep.subr.bf16.mxu0 0
        %3421 = vmatpush1.bf16.msra.mxu0 %v3418
        %3422 = vmatprep.subr.bf16.mxu0 0
        %3423 = vmatpush1.bf16.msra.mxu0 0
        %3424 = vmatprep.subr.bf16.mxu0 0
        %3425 = vmatpush1.bf16.msra.mxu0 0
        %3426 = vmatprep.subr.bf16.mxu0 0
        %3427 = vmatpush1.bf16.msra.mxu0 0
        %3428 = vmatprep.subr.bf16.mxu0 0
        %3429 = vmatpush1.bf16.msra.mxu0 0
        %3430 = vmatprep.subr.bf16.mxu0 0
        %3431 = vmatpush1.bf16.msra.mxu0 0
        %3432 = vmatprep.subr.bf16.mxu0 0
        %3433 = vmatpush1.bf16.msra.mxu0 0
        %3434 = vmatprep.subr.bf16.mxu0 0
        %3435 = vmatpush1.bf16.msra.mxu0 0
        %3436 = vmatprep.subr.bf16.mxu0 0
        %3437 = vmatpush1.bf16.msra.mxu0 0
        %3438 = vmatprep.subr.bf16.mxu0 0
        %3439 = vmatpush1.bf16.msra.mxu0 0
        %3440 = vmatprep.subr.bf16.mxu0 0
        %3441 = vmatpush1.bf16.msra.mxu0 0
        %3442 = vmatprep.subr.bf16.mxu0 0
        %3443 = vmatpush1.bf16.msra.mxu0 0
        %3444 = vmatprep.subr.bf16.mxu0 0
        %3445 = vmatpush1.bf16.msra.mxu0 0
        %3446 = vmatprep.subr.bf16.mxu0 0
        %3447 = vmatpush1.bf16.msra.mxu0 0
        %3448 = vmatprep.subr.bf16.mxu0 0
        %3449 = vmatpush1.bf16.msra.mxu0 0
        %3450 = vmatprep.subr.bf16.mxu0 0
        %3451 = vmatpush1.bf16.msra.mxu0 0
        %3452 = vmatprep.mubr.bf16.mxu0 0
        %3453 = vmatmul.mubr.bf16.gmra.mrb[0].mxu0 %v3415
        %v3454 = vpop.f32.mrb[0].mxu0
        %v3455 = vadd.f32 0.0, %v3454
        %v3456 = vpop.f32.mrb[0].mxu0
        %v3457 = vpop.f32.mrb[0].mxu0
        %v3458 = vpop.f32.mrb[0].mxu0
        %3459 = vdwg.mxu0
        %v3461 = vsel %vm1684, %v3362, 0
        %v3464 = vsel %vm1932, %v3366, 0
        %3466 = vmatprep.subr.bf16.mxu0 0
        %3467 = vmatpush1.bf16.msra.mxu0 %v3464
        %3468 = vmatprep.subr.bf16.mxu0 0
        %3469 = vmatpush1.bf16.msra.mxu0 0
        %3470 = vmatprep.subr.bf16.mxu0 0
        %3471 = vmatpush1.bf16.msra.mxu0 0
        %3472 = vmatprep.subr.bf16.mxu0 0
        %3473 = vmatpush1.bf16.msra.mxu0 0
        %3474 = vmatprep.subr.bf16.mxu0 0
        %3475 = vmatpush1.bf16.msra.mxu0 0
        %3476 = vmatprep.subr.bf16.mxu0 0
        %3477 = vmatpush1.bf16.msra.mxu0 0
        %3478 = vmatprep.subr.bf16.mxu0 0
        %3479 = vmatpush1.bf16.msra.mxu0 0
        %3480 = vmatprep.subr.bf16.mxu0 0
        %3481 = vmatpush1.bf16.msra.mxu0 0
        %3482 = vmatprep.subr.bf16.mxu0 0
        %3483 = vmatpush1.bf16.msra.mxu0 0
        %3484 = vmatprep.subr.bf16.mxu0 0
        %3485 = vmatpush1.bf16.msra.mxu0 0
        %3486 = vmatprep.subr.bf16.mxu0 0
        %3487 = vmatpush1.bf16.msra.mxu0 0
        %3488 = vmatprep.subr.bf16.mxu0 0
        %3489 = vmatpush1.bf16.msra.mxu0 0
        %3490 = vmatprep.subr.bf16.mxu0 0
        %3491 = vmatpush1.bf16.msra.mxu0 0
        %3492 = vmatprep.subr.bf16.mxu0 0
        %3493 = vmatpush1.bf16.msra.mxu0 0
        %3494 = vmatprep.subr.bf16.mxu0 0
        %3495 = vmatpush1.bf16.msra.mxu0 0
        %3496 = vmatprep.subr.bf16.mxu0 0
        %3497 = vmatpush1.bf16.msra.mxu0 0
        %3498 = vmatprep.mubr.bf16.mxu0 0
        %3499 = vmatmul.mubr.bf16.gmra.mrb[0].mxu0 %v3461
        %v3500 = vpop.f32.mrb[0].mxu0
        %v3501 = vadd.f32 0.0, %v3500
        %v3502 = vpop.f32.mrb[0].mxu0
        %v3503 = vpop.f32.mrb[0].mxu0
        %v3504 = vpop.f32.mrb[0].mxu0
        %3505 = vdwg.mxu0
        %v3507 = vsel %vm1684, %v3363, 0
        %v3510 = vsel %vm1932, %v3367, 0
        %3512 = vmatprep.subr.bf16.mxu0 0
        %3513 = vmatpush1.bf16.msra.mxu0 %v3510
        %3514 = vmatprep.subr.bf16.mxu0 0
        %3515 = vmatpush1.bf16.msra.mxu0 0
        %3516 = vmatprep.subr.bf16.mxu0 0
        %3517 = vmatpush1.bf16.msra.mxu0 0
        %3518 = vmatprep.subr.bf16.mxu0 0
        %3519 = vmatpush1.bf16.msra.mxu0 0
        %3520 = vmatprep.subr.bf16.mxu0 0
        %3521 = vmatpush1.bf16.msra.mxu0 0
        %3522 = vmatprep.subr.bf16.mxu0 0
        %3523 = vmatpush1.bf16.msra.mxu0 0
        %3524 = vmatprep.subr.bf16.mxu0 0
        %3525 = vmatpush1.bf16.msra.mxu0 0
        %3526 = vmatprep.subr.bf16.mxu0 0
        %3527 = vmatpush1.bf16.msra.mxu0 0
        %3528 = vmatprep.subr.bf16.mxu0 0
        %3529 = vmatpush1.bf16.msra.mxu0 0
        %3530 = vmatprep.subr.bf16.mxu0 0
        %3531 = vmatpush1.bf16.msra.mxu0 0
        %3532 = vmatprep.subr.bf16.mxu0 0
        %3533 = vmatpush1.bf16.msra.mxu0 0
        %3534 = vmatprep.subr.bf16.mxu0 0
        %3535 = vmatpush1.bf16.msra.mxu0 0
        %3536 = vmatprep.subr.bf16.mxu0 0
        %3537 = vmatpush1.bf16.msra.mxu0 0
        %3538 = vmatprep.subr.bf16.mxu0 0
        %3539 = vmatpush1.bf16.msra.mxu0 0
        %3540 = vmatprep.subr.bf16.mxu0 0
        %3541 = vmatpush1.bf16.msra.mxu0 0
        %3542 = vmatprep.subr.bf16.mxu0 0
        %3543 = vmatpush1.bf16.msra.mxu0 0
        %3544 = vmatprep.mubr.bf16.mxu0 0
        %3545 = vmatmul.mubr.bf16.gmra.mrb[0].mxu0 %v3507
        %v3546 = vpop.f32.mrb[0].mxu0
        %v3547 = vadd.f32 0.0, %v3546
        %v3548 = vpop.f32.mrb[0].mxu0
        %v3549 = vpop.f32.mrb[0].mxu0
        %v3550 = vpop.f32.mrb[0].mxu0
        %3551 = vdwg.mxu0
        %v3552 = vpack.c.bf16 %v3409, %v3409
        %v3553 = vpack.c.bf16 %v3455, %v3455
        %v3554 = vpack.c.bf16 %v3501, %v3501
        %v3555 = vpack.c.bf16 %v3547, %v3547
        %v3556 = vld [vmem:[%s857] sm:$0xf]
        %v3557 = vld [vmem:[%s857 + $0x4] sm:$0xf]
        %v3558 = vld [vmem:[%s857 + $0x8] sm:$0xf]
        %v3559 = vld [vmem:[%s857 + $0xc] sm:$0xf]
        %v3561 = vsel %vm1684, %v3552, 0
        %v3564 = vsel %vm1932, %v3556, 0
        %3566 = vmatprep.subr.bf16.mxu0 0
        %3567 = vmatpush1.bf16.msra.mxu0 %v3564
        %3568 = vmatprep.subr.bf16.mxu0 0
        %3569 = vmatpush1.bf16.msra.mxu0 0
        %3570 = vmatprep.subr.bf16.mxu0 0
        %3571 = vmatpush1.bf16.msra.mxu0 0
        %3572 = vmatprep.subr.bf16.mxu0 0
        %3573 = vmatpush1.bf16.msra.mxu0 0
        %3574 = vmatprep.subr.bf16.mxu0 0
        %3575 = vmatpush1.bf16.msra.mxu0 0
        %3576 = vmatprep.subr.bf16.mxu0 0
        %3577 = vmatpush1.bf16.msra.mxu0 0
        %3578 = vmatprep.subr.bf16.mxu0 0
        %3579 = vmatpush1.bf16.msra.mxu0 0
        %3580 = vmatprep.subr.bf16.mxu0 0
        %3581 = vmatpush1.bf16.msra.mxu0 0
        %3582 = vmatprep.subr.bf16.mxu0 0
        %3583 = vmatpush1.bf16.msra.mxu0 0
        %3584 = vmatprep.subr.bf16.mxu0 0
        %3585 = vmatpush1.bf16.msra.mxu0 0
        %3586 = vmatprep.subr.bf16.mxu0 0
        %3587 = vmatpush1.bf16.msra.mxu0 0
        %3588 = vmatprep.subr.bf16.mxu0 0
        %3589 = vmatpush1.bf16.msra.mxu0 0
        %3590 = vmatprep.subr.bf16.mxu0 0
        %3591 = vmatpush1.bf16.msra.mxu0 0
        %3592 = vmatprep.subr.bf16.mxu0 0
        %3593 = vmatpush1.bf16.msra.mxu0 0
        %3594 = vmatprep.subr.bf16.mxu0 0
        %3595 = vmatpush1.bf16.msra.mxu0 0
        %3596 = vmatprep.subr.bf16.mxu0 0
        %3597 = vmatpush1.bf16.msra.mxu0 0
        %3598 = vmatprep.mubr.bf16.mxu0 0
        %3599 = vmatmul.mubr.bf16.gmra.mrb[0].mxu0 %v3561
        %v3600 = vpop.f32.mrb[0].mxu0
        %v3601 = vadd.f32 0.0, %v3600
        %v3602 = vpop.f32.mrb[0].mxu0
        %v3603 = vpop.f32.mrb[0].mxu0
        %v3604 = vpop.f32.mrb[0].mxu0
        %3605 = vdwg.mxu0
        %v3607 = vsel %vm1684, %v3553, 0
        %v3610 = vsel %vm1932, %v3557, 0
        %3612 = vmatprep.subr.bf16.mxu0 0
        %3613 = vmatpush1.bf16.msra.mxu0 %v3610
        %3614 = vmatprep.subr.bf16.mxu0 0
        %3615 = vmatpush1.bf16.msra.mxu0 0
        %3616 = vmatprep.subr.bf16.mxu0 0
        %3617 = vmatpush1.bf16.msra.mxu0 0
        %3618 = vmatprep.subr.bf16.mxu0 0
        %3619 = vmatpush1.bf16.msra.mxu0 0
        %3620 = vmatprep.subr.bf16.mxu0 0
        %3621 = vmatpush1.bf16.msra.mxu0 0
        %3622 = vmatprep.subr.bf16.mxu0 0
        %3623 = vmatpush1.bf16.msra.mxu0 0
        %3624 = vmatprep.subr.bf16.mxu0 0
        %3625 = vmatpush1.bf16.msra.mxu0 0
        %3626 = vmatprep.subr.bf16.mxu0 0
        %3627 = vmatpush1.bf16.msra.mxu0 0
        %3628 = vmatprep.subr.bf16.mxu0 0
        %3629 = vmatpush1.bf16.msra.mxu0 0
        %3630 = vmatprep.subr.bf16.mxu0 0
        %3631 = vmatpush1.bf16.msra.mxu0 0
        %3632 = vmatprep.subr.bf16.mxu0 0
        %3633 = vmatpush1.bf16.msra.mxu0 0
        %3634 = vmatprep.subr.bf16.mxu0 0
        %3635 = vmatpush1.bf16.msra.mxu0 0
        %3636 = vmatprep.subr.bf16.mxu0 0
        %3637 = vmatpush1.bf16.msra.mxu0 0
        %3638 = vmatprep.subr.bf16.mxu0 0
        %3639 = vmatpush1.bf16.msra.mxu0 0
        %3640 = vmatprep.subr.bf16.mxu0 0
        %3641 = vmatpush1.bf16.msra.mxu0 0
        %3642 = vmatprep.subr.bf16.mxu0 0
        %3643 = vmatpush1.bf16.msra.mxu0 0
        %3644 = vmatprep.mubr.bf16.mxu0 0
        %3645 = vmatmul.mubr.bf16.gmra.mrb[0].mxu0 %v3607
        %v3646 = vpop.f32.mrb[0].mxu0
        %v3647 = vadd.f32 0.0, %v3646
        %v3648 = vpop.f32.mrb[0].mxu0
        %v3649 = vpop.f32.mrb[0].mxu0
        %v3650 = vpop.f32.mrb[0].mxu0
        %3651 = vdwg.mxu0
        %v3653 = vsel %vm1684, %v3554, 0
        %v3656 = vsel %vm1932, %v3558, 0
        %3658 = vmatprep.subr.bf16.mxu0 0
        %3659 = vmatpush1.bf16.msra.mxu0 %v3656
        %3660 = vmatprep.subr.bf16.mxu0 0
        %3661 = vmatpush1.bf16.msra.mxu0 0
        %3662 = vmatprep.subr.bf16.mxu0 0
        %3663 = vmatpush1.bf16.msra.mxu0 0
        %3664 = vmatprep.subr.bf16.mxu0 0
        %3665 = vmatpush1.bf16.msra.mxu0 0
        %3666 = vmatprep.subr.bf16.mxu0 0
        %3667 = vmatpush1.bf16.msra.mxu0 0
        %3668 = vmatprep.subr.bf16.mxu0 0
        %3669 = vmatpush1.bf16.msra.mxu0 0
        %3670 = vmatprep.subr.bf16.mxu0 0
        %3671 = vmatpush1.bf16.msra.mxu0 0
        %3672 = vmatprep.subr.bf16.mxu0 0
        %3673 = vmatpush1.bf16.msra.mxu0 0
        %3674 = vmatprep.subr.bf16.mxu0 0
        %3675 = vmatpush1.bf16.msra.mxu0 0
        %3676 = vmatprep.subr.bf16.mxu0 0
        %3677 = vmatpush1.bf16.msra.mxu0 0
        %3678 = vmatprep.subr.bf16.mxu0 0
        %3679 = vmatpush1.bf16.msra.mxu0 0
        %3680 = vmatprep.subr.bf16.mxu0 0
        %3681 = vmatpush1.bf16.msra.mxu0 0
        %3682 = vmatprep.subr.bf16.mxu0 0
        %3683 = vmatpush1.bf16.msra.mxu0 0
        %3684 = vmatprep.subr.bf16.mxu0 0
        %3685 = vmatpush1.bf16.msra.mxu0 0
        %3686 = vmatprep.subr.bf16.mxu0 0
        %3687 = vmatpush1.bf16.msra.mxu0 0
        %3688 = vmatprep.subr.bf16.mxu0 0
        %3689 = vmatpush1.bf16.msra.mxu0 0
        %3690 = vmatprep.mubr.bf16.mxu0 0
        %3691 = vmatmul.mubr.bf16.gmra.mrb[0].mxu0 %v3653
        %v3692 = vpop.f32.mrb[0].mxu0
        %v3693 = vadd.f32 0.0, %v3692
        %v3694 = vpop.f32.mrb[0].mxu0
        %v3695 = vpop.f32.mrb[0].mxu0
        %v3696 = vpop.f32.mrb[0].mxu0
        %3697 = vdwg.mxu0
        %v3699 = vsel %vm1684, %v3555, 0
        %v3702 = vsel %vm1932, %v3559, 0
        %3704 = vmatprep.subr.bf16.mxu0 0
        %3705 = vmatpush1.bf16.msra.mxu0 %v3702
        %3706 = vmatprep.subr.bf16.mxu0 0
        %3707 = vmatpush1.bf16.msra.mxu0 0
        %3708 = vmatprep.subr.bf16.mxu0 0
        %3709 = vmatpush1.bf16.msra.mxu0 0
        %3710 = vmatprep.subr.bf16.mxu0 0
        %3711 = vmatpush1.bf16.msra.mxu0 0
        %3712 = vmatprep.subr.bf16.mxu0 0
        %3713 = vmatpush1.bf16.msra.mxu0 0
        %3714 = vmatprep.subr.bf16.mxu0 0
        %3715 = vmatpush1.bf16.msra.mxu0 0
        %3716 = vmatprep.subr.bf16.mxu0 0
        %3717 = vmatpush1.bf16.msra.mxu0 0
        %3718 = vmatprep.subr.bf16.mxu0 0
        %3719 = vmatpush1.bf16.msra.mxu0 0
        %3720 = vmatprep.subr.bf16.mxu0 0
        %3721 = vmatpush1.bf16.msra.mxu0 0
        %3722 = vmatprep.subr.bf16.mxu0 0
        %3723 = vmatpush1.bf16.msra.mxu0 0
        %3724 = vmatprep.subr.bf16.mxu0 0
        %3725 = vmatpush1.bf16.msra.mxu0 0
        %3726 = vmatprep.subr.bf16.mxu0 0
        %3727 = vmatpush1.bf16.msra.mxu0 0
        %3728 = vmatprep.subr.bf16.mxu0 0
        %3729 = vmatpush1.bf16.msra.mxu0 0
        %3730 = vmatprep.subr.bf16.mxu0 0
        %3731 = vmatpush1.bf16.msra.mxu0 0
        %3732 = vmatprep.subr.bf16.mxu0 0
        %3733 = vmatpush1.bf16.msra.mxu0 0
        %3734 = vmatprep.subr.bf16.mxu0 0
        %3735 = vmatpush1.bf16.msra.mxu0 0
        %3736 = vmatprep.mubr.bf16.mxu0 0
        %3737 = vmatmul.mubr.bf16.gmra.mrb[0].mxu0 %v3699
        %v3738 = vpop.f32.mrb[0].mxu0
        %v3739 = vadd.f32 0.0, %v3738
        %v3740 = vpop.f32.mrb[0].mxu0
        %v3741 = vpop.f32.mrb[0].mxu0
        %v3742 = vpop.f32.mrb[0].mxu0
        %3743 = vdwg.mxu0
        %v3744 = vsel %vm1012, %v3601, 0.0
        %v3745 = vsel %vm1012, %v3647, 0.0
        %v3746 = vadd.f32 %v3744, %v3745
        %v3747 = vsel %vm1012, %v3693, 0.0
        %v3748 = vadd.f32 %v3746, %v3747
        %v3749 = vsel %vm1012, %v3739, 0.0
        %v3750 = vadd.f32 %v3748, %v3749
        %v3751 = vld [vmem:[%s860] sm:$0x1]
        %v3753 = vlaneseq
        %v3754 = vshrl.u32 %v3753, 7
        %v3755 = vsub.s32 0, %v3754
        %v3756 = vrot.slane %v3751, %v3755
        %v3758 = vadd.f32 %v3750, %v3756
        %v3759 = vadd.f32 %v2351, %v3758
        %s3760 = scalar_lea.vmem %s880, 1
        %v3761 = vld [vmem:[%s3760] sm:$0x1]
        %s3762 = scalar_lea.vmem %s884, 1
        %v3763 = vld [vmem:[%s3762] sm:$0x1]
        %v3764 = vsel %vm1012, %v3759, 0.0
        %3765 = vadd.xlane.f32.xlu0 %v3764
        %v3766 = vpop.xlane.xlu0 %3765
        %v3767 = vmul.f32 %v3766, %v2327
        %v3768 = vsub.f32 %v3759, %v3767
        %v3769 = vmul.f32 %v3768, %v3768
        %v3770 = vsel %vm1012, %v3769, 0.0
        %3771 = vadd.xlane.f32.xlu0 %v3770
        %v3772 = vpop.xlane.xlu0 %3771
        %v3773 = vmul.f32 %v3772, %v2327
        %v3774 = vadd.f32 %v3773, 1e-05
        %v3775 = vrsqrt.pop %v3774
        %v3776 = vmul.f32 %v3768, %v3775
        %v3778 = vlaneseq
        %v3779 = vshrl.u32 %v3778, 7
        %v3780 = vsub.s32 0, %v3779
        %v3781 = vrot.slane %v3761, %v3780
        %v3783 = vmul.f32 %v3776, %v3781
        %v3785 = vlaneseq
        %v3786 = vshrl.u32 %v3785, 7
        %v3787 = vsub.s32 0, %v3786
        %v3788 = vrot.slane %v3763, %v3787
        %v3790 = vadd.f32 %v3783, %v3788
        %v3791 = vpack.c.bf16 %v3790, %v3790
        %v3792 = vld [vmem:[%s865] sm:$0xf]
        %v3793 = vld [vmem:[%s865 + $0x4] sm:$0xf]
        %v3794 = vld [vmem:[%s865 + $0x8] sm:$0xf]
        %v3795 = vld [vmem:[%s865 + $0xc] sm:$0xf]
        %v3796 = vld [vmem:[%s868] sm:$0x1]
        %v3798 = vlaneseq
        %v3799 = vshrl.u32 %v3798, 7
        %v3800 = vsub.s32 0, %v3799
        %v3801 = vrot.slane %v3796, %v3800
        %v3807 = vunpack.c.l.b16 %v3792
        %v3808 = vunpack.c.l.b16 %v3793
        %v3809 = vunpack.c.l.b16 %v3794
        %v3810 = vunpack.c.l.b16 %v3795
        %v3811 = vpack.c.b16 %v3808, %v3807
        %v3812 = vpack.c.b16 %v3810, %v3809
        %v3816 = vsel %vm1012, %v3791, 0
        %3818 = vmatprep.subr.bf16.mxu0 0
        %3819 = vmatpush1.bf16.msra.mxu0 %v3811
        %3820 = vmatprep.subr.bf16.mxu0 0
        %3821 = vmatpush1.bf16.msra.mxu0 %v3812
        %3822 = vmatprep.subr.bf16.mxu0 0
        %3823 = vmatpush1.bf16.msra.mxu0 0
        %3824 = vmatprep.subr.bf16.mxu0 0
        %3825 = vmatpush1.bf16.msra.mxu0 0
        %3826 = vmatprep.subr.bf16.mxu0 0
        %3827 = vmatpush1.bf16.msra.mxu0 0
        %3828 = vmatprep.subr.bf16.mxu0 0
        %3829 = vmatpush1.bf16.msra.mxu0 0
        %3830 = vmatprep.subr.bf16.mxu0 0
        %3831 = vmatpush1.bf16.msra.mxu0 0
        %3832 = vmatprep.subr.bf16.mxu0 0
        %3833 = vmatpush1.bf16.msra.mxu0 0
        %3834 = vmatprep.subr.bf16.mxu0 0
        %3835 = vmatpush1.bf16.msra.mxu0 0
        %3836 = vmatprep.subr.bf16.mxu0 0
        %3837 = vmatpush1.bf16.msra.mxu0 0
        %3838 = vmatprep.subr.bf16.mxu0 0
        %3839 = vmatpush1.bf16.msra.mxu0 0
        %3840 = vmatprep.subr.bf16.mxu0 0
        %3841 = vmatpush1.bf16.msra.mxu0 0
        %3842 = vmatprep.subr.bf16.mxu0 0
        %3843 = vmatpush1.bf16.msra.mxu0 0
        %3844 = vmatprep.subr.bf16.mxu0 0
        %3845 = vmatpush1.bf16.msra.mxu0 0
        %3846 = vmatprep.subr.bf16.mxu0 0
        %3847 = vmatpush1.bf16.msra.mxu0 0
        %3848 = vmatprep.subr.bf16.mxu0 0
        %3849 = vmatpush1.bf16.msra.mxu0 0
        %3850 = vmatprep.mubr.bf16.mxu0 0
        %3851 = vmatmul.mubr.bf16.gmra.mrb[0].mxu0 %v3816
        %v3852 = vpop.f32.mrb[0].mxu0
        %v3853 = vadd.f32 %v3801, %v3852
        %v3854 = vpop.f32.mrb[0].mxu0
        %v3855 = vpop.f32.mrb[0].mxu0
        %v3856 = vpop.f32.mrb[0].mxu0
        %3857 = vdwg.mxu0
        %v3858 = vmax.f32 %v3853, 0.0
        %v3859 = vpack.c.bf16 %v3858, %v3858
        %v3860 = vld [vmem:[%s873] sm:$0xf]
        %v3861 = vld [vmem:[%s873 + $0x4] sm:$0xf]
        %v3862 = vld [vmem:[%s873 + $0x8] sm:$0xf]
        %v3863 = vld [vmem:[%s873 + $0xc] sm:$0xf]
        %v3864 = vld [vmem:[%s876] sm:$0x1]
        %v3866 = vlaneseq
        %v3867 = vshrl.u32 %v3866, 7
        %v3868 = vsub.s32 0, %v3867
        %v3869 = vrot.slane %v3864, %v3868
        %v3875 = vunpack.c.l.b16 %v3860
        %v3876 = vunpack.c.l.b16 %v3861
        %v3877 = vunpack.c.l.b16 %v3862
        %v3878 = vunpack.c.l.b16 %v3863
        %v3879 = vpack.c.b16 %v3876, %v3875
        %v3880 = vpack.c.b16 %v3878, %v3877
        %v3884 = vsel %vm1012, %v3859, 0
        %3886 = vmatprep.subr.bf16.mxu0 0
        %3887 = vmatpush1.bf16.msra.mxu0 %v3879
        %3888 = vmatprep.subr.bf16.mxu0 0
        %3889 = vmatpush1.bf16.msra.mxu0 %v3880
        %3890 = vmatprep.subr.bf16.mxu0 0
        %3891 = vmatpush1.bf16.msra.mxu0 0
        %3892 = vmatprep.subr.bf16.mxu0 0
        %3893 = vmatpush1.bf16.msra.mxu0 0
        %3894 = vmatprep.subr.bf16.mxu0 0
        %3895 = vmatpush1.bf16.msra.mxu0 0
        %3896 = vmatprep.subr.bf16.mxu0 0
        %3897 = vmatpush1.bf16.msra.mxu0 0
        %3898 = vmatprep.subr.bf16.mxu0 0
        %3899 = vmatpush1.bf16.msra.mxu0 0
        %3900 = vmatprep.subr.bf16.mxu0 0
        %3901 = vmatpush1.bf16.msra.mxu0 0
        %3902 = vmatprep.subr.bf16.mxu0 0
        %3903 = vmatpush1.bf16.msra.mxu0 0
        %3904 = vmatprep.subr.bf16.mxu0 0
        %3905 = vmatpush1.bf16.msra.mxu0 0
        %3906 = vmatprep.subr.bf16.mxu0 0
        %3907 = vmatpush1.bf16.msra.mxu0 0
        %3908 = vmatprep.subr.bf16.mxu0 0
        %3909 = vmatpush1.bf16.msra.mxu0 0
        %3910 = vmatprep.subr.bf16.mxu0 0
        %3911 = vmatpush1.bf16.msra.mxu0 0
        %3912 = vmatprep.subr.bf16.mxu0 0
        %3913 = vmatpush1.bf16.msra.mxu0 0
        %3914 = vmatprep.subr.bf16.mxu0 0
        %3915 = vmatpush1.bf16.msra.mxu0 0
        %3916 = vmatprep.subr.bf16.mxu0 0
        %3917 = vmatpush1.bf16.msra.mxu0 0
        %3918 = vmatprep.mubr.bf16.mxu0 0
        %3919 = vmatmul.mubr.bf16.gmra.mrb[0].mxu0 %v3884
        %v3920 = vpop.f32.mrb[0].mxu0
        %v3921 = vadd.f32 %v3869, %v3920
        %v3922 = vpop.f32.mrb[0].mxu0
        %v3923 = vpop.f32.mrb[0].mxu0
        %v3924 = vpop.f32.mrb[0].mxu0
        %3925 = vdwg.mxu0
        %v3926 = vadd.f32 %v3790, %v3921
        %s3927 = scalar_lea.vmem %s880, 2
        %v3928 = vld [vmem:[%s3927] sm:$0x1]
        %s3929 = scalar_lea.vmem %s884, 2
        %v3930 = vld [vmem:[%s3929] sm:$0x1]
        %v3931 = vsel %vm1012, %v3926, 0.0
        %3932 = vadd.xlane.f32.xlu0 %v3931
        %v3933 = vpop.xlane.xlu0 %3932
        %v3934 = vmul.f32 %v3933, %v2327
        %v3935 = vsub.f32 %v3926, %v3934
        %v3936 = vmul.f32 %v3935, %v3935
        %v3937 = vsel %vm1012, %v3936, 0.0
        %3938 = vadd.xlane.f32.xlu0 %v3937
        %v3939 = vpop.xlane.xlu0 %3938
        %v3940 = vmul.f32 %v3939, %v2327
        %v3941 = vadd.f32 %v3940, 1e-05
        %v3942 = vrsqrt.pop %v3941
        %v3943 = vmul.f32 %v3935, %v3942
        %v3945 = vlaneseq
        %v3946 = vshrl.u32 %v3945, 7
        %v3947 = vsub.s32 0, %v3946
        %v3948 = vrot.slane %v3928, %v3947
        %v3950 = vmul.f32 %v3943, %v3948
        %v3952 = vlaneseq
        %v3953 = vshrl.u32 %v3952, 7
        %v3954 = vsub.s32 0, %v3953
        %v3955 = vrot.slane %v3930, %v3954
        %v3957 = vadd.f32 %v3950, %v3955
        %3958 = vst.msk [vmem:[#allocation2] sm:$0xff] %vm1012, %v3957
        %p3959 = scmp.eq.s32.totalorder %s38, 1
        // Predicated region
        $region101: #{generate_task_model_forward.3} parent=95 // pred_check
          %p3960 = pneg %p3959
        $region102: #{generate_task_model_forward.3} parent=95 // pred_check_branch
          %3962 = sbr.rel (%p3960) target = $region104
        $region103: #{generate_task_model_forward.3} parent=95 // pred_region
          %v3963 = vld [vmem:[%s17] sm:$0x1]
          %v3964 = vld [vmem:[%s18] sm:$0x1]
          %v3965 = vsel %vm1012, %v3957, 0.0
          %3966 = vadd.xlane.f32.xlu0 %v3965
          %v3967 = vpop.xlane.xlu0 %3966
          %v3968 = vmul.f32 %v3967, %v2327
          %v3969 = vsub.f32 %v3957, %v3968
          %v3970 = vmul.f32 %v3969, %v3969
          %v3971 = vsel %vm1012, %v3970, 0.0
          %3972 = vadd.xlane.f32.xlu0 %v3971
          %v3973 = vpop.xlane.xlu0 %3972
          %v3974 = vmul.f32 %v3973, %v2327
          %v3975 = vadd.f32 %v3974, 1e-05
          %v3976 = vrsqrt.pop %v3975
          %v3977 = vmul.f32 %v3969, %v3976
          %v3979 = vlaneseq
          %v3980 = vshrl.u32 %v3979, 7
          %v3981 = vsub.s32 0, %v3980
          %v3982 = vrot.slane %v3963, %v3981
          %v3984 = vmul.f32 %v3977, %v3982
          %v3986 = vlaneseq
          %v3987 = vshrl.u32 %v3986, 7
          %v3988 = vsub.s32 0, %v3987
          %v3989 = vrot.slane %v3964, %v3988
          %v3991 = vadd.f32 %v3984, %v3989
          %3992 = vst.msk [vmem:[%s815] sm:$0xff] %vm1012, %v3991
        $region104: #{generate_task_model_forward.3} parent=95 // pred_fallthru
          _
        %s3993 = sand.u32 %s537, 1
        %s3994 = scalar_lea.sflag [#allocation4], %s3993
        %s3995 = sand.u32 %s537, 1
        %s3996 = smul.addr %s3995, 8
        %s3997 = scalar_lea.vmem [#allocation3], %s3996
        // Predicated region
        $region105: #{generate_task_model_forward.3} parent=95 // pred_check
          %p3998 = pneg %p547
        $region106: #{generate_task_model_forward.3} parent=95 // pred_check_branch
          %4000 = sbr.rel (%p3998) target = $region108
        $region107: #{generate_task_model_forward.3} parent=95 // pred_region
          %s4002 = ssub.s32 128, 128
          %4003 = vsyncadd %s3994, %s4002
          %s4004 = smul.addr %s37, 128
          %s4005 = scalar_lea.hbm %s19, %s4004
          %s4007 = sshll.u32 %s3997, 4
          %s4008 = int_to_ptr.vmem [resolvable:$true] %s4007
          %4010 = dma.vmem_to_hbm [thread:$0]  %s4008, 128, %s4005, %s3994
        $region108: #{generate_task_model_forward.3} parent=95 // pred_fallthru
          _
      $region96: #{generate_task_model_forward.3} parent=5 // pred_fallthru
        _
      %p4011 = scmp.le.s32.totalorder 2, %s28
      // Predicated region
      $region109: #{generate_task_model_forward.3} parent=5 // pred_check
        %p4012 = pneg %p4011
      $region110: #{generate_task_model_forward.3} parent=5 // pred_check_branch
        %4014 = sbr.rel (%p4012) target = $region112
      $region111: #{generate_task_model_forward.3} parent=5 // pred_region
        %s4015 = ssub.s32 %s28, 2
        // Predicated region
        $region113: #{generate_task_model_forward.3} parent=111 // pred_check
          %p4016 = pneg %p553
        $region114: #{generate_task_model_forward.3} parent=111 // pred_check_branch
          %4018 = sbr.rel (%p4016) target = $region116
        $region115: #{generate_task_model_forward.3} parent=111 // pred_region
          %s4019 = sand.u32 %s538, 1
          %s4020 = scalar_lea.sflag [#allocation4], %s4019
          %s4021 = sand.u32 %s538, 1
          %s4022 = smul.addr %s4021, 8
          %s4023 = scalar_lea.vmem [#allocation3], %s4022
          %4024 = dma.done %s4020, 128
        $region116: #{generate_task_model_forward.3} parent=111 // pred_fallthru
          _
      $region112: #{generate_task_model_forward.3} parent=5 // pred_fallthru
        _
    $region6: #{generate_task_model_forward.3} parent=1 // loop_footer
      %s32 = sadd.s32 1, %s28
    $region7: #{generate_task_model_forward.3} parent=1 // loop_footer_branch
      %27 = sbr.rel target = $region3
    $region8: #{generate_task_model_forward.3} parent=1 // loop_exit
      _
    %4025 = vsyncpa [#allocation4], 1
    %s4026 = scalar_lea.sflag [#allocation4], 1
    %4027 = vsyncpa %s4026, 1

</llo_original>
